<compile_context>
chip_gen: v7x
topology: tpu7x:2x2x1
jax: 0.10.0
libtpu: 0.0.40
codegen_flags: <defaults>
</compile_context>

<pallas_src>
import functools

import numpy as np
import jax
import jax.numpy as jnp
from jax import lax
from jax.experimental import pallas as pl
from jax.experimental.pallas import tpu as pltpu

N_FFT = 304
WIN_LENGTH = 304
HOP = 152                       # = N_FFT // 2 (required by this kernel)
F = N_FFT // 2 + 1              # 153


def _basis_numpy():
    """Windowed, 1/n_fft-scaled irfft bases and the OLA envelope (float64)."""
    n = np.arange(N_FFT)
    k = np.arange(F)
    # periodic Hann window (torch.hann_window default periodic=True)
    w = 0.5 - 0.5 * np.cos(2.0 * np.pi * n / WIN_LENGTH)
    ang = 2.0 * np.pi * np.outer(k, n) / N_FFT
    coef = np.full((F,), 2.0)
    coef[0] = 1.0
    coef[-1] = 1.0                               # Nyquist bin (n_fft even)
    C = (coef[:, None] * np.cos(ang) / N_FFT) * w[None, :]      # [F, N_FFT]
    S = (-coef[:, None] * np.sin(ang) / N_FFT) * w[None, :]
    # hop == n_fft/2  =>  the squared-window OLA envelope of every retained
    # hop-sized chunk is the same [HOP] vector.
    inv_env = 1.0 / (w[:HOP] ** 2 + w[HOP:] ** 2)               # [HOP]
    return C, S, inv_env


@functools.lru_cache(maxsize=1)
def _fused_bases():
    """Pre-transposed, window/scale/OLA-norm-folded bases for the kernel."""
    C, S, inv_env = _basis_numpy()
    env_full = np.concatenate([inv_env, inv_env])               # [N_FFT]
    Cn = (C * env_full[None, :]).astype(np.float32)             # [F, N_FFT]
    Sn = (S * env_full[None, :]).astype(np.float32)
    cbT = jnp.asarray(np.ascontiguousarray(Cn.T))               # [N_FFT, F]
    sbT = jnp.asarray(np.ascontiguousarray(Sn.T))
    cb1 = jnp.asarray(np.ascontiguousarray(Cn[:, :HOP]))        # [F, HOP]
    sb1 = jnp.asarray(np.ascontiguousarray(Sn[:, :HOP]))
    return cbT, sbT, cb1, sb1


def _istft_kernel(mag_ref, ph_ref, bmag_ref, bph_ref, cbT_ref, sbT_ref,
                  cb1_ref, sb1_ref, out_ref, *, total_frames, tiled):
    # mag_ref / ph_ref : (1, F, TT)    spectrogram tile, native [B, F, T] layout
    # bmag_ref/bph_ref : (1, NT, F)    boundary frames (first frame of next tile)
    # cbT_ref / sbT_ref: (N_FFT, F)    fused irfft bases, pre-transposed
    # cb1_ref / sb1_ref: (F, HOP)      first-half bases, row form (boundary frame)
    # out_ref          : (1, rows, HOP) hop-sized audio chunks
    j = pl.program_id(1)
    tt = mag_ref.shape[2]
    f32 = jnp.float32
    prec = lax.Precision.HIGHEST

    # Mask frame columns past the end of the signal (partial edge tile) so no
    # stale VMEM can propagate.  Their output rows are dropped on writeback
    # anyway; this makes that independent of op ordering.
    col = lax.broadcasted_iota(jnp.int32, (F, tt), 1)
    valid = (j * tt + col) < total_frames
    mag = jnp.where(valid, mag_ref[0].astype(f32), 0.0)
    ph = jnp.where(valid, ph_ref[0].astype(f32), 0.0)
    re = mag * jnp.cos(ph)                                   # Re(spec), [F, tt]
    im = mag * jnp.sin(ph)                                   # Im(spec), [F, tt]

    # Transposed frames straight off the MXU: lhs is the pre-transposed basis,
    # so the native-F contraction needs no operand transpose or pack scratch.
    # framesT[n, m] = sample n of the windowed, OLA-normalised frame m.
    framesT = (jnp.dot(cbT_ref[...], re, preferred_element_type=f32, precision=prec)
               + jnp.dot(sbT_ref[...], im, preferred_element_type=f32, precision=prec))

    firstT = jnp.transpose(framesT[0:HOP, :])                # [tt, HOP]
    secondT = jnp.transpose(framesT[HOP:N_FFT, :])           # [tt, HOP]

    # chunk m = first half of frame m+1  +  second half of frame m
    out_ref[0, 0:tt - 1, :] = (firstT[1:tt, :]
                               + secondT[0:tt - 1, :]).astype(out_ref.dtype)

    if tiled:
        # Last local chunk needs the first frame of the NEXT tile; recompute it
        # from the tiny gathered boundary input (no cross-tile carry, so the
        # time grid axis stays "parallel").
        bmag = bmag_ref[0, pl.ds(j, 1), :].astype(f32)       # [1, F]
        bph = bph_ref[0, pl.ds(j, 1), :].astype(f32)
        bre = bmag * jnp.cos(bph)
        bim = bmag * jnp.sin(bph)
        bfirst = (jnp.dot(bre, cb1_ref[...], preferred_element_type=f32, precision=prec)
                  + jnp.dot(bim, sb1_ref[...], preferred_element_type=f32, precision=prec))
        out_ref[0, tt - 1:tt, :] = (bfirst
                                    + secondT[tt - 1:tt, :]).astype(out_ref.dtype)


def inverse_spectrogram(magnitude: jax.Array, phase: jax.Array) -> jax.Array:
    """magnitude, phase: [B, F, T] (F = n_fft//2 + 1) -> audio [B, (T-1)*HOP]."""
    B, f_dim, T = magnitude.shape
    assert f_dim == F and T >= 2, (magnitude.shape,)
    # The overlap-add simplification is only valid for this configuration.
    assert WIN_LENGTH == N_FFT and 2 * HOP == N_FFT and F == N_FFT // 2 + 1

    cbT, sbT, cb1, sb1 = _fused_bases()
    n_chunks = T - 1

    if n_chunks <= 256:
        # Single tile with full-extent blocks: legal for any T, no boundary
        # frame needed (every frame is in the block).
        tiled = False
        TT = T                       # frames per tile
        out_rows = n_chunks
        NT = 1
        bmag = jnp.zeros((B, 1, F), magnitude.dtype)
        bph = jnp.zeros((B, 1, F), phase.dtype)
    else:
        # Tiled path: TT is a multiple of 128 and never exceeds n_chunks.
        tiled = True
        TT = 256 if n_chunks <= 512 else 512
        out_rows = TT
        NT = pl.cdiv(n_chunks, TT)
        # Boundary column j = spectrogram frame min((j+1)*TT, T-1): the one
        # next-tile frame whose first half feeds tile j's last output chunk.
        next_idx = jnp.minimum((jnp.arange(NT, dtype=jnp.int32) + 1) * TT, T - 1)
        bmag = jnp.take(magnitude, next_idx, axis=2).transpose(0, 2, 1)  # [B, NT, F]
        bph = jnp.take(phase, next_idx, axis=2).transpose(0, 2, 1)

    kernel = functools.partial(_istft_kernel, total_frames=T, tiled=tiled)

    out = pl.pallas_call(
        kernel,
        out_shape=jax.ShapeDtypeStruct((B, n_chunks, HOP), magnitude.dtype),
        grid_spec=pltpu.PrefetchScalarGridSpec(
            num_scalar_prefetch=0,
            grid=(B, NT),
            in_specs=[
                pl.BlockSpec((1, F, TT), lambda b, j: (b, 0, j)),
                pl.BlockSpec((1, F, TT), lambda b, j: (b, 0, j)),
                pl.BlockSpec((1, NT, F), lambda b, j: (b, 0, 0)),
                pl.BlockSpec((1, NT, F), lambda b, j: (b, 0, 0)),
                pl.BlockSpec((N_FFT, F), lambda b, j: (0, 0)),
                pl.BlockSpec((N_FFT, F), lambda b, j: (0, 0)),
                pl.BlockSpec((F, HOP), lambda b, j: (0, 0)),
                pl.BlockSpec((F, HOP), lambda b, j: (0, 0)),
            ],
            out_specs=pl.BlockSpec((1, out_rows, HOP), lambda b, j: (b, j, 0)),
        ),
        compiler_params=pltpu.CompilerParams(
            dimension_semantics=("parallel", "parallel")),
    )(magnitude, phase, bmag, bph, cbT, sbT, cb1, sb1)
    # contiguous [B, T-1, HOP] -> [B, (T-1)*HOP] is a free (metadata) reshape.
    return out.reshape(B, n_chunks * HOP)


def _reference_istft(magnitude, phase):
    """Pure-JAX reference (same math, HIGHEST precision) for correctness."""
    C, S, inv_env = _basis_numpy()
    C = jnp.asarray(C, jnp.float32)
    S = jnp.asarray(S, jnp.float32)
    env = jnp.asarray(1.0 / inv_env, jnp.float32)   # w[s]^2 + w[s+HOP]^2
    re = magnitude * jnp.cos(phase)
    im = magnitude * jnp.sin(phase)
    frames = (jnp.einsum("bft,fn->btn", re, C, precision=lax.Precision.HIGHEST)
              + jnp.einsum("bft,fn->btn", im, S, precision=lax.Precision.HIGHEST))
    out = (frames[:, 1:, :HOP] + frames[:, :-1, HOP:]) / env[None, None, :]
    return out.reshape(magnitude.shape[0], -1)


def _check(B, T, key):
    k1, k2 = jax.random.split(key)
    magnitude = jnp.abs(jax.random.normal(k1, (B, F, T), dtype=jnp.float32))
    phase = jax.random.uniform(k2, (B, F, T), dtype=jnp.float32,
                               minval=-np.pi, maxval=np.pi)
    audio = jax.block_until_ready(inverse_spectrogram(magnitude, phase))
    assert audio.shape == (B, (T - 1) * HOP), audio.shape
    assert bool(jnp.all(jnp.isfinite(audio)))
    ref = _reference_istft(magnitude, phase)
    np.testing.assert_allclose(np.asarray(audio), np.asarray(ref),
                               rtol=1e-4, atol=1e-4)


if __name__ == "__main__":
    key = jax.random.PRNGKey(0)
    k_small, k_large = jax.random.split(key)
    _check(B=2, T=9, key=k_small)     # small demo shape: [2, 153, 9]
    _check(B=2, T=300, key=k_large)   # multi-tile: boundary frame + partial edge tile
    print("KERNEL_OK")
</pallas_src>

<mosaic_0001>
module attributes {stable_mosaic.version = 11 : i64} {
  func.func @_istft_kernel(%arg0: i32, %arg1: i32, %arg2: memref<1x153x9xf32, #tpu.memory_space<vmem>>, %arg3: memref<1x153x9xf32, #tpu.memory_space<vmem>>, %arg4: memref<1x1x153xf32, #tpu.memory_space<vmem>>, %arg5: memref<1x1x153xf32, #tpu.memory_space<vmem>>, %arg6: memref<304x153xf32, #tpu.memory_space<vmem>>, %arg7: memref<304x153xf32, #tpu.memory_space<vmem>>, %arg8: memref<153x152xf32, #tpu.memory_space<vmem>>, %arg9: memref<153x152xf32, #tpu.memory_space<vmem>>, %arg10: memref<1x8x152xf32, #tpu.memory_space<vmem>>) attributes {dimension_semantics = [#tpu.dimension_semantics<parallel>, #tpu.dimension_semantics<parallel>], iteration_bounds = array<i64: 2, 1>, scalar_prefetch = 0 : i64, scratch_operands = 0 : i64, tpu.core_type = #tpu.core_type<tc>, window_params = [{transform_indices = @transform_0, window_bounds = array<i64: 1, 153, 9>}, {transform_indices = @transform_1, window_bounds = array<i64: 1, 153, 9>}, {transform_indices = @transform_2, window_bounds = array<i64: 1, 1, 153>}, {transform_indices = @transform_3, window_bounds = array<i64: 1, 1, 153>}, {pipeline_mode = #tpu.pipeline_mode<synchronous>, transform_indices = @transform_4, window_bounds = array<i64: 304, 153>}, {pipeline_mode = #tpu.pipeline_mode<synchronous>, transform_indices = @transform_5, window_bounds = array<i64: 304, 153>}, {pipeline_mode = #tpu.pipeline_mode<synchronous>, transform_indices = @transform_6, window_bounds = array<i64: 153, 152>}, {pipeline_mode = #tpu.pipeline_mode<synchronous>, transform_indices = @transform_7, window_bounds = array<i64: 153, 152>}, {transform_indices = @transform_8, window_bounds = array<i64: 1, 8, 152>}]} {
    %0 = tpu.iota {dimensions = array<i32: 1>} : vector<153x9xi32>
    %c9_i32 = arith.constant 9 : i32
    %1 = arith.muli %arg1, %c9_i32 : i32
    %2 = vector.broadcast %1 : i32 to vector<153x9xi32>
    %3 = arith.addi %2, %0 : vector<153x9xi32>
    %c9_i32_0 = arith.constant 9 : i32
    %4 = vector.broadcast %c9_i32_0 : i32 to vector<153x9xi32>
    %5 = arith.cmpi slt, %3, %4 : vector<153x9xi32>
    %c0 = arith.constant 0 : index
    %c0_1 = arith.constant 0 : index
    %c0_2 = arith.constant 0 : index
    %6 = vector.load %arg2[%c0, %c0_1, %c0_2] : memref<1x153x9xf32, #tpu.memory_space<vmem>>, vector<1x153x9xf32>
    %7 = vector.shape_cast %6 : vector<1x153x9xf32> to vector<153x9xf32>
    %cst = arith.constant 0.000000e+00 : f32
    %8 = vector.broadcast %cst : f32 to vector<153x9xf32>
    %9 = arith.select %5, %7, %8 : vector<153x9xi1>, vector<153x9xf32>
    %c0_3 = arith.constant 0 : index
    %c0_4 = arith.constant 0 : index
    %c0_5 = arith.constant 0 : index
    %10 = vector.load %arg3[%c0_3, %c0_4, %c0_5] : memref<1x153x9xf32, #tpu.memory_space<vmem>>, vector<1x153x9xf32>
    %11 = vector.shape_cast %10 : vector<1x153x9xf32> to vector<153x9xf32>
    %cst_6 = arith.constant 0.000000e+00 : f32
    %12 = vector.broadcast %cst_6 : f32 to vector<153x9xf32>
    %13 = arith.select %5, %11, %12 : vector<153x9xi1>, vector<153x9xf32>
    %14 = math.cos %13 : vector<153x9xf32>
    %15 = arith.mulf %9, %14 : vector<153x9xf32>
    %16 = math.sin %13 : vector<153x9xf32>
    %17 = arith.mulf %9, %16 : vector<153x9xf32>
    %c0_7 = arith.constant 0 : index
    %c0_8 = arith.constant 0 : index
    %18 = vector.load %arg6[%c0_7, %c0_8] : memref<304x153xf32, #tpu.memory_space<vmem>>, vector<304x153xf32>
    %cst_9 = arith.constant dense<0.000000e+00> : vector<304x9xf32>
    %19 = tpu.matmul %18, %15, %cst_9 {dimension_numbers = #tpu.dot_dimension_numbers<[1], [0], [0], [1], [0, 0, 1, 1], [], []>, precision = #tpu.contract_precision<fp32>} : vector<304x153xf32>, vector<153x9xf32>, vector<304x9xf32> -> vector<304x9xf32>
    %c0_10 = arith.constant 0 : index
    %c0_11 = arith.constant 0 : index
    %20 = vector.load %arg7[%c0_10, %c0_11] : memref<304x153xf32, #tpu.memory_space<vmem>>, vector<304x153xf32>
    %cst_12 = arith.constant dense<0.000000e+00> : vector<304x9xf32>
    %21 = tpu.matmul %20, %17, %cst_12 {dimension_numbers = #tpu.dot_dimension_numbers<[1], [0], [0], [1], [0, 0, 1, 1], [], []>, precision = #tpu.contract_precision<fp32>} : vector<304x153xf32>, vector<153x9xf32>, vector<304x9xf32> -> vector<304x9xf32>
    %22 = arith.addf %19, %21 : vector<304x9xf32>
    %23 = vector.extract_strided_slice %22 {offsets = [0, 0], sizes = [152, 9], strides = [1, 1]} : vector<304x9xf32> to vector<152x9xf32>
    %24 = tpu.transpose %23, [1, 0] : vector<152x9xf32> -> vector<9x152xf32>
    %25 = vector.extract_strided_slice %22 {offsets = [152, 0], sizes = [152, 9], strides = [1, 1]} : vector<304x9xf32> to vector<152x9xf32>
    %26 = tpu.transpose %25, [1, 0] : vector<152x9xf32> -> vector<9x152xf32>
    %27 = vector.extract_strided_slice %24 {offsets = [1, 0], sizes = [8, 152], strides = [1, 1]} : vector<9x152xf32> to vector<8x152xf32>
    %28 = vector.extract_strided_slice %26 {offsets = [0, 0], sizes = [8, 152], strides = [1, 1]} : vector<9x152xf32> to vector<8x152xf32>
    %29 = arith.addf %27, %28 : vector<8x152xf32>
    %c0_13 = arith.constant 0 : index
    %c0_14 = arith.constant 0 : index
    %c0_15 = arith.constant 0 : index
    %30 = vector.load %arg10[%c0_13, %c0_14, %c0_15] : memref<1x8x152xf32, #tpu.memory_space<vmem>>, vector<1x8x152xf32>
    %31 = vector.shape_cast %30 : vector<1x8x152xf32> to vector<8x152xf32>
    %32 = vector.shape_cast %29 : vector<8x152xf32> to vector<1x8x152xf32>
    tpu.vector_store %arg10[%c0_13, %c0_14, %c0_15], %32 {strides = array<i32>} : memref<1x8x152xf32, #tpu.memory_space<vmem>>, vector<1x8x152xf32>,
    return
  }
  func.func @transform_0(%arg0: i32, %arg1: i32) -> (i32, i32, i32) {
    %c0_i32 = arith.constant 0 : i32
    %c0_i32_0 = arith.constant 0 : i32
    return %arg0, %c0_i32, %arg1 : i32, i32, i32
  }
  func.func @transform_1(%arg0: i32, %arg1: i32) -> (i32, i32, i32) {
    %c0_i32 = arith.constant 0 : i32
    %c0_i32_0 = arith.constant 0 : i32
    return %arg0, %c0_i32, %arg1 : i32, i32, i32
  }
  func.func @transform_2(%arg0: i32, %arg1: i32) -> (i32, i32, i32) {
    %c0_i32 = arith.constant 0 : i32
    %c0_i32_0 = arith.constant 0 : i32
    %c0_i32_1 = arith.constant 0 : i32
    return %arg0, %c0_i32, %c0_i32_0 : i32, i32, i32
  }
  func.func @transform_3(%arg0: i32, %arg1: i32) -> (i32, i32, i32) {
    %c0_i32 = arith.constant 0 : i32
    %c0_i32_0 = arith.constant 0 : i32
    %c0_i32_1 = arith.constant 0 : i32
    return %arg0, %c0_i32, %c0_i32_0 : i32, i32, i32
  }
  func.func @transform_4(%arg0: i32, %arg1: i32) -> (i32, i32) {
    %c0_i32 = arith.constant 0 : i32
    %c0_i32_0 = arith.constant 0 : i32
    %c0_i32_1 = arith.constant 0 : i32
    return %c0_i32, %c0_i32_0 : i32, i32
  }
  func.func @transform_5(%arg0: i32, %arg1: i32) -> (i32, i32) {
    %c0_i32 = arith.constant 0 : i32
    %c0_i32_0 = arith.constant 0 : i32
    %c0_i32_1 = arith.constant 0 : i32
    return %c0_i32, %c0_i32_0 : i32, i32
  }
  func.func @transform_6(%arg0: i32, %arg1: i32) -> (i32, i32) {
    %c0_i32 = arith.constant 0 : i32
    %c0_i32_0 = arith.constant 0 : i32
    %c0_i32_1 = arith.constant 0 : i32
    return %c0_i32, %c0_i32_0 : i32, i32
  }
  func.func @transform_7(%arg0: i32, %arg1: i32) -> (i32, i32) {
    %c0_i32 = arith.constant 0 : i32
    %c0_i32_0 = arith.constant 0 : i32
    %c0_i32_1 = arith.constant 0 : i32
    return %c0_i32, %c0_i32_0 : i32, i32
  }
  func.func @transform_8(%arg0: i32, %arg1: i32) -> (i32, i32, i32) {
    %c0_i32 = arith.constant 0 : i32
    %c0_i32_0 = arith.constant 0 : i32
    return %arg0, %arg1, %c0_i32 : i32, i32, i32
  }
}

</mosaic_0001>

<llo_original>
// kernel: tpu_custom_call.1
$region0: #{tpu_custom_call.1}
  #allocation0 [shape = 'u32[]', space=smem, size = 0x4, offset = 0x4, fixed_abs, tag = 'smem constant byte address 0x4 - core index']
  #allocation1 [shape = 'u32[144,128]{1,0:T(1,128)}', space=vmem, size = 0x12000, scoped, tag = 'internal scratch']
  %s0 = inlined_call_operand.vmem [shape: f32[2,153,9], index: 0, kind: input, shape index: {}]
  %s1 = inlined_call_operand.vmem [shape: f32[2,153,9], index: 1, kind: input, shape index: {}]
  %s2 = inlined_call_operand.vmem [shape: f32[2,1,153], index: 2, kind: input, shape index: {}]
  %s3 = inlined_call_operand.vmem [shape: f32[2,1,153], index: 3, kind: input, shape index: {}]
  %s4 = inlined_call_operand.vmem [shape: f32[304,153], index: 4, kind: input, shape index: {}]
  %s5 = inlined_call_operand.vmem [shape: f32[304,153], index: 5, kind: input, shape index: {}]
  %s6 = inlined_call_operand.vmem [shape: f32[153,152], index: 6, kind: input, shape index: {}]
  %s7 = inlined_call_operand.vmem [shape: f32[153,152], index: 7, kind: input, shape index: {}]
  %s8 = inlined_call_operand.hbm [shape: f32[2,8,152], index: 8, kind: output, shape index: {}]
  %s9 = sld [smem:[#allocation0]]
  $region65: #{tpu_custom_call.1} parent=0
    _
  %s11 = ssub.s32 1, %s9
  %s12 = scalar_select 0, %s11, %s9
  $region1: #{tpu_custom_call.1} parent=0
    #allocation2 [shape = 'u8[16384]{0}', space=vmem, size = 0x4000, scoped, tag = 'output window, operand 0']
    #allocation3 [shape = 's32[2]{0}', space=sflag, size = 0x8, scoped, tag = 'scoped memory for tpu_custom_call.1']
    %13 = vsyncpa [#allocation3], 0
    %s14 = scalar_lea.sflag [#allocation3], 1
    %15 = vsyncpa %s14, 0
    loop: start=0, step=1, limit=4
    $region2: #{tpu_custom_call.1} parent=1 // loop_pre_header
      _
    $region3: #{tpu_custom_call.1} parent=1 // loop_header
      %s17 = sphi 0, %s21
      %p18 = scmp.ge.s32.totalorder %s17, 4
      %s24 = sphi 0, %s36
      %s25 = sphi 0, %s32
      %s26 = sphi 0, %s24
      %s27 = sphi 0, %s25
      %s28 = sphi 0, %s26
      %s29 = sphi 0, %s27
      %s41 = sphi 0, %s43
      %s44 = sphi 0, %s41
      %s45 = sphi 0, %s44
      %s61 = sphi 0, %s45
      %s69 = sphi 0, %s71
      %s72 = sphi 0, %s69
      %s73 = sphi 0, %s72
      %s89 = sphi 0, %s73
      %s95 = sphi 0, %s97
      %s98 = sphi 0, %s95
      %s99 = sphi 0, %s98
      %s115 = sphi 0, %s99
      %s121 = sphi 0, %s123
      %s124 = sphi 0, %s121
      %s125 = sphi 0, %s124
      %s141 = sphi 0, %s125
      %s145 = sphi 0, %s145
      %s147 = sphi 0, %s145
      %s148 = sphi 0, %s147
      %s162 = sphi 0, %s148
      %s166 = sphi 0, %s166
      %s168 = sphi 0, %s166
      %s169 = sphi 0, %s168
      %s183 = sphi 0, %s169
      %s187 = sphi 0, %s187
      %s189 = sphi 0, %s187
      %s190 = sphi 0, %s189
      %s204 = sphi 0, %s190
      %s208 = sphi 0, %s208
      %s210 = sphi 0, %s208
      %s211 = sphi 0, %s210
      %s225 = sphi 0, %s211
      %s233 = sphi 0, %s235
      %s236 = sphi 0, %s233
      %s237 = sphi 0, %s236
      %s253 = sphi 0, %s237
    $region4: #{tpu_custom_call.1} parent=1 // loop_header_branch
      %20 = sbr.rel (%p18) target = $region8
    $region5: #{tpu_custom_call.1} parent=1 // loop_body
      %s22 = ssub.s32 %s17, 1
      %s23 = ssub.s32 %s17, 2
      %s30 = sadd.s32 1, %s25
      %p31 = scmp.ge.s32.totalorder %s30, 1
      %s32 = scalar_select %p31, 0, %s30
      %s33 = sadd.s32 1, %s24
      %s34 = scalar_select %p31, %s33, %s24
      %p35 = scmp.ge.s32.totalorder %s34, 2
      %s36 = scalar_select %p35, 0, %s34
      %s37 = ssub.s32 %s24, %s36
      %s38 = ssub.s32 %s25, %s32
      %s39 = sor.u32 %s37, %s38
      %p40 = scmp.eq.s32.totalorder %s39, 0
      %s42 = sadd.s32 %s41, 1
      %s43 = scalar_select %p40, %s41, %s42
      %p46 = pneg %p40
      %p47 = scmp.eq.s32.totalorder %s17, 1
      %p48 = por %p46, %p47
      %p49 = scmp.ne.s32.totalorder %s41, %s44
      %p50 = scmp.eq.s32.totalorder %s17, 0
      %p51 = por %p49, %p50
      %p52 = scmp.ne.s32.totalorder %s41, %s44
      %p53 = scmp.eq.s32.totalorder %s22, 1
      %p54 = por %p52, %p53
      %p55 = scmp.ne.s32.totalorder %s44, %s45
      %p56 = scmp.eq.s32.totalorder %s22, 0
      %p57 = por %p55, %p56
      %p58 = scmp.ne.s32.totalorder %s44, %s45
      %p59 = scmp.eq.s32.totalorder %s23, 1
      %p60 = por %p58, %p59
      %p62 = scmp.ne.s32.totalorder %s45, %s61
      %p63 = scmp.eq.s32.totalorder %s23, 0
      %p64 = por %p62, %p63
      %s65 = ssub.s32 %s24, %s36
      %s66 = ssub.s32 %s25, %s32
      %s67 = sor.u32 %s65, %s66
      %p68 = scmp.eq.s32.totalorder %s67, 0
      %s70 = sadd.s32 %s69, 1
      %s71 = scalar_select %p68, %s69, %s70
      %p74 = pneg %p68
      %p75 = scmp.eq.s32.totalorder %s17, 1
      %p76 = por %p74, %p75
      %p77 = scmp.ne.s32.totalorder %s69, %s72
      %p78 = scmp.eq.s32.totalorder %s17, 0
      %p79 = por %p77, %p78
      %p80 = scmp.ne.s32.totalorder %s69, %s72
      %p81 = scmp.eq.s32.totalorder %s22, 1
      %p82 = por %p80, %p81
      %p83 = scmp.ne.s32.totalorder %s72, %s73
      %p84 = scmp.eq.s32.totalorder %s22, 0
      %p85 = por %p83, %p84
      %p86 = scmp.ne.s32.totalorder %s72, %s73
      %p87 = scmp.eq.s32.totalorder %s23, 1
      %p88 = por %p86, %p87
      %p90 = scmp.ne.s32.totalorder %s73, %s89
      %p91 = scmp.eq.s32.totalorder %s23, 0
      %p92 = por %p90, %p91
      %s93 = ssub.s32 %s24, %s36
      %p94 = scmp.eq.s32.totalorder %s93, 0
      %s96 = sadd.s32 %s95, 1
      %s97 = scalar_select %p94, %s95, %s96
      %p100 = pneg %p94
      %p101 = scmp.eq.s32.totalorder %s17, 1
      %p102 = por %p100, %p101
      %p103 = scmp.ne.s32.totalorder %s95, %s98
      %p104 = scmp.eq.s32.totalorder %s17, 0
      %p105 = por %p103, %p104
      %p106 = scmp.ne.s32.totalorder %s95, %s98
      %p107 = scmp.eq.s32.totalorder %s22, 1
      %p108 = por %p106, %p107
      %p109 = scmp.ne.s32.totalorder %s98, %s99
      %p110 = scmp.eq.s32.totalorder %s22, 0
      %p111 = por %p109, %p110
      %p112 = scmp.ne.s32.totalorder %s98, %s99
      %p113 = scmp.eq.s32.totalorder %s23, 1
      %p114 = por %p112, %p113
      %p116 = scmp.ne.s32.totalorder %s99, %s115
      %p117 = scmp.eq.s32.totalorder %s23, 0
      %p118 = por %p116, %p117
      %s119 = ssub.s32 %s24, %s36
      %p120 = scmp.eq.s32.totalorder %s119, 0
      %s122 = sadd.s32 %s121, 1
      %s123 = scalar_select %p120, %s121, %s122
      %p126 = pneg %p120
      %p127 = scmp.eq.s32.totalorder %s17, 1
      %p128 = por %p126, %p127
      %p129 = scmp.ne.s32.totalorder %s121, %s124
      %p130 = scmp.eq.s32.totalorder %s17, 0
      %p131 = por %p129, %p130
      %p132 = scmp.ne.s32.totalorder %s121, %s124
      %p133 = scmp.eq.s32.totalorder %s22, 1
      %p134 = por %p132, %p133
      %p135 = scmp.ne.s32.totalorder %s124, %s125
      %p136 = scmp.eq.s32.totalorder %s22, 0
      %p137 = por %p135, %p136
      %p138 = scmp.ne.s32.totalorder %s124, %s125
      %p139 = scmp.eq.s32.totalorder %s23, 1
      %p140 = por %p138, %p139
      %p142 = scmp.ne.s32.totalorder %s125, %s141
      %p143 = scmp.eq.s32.totalorder %s23, 0
      %p144 = por %p142, %p143
      %s146 = sadd.s32 %s145, 1
      %p149 = scmp.eq.s32.totalorder %s17, 1
      %p150 = scmp.ne.s32.totalorder %s145, %s147
      %p151 = scmp.eq.s32.totalorder %s17, 0
      %p152 = por %p150, %p151
      %p153 = scmp.ne.s32.totalorder %s145, %s147
      %p154 = scmp.eq.s32.totalorder %s22, 1
      %p155 = por %p153, %p154
      %p156 = scmp.ne.s32.totalorder %s147, %s148
      %p157 = scmp.eq.s32.totalorder %s22, 0
      %p158 = por %p156, %p157
      %p159 = scmp.ne.s32.totalorder %s147, %s148
      %p160 = scmp.eq.s32.totalorder %s23, 1
      %p161 = por %p159, %p160
      %p163 = scmp.ne.s32.totalorder %s148, %s162
      %p164 = scmp.eq.s32.totalorder %s23, 0
      %p165 = por %p163, %p164
      %s167 = sadd.s32 %s166, 1
      %p170 = scmp.eq.s32.totalorder %s17, 1
      %p171 = scmp.ne.s32.totalorder %s166, %s168
      %p172 = scmp.eq.s32.totalorder %s17, 0
      %p173 = por %p171, %p172
      %p174 = scmp.ne.s32.totalorder %s166, %s168
      %p175 = scmp.eq.s32.totalorder %s22, 1
      %p176 = por %p174, %p175
      %p177 = scmp.ne.s32.totalorder %s168, %s169
      %p178 = scmp.eq.s32.totalorder %s22, 0
      %p179 = por %p177, %p178
      %p180 = scmp.ne.s32.totalorder %s168, %s169
      %p181 = scmp.eq.s32.totalorder %s23, 1
      %p182 = por %p180, %p181
      %p184 = scmp.ne.s32.totalorder %s169, %s183
      %p185 = scmp.eq.s32.totalorder %s23, 0
      %p186 = por %p184, %p185
      %s188 = sadd.s32 %s187, 1
      %p191 = scmp.eq.s32.totalorder %s17, 1
      %p192 = scmp.ne.s32.totalorder %s187, %s189
      %p193 = scmp.eq.s32.totalorder %s17, 0
      %p194 = por %p192, %p193
      %p195 = scmp.ne.s32.totalorder %s187, %s189
      %p196 = scmp.eq.s32.totalorder %s22, 1
      %p197 = por %p195, %p196
      %p198 = scmp.ne.s32.totalorder %s189, %s190
      %p199 = scmp.eq.s32.totalorder %s22, 0
      %p200 = por %p198, %p199
      %p201 = scmp.ne.s32.totalorder %s189, %s190
      %p202 = scmp.eq.s32.totalorder %s23, 1
      %p203 = por %p201, %p202
      %p205 = scmp.ne.s32.totalorder %s190, %s204
      %p206 = scmp.eq.s32.totalorder %s23, 0
      %p207 = por %p205, %p206
      %s209 = sadd.s32 %s208, 1
      %p212 = scmp.eq.s32.totalorder %s17, 1
      %p213 = scmp.ne.s32.totalorder %s208, %s210
      %p214 = scmp.eq.s32.totalorder %s17, 0
      %p215 = por %p213, %p214
      %p216 = scmp.ne.s32.totalorder %s208, %s210
      %p217 = scmp.eq.s32.totalorder %s22, 1
      %p218 = por %p216, %p217
      %p219 = scmp.ne.s32.totalorder %s210, %s211
      %p220 = scmp.eq.s32.totalorder %s22, 0
      %p221 = por %p219, %p220
      %p222 = scmp.ne.s32.totalorder %s210, %s211
      %p223 = scmp.eq.s32.totalorder %s23, 1
      %p224 = por %p222, %p223
      %p226 = scmp.ne.s32.totalorder %s211, %s225
      %p227 = scmp.eq.s32.totalorder %s23, 0
      %p228 = por %p226, %p227
      %s229 = ssub.s32 %s24, %s36
      %s230 = ssub.s32 %s25, %s32
      %s231 = sor.u32 %s229, %s230
      %p232 = scmp.eq.s32.totalorder %s231, 0
      %s234 = sadd.s32 %s233, 1
      %s235 = scalar_select %p232, %s233, %s234
      %p238 = pneg %p232
      %p239 = scmp.eq.s32.totalorder %s17, 1
      %p240 = por %p238, %p239
      %p241 = scmp.ne.s32.totalorder %s233, %s236
      %p242 = scmp.eq.s32.totalorder %s17, 0
      %p243 = por %p241, %p242
      %p244 = scmp.ne.s32.totalorder %s233, %s236
      %p245 = scmp.eq.s32.totalorder %s22, 1
      %p246 = por %p244, %p245
      %p247 = scmp.ne.s32.totalorder %s236, %s237
      %p248 = scmp.eq.s32.totalorder %s22, 0
      %p249 = por %p247, %p248
      %p250 = scmp.ne.s32.totalorder %s236, %s237
      %p251 = scmp.eq.s32.totalorder %s23, 1
      %p252 = por %p250, %p251
      %p254 = scmp.ne.s32.totalorder %s237, %s253
      %p255 = scmp.eq.s32.totalorder %s23, 0
      %p256 = por %p254, %p255
      %p257 = scmp.le.s32.totalorder 1, %s17
      %p258 = scmp.lt.s32.totalorder %s17, 3
      %p259 = pnand %p257, %p258
      %p260 = pneg %p259
      // Predicated region
      $region9: #{tpu_custom_call.1} parent=5 // pred_check
        _
      $region10: #{tpu_custom_call.1} parent=5 // pred_check_branch
        %262 = sbr.rel (%p259) target = $region12
      $region11: #{tpu_custom_call.1} parent=5 // pred_region
        %s263 = ssub.s32 %s17, 1
        // Predicated region
        $region13: #{tpu_custom_call.1} parent=11 // pred_check
          %p264 = pneg %p158
        $region14: #{tpu_custom_call.1} parent=11 // pred_check_branch
          %266 = sbr.rel (%p264) target = $region16
        $region15: #{tpu_custom_call.1} parent=11 // pred_region
          _
        $region16: #{tpu_custom_call.1} parent=11 // pred_fallthru
          _
        // Predicated region
        $region17: #{tpu_custom_call.1} parent=11 // pred_check
          %p267 = pneg %p179
        $region18: #{tpu_custom_call.1} parent=11 // pred_check_branch
          %269 = sbr.rel (%p267) target = $region20
        $region19: #{tpu_custom_call.1} parent=11 // pred_region
          _
        $region20: #{tpu_custom_call.1} parent=11 // pred_fallthru
          _
        // Predicated region
        $region21: #{tpu_custom_call.1} parent=11 // pred_check
          %p270 = pneg %p200
        $region22: #{tpu_custom_call.1} parent=11 // pred_check_branch
          %272 = sbr.rel (%p270) target = $region24
        $region23: #{tpu_custom_call.1} parent=11 // pred_region
          _
        $region24: #{tpu_custom_call.1} parent=11 // pred_fallthru
          _
        // Predicated region
        $region25: #{tpu_custom_call.1} parent=11 // pred_check
          %p273 = pneg %p221
        $region26: #{tpu_custom_call.1} parent=11 // pred_check_branch
          %275 = sbr.rel (%p273) target = $region28
        $region27: #{tpu_custom_call.1} parent=11 // pred_region
          _
        $region28: #{tpu_custom_call.1} parent=11 // pred_fallthru
          _
      $region12: #{tpu_custom_call.1} parent=5 // pred_fallthru
        _
      %p276 = scmp.lt.s32.totalorder %s17, 2
      // Predicated region
      $region29: #{tpu_custom_call.1} parent=5 // pred_check
        %p277 = pneg %p276
      $region30: #{tpu_custom_call.1} parent=5 // pred_check_branch
        %279 = sbr.rel (%p277) target = $region32
      $region31: #{tpu_custom_call.1} parent=5 // pred_region
        // Predicated region
        $region33: #{tpu_custom_call.1} parent=31 // pred_check
          %p280 = pneg %p51
        $region34: #{tpu_custom_call.1} parent=31 // pred_check_branch
          %282 = sbr.rel (%p280) target = $region36
        $region35: #{tpu_custom_call.1} parent=31 // pred_region
          %p283 = scmp.lt.s32.totalorder %s24, 1
          %s284 = scalar_select %p283, %s24, 1
          %p285 = scmp.lt.s32.totalorder %s25, 0
          %s286 = scalar_select %p285, %s25, 0
          %s287 = smul.addr %s284, 20
          %s288 = sadd.s32 %s286, %s287
          %s289 = smul.addr %s288, 8
          %s290 = scalar_lea.vmem %s0, %s289
        $region36: #{tpu_custom_call.1} parent=31 // pred_fallthru
          _
        // Predicated region
        $region37: #{tpu_custom_call.1} parent=31 // pred_check
          %p291 = pneg %p79
        $region38: #{tpu_custom_call.1} parent=31 // pred_check_branch
          %293 = sbr.rel (%p291) target = $region40
        $region39: #{tpu_custom_call.1} parent=31 // pred_region
          %p294 = scmp.lt.s32.totalorder %s24, 1
          %s295 = scalar_select %p294, %s24, 1
          %p296 = scmp.lt.s32.totalorder %s25, 0
          %s297 = scalar_select %p296, %s25, 0
          %s298 = smul.addr %s295, 20
          %s299 = sadd.s32 %s297, %s298
          %s300 = smul.addr %s299, 8
          %s301 = scalar_lea.vmem %s1, %s300
        $region40: #{tpu_custom_call.1} parent=31 // pred_fallthru
          _
        // Predicated region
        $region41: #{tpu_custom_call.1} parent=31 // pred_check
          %p302 = pneg %p105
        $region42: #{tpu_custom_call.1} parent=31 // pred_check_branch
          %304 = sbr.rel (%p302) target = $region44
        $region43: #{tpu_custom_call.1} parent=31 // pred_region
          %p305 = scmp.lt.s32.totalorder %s24, 1
          %s306 = scalar_select %p305, %s24, 1
          %s307 = smul.addr %s306, 2
          %s308 = scalar_lea.vmem %s2, %s307
        $region44: #{tpu_custom_call.1} parent=31 // pred_fallthru
          _
        // Predicated region
        $region45: #{tpu_custom_call.1} parent=31 // pred_check
          %p309 = pneg %p131
        $region46: #{tpu_custom_call.1} parent=31 // pred_check_branch
          %311 = sbr.rel (%p309) target = $region48
        $region47: #{tpu_custom_call.1} parent=31 // pred_region
          %p312 = scmp.lt.s32.totalorder %s24, 1
          %s313 = scalar_select %p312, %s24, 1
          %s314 = smul.addr %s313, 2
          %s315 = scalar_lea.vmem %s3, %s314
        $region48: #{tpu_custom_call.1} parent=31 // pred_fallthru
          _
      $region32: #{tpu_custom_call.1} parent=5 // pred_fallthru
        _
      %p316 = scmp.le.s32.totalorder 1, %s17
      %p317 = scmp.lt.s32.totalorder %s17, 3
      %p318 = pnand %p316, %p317
      %p319 = pneg %p318
      // Predicated region
      $region49: #{tpu_custom_call.1} parent=5 // pred_check
        _
      $region50: #{tpu_custom_call.1} parent=5 // pred_check_branch
        %321 = sbr.rel (%p318) target = $region52
      $region51: #{tpu_custom_call.1} parent=5 // pred_region
        %s322 = ssub.s32 %s17, 1
        %p323 = scmp.lt.s32.totalorder %s26, 1
        %s324 = scalar_select %p323, %s26, 1
        %p325 = scmp.lt.s32.totalorder %s27, 0
        %s326 = scalar_select %p325, %s27, 0
        %s327 = smul.addr %s324, 20
        %s328 = sadd.s32 %s326, %s327
        %s329 = smul.addr %s328, 8
        %s330 = scalar_lea.vmem %s0, %s329
        %p331 = pneg %p57
        %p332 = pneg %p54
        %p333 = scmp.lt.s32.totalorder %s26, 1
        %s334 = scalar_select %p333, %s26, 1
        %p335 = scmp.lt.s32.totalorder %s27, 0
        %s336 = scalar_select %p335, %s27, 0
        %s337 = smul.addr %s334, 20
        %s338 = sadd.s32 %s336, %s337
        %s339 = smul.addr %s338, 8
        %s340 = scalar_lea.vmem %s1, %s339
        %p341 = pneg %p85
        %p342 = pneg %p82
        %p343 = scmp.lt.s32.totalorder %s26, 1
        %s344 = scalar_select %p343, %s26, 1
        %s345 = smul.addr %s344, 2
        %s346 = scalar_lea.vmem %s2, %s345
        %p347 = pneg %p111
        %p348 = pneg %p108
        %p349 = scmp.lt.s32.totalorder %s26, 1
        %s350 = scalar_select %p349, %s26, 1
        %s351 = smul.addr %s350, 2
        %s352 = scalar_lea.vmem %s3, %s351
        %p353 = pneg %p137
        %p354 = pneg %p134
        %p355 = pneg %p158
        %p356 = pneg %p155
        %p357 = pneg %p179
        %p358 = pneg %p176
        %p359 = pneg %p200
        %p360 = pneg %p197
        %p361 = pneg %p221
        %p362 = pneg %p218
        %p363 = pneg %p249
        %p364 = pneg %p246
        %s365 = sand.u32 %s236, 1
        %s366 = scalar_lea.sflag [#allocation3], %s365
        %s367 = sand.u32 %s236, 1
        %s368 = smul.addr %s367, 16
        %s369 = scalar_lea.vmem [#allocation2], %s368
        %p370 = scmp.lt.s32.totalorder %s26, 1
        %s371 = scalar_select %p370, %s26, 1
        %p372 = scmp.lt.s32.totalorder %s27, 0
        %s373 = scalar_select %p372, %s27, 0
        %s374 = smul.addr %s371, 20
        %s375 = sadd.s32 %s373, %s374
        %s376 = smul.addr %s375, 8
        %s377 = scalar_lea.vmem %s0, %s376
        %p378 = scmp.lt.s32.totalorder %s26, 1
        %s379 = scalar_select %p378, %s26, 1
        %p380 = scmp.lt.s32.totalorder %s27, 0
        %s381 = scalar_select %p380, %s27, 0
        %s382 = smul.addr %s379, 20
        %s383 = sadd.s32 %s381, %s382
        %s384 = smul.addr %s383, 8
        %s385 = scalar_lea.vmem %s1, %s384
        %p386 = scmp.lt.s32.totalorder %s26, 1
        %s387 = scalar_select %p386, %s26, 1
        %s388 = smul.addr %s387, 2
        %s389 = scalar_lea.vmem %s2, %s388
        %p390 = scmp.lt.s32.totalorder %s26, 1
        %s391 = scalar_select %p390, %s26, 1
        %s392 = smul.addr %s391, 2
        %s393 = scalar_lea.vmem %s3, %s392
        %v394 = vlaneseq
        %v395 = vand.u32 %v394, 127
        %s396 = smul.u32 %s27, 9
        %v397 = vstv %s396
        %v398 = vadd.s32 %v397, %v395
        %vm399 = vcmp.lt.s32.totalorder %v398, 9
        %v400 = vld [vmem:[%s377] sm:$0xff]
        %v401 = vld [vmem:[%s377 + $0x8] sm:$0xff]
        %v402 = vld [vmem:[%s377 + $0x10] sm:$0xff]
        %v403 = vld [vmem:[%s377 + $0x18] sm:$0xff]
        %v404 = vld [vmem:[%s377 + $0x20] sm:$0xff]
        %v405 = vld [vmem:[%s377 + $0x28] sm:$0xff]
        %v406 = vld [vmem:[%s377 + $0x30] sm:$0xff]
        %v407 = vld [vmem:[%s377 + $0x38] sm:$0xff]
        %v408 = vld [vmem:[%s377 + $0x40] sm:$0xff]
        %v409 = vld [vmem:[%s377 + $0x48] sm:$0xff]
        %v410 = vld [vmem:[%s377 + $0x50] sm:$0xff]
        %v411 = vld [vmem:[%s377 + $0x58] sm:$0xff]
        %v412 = vld [vmem:[%s377 + $0x60] sm:$0xff]
        %v413 = vld [vmem:[%s377 + $0x68] sm:$0xff]
        %v414 = vld [vmem:[%s377 + $0x70] sm:$0xff]
        %v415 = vld [vmem:[%s377 + $0x78] sm:$0xff]
        %v416 = vld [vmem:[%s377 + $0x80] sm:$0xff]
        %v417 = vld [vmem:[%s377 + $0x88] sm:$0xff]
        %v418 = vld [vmem:[%s377 + $0x90] sm:$0xff]
        %v419 = vld [vmem:[%s377 + $0x98] sm:$0x1]
        %v420 = vsel %vm399, %v400, 0.0
        %v421 = vsel %vm399, %v401, 0.0
        %v422 = vsel %vm399, %v402, 0.0
        %v423 = vsel %vm399, %v403, 0.0
        %v424 = vsel %vm399, %v404, 0.0
        %v425 = vsel %vm399, %v405, 0.0
        %v426 = vsel %vm399, %v406, 0.0
        %v427 = vsel %vm399, %v407, 0.0
        %v428 = vsel %vm399, %v408, 0.0
        %v429 = vsel %vm399, %v409, 0.0
        %v430 = vsel %vm399, %v410, 0.0
        %v431 = vsel %vm399, %v411, 0.0
        %v432 = vsel %vm399, %v412, 0.0
        %v433 = vsel %vm399, %v413, 0.0
        %v434 = vsel %vm399, %v414, 0.0
        %v435 = vsel %vm399, %v415, 0.0
        %v436 = vsel %vm399, %v416, 0.0
        %v437 = vsel %vm399, %v417, 0.0
        %v438 = vsel %vm399, %v418, 0.0
        %v439 = vsel %vm399, %v419, 0.0
        %v440 = vld [vmem:[%s385] sm:$0xff]
        %v441 = vld [vmem:[%s385 + $0x8] sm:$0xff]
        %v442 = vld [vmem:[%s385 + $0x10] sm:$0xff]
        %v443 = vld [vmem:[%s385 + $0x18] sm:$0xff]
        %v444 = vld [vmem:[%s385 + $0x20] sm:$0xff]
        %v445 = vld [vmem:[%s385 + $0x28] sm:$0xff]
        %v446 = vld [vmem:[%s385 + $0x30] sm:$0xff]
        %v447 = vld [vmem:[%s385 + $0x38] sm:$0xff]
        %v448 = vld [vmem:[%s385 + $0x40] sm:$0xff]
        %v449 = vld [vmem:[%s385 + $0x48] sm:$0xff]
        %v450 = vld [vmem:[%s385 + $0x50] sm:$0xff]
        %v451 = vld [vmem:[%s385 + $0x58] sm:$0xff]
        %v452 = vld [vmem:[%s385 + $0x60] sm:$0xff]
        %v453 = vld [vmem:[%s385 + $0x68] sm:$0xff]
        %v454 = vld [vmem:[%s385 + $0x70] sm:$0xff]
        %v455 = vld [vmem:[%s385 + $0x78] sm:$0xff]
        %v456 = vld [vmem:[%s385 + $0x80] sm:$0xff]
        %v457 = vld [vmem:[%s385 + $0x88] sm:$0xff]
        %v458 = vld [vmem:[%s385 + $0x90] sm:$0xff]
        %v459 = vld [vmem:[%s385 + $0x98] sm:$0x1]
        %v460 = vsel %vm399, %v440, 0.0
        %v461 = vsel %vm399, %v441, 0.0
        %v462 = vsel %vm399, %v442, 0.0
        %v463 = vsel %vm399, %v443, 0.0
        %v464 = vsel %vm399, %v444, 0.0
        %v465 = vsel %vm399, %v445, 0.0
        %v466 = vsel %vm399, %v446, 0.0
        %v467 = vsel %vm399, %v447, 0.0
        %v468 = vsel %vm399, %v448, 0.0
        %v469 = vsel %vm399, %v449, 0.0
        %v470 = vsel %vm399, %v450, 0.0
        %v471 = vsel %vm399, %v451, 0.0
        %v472 = vsel %vm399, %v452, 0.0
        %v473 = vsel %vm399, %v453, 0.0
        %v474 = vsel %vm399, %v454, 0.0
        %v475 = vsel %vm399, %v455, 0.0
        %v476 = vsel %vm399, %v456, 0.0
        %v477 = vsel %vm399, %v457, 0.0
        %v478 = vsel %vm399, %v458, 0.0
        %v479 = vsel %vm399, %v459, 0.0
        %v480 = vand.u32 2147483647, %v460
        %vm481 = vcmp.le.f32.partialorder %v480, 0.7853982
        %vm482 = vcmp.lt.s32.totalorder %v460, 0
        %v483 = vand.u32 %v460, 2139095040
        %v484 = vshrl.u32 %v483, 23
        %v485 = vsub.s32 %v484, 127
        %v486 = vand.u32 2147483647, %v460
        %v487 = vand.u32 %v486, 8388607
        %v488 = vor.u32 %v487, 8388608
        %v489 = vsub.s32 0, %v488
        %v490 = vadd.s32 %v485, 1
        %vm491 = vcmp.gt.s32.totalorder %v490, 0
        %v492 = vsel %vm491, %v490, 0
        %v493 = vshrl.u32 %v492, 5
        %v494 = vand.u32 %v492, 31
        %v495 = vsub.s32 32, %v494
        %v496 = vshrl.u32 683565275, %v495
        %v497 = vshll.u32 683565275, %v494
        %v498 = vshrl.u32 2475754826, %v495
        %v499 = vor.u32 %v497, %v498
        %v500 = vshll.u32 2475754826, %v494
        %v501 = vshrl.u32 2131351028, %v495
        %v502 = vor.u32 %v500, %v501
        %v503 = vshll.u32 2131351028, %v494
        %v504 = vshrl.u32 2102212464, %v495
        %v505 = vor.u32 %v503, %v504
        %v506 = vshll.u32 2102212464, %v494
        %v507 = vshrl.u32 920167782, %v495
        %v508 = vor.u32 %v506, %v507
        %v509 = vshll.u32 920167782, %v494
        %v510 = vshrl.u32 1326507024, %v495
        %v511 = vor.u32 %v509, %v510
        %vm512 = vcmp.lt.s32.totalorder %v493, 1
        %vm513 = vcmp.lt.s32.totalorder %v493, 2
        %vm514 = vcmp.lt.s32.totalorder %v493, 3
        %vm515 = vcmp.lt.s32.totalorder %v493, 4
        %v516 = vsel %vm512, %v496, %v499
        %v517 = vsel %vm515, %v505, 2102212464
        %v518 = vsel %vm514, %v502, %v517
        %v519 = vsel %vm513, %v516, %v518
        %v520 = vsel %vm512, %v499, %v502
        %v521 = vsel %vm515, %v508, 920167782
        %v522 = vsel %vm514, %v505, %v521
        %v523 = vsel %vm513, %v520, %v522
        %v524 = vsel %vm512, %v502, %v505
        %v525 = vsel %vm515, %v511, 1326507024
        %v526 = vsel %vm514, %v508, %v525
        %v527 = vsel %vm513, %v524, %v526
        %v528 = vshll.u32 %v488, 8
        %v529 = vmul.u32.u64.compose %v528, %v527
        %v530 = vextract.low.u32 %v529
        %v531 = vextract.high.u32 %v529
        %v532 = vmul.u32.u64.compose %v528, %v523
        %v533 = vextract.low.u32 %v532
        %v534 = vextract.high.u32 %v532
        %v535 = vmul.u32 %v528, %v519
        %v536 = vadd.s32 %v531, %v533
        %vm537 = vc.u32 %v531, %v533
        %v538 = vadd.s32 %v534, 1
        %v539 = vsel %vm537, %v538, %v534
        %v540 = vadd.s32 %v535, %v539
        %v541 = vadd.s32 %v540, 536870912
        %v542 = vshrl.u32 %v541, 30
        %v543 = vshll.u32 %v542, 30
        %v544 = vsub.s32 %v540, %v543
        %vm545 = vcmp.lt.s32.totalorder %v544, 0
        %v546 = vsub.s32 0, %v544
        %v547 = vsel %vm545, %v546, %v544
        %v548 = vclz %v547
        %v549 = vsub.s32 %v548, 2
        %vm550 = vcmp.gt.s32.totalorder 0, %v549
        %v551 = vsel %vm550, 0, %v549
        %v552 = vsub.s32 32, %v551
        %v553 = vshll.u32 %v544, %v551
        %v554 = vshrl.u32 %v536, %v552
        %v555 = vor.u32 %v553, %v554
        %v556 = vsub.s32 4294967266, %v551
        %v557 = vadd.s32 %v556, 127
        %v558 = vshll.u32 %v557, 23
        %v559 = vor.u32 4788187, %v558
        %v560 = vand.u32 2147483647, %v559
        %v562 = vcvt.s32.f32 %v555
        %v563 = vmul.f32 %v562, %v560
        %v564 = vxor.u32 %v563, 2147483648
        %v565 = vsel %vm482, %v564, %v563
        %v566 = vsub.s32 4, %v542
        %v567 = vsel %vm482, %v566, %v542
        %v568 = vsel %vm481, %v460, %v565
        %v569 = vsel %vm481, 0, %v567
        %v570 = vcosq.f32.pop %v568
        %v571 = vsinq.f32.pop %v568
        %vm572 = vweird.f32 %v460
        %v573 = vand.u32 %v569, 3
        %vm574 = vcmp.lt.s32.totalorder %v573, 2
        %vm575 = vcmp.eq.s32.totalorder %v573, 0
        %v576 = vxor.u32 %v571, 2147483648
        %v577 = vsel %vm575, %v570, %v576
        %vm578 = vcmp.eq.s32.totalorder %v573, 2
        %v579 = vxor.u32 %v570, 2147483648
        %v580 = vsel %vm578, %v579, %v571
        %v581 = vsel %vm574, %v577, %v580
        %v582 = vsel %vm572, nan, %v581
        %v583 = vand.u32 2147483647, %v461
        %vm584 = vcmp.le.f32.partialorder %v583, 0.7853982
        %vm585 = vcmp.lt.s32.totalorder %v461, 0
        %v586 = vand.u32 %v461, 2139095040
        %v587 = vshrl.u32 %v586, 23
        %v588 = vsub.s32 %v587, 127
        %v589 = vand.u32 2147483647, %v461
        %v590 = vand.u32 %v589, 8388607
        %v591 = vor.u32 %v590, 8388608
        %v592 = vsub.s32 0, %v591
        %v593 = vadd.s32 %v588, 1
        %vm594 = vcmp.gt.s32.totalorder %v593, 0
        %v595 = vsel %vm594, %v593, 0
        %v596 = vshrl.u32 %v595, 5
        %v597 = vand.u32 %v595, 31
        %v598 = vsub.s32 32, %v597
        %v599 = vshrl.u32 683565275, %v598
        %v600 = vshll.u32 683565275, %v597
        %v601 = vshrl.u32 2475754826, %v598
        %v602 = vor.u32 %v600, %v601
        %v603 = vshll.u32 2475754826, %v597
        %v604 = vshrl.u32 2131351028, %v598
        %v605 = vor.u32 %v603, %v604
        %v606 = vshll.u32 2131351028, %v597
        %v607 = vshrl.u32 2102212464, %v598
        %v608 = vor.u32 %v606, %v607
        %v609 = vshll.u32 2102212464, %v597
        %v610 = vshrl.u32 920167782, %v598
        %v611 = vor.u32 %v609, %v610
        %v612 = vshll.u32 920167782, %v597
        %v613 = vshrl.u32 1326507024, %v598
        %v614 = vor.u32 %v612, %v613
        %vm615 = vcmp.lt.s32.totalorder %v596, 1
        %vm616 = vcmp.lt.s32.totalorder %v596, 2
        %vm617 = vcmp.lt.s32.totalorder %v596, 3
        %vm618 = vcmp.lt.s32.totalorder %v596, 4
        %v619 = vsel %vm615, %v599, %v602
        %v620 = vsel %vm618, %v608, 2102212464
        %v621 = vsel %vm617, %v605, %v620
        %v622 = vsel %vm616, %v619, %v621
        %v623 = vsel %vm615, %v602, %v605
        %v624 = vsel %vm618, %v611, 920167782
        %v625 = vsel %vm617, %v608, %v624
        %v626 = vsel %vm616, %v623, %v625
        %v627 = vsel %vm615, %v605, %v608
        %v628 = vsel %vm618, %v614, 1326507024
        %v629 = vsel %vm617, %v611, %v628
        %v630 = vsel %vm616, %v627, %v629
        %v631 = vshll.u32 %v591, 8
        %v632 = vmul.u32.u64.compose %v631, %v630
        %v633 = vextract.low.u32 %v632
        %v634 = vextract.high.u32 %v632
        %v635 = vmul.u32.u64.compose %v631, %v626
        %v636 = vextract.low.u32 %v635
        %v637 = vextract.high.u32 %v635
        %v638 = vmul.u32 %v631, %v622
        %v639 = vadd.s32 %v634, %v636
        %vm640 = vc.u32 %v634, %v636
        %v641 = vadd.s32 %v637, 1
        %v642 = vsel %vm640, %v641, %v637
        %v643 = vadd.s32 %v638, %v642
        %v644 = vadd.s32 %v643, 536870912
        %v645 = vshrl.u32 %v644, 30
        %v646 = vshll.u32 %v645, 30
        %v647 = vsub.s32 %v643, %v646
        %vm648 = vcmp.lt.s32.totalorder %v647, 0
        %v649 = vsub.s32 0, %v647
        %v650 = vsel %vm648, %v649, %v647
        %v651 = vclz %v650
        %v652 = vsub.s32 %v651, 2
        %vm653 = vcmp.gt.s32.totalorder 0, %v652
        %v654 = vsel %vm653, 0, %v652
        %v655 = vsub.s32 32, %v654
        %v656 = vshll.u32 %v647, %v654
        %v657 = vshrl.u32 %v639, %v655
        %v658 = vor.u32 %v656, %v657
        %v659 = vsub.s32 4294967266, %v654
        %v660 = vadd.s32 %v659, 127
        %v661 = vshll.u32 %v660, 23
        %v662 = vor.u32 4788187, %v661
        %v663 = vand.u32 2147483647, %v662
        %v665 = vcvt.s32.f32 %v658
        %v666 = vmul.f32 %v665, %v663
        %v667 = vxor.u32 %v666, 2147483648
        %v668 = vsel %vm585, %v667, %v666
        %v669 = vsub.s32 4, %v645
        %v670 = vsel %vm585, %v669, %v645
        %v671 = vsel %vm584, %v461, %v668
        %v672 = vsel %vm584, 0, %v670
        %v673 = vcosq.f32.pop %v671
        %v674 = vsinq.f32.pop %v671
        %vm675 = vweird.f32 %v461
        %v676 = vand.u32 %v672, 3
        %vm677 = vcmp.lt.s32.totalorder %v676, 2
        %vm678 = vcmp.eq.s32.totalorder %v676, 0
        %v679 = vxor.u32 %v674, 2147483648
        %v680 = vsel %vm678, %v673, %v679
        %vm681 = vcmp.eq.s32.totalorder %v676, 2
        %v682 = vxor.u32 %v673, 2147483648
        %v683 = vsel %vm681, %v682, %v674
        %v684 = vsel %vm677, %v680, %v683
        %v685 = vsel %vm675, nan, %v684
        %v686 = vand.u32 2147483647, %v462
        %vm687 = vcmp.le.f32.partialorder %v686, 0.7853982
        %vm688 = vcmp.lt.s32.totalorder %v462, 0
        %v689 = vand.u32 %v462, 2139095040
        %v690 = vshrl.u32 %v689, 23
        %v691 = vsub.s32 %v690, 127
        %v692 = vand.u32 2147483647, %v462
        %v693 = vand.u32 %v692, 8388607
        %v694 = vor.u32 %v693, 8388608
        %v695 = vsub.s32 0, %v694
        %v696 = vadd.s32 %v691, 1
        %vm697 = vcmp.gt.s32.totalorder %v696, 0
        %v698 = vsel %vm697, %v696, 0
        %v699 = vshrl.u32 %v698, 5
        %v700 = vand.u32 %v698, 31
        %v701 = vsub.s32 32, %v700
        %v702 = vshrl.u32 683565275, %v701
        %v703 = vshll.u32 683565275, %v700
        %v704 = vshrl.u32 2475754826, %v701
        %v705 = vor.u32 %v703, %v704
        %v706 = vshll.u32 2475754826, %v700
        %v707 = vshrl.u32 2131351028, %v701
        %v708 = vor.u32 %v706, %v707
        %v709 = vshll.u32 2131351028, %v700
        %v710 = vshrl.u32 2102212464, %v701
        %v711 = vor.u32 %v709, %v710
        %v712 = vshll.u32 2102212464, %v700
        %v713 = vshrl.u32 920167782, %v701
        %v714 = vor.u32 %v712, %v713
        %v715 = vshll.u32 920167782, %v700
        %v716 = vshrl.u32 1326507024, %v701
        %v717 = vor.u32 %v715, %v716
        %vm718 = vcmp.lt.s32.totalorder %v699, 1
        %vm719 = vcmp.lt.s32.totalorder %v699, 2
        %vm720 = vcmp.lt.s32.totalorder %v699, 3
        %vm721 = vcmp.lt.s32.totalorder %v699, 4
        %v722 = vsel %vm718, %v702, %v705
        %v723 = vsel %vm721, %v711, 2102212464
        %v724 = vsel %vm720, %v708, %v723
        %v725 = vsel %vm719, %v722, %v724
        %v726 = vsel %vm718, %v705, %v708
        %v727 = vsel %vm721, %v714, 920167782
        %v728 = vsel %vm720, %v711, %v727
        %v729 = vsel %vm719, %v726, %v728
        %v730 = vsel %vm718, %v708, %v711
        %v731 = vsel %vm721, %v717, 1326507024
        %v732 = vsel %vm720, %v714, %v731
        %v733 = vsel %vm719, %v730, %v732
        %v734 = vshll.u32 %v694, 8
        %v735 = vmul.u32.u64.compose %v734, %v733
        %v736 = vextract.low.u32 %v735
        %v737 = vextract.high.u32 %v735
        %v738 = vmul.u32.u64.compose %v734, %v729
        %v739 = vextract.low.u32 %v738
        %v740 = vextract.high.u32 %v738
        %v741 = vmul.u32 %v734, %v725
        %v742 = vadd.s32 %v737, %v739
        %vm743 = vc.u32 %v737, %v739
        %v744 = vadd.s32 %v740, 1
        %v745 = vsel %vm743, %v744, %v740
        %v746 = vadd.s32 %v741, %v745
        %v747 = vadd.s32 %v746, 536870912
        %v748 = vshrl.u32 %v747, 30
        %v749 = vshll.u32 %v748, 30
        %v750 = vsub.s32 %v746, %v749
        %vm751 = vcmp.lt.s32.totalorder %v750, 0
        %v752 = vsub.s32 0, %v750
        %v753 = vsel %vm751, %v752, %v750
        %v754 = vclz %v753
        %v755 = vsub.s32 %v754, 2
        %vm756 = vcmp.gt.s32.totalorder 0, %v755
        %v757 = vsel %vm756, 0, %v755
        %v758 = vsub.s32 32, %v757
        %v759 = vshll.u32 %v750, %v757
        %v760 = vshrl.u32 %v742, %v758
        %v761 = vor.u32 %v759, %v760
        %v762 = vsub.s32 4294967266, %v757
        %v763 = vadd.s32 %v762, 127
        %v764 = vshll.u32 %v763, 23
        %v765 = vor.u32 4788187, %v764
        %v766 = vand.u32 2147483647, %v765
        %v768 = vcvt.s32.f32 %v761
        %v769 = vmul.f32 %v768, %v766
        %v770 = vxor.u32 %v769, 2147483648
        %v771 = vsel %vm688, %v770, %v769
        %v772 = vsub.s32 4, %v748
        %v773 = vsel %vm688, %v772, %v748
        %v774 = vsel %vm687, %v462, %v771
        %v775 = vsel %vm687, 0, %v773
        %v776 = vcosq.f32.pop %v774
        %v777 = vsinq.f32.pop %v774
        %vm778 = vweird.f32 %v462
        %v779 = vand.u32 %v775, 3
        %vm780 = vcmp.lt.s32.totalorder %v779, 2
        %vm781 = vcmp.eq.s32.totalorder %v779, 0
        %v782 = vxor.u32 %v777, 2147483648
        %v783 = vsel %vm781, %v776, %v782
        %vm784 = vcmp.eq.s32.totalorder %v779, 2
        %v785 = vxor.u32 %v776, 2147483648
        %v786 = vsel %vm784, %v785, %v777
        %v787 = vsel %vm780, %v783, %v786
        %v788 = vsel %vm778, nan, %v787
        %v789 = vand.u32 2147483647, %v463
        %vm790 = vcmp.le.f32.partialorder %v789, 0.7853982
        %vm791 = vcmp.lt.s32.totalorder %v463, 0
        %v792 = vand.u32 %v463, 2139095040
        %v793 = vshrl.u32 %v792, 23
        %v794 = vsub.s32 %v793, 127
        %v795 = vand.u32 2147483647, %v463
        %v796 = vand.u32 %v795, 8388607
        %v797 = vor.u32 %v796, 8388608
        %v798 = vsub.s32 0, %v797
        %v799 = vadd.s32 %v794, 1
        %vm800 = vcmp.gt.s32.totalorder %v799, 0
        %v801 = vsel %vm800, %v799, 0
        %v802 = vshrl.u32 %v801, 5
        %v803 = vand.u32 %v801, 31
        %v804 = vsub.s32 32, %v803
        %v805 = vshrl.u32 683565275, %v804
        %v806 = vshll.u32 683565275, %v803
        %v807 = vshrl.u32 2475754826, %v804
        %v808 = vor.u32 %v806, %v807
        %v809 = vshll.u32 2475754826, %v803
        %v810 = vshrl.u32 2131351028, %v804
        %v811 = vor.u32 %v809, %v810
        %v812 = vshll.u32 2131351028, %v803
        %v813 = vshrl.u32 2102212464, %v804
        %v814 = vor.u32 %v812, %v813
        %v815 = vshll.u32 2102212464, %v803
        %v816 = vshrl.u32 920167782, %v804
        %v817 = vor.u32 %v815, %v816
        %v818 = vshll.u32 920167782, %v803
        %v819 = vshrl.u32 1326507024, %v804
        %v820 = vor.u32 %v818, %v819
        %vm821 = vcmp.lt.s32.totalorder %v802, 1
        %vm822 = vcmp.lt.s32.totalorder %v802, 2
        %vm823 = vcmp.lt.s32.totalorder %v802, 3
        %vm824 = vcmp.lt.s32.totalorder %v802, 4
        %v825 = vsel %vm821, %v805, %v808
        %v826 = vsel %vm824, %v814, 2102212464
        %v827 = vsel %vm823, %v811, %v826
        %v828 = vsel %vm822, %v825, %v827
        %v829 = vsel %vm821, %v808, %v811
        %v830 = vsel %vm824, %v817, 920167782
        %v831 = vsel %vm823, %v814, %v830
        %v832 = vsel %vm822, %v829, %v831
        %v833 = vsel %vm821, %v811, %v814
        %v834 = vsel %vm824, %v820, 1326507024
        %v835 = vsel %vm823, %v817, %v834
        %v836 = vsel %vm822, %v833, %v835
        %v837 = vshll.u32 %v797, 8
        %v838 = vmul.u32.u64.compose %v837, %v836
        %v839 = vextract.low.u32 %v838
        %v840 = vextract.high.u32 %v838
        %v841 = vmul.u32.u64.compose %v837, %v832
        %v842 = vextract.low.u32 %v841
        %v843 = vextract.high.u32 %v841
        %v844 = vmul.u32 %v837, %v828
        %v845 = vadd.s32 %v840, %v842
        %vm846 = vc.u32 %v840, %v842
        %v847 = vadd.s32 %v843, 1
        %v848 = vsel %vm846, %v847, %v843
        %v849 = vadd.s32 %v844, %v848
        %v850 = vadd.s32 %v849, 536870912
        %v851 = vshrl.u32 %v850, 30
        %v852 = vshll.u32 %v851, 30
        %v853 = vsub.s32 %v849, %v852
        %vm854 = vcmp.lt.s32.totalorder %v853, 0
        %v855 = vsub.s32 0, %v853
        %v856 = vsel %vm854, %v855, %v853
        %v857 = vclz %v856
        %v858 = vsub.s32 %v857, 2
        %vm859 = vcmp.gt.s32.totalorder 0, %v858
        %v860 = vsel %vm859, 0, %v858
        %v861 = vsub.s32 32, %v860
        %v862 = vshll.u32 %v853, %v860
        %v863 = vshrl.u32 %v845, %v861
        %v864 = vor.u32 %v862, %v863
        %v865 = vsub.s32 4294967266, %v860
        %v866 = vadd.s32 %v865, 127
        %v867 = vshll.u32 %v866, 23
        %v868 = vor.u32 4788187, %v867
        %v869 = vand.u32 2147483647, %v868
        %v871 = vcvt.s32.f32 %v864
        %v872 = vmul.f32 %v871, %v869
        %v873 = vxor.u32 %v872, 2147483648
        %v874 = vsel %vm791, %v873, %v872
        %v875 = vsub.s32 4, %v851
        %v876 = vsel %vm791, %v875, %v851
        %v877 = vsel %vm790, %v463, %v874
        %v878 = vsel %vm790, 0, %v876
        %v879 = vcosq.f32.pop %v877
        %v880 = vsinq.f32.pop %v877
        %vm881 = vweird.f32 %v463
        %v882 = vand.u32 %v878, 3
        %vm883 = vcmp.lt.s32.totalorder %v882, 2
        %vm884 = vcmp.eq.s32.totalorder %v882, 0
        %v885 = vxor.u32 %v880, 2147483648
        %v886 = vsel %vm884, %v879, %v885
        %vm887 = vcmp.eq.s32.totalorder %v882, 2
        %v888 = vxor.u32 %v879, 2147483648
        %v889 = vsel %vm887, %v888, %v880
        %v890 = vsel %vm883, %v886, %v889
        %v891 = vsel %vm881, nan, %v890
        %v892 = vand.u32 2147483647, %v464
        %vm893 = vcmp.le.f32.partialorder %v892, 0.7853982
        %vm894 = vcmp.lt.s32.totalorder %v464, 0
        %v895 = vand.u32 %v464, 2139095040
        %v896 = vshrl.u32 %v895, 23
        %v897 = vsub.s32 %v896, 127
        %v898 = vand.u32 2147483647, %v464
        %v899 = vand.u32 %v898, 8388607
        %v900 = vor.u32 %v899, 8388608
        %v901 = vsub.s32 0, %v900
        %v902 = vadd.s32 %v897, 1
        %vm903 = vcmp.gt.s32.totalorder %v902, 0
        %v904 = vsel %vm903, %v902, 0
        %v905 = vshrl.u32 %v904, 5
        %v906 = vand.u32 %v904, 31
        %v907 = vsub.s32 32, %v906
        %v908 = vshrl.u32 683565275, %v907
        %v909 = vshll.u32 683565275, %v906
        %v910 = vshrl.u32 2475754826, %v907
        %v911 = vor.u32 %v909, %v910
        %v912 = vshll.u32 2475754826, %v906
        %v913 = vshrl.u32 2131351028, %v907
        %v914 = vor.u32 %v912, %v913
        %v915 = vshll.u32 2131351028, %v906
        %v916 = vshrl.u32 2102212464, %v907
        %v917 = vor.u32 %v915, %v916
        %v918 = vshll.u32 2102212464, %v906
        %v919 = vshrl.u32 920167782, %v907
        %v920 = vor.u32 %v918, %v919
        %v921 = vshll.u32 920167782, %v906
        %v922 = vshrl.u32 1326507024, %v907
        %v923 = vor.u32 %v921, %v922
        %vm924 = vcmp.lt.s32.totalorder %v905, 1
        %vm925 = vcmp.lt.s32.totalorder %v905, 2
        %vm926 = vcmp.lt.s32.totalorder %v905, 3
        %vm927 = vcmp.lt.s32.totalorder %v905, 4
        %v928 = vsel %vm924, %v908, %v911
        %v929 = vsel %vm927, %v917, 2102212464
        %v930 = vsel %vm926, %v914, %v929
        %v931 = vsel %vm925, %v928, %v930
        %v932 = vsel %vm924, %v911, %v914
        %v933 = vsel %vm927, %v920, 920167782
        %v934 = vsel %vm926, %v917, %v933
        %v935 = vsel %vm925, %v932, %v934
        %v936 = vsel %vm924, %v914, %v917
        %v937 = vsel %vm927, %v923, 1326507024
        %v938 = vsel %vm926, %v920, %v937
        %v939 = vsel %vm925, %v936, %v938
        %v940 = vshll.u32 %v900, 8
        %v941 = vmul.u32.u64.compose %v940, %v939
        %v942 = vextract.low.u32 %v941
        %v943 = vextract.high.u32 %v941
        %v944 = vmul.u32.u64.compose %v940, %v935
        %v945 = vextract.low.u32 %v944
        %v946 = vextract.high.u32 %v944
        %v947 = vmul.u32 %v940, %v931
        %v948 = vadd.s32 %v943, %v945
        %vm949 = vc.u32 %v943, %v945
        %v950 = vadd.s32 %v946, 1
        %v951 = vsel %vm949, %v950, %v946
        %v952 = vadd.s32 %v947, %v951
        %v953 = vadd.s32 %v952, 536870912
        %v954 = vshrl.u32 %v953, 30
        %v955 = vshll.u32 %v954, 30
        %v956 = vsub.s32 %v952, %v955
        %vm957 = vcmp.lt.s32.totalorder %v956, 0
        %v958 = vsub.s32 0, %v956
        %v959 = vsel %vm957, %v958, %v956
        %v960 = vclz %v959
        %v961 = vsub.s32 %v960, 2
        %vm962 = vcmp.gt.s32.totalorder 0, %v961
        %v963 = vsel %vm962, 0, %v961
        %v964 = vsub.s32 32, %v963
        %v965 = vshll.u32 %v956, %v963
        %v966 = vshrl.u32 %v948, %v964
        %v967 = vor.u32 %v965, %v966
        %v968 = vsub.s32 4294967266, %v963
        %v969 = vadd.s32 %v968, 127
        %v970 = vshll.u32 %v969, 23
        %v971 = vor.u32 4788187, %v970
        %v972 = vand.u32 2147483647, %v971
        %v974 = vcvt.s32.f32 %v967
        %v975 = vmul.f32 %v974, %v972
        %v976 = vxor.u32 %v975, 2147483648
        %v977 = vsel %vm894, %v976, %v975
        %v978 = vsub.s32 4, %v954
        %v979 = vsel %vm894, %v978, %v954
        %v980 = vsel %vm893, %v464, %v977
        %v981 = vsel %vm893, 0, %v979
        %v982 = vcosq.f32.pop %v980
        %v983 = vsinq.f32.pop %v980
        %vm984 = vweird.f32 %v464
        %v985 = vand.u32 %v981, 3
        %vm986 = vcmp.lt.s32.totalorder %v985, 2
        %vm987 = vcmp.eq.s32.totalorder %v985, 0
        %v988 = vxor.u32 %v983, 2147483648
        %v989 = vsel %vm987, %v982, %v988
        %vm990 = vcmp.eq.s32.totalorder %v985, 2
        %v991 = vxor.u32 %v982, 2147483648
        %v992 = vsel %vm990, %v991, %v983
        %v993 = vsel %vm986, %v989, %v992
        %v994 = vsel %vm984, nan, %v993
        %v995 = vand.u32 2147483647, %v465
        %vm996 = vcmp.le.f32.partialorder %v995, 0.7853982
        %vm997 = vcmp.lt.s32.totalorder %v465, 0
        %v998 = vand.u32 %v465, 2139095040
        %v999 = vshrl.u32 %v998, 23
        %v1000 = vsub.s32 %v999, 127
        %v1001 = vand.u32 2147483647, %v465
        %v1002 = vand.u32 %v1001, 8388607
        %v1003 = vor.u32 %v1002, 8388608
        %v1004 = vsub.s32 0, %v1003
        %v1005 = vadd.s32 %v1000, 1
        %vm1006 = vcmp.gt.s32.totalorder %v1005, 0
        %v1007 = vsel %vm1006, %v1005, 0
        %v1008 = vshrl.u32 %v1007, 5
        %v1009 = vand.u32 %v1007, 31
        %v1010 = vsub.s32 32, %v1009
        %v1011 = vshrl.u32 683565275, %v1010
        %v1012 = vshll.u32 683565275, %v1009
        %v1013 = vshrl.u32 2475754826, %v1010
        %v1014 = vor.u32 %v1012, %v1013
        %v1015 = vshll.u32 2475754826, %v1009
        %v1016 = vshrl.u32 2131351028, %v1010
        %v1017 = vor.u32 %v1015, %v1016
        %v1018 = vshll.u32 2131351028, %v1009
        %v1019 = vshrl.u32 2102212464, %v1010
        %v1020 = vor.u32 %v1018, %v1019
        %v1021 = vshll.u32 2102212464, %v1009
        %v1022 = vshrl.u32 920167782, %v1010
        %v1023 = vor.u32 %v1021, %v1022
        %v1024 = vshll.u32 920167782, %v1009
        %v1025 = vshrl.u32 1326507024, %v1010
        %v1026 = vor.u32 %v1024, %v1025
        %vm1027 = vcmp.lt.s32.totalorder %v1008, 1
        %vm1028 = vcmp.lt.s32.totalorder %v1008, 2
        %vm1029 = vcmp.lt.s32.totalorder %v1008, 3
        %vm1030 = vcmp.lt.s32.totalorder %v1008, 4
        %v1031 = vsel %vm1027, %v1011, %v1014
        %v1032 = vsel %vm1030, %v1020, 2102212464
        %v1033 = vsel %vm1029, %v1017, %v1032
        %v1034 = vsel %vm1028, %v1031, %v1033
        %v1035 = vsel %vm1027, %v1014, %v1017
        %v1036 = vsel %vm1030, %v1023, 920167782
        %v1037 = vsel %vm1029, %v1020, %v1036
        %v1038 = vsel %vm1028, %v1035, %v1037
        %v1039 = vsel %vm1027, %v1017, %v1020
        %v1040 = vsel %vm1030, %v1026, 1326507024
        %v1041 = vsel %vm1029, %v1023, %v1040
        %v1042 = vsel %vm1028, %v1039, %v1041
        %v1043 = vshll.u32 %v1003, 8
        %v1044 = vmul.u32.u64.compose %v1043, %v1042
        %v1045 = vextract.low.u32 %v1044
        %v1046 = vextract.high.u32 %v1044
        %v1047 = vmul.u32.u64.compose %v1043, %v1038
        %v1048 = vextract.low.u32 %v1047
        %v1049 = vextract.high.u32 %v1047
        %v1050 = vmul.u32 %v1043, %v1034
        %v1051 = vadd.s32 %v1046, %v1048
        %vm1052 = vc.u32 %v1046, %v1048
        %v1053 = vadd.s32 %v1049, 1
        %v1054 = vsel %vm1052, %v1053, %v1049
        %v1055 = vadd.s32 %v1050, %v1054
        %v1056 = vadd.s32 %v1055, 536870912
        %v1057 = vshrl.u32 %v1056, 30
        %v1058 = vshll.u32 %v1057, 30
        %v1059 = vsub.s32 %v1055, %v1058
        %vm1060 = vcmp.lt.s32.totalorder %v1059, 0
        %v1061 = vsub.s32 0, %v1059
        %v1062 = vsel %vm1060, %v1061, %v1059
        %v1063 = vclz %v1062
        %v1064 = vsub.s32 %v1063, 2
        %vm1065 = vcmp.gt.s32.totalorder 0, %v1064
        %v1066 = vsel %vm1065, 0, %v1064
        %v1067 = vsub.s32 32, %v1066
        %v1068 = vshll.u32 %v1059, %v1066
        %v1069 = vshrl.u32 %v1051, %v1067
        %v1070 = vor.u32 %v1068, %v1069
        %v1071 = vsub.s32 4294967266, %v1066
        %v1072 = vadd.s32 %v1071, 127
        %v1073 = vshll.u32 %v1072, 23
        %v1074 = vor.u32 4788187, %v1073
        %v1075 = vand.u32 2147483647, %v1074
        %v1077 = vcvt.s32.f32 %v1070
        %v1078 = vmul.f32 %v1077, %v1075
        %v1079 = vxor.u32 %v1078, 2147483648
        %v1080 = vsel %vm997, %v1079, %v1078
        %v1081 = vsub.s32 4, %v1057
        %v1082 = vsel %vm997, %v1081, %v1057
        %v1083 = vsel %vm996, %v465, %v1080
        %v1084 = vsel %vm996, 0, %v1082
        %v1085 = vcosq.f32.pop %v1083
        %v1086 = vsinq.f32.pop %v1083
        %vm1087 = vweird.f32 %v465
        %v1088 = vand.u32 %v1084, 3
        %vm1089 = vcmp.lt.s32.totalorder %v1088, 2
        %vm1090 = vcmp.eq.s32.totalorder %v1088, 0
        %v1091 = vxor.u32 %v1086, 2147483648
        %v1092 = vsel %vm1090, %v1085, %v1091
        %vm1093 = vcmp.eq.s32.totalorder %v1088, 2
        %v1094 = vxor.u32 %v1085, 2147483648
        %v1095 = vsel %vm1093, %v1094, %v1086
        %v1096 = vsel %vm1089, %v1092, %v1095
        %v1097 = vsel %vm1087, nan, %v1096
        %v1098 = vand.u32 2147483647, %v466
        %vm1099 = vcmp.le.f32.partialorder %v1098, 0.7853982
        %vm1100 = vcmp.lt.s32.totalorder %v466, 0
        %v1101 = vand.u32 %v466, 2139095040
        %v1102 = vshrl.u32 %v1101, 23
        %v1103 = vsub.s32 %v1102, 127
        %v1104 = vand.u32 2147483647, %v466
        %v1105 = vand.u32 %v1104, 8388607
        %v1106 = vor.u32 %v1105, 8388608
        %v1107 = vsub.s32 0, %v1106
        %v1108 = vadd.s32 %v1103, 1
        %vm1109 = vcmp.gt.s32.totalorder %v1108, 0
        %v1110 = vsel %vm1109, %v1108, 0
        %v1111 = vshrl.u32 %v1110, 5
        %v1112 = vand.u32 %v1110, 31
        %v1113 = vsub.s32 32, %v1112
        %v1114 = vshrl.u32 683565275, %v1113
        %v1115 = vshll.u32 683565275, %v1112
        %v1116 = vshrl.u32 2475754826, %v1113
        %v1117 = vor.u32 %v1115, %v1116
        %v1118 = vshll.u32 2475754826, %v1112
        %v1119 = vshrl.u32 2131351028, %v1113
        %v1120 = vor.u32 %v1118, %v1119
        %v1121 = vshll.u32 2131351028, %v1112
        %v1122 = vshrl.u32 2102212464, %v1113
        %v1123 = vor.u32 %v1121, %v1122
        %v1124 = vshll.u32 2102212464, %v1112
        %v1125 = vshrl.u32 920167782, %v1113
        %v1126 = vor.u32 %v1124, %v1125
        %v1127 = vshll.u32 920167782, %v1112
        %v1128 = vshrl.u32 1326507024, %v1113
        %v1129 = vor.u32 %v1127, %v1128
        %vm1130 = vcmp.lt.s32.totalorder %v1111, 1
        %vm1131 = vcmp.lt.s32.totalorder %v1111, 2
        %vm1132 = vcmp.lt.s32.totalorder %v1111, 3
        %vm1133 = vcmp.lt.s32.totalorder %v1111, 4
        %v1134 = vsel %vm1130, %v1114, %v1117
        %v1135 = vsel %vm1133, %v1123, 2102212464
        %v1136 = vsel %vm1132, %v1120, %v1135
        %v1137 = vsel %vm1131, %v1134, %v1136
        %v1138 = vsel %vm1130, %v1117, %v1120
        %v1139 = vsel %vm1133, %v1126, 920167782
        %v1140 = vsel %vm1132, %v1123, %v1139
        %v1141 = vsel %vm1131, %v1138, %v1140
        %v1142 = vsel %vm1130, %v1120, %v1123
        %v1143 = vsel %vm1133, %v1129, 1326507024
        %v1144 = vsel %vm1132, %v1126, %v1143
        %v1145 = vsel %vm1131, %v1142, %v1144
        %v1146 = vshll.u32 %v1106, 8
        %v1147 = vmul.u32.u64.compose %v1146, %v1145
        %v1148 = vextract.low.u32 %v1147
        %v1149 = vextract.high.u32 %v1147
        %v1150 = vmul.u32.u64.compose %v1146, %v1141
        %v1151 = vextract.low.u32 %v1150
        %v1152 = vextract.high.u32 %v1150
        %v1153 = vmul.u32 %v1146, %v1137
        %v1154 = vadd.s32 %v1149, %v1151
        %vm1155 = vc.u32 %v1149, %v1151
        %v1156 = vadd.s32 %v1152, 1
        %v1157 = vsel %vm1155, %v1156, %v1152
        %v1158 = vadd.s32 %v1153, %v1157
        %v1159 = vadd.s32 %v1158, 536870912
        %v1160 = vshrl.u32 %v1159, 30
        %v1161 = vshll.u32 %v1160, 30
        %v1162 = vsub.s32 %v1158, %v1161
        %vm1163 = vcmp.lt.s32.totalorder %v1162, 0
        %v1164 = vsub.s32 0, %v1162
        %v1165 = vsel %vm1163, %v1164, %v1162
        %v1166 = vclz %v1165
        %v1167 = vsub.s32 %v1166, 2
        %vm1168 = vcmp.gt.s32.totalorder 0, %v1167
        %v1169 = vsel %vm1168, 0, %v1167
        %v1170 = vsub.s32 32, %v1169
        %v1171 = vshll.u32 %v1162, %v1169
        %v1172 = vshrl.u32 %v1154, %v1170
        %v1173 = vor.u32 %v1171, %v1172
        %v1174 = vsub.s32 4294967266, %v1169
        %v1175 = vadd.s32 %v1174, 127
        %v1176 = vshll.u32 %v1175, 23
        %v1177 = vor.u32 4788187, %v1176
        %v1178 = vand.u32 2147483647, %v1177
        %v1180 = vcvt.s32.f32 %v1173
        %v1181 = vmul.f32 %v1180, %v1178
        %v1182 = vxor.u32 %v1181, 2147483648
        %v1183 = vsel %vm1100, %v1182, %v1181
        %v1184 = vsub.s32 4, %v1160
        %v1185 = vsel %vm1100, %v1184, %v1160
        %v1186 = vsel %vm1099, %v466, %v1183
        %v1187 = vsel %vm1099, 0, %v1185
        %v1188 = vcosq.f32.pop %v1186
        %v1189 = vsinq.f32.pop %v1186
        %vm1190 = vweird.f32 %v466
        %v1191 = vand.u32 %v1187, 3
        %vm1192 = vcmp.lt.s32.totalorder %v1191, 2
        %vm1193 = vcmp.eq.s32.totalorder %v1191, 0
        %v1194 = vxor.u32 %v1189, 2147483648
        %v1195 = vsel %vm1193, %v1188, %v1194
        %vm1196 = vcmp.eq.s32.totalorder %v1191, 2
        %v1197 = vxor.u32 %v1188, 2147483648
        %v1198 = vsel %vm1196, %v1197, %v1189
        %v1199 = vsel %vm1192, %v1195, %v1198
        %v1200 = vsel %vm1190, nan, %v1199
        %v1201 = vand.u32 2147483647, %v467
        %vm1202 = vcmp.le.f32.partialorder %v1201, 0.7853982
        %vm1203 = vcmp.lt.s32.totalorder %v467, 0
        %v1204 = vand.u32 %v467, 2139095040
        %v1205 = vshrl.u32 %v1204, 23
        %v1206 = vsub.s32 %v1205, 127
        %v1207 = vand.u32 2147483647, %v467
        %v1208 = vand.u32 %v1207, 8388607
        %v1209 = vor.u32 %v1208, 8388608
        %v1210 = vsub.s32 0, %v1209
        %v1211 = vadd.s32 %v1206, 1
        %vm1212 = vcmp.gt.s32.totalorder %v1211, 0
        %v1213 = vsel %vm1212, %v1211, 0
        %v1214 = vshrl.u32 %v1213, 5
        %v1215 = vand.u32 %v1213, 31
        %v1216 = vsub.s32 32, %v1215
        %v1217 = vshrl.u32 683565275, %v1216
        %v1218 = vshll.u32 683565275, %v1215
        %v1219 = vshrl.u32 2475754826, %v1216
        %v1220 = vor.u32 %v1218, %v1219
        %v1221 = vshll.u32 2475754826, %v1215
        %v1222 = vshrl.u32 2131351028, %v1216
        %v1223 = vor.u32 %v1221, %v1222
        %v1224 = vshll.u32 2131351028, %v1215
        %v1225 = vshrl.u32 2102212464, %v1216
        %v1226 = vor.u32 %v1224, %v1225
        %v1227 = vshll.u32 2102212464, %v1215
        %v1228 = vshrl.u32 920167782, %v1216
        %v1229 = vor.u32 %v1227, %v1228
        %v1230 = vshll.u32 920167782, %v1215
        %v1231 = vshrl.u32 1326507024, %v1216
        %v1232 = vor.u32 %v1230, %v1231
        %vm1233 = vcmp.lt.s32.totalorder %v1214, 1
        %vm1234 = vcmp.lt.s32.totalorder %v1214, 2
        %vm1235 = vcmp.lt.s32.totalorder %v1214, 3
        %vm1236 = vcmp.lt.s32.totalorder %v1214, 4
        %v1237 = vsel %vm1233, %v1217, %v1220
        %v1238 = vsel %vm1236, %v1226, 2102212464
        %v1239 = vsel %vm1235, %v1223, %v1238
        %v1240 = vsel %vm1234, %v1237, %v1239
        %v1241 = vsel %vm1233, %v1220, %v1223
        %v1242 = vsel %vm1236, %v1229, 920167782
        %v1243 = vsel %vm1235, %v1226, %v1242
        %v1244 = vsel %vm1234, %v1241, %v1243
        %v1245 = vsel %vm1233, %v1223, %v1226
        %v1246 = vsel %vm1236, %v1232, 1326507024
        %v1247 = vsel %vm1235, %v1229, %v1246
        %v1248 = vsel %vm1234, %v1245, %v1247
        %v1249 = vshll.u32 %v1209, 8
        %v1250 = vmul.u32.u64.compose %v1249, %v1248
        %v1251 = vextract.low.u32 %v1250
        %v1252 = vextract.high.u32 %v1250
        %v1253 = vmul.u32.u64.compose %v1249, %v1244
        %v1254 = vextract.low.u32 %v1253
        %v1255 = vextract.high.u32 %v1253
        %v1256 = vmul.u32 %v1249, %v1240
        %v1257 = vadd.s32 %v1252, %v1254
        %vm1258 = vc.u32 %v1252, %v1254
        %v1259 = vadd.s32 %v1255, 1
        %v1260 = vsel %vm1258, %v1259, %v1255
        %v1261 = vadd.s32 %v1256, %v1260
        %v1262 = vadd.s32 %v1261, 536870912
        %v1263 = vshrl.u32 %v1262, 30
        %v1264 = vshll.u32 %v1263, 30
        %v1265 = vsub.s32 %v1261, %v1264
        %vm1266 = vcmp.lt.s32.totalorder %v1265, 0
        %v1267 = vsub.s32 0, %v1265
        %v1268 = vsel %vm1266, %v1267, %v1265
        %v1269 = vclz %v1268
        %v1270 = vsub.s32 %v1269, 2
        %vm1271 = vcmp.gt.s32.totalorder 0, %v1270
        %v1272 = vsel %vm1271, 0, %v1270
        %v1273 = vsub.s32 32, %v1272
        %v1274 = vshll.u32 %v1265, %v1272
        %v1275 = vshrl.u32 %v1257, %v1273
        %v1276 = vor.u32 %v1274, %v1275
        %v1277 = vsub.s32 4294967266, %v1272
        %v1278 = vadd.s32 %v1277, 127
        %v1279 = vshll.u32 %v1278, 23
        %v1280 = vor.u32 4788187, %v1279
        %v1281 = vand.u32 2147483647, %v1280
        %v1283 = vcvt.s32.f32 %v1276
        %v1284 = vmul.f32 %v1283, %v1281
        %v1285 = vxor.u32 %v1284, 2147483648
        %v1286 = vsel %vm1203, %v1285, %v1284
        %v1287 = vsub.s32 4, %v1263
        %v1288 = vsel %vm1203, %v1287, %v1263
        %v1289 = vsel %vm1202, %v467, %v1286
        %v1290 = vsel %vm1202, 0, %v1288
        %v1291 = vcosq.f32.pop %v1289
        %v1292 = vsinq.f32.pop %v1289
        %vm1293 = vweird.f32 %v467
        %v1294 = vand.u32 %v1290, 3
        %vm1295 = vcmp.lt.s32.totalorder %v1294, 2
        %vm1296 = vcmp.eq.s32.totalorder %v1294, 0
        %v1297 = vxor.u32 %v1292, 2147483648
        %v1298 = vsel %vm1296, %v1291, %v1297
        %vm1299 = vcmp.eq.s32.totalorder %v1294, 2
        %v1300 = vxor.u32 %v1291, 2147483648
        %v1301 = vsel %vm1299, %v1300, %v1292
        %v1302 = vsel %vm1295, %v1298, %v1301
        %v1303 = vsel %vm1293, nan, %v1302
        %v1304 = vand.u32 2147483647, %v468
        %vm1305 = vcmp.le.f32.partialorder %v1304, 0.7853982
        %vm1306 = vcmp.lt.s32.totalorder %v468, 0
        %v1307 = vand.u32 %v468, 2139095040
        %v1308 = vshrl.u32 %v1307, 23
        %v1309 = vsub.s32 %v1308, 127
        %v1310 = vand.u32 2147483647, %v468
        %v1311 = vand.u32 %v1310, 8388607
        %v1312 = vor.u32 %v1311, 8388608
        %v1313 = vsub.s32 0, %v1312
        %v1314 = vadd.s32 %v1309, 1
        %vm1315 = vcmp.gt.s32.totalorder %v1314, 0
        %v1316 = vsel %vm1315, %v1314, 0
        %v1317 = vshrl.u32 %v1316, 5
        %v1318 = vand.u32 %v1316, 31
        %v1319 = vsub.s32 32, %v1318
        %v1320 = vshrl.u32 683565275, %v1319
        %v1321 = vshll.u32 683565275, %v1318
        %v1322 = vshrl.u32 2475754826, %v1319
        %v1323 = vor.u32 %v1321, %v1322
        %v1324 = vshll.u32 2475754826, %v1318
        %v1325 = vshrl.u32 2131351028, %v1319
        %v1326 = vor.u32 %v1324, %v1325
        %v1327 = vshll.u32 2131351028, %v1318
        %v1328 = vshrl.u32 2102212464, %v1319
        %v1329 = vor.u32 %v1327, %v1328
        %v1330 = vshll.u32 2102212464, %v1318
        %v1331 = vshrl.u32 920167782, %v1319
        %v1332 = vor.u32 %v1330, %v1331
        %v1333 = vshll.u32 920167782, %v1318
        %v1334 = vshrl.u32 1326507024, %v1319
        %v1335 = vor.u32 %v1333, %v1334
        %vm1336 = vcmp.lt.s32.totalorder %v1317, 1
        %vm1337 = vcmp.lt.s32.totalorder %v1317, 2
        %vm1338 = vcmp.lt.s32.totalorder %v1317, 3
        %vm1339 = vcmp.lt.s32.totalorder %v1317, 4
        %v1340 = vsel %vm1336, %v1320, %v1323
        %v1341 = vsel %vm1339, %v1329, 2102212464
        %v1342 = vsel %vm1338, %v1326, %v1341
        %v1343 = vsel %vm1337, %v1340, %v1342
        %v1344 = vsel %vm1336, %v1323, %v1326
        %v1345 = vsel %vm1339, %v1332, 920167782
        %v1346 = vsel %vm1338, %v1329, %v1345
        %v1347 = vsel %vm1337, %v1344, %v1346
        %v1348 = vsel %vm1336, %v1326, %v1329
        %v1349 = vsel %vm1339, %v1335, 1326507024
        %v1350 = vsel %vm1338, %v1332, %v1349
        %v1351 = vsel %vm1337, %v1348, %v1350
        %v1352 = vshll.u32 %v1312, 8
        %v1353 = vmul.u32.u64.compose %v1352, %v1351
        %v1354 = vextract.low.u32 %v1353
        %v1355 = vextract.high.u32 %v1353
        %v1356 = vmul.u32.u64.compose %v1352, %v1347
        %v1357 = vextract.low.u32 %v1356
        %v1358 = vextract.high.u32 %v1356
        %v1359 = vmul.u32 %v1352, %v1343
        %v1360 = vadd.s32 %v1355, %v1357
        %vm1361 = vc.u32 %v1355, %v1357
        %v1362 = vadd.s32 %v1358, 1
        %v1363 = vsel %vm1361, %v1362, %v1358
        %v1364 = vadd.s32 %v1359, %v1363
        %v1365 = vadd.s32 %v1364, 536870912
        %v1366 = vshrl.u32 %v1365, 30
        %v1367 = vshll.u32 %v1366, 30
        %v1368 = vsub.s32 %v1364, %v1367
        %vm1369 = vcmp.lt.s32.totalorder %v1368, 0
        %v1370 = vsub.s32 0, %v1368
        %v1371 = vsel %vm1369, %v1370, %v1368
        %v1372 = vclz %v1371
        %v1373 = vsub.s32 %v1372, 2
        %vm1374 = vcmp.gt.s32.totalorder 0, %v1373
        %v1375 = vsel %vm1374, 0, %v1373
        %v1376 = vsub.s32 32, %v1375
        %v1377 = vshll.u32 %v1368, %v1375
        %v1378 = vshrl.u32 %v1360, %v1376
        %v1379 = vor.u32 %v1377, %v1378
        %v1380 = vsub.s32 4294967266, %v1375
        %v1381 = vadd.s32 %v1380, 127
        %v1382 = vshll.u32 %v1381, 23
        %v1383 = vor.u32 4788187, %v1382
        %v1384 = vand.u32 2147483647, %v1383
        %v1386 = vcvt.s32.f32 %v1379
        %v1387 = vmul.f32 %v1386, %v1384
        %v1388 = vxor.u32 %v1387, 2147483648
        %v1389 = vsel %vm1306, %v1388, %v1387
        %v1390 = vsub.s32 4, %v1366
        %v1391 = vsel %vm1306, %v1390, %v1366
        %v1392 = vsel %vm1305, %v468, %v1389
        %v1393 = vsel %vm1305, 0, %v1391
        %v1394 = vcosq.f32.pop %v1392
        %v1395 = vsinq.f32.pop %v1392
        %vm1396 = vweird.f32 %v468
        %v1397 = vand.u32 %v1393, 3
        %vm1398 = vcmp.lt.s32.totalorder %v1397, 2
        %vm1399 = vcmp.eq.s32.totalorder %v1397, 0
        %v1400 = vxor.u32 %v1395, 2147483648
        %v1401 = vsel %vm1399, %v1394, %v1400
        %vm1402 = vcmp.eq.s32.totalorder %v1397, 2
        %v1403 = vxor.u32 %v1394, 2147483648
        %v1404 = vsel %vm1402, %v1403, %v1395
        %v1405 = vsel %vm1398, %v1401, %v1404
        %v1406 = vsel %vm1396, nan, %v1405
        %v1407 = vand.u32 2147483647, %v469
        %vm1408 = vcmp.le.f32.partialorder %v1407, 0.7853982
        %vm1409 = vcmp.lt.s32.totalorder %v469, 0
        %v1410 = vand.u32 %v469, 2139095040
        %v1411 = vshrl.u32 %v1410, 23
        %v1412 = vsub.s32 %v1411, 127
        %v1413 = vand.u32 2147483647, %v469
        %v1414 = vand.u32 %v1413, 8388607
        %v1415 = vor.u32 %v1414, 8388608
        %v1416 = vsub.s32 0, %v1415
        %v1417 = vadd.s32 %v1412, 1
        %vm1418 = vcmp.gt.s32.totalorder %v1417, 0
        %v1419 = vsel %vm1418, %v1417, 0
        %v1420 = vshrl.u32 %v1419, 5
        %v1421 = vand.u32 %v1419, 31
        %v1422 = vsub.s32 32, %v1421
        %v1423 = vshrl.u32 683565275, %v1422
        %v1424 = vshll.u32 683565275, %v1421
        %v1425 = vshrl.u32 2475754826, %v1422
        %v1426 = vor.u32 %v1424, %v1425
        %v1427 = vshll.u32 2475754826, %v1421
        %v1428 = vshrl.u32 2131351028, %v1422
        %v1429 = vor.u32 %v1427, %v1428
        %v1430 = vshll.u32 2131351028, %v1421
        %v1431 = vshrl.u32 2102212464, %v1422
        %v1432 = vor.u32 %v1430, %v1431
        %v1433 = vshll.u32 2102212464, %v1421
        %v1434 = vshrl.u32 920167782, %v1422
        %v1435 = vor.u32 %v1433, %v1434
        %v1436 = vshll.u32 920167782, %v1421
        %v1437 = vshrl.u32 1326507024, %v1422
        %v1438 = vor.u32 %v1436, %v1437
        %vm1439 = vcmp.lt.s32.totalorder %v1420, 1
        %vm1440 = vcmp.lt.s32.totalorder %v1420, 2
        %vm1441 = vcmp.lt.s32.totalorder %v1420, 3
        %vm1442 = vcmp.lt.s32.totalorder %v1420, 4
        %v1443 = vsel %vm1439, %v1423, %v1426
        %v1444 = vsel %vm1442, %v1432, 2102212464
        %v1445 = vsel %vm1441, %v1429, %v1444
        %v1446 = vsel %vm1440, %v1443, %v1445
        %v1447 = vsel %vm1439, %v1426, %v1429
        %v1448 = vsel %vm1442, %v1435, 920167782
        %v1449 = vsel %vm1441, %v1432, %v1448
        %v1450 = vsel %vm1440, %v1447, %v1449
        %v1451 = vsel %vm1439, %v1429, %v1432
        %v1452 = vsel %vm1442, %v1438, 1326507024
        %v1453 = vsel %vm1441, %v1435, %v1452
        %v1454 = vsel %vm1440, %v1451, %v1453
        %v1455 = vshll.u32 %v1415, 8
        %v1456 = vmul.u32.u64.compose %v1455, %v1454
        %v1457 = vextract.low.u32 %v1456
        %v1458 = vextract.high.u32 %v1456
        %v1459 = vmul.u32.u64.compose %v1455, %v1450
        %v1460 = vextract.low.u32 %v1459
        %v1461 = vextract.high.u32 %v1459
        %v1462 = vmul.u32 %v1455, %v1446
        %v1463 = vadd.s32 %v1458, %v1460
        %vm1464 = vc.u32 %v1458, %v1460
        %v1465 = vadd.s32 %v1461, 1
        %v1466 = vsel %vm1464, %v1465, %v1461
        %v1467 = vadd.s32 %v1462, %v1466
        %v1468 = vadd.s32 %v1467, 536870912
        %v1469 = vshrl.u32 %v1468, 30
        %v1470 = vshll.u32 %v1469, 30
        %v1471 = vsub.s32 %v1467, %v1470
        %vm1472 = vcmp.lt.s32.totalorder %v1471, 0
        %v1473 = vsub.s32 0, %v1471
        %v1474 = vsel %vm1472, %v1473, %v1471
        %v1475 = vclz %v1474
        %v1476 = vsub.s32 %v1475, 2
        %vm1477 = vcmp.gt.s32.totalorder 0, %v1476
        %v1478 = vsel %vm1477, 0, %v1476
        %v1479 = vsub.s32 32, %v1478
        %v1480 = vshll.u32 %v1471, %v1478
        %v1481 = vshrl.u32 %v1463, %v1479
        %v1482 = vor.u32 %v1480, %v1481
        %v1483 = vsub.s32 4294967266, %v1478
        %v1484 = vadd.s32 %v1483, 127
        %v1485 = vshll.u32 %v1484, 23
        %v1486 = vor.u32 4788187, %v1485
        %v1487 = vand.u32 2147483647, %v1486
        %v1489 = vcvt.s32.f32 %v1482
        %v1490 = vmul.f32 %v1489, %v1487
        %v1491 = vxor.u32 %v1490, 2147483648
        %v1492 = vsel %vm1409, %v1491, %v1490
        %v1493 = vsub.s32 4, %v1469
        %v1494 = vsel %vm1409, %v1493, %v1469
        %v1495 = vsel %vm1408, %v469, %v1492
        %v1496 = vsel %vm1408, 0, %v1494
        %v1497 = vcosq.f32.pop %v1495
        %v1498 = vsinq.f32.pop %v1495
        %vm1499 = vweird.f32 %v469
        %v1500 = vand.u32 %v1496, 3
        %vm1501 = vcmp.lt.s32.totalorder %v1500, 2
        %vm1502 = vcmp.eq.s32.totalorder %v1500, 0
        %v1503 = vxor.u32 %v1498, 2147483648
        %v1504 = vsel %vm1502, %v1497, %v1503
        %vm1505 = vcmp.eq.s32.totalorder %v1500, 2
        %v1506 = vxor.u32 %v1497, 2147483648
        %v1507 = vsel %vm1505, %v1506, %v1498
        %v1508 = vsel %vm1501, %v1504, %v1507
        %v1509 = vsel %vm1499, nan, %v1508
        %v1510 = vand.u32 2147483647, %v470
        %vm1511 = vcmp.le.f32.partialorder %v1510, 0.7853982
        %vm1512 = vcmp.lt.s32.totalorder %v470, 0
        %v1513 = vand.u32 %v470, 2139095040
        %v1514 = vshrl.u32 %v1513, 23
        %v1515 = vsub.s32 %v1514, 127
        %v1516 = vand.u32 2147483647, %v470
        %v1517 = vand.u32 %v1516, 8388607
        %v1518 = vor.u32 %v1517, 8388608
        %v1519 = vsub.s32 0, %v1518
        %v1520 = vadd.s32 %v1515, 1
        %vm1521 = vcmp.gt.s32.totalorder %v1520, 0
        %v1522 = vsel %vm1521, %v1520, 0
        %v1523 = vshrl.u32 %v1522, 5
        %v1524 = vand.u32 %v1522, 31
        %v1525 = vsub.s32 32, %v1524
        %v1526 = vshrl.u32 683565275, %v1525
        %v1527 = vshll.u32 683565275, %v1524
        %v1528 = vshrl.u32 2475754826, %v1525
        %v1529 = vor.u32 %v1527, %v1528
        %v1530 = vshll.u32 2475754826, %v1524
        %v1531 = vshrl.u32 2131351028, %v1525
        %v1532 = vor.u32 %v1530, %v1531
        %v1533 = vshll.u32 2131351028, %v1524
        %v1534 = vshrl.u32 2102212464, %v1525
        %v1535 = vor.u32 %v1533, %v1534
        %v1536 = vshll.u32 2102212464, %v1524
        %v1537 = vshrl.u32 920167782, %v1525
        %v1538 = vor.u32 %v1536, %v1537
        %v1539 = vshll.u32 920167782, %v1524
        %v1540 = vshrl.u32 1326507024, %v1525
        %v1541 = vor.u32 %v1539, %v1540
        %vm1542 = vcmp.lt.s32.totalorder %v1523, 1
        %vm1543 = vcmp.lt.s32.totalorder %v1523, 2
        %vm1544 = vcmp.lt.s32.totalorder %v1523, 3
        %vm1545 = vcmp.lt.s32.totalorder %v1523, 4
        %v1546 = vsel %vm1542, %v1526, %v1529
        %v1547 = vsel %vm1545, %v1535, 2102212464
        %v1548 = vsel %vm1544, %v1532, %v1547
        %v1549 = vsel %vm1543, %v1546, %v1548
        %v1550 = vsel %vm1542, %v1529, %v1532
        %v1551 = vsel %vm1545, %v1538, 920167782
        %v1552 = vsel %vm1544, %v1535, %v1551
        %v1553 = vsel %vm1543, %v1550, %v1552
        %v1554 = vsel %vm1542, %v1532, %v1535
        %v1555 = vsel %vm1545, %v1541, 1326507024
        %v1556 = vsel %vm1544, %v1538, %v1555
        %v1557 = vsel %vm1543, %v1554, %v1556
        %v1558 = vshll.u32 %v1518, 8
        %v1559 = vmul.u32.u64.compose %v1558, %v1557
        %v1560 = vextract.low.u32 %v1559
        %v1561 = vextract.high.u32 %v1559
        %v1562 = vmul.u32.u64.compose %v1558, %v1553
        %v1563 = vextract.low.u32 %v1562
        %v1564 = vextract.high.u32 %v1562
        %v1565 = vmul.u32 %v1558, %v1549
        %v1566 = vadd.s32 %v1561, %v1563
        %vm1567 = vc.u32 %v1561, %v1563
        %v1568 = vadd.s32 %v1564, 1
        %v1569 = vsel %vm1567, %v1568, %v1564
        %v1570 = vadd.s32 %v1565, %v1569
        %v1571 = vadd.s32 %v1570, 536870912
        %v1572 = vshrl.u32 %v1571, 30
        %v1573 = vshll.u32 %v1572, 30
        %v1574 = vsub.s32 %v1570, %v1573
        %vm1575 = vcmp.lt.s32.totalorder %v1574, 0
        %v1576 = vsub.s32 0, %v1574
        %v1577 = vsel %vm1575, %v1576, %v1574
        %v1578 = vclz %v1577
        %v1579 = vsub.s32 %v1578, 2
        %vm1580 = vcmp.gt.s32.totalorder 0, %v1579
        %v1581 = vsel %vm1580, 0, %v1579
        %v1582 = vsub.s32 32, %v1581
        %v1583 = vshll.u32 %v1574, %v1581
        %v1584 = vshrl.u32 %v1566, %v1582
        %v1585 = vor.u32 %v1583, %v1584
        %v1586 = vsub.s32 4294967266, %v1581
        %v1587 = vadd.s32 %v1586, 127
        %v1588 = vshll.u32 %v1587, 23
        %v1589 = vor.u32 4788187, %v1588
        %v1590 = vand.u32 2147483647, %v1589
        %v1592 = vcvt.s32.f32 %v1585
        %v1593 = vmul.f32 %v1592, %v1590
        %v1594 = vxor.u32 %v1593, 2147483648
        %v1595 = vsel %vm1512, %v1594, %v1593
        %v1596 = vsub.s32 4, %v1572
        %v1597 = vsel %vm1512, %v1596, %v1572
        %v1598 = vsel %vm1511, %v470, %v1595
        %v1599 = vsel %vm1511, 0, %v1597
        %v1600 = vcosq.f32.pop %v1598
        %v1601 = vsinq.f32.pop %v1598
        %vm1602 = vweird.f32 %v470
        %v1603 = vand.u32 %v1599, 3
        %vm1604 = vcmp.lt.s32.totalorder %v1603, 2
        %vm1605 = vcmp.eq.s32.totalorder %v1603, 0
        %v1606 = vxor.u32 %v1601, 2147483648
        %v1607 = vsel %vm1605, %v1600, %v1606
        %vm1608 = vcmp.eq.s32.totalorder %v1603, 2
        %v1609 = vxor.u32 %v1600, 2147483648
        %v1610 = vsel %vm1608, %v1609, %v1601
        %v1611 = vsel %vm1604, %v1607, %v1610
        %v1612 = vsel %vm1602, nan, %v1611
        %v1613 = vand.u32 2147483647, %v471
        %vm1614 = vcmp.le.f32.partialorder %v1613, 0.7853982
        %vm1615 = vcmp.lt.s32.totalorder %v471, 0
        %v1616 = vand.u32 %v471, 2139095040
        %v1617 = vshrl.u32 %v1616, 23
        %v1618 = vsub.s32 %v1617, 127
        %v1619 = vand.u32 2147483647, %v471
        %v1620 = vand.u32 %v1619, 8388607
        %v1621 = vor.u32 %v1620, 8388608
        %v1622 = vsub.s32 0, %v1621
        %v1623 = vadd.s32 %v1618, 1
        %vm1624 = vcmp.gt.s32.totalorder %v1623, 0
        %v1625 = vsel %vm1624, %v1623, 0
        %v1626 = vshrl.u32 %v1625, 5
        %v1627 = vand.u32 %v1625, 31
        %v1628 = vsub.s32 32, %v1627
        %v1629 = vshrl.u32 683565275, %v1628
        %v1630 = vshll.u32 683565275, %v1627
        %v1631 = vshrl.u32 2475754826, %v1628
        %v1632 = vor.u32 %v1630, %v1631
        %v1633 = vshll.u32 2475754826, %v1627
        %v1634 = vshrl.u32 2131351028, %v1628
        %v1635 = vor.u32 %v1633, %v1634
        %v1636 = vshll.u32 2131351028, %v1627
        %v1637 = vshrl.u32 2102212464, %v1628
        %v1638 = vor.u32 %v1636, %v1637
        %v1639 = vshll.u32 2102212464, %v1627
        %v1640 = vshrl.u32 920167782, %v1628
        %v1641 = vor.u32 %v1639, %v1640
        %v1642 = vshll.u32 920167782, %v1627
        %v1643 = vshrl.u32 1326507024, %v1628
        %v1644 = vor.u32 %v1642, %v1643
        %vm1645 = vcmp.lt.s32.totalorder %v1626, 1
        %vm1646 = vcmp.lt.s32.totalorder %v1626, 2
        %vm1647 = vcmp.lt.s32.totalorder %v1626, 3
        %vm1648 = vcmp.lt.s32.totalorder %v1626, 4
        %v1649 = vsel %vm1645, %v1629, %v1632
        %v1650 = vsel %vm1648, %v1638, 2102212464
        %v1651 = vsel %vm1647, %v1635, %v1650
        %v1652 = vsel %vm1646, %v1649, %v1651
        %v1653 = vsel %vm1645, %v1632, %v1635
        %v1654 = vsel %vm1648, %v1641, 920167782
        %v1655 = vsel %vm1647, %v1638, %v1654
        %v1656 = vsel %vm1646, %v1653, %v1655
        %v1657 = vsel %vm1645, %v1635, %v1638
        %v1658 = vsel %vm1648, %v1644, 1326507024
        %v1659 = vsel %vm1647, %v1641, %v1658
        %v1660 = vsel %vm1646, %v1657, %v1659
        %v1661 = vshll.u32 %v1621, 8
        %v1662 = vmul.u32.u64.compose %v1661, %v1660
        %v1663 = vextract.low.u32 %v1662
        %v1664 = vextract.high.u32 %v1662
        %v1665 = vmul.u32.u64.compose %v1661, %v1656
        %v1666 = vextract.low.u32 %v1665
        %v1667 = vextract.high.u32 %v1665
        %v1668 = vmul.u32 %v1661, %v1652
        %v1669 = vadd.s32 %v1664, %v1666
        %vm1670 = vc.u32 %v1664, %v1666
        %v1671 = vadd.s32 %v1667, 1
        %v1672 = vsel %vm1670, %v1671, %v1667
        %v1673 = vadd.s32 %v1668, %v1672
        %v1674 = vadd.s32 %v1673, 536870912
        %v1675 = vshrl.u32 %v1674, 30
        %v1676 = vshll.u32 %v1675, 30
        %v1677 = vsub.s32 %v1673, %v1676
        %vm1678 = vcmp.lt.s32.totalorder %v1677, 0
        %v1679 = vsub.s32 0, %v1677
        %v1680 = vsel %vm1678, %v1679, %v1677
        %v1681 = vclz %v1680
        %v1682 = vsub.s32 %v1681, 2
        %vm1683 = vcmp.gt.s32.totalorder 0, %v1682
        %v1684 = vsel %vm1683, 0, %v1682
        %v1685 = vsub.s32 32, %v1684
        %v1686 = vshll.u32 %v1677, %v1684
        %v1687 = vshrl.u32 %v1669, %v1685
        %v1688 = vor.u32 %v1686, %v1687
        %v1689 = vsub.s32 4294967266, %v1684
        %v1690 = vadd.s32 %v1689, 127
        %v1691 = vshll.u32 %v1690, 23
        %v1692 = vor.u32 4788187, %v1691
        %v1693 = vand.u32 2147483647, %v1692
        %v1695 = vcvt.s32.f32 %v1688
        %v1696 = vmul.f32 %v1695, %v1693
        %v1697 = vxor.u32 %v1696, 2147483648
        %v1698 = vsel %vm1615, %v1697, %v1696
        %v1699 = vsub.s32 4, %v1675
        %v1700 = vsel %vm1615, %v1699, %v1675
        %v1701 = vsel %vm1614, %v471, %v1698
        %v1702 = vsel %vm1614, 0, %v1700
        %v1703 = vcosq.f32.pop %v1701
        %v1704 = vsinq.f32.pop %v1701
        %vm1705 = vweird.f32 %v471
        %v1706 = vand.u32 %v1702, 3
        %vm1707 = vcmp.lt.s32.totalorder %v1706, 2
        %vm1708 = vcmp.eq.s32.totalorder %v1706, 0
        %v1709 = vxor.u32 %v1704, 2147483648
        %v1710 = vsel %vm1708, %v1703, %v1709
        %vm1711 = vcmp.eq.s32.totalorder %v1706, 2
        %v1712 = vxor.u32 %v1703, 2147483648
        %v1713 = vsel %vm1711, %v1712, %v1704
        %v1714 = vsel %vm1707, %v1710, %v1713
        %v1715 = vsel %vm1705, nan, %v1714
        %v1716 = vand.u32 2147483647, %v472
        %vm1717 = vcmp.le.f32.partialorder %v1716, 0.7853982
        %vm1718 = vcmp.lt.s32.totalorder %v472, 0
        %v1719 = vand.u32 %v472, 2139095040
        %v1720 = vshrl.u32 %v1719, 23
        %v1721 = vsub.s32 %v1720, 127
        %v1722 = vand.u32 2147483647, %v472
        %v1723 = vand.u32 %v1722, 8388607
        %v1724 = vor.u32 %v1723, 8388608
        %v1725 = vsub.s32 0, %v1724
        %v1726 = vadd.s32 %v1721, 1
        %vm1727 = vcmp.gt.s32.totalorder %v1726, 0
        %v1728 = vsel %vm1727, %v1726, 0
        %v1729 = vshrl.u32 %v1728, 5
        %v1730 = vand.u32 %v1728, 31
        %v1731 = vsub.s32 32, %v1730
        %v1732 = vshrl.u32 683565275, %v1731
        %v1733 = vshll.u32 683565275, %v1730
        %v1734 = vshrl.u32 2475754826, %v1731
        %v1735 = vor.u32 %v1733, %v1734
        %v1736 = vshll.u32 2475754826, %v1730
        %v1737 = vshrl.u32 2131351028, %v1731
        %v1738 = vor.u32 %v1736, %v1737
        %v1739 = vshll.u32 2131351028, %v1730
        %v1740 = vshrl.u32 2102212464, %v1731
        %v1741 = vor.u32 %v1739, %v1740
        %v1742 = vshll.u32 2102212464, %v1730
        %v1743 = vshrl.u32 920167782, %v1731
        %v1744 = vor.u32 %v1742, %v1743
        %v1745 = vshll.u32 920167782, %v1730
        %v1746 = vshrl.u32 1326507024, %v1731
        %v1747 = vor.u32 %v1745, %v1746
        %vm1748 = vcmp.lt.s32.totalorder %v1729, 1
        %vm1749 = vcmp.lt.s32.totalorder %v1729, 2
        %vm1750 = vcmp.lt.s32.totalorder %v1729, 3
        %vm1751 = vcmp.lt.s32.totalorder %v1729, 4
        %v1752 = vsel %vm1748, %v1732, %v1735
        %v1753 = vsel %vm1751, %v1741, 2102212464
        %v1754 = vsel %vm1750, %v1738, %v1753
        %v1755 = vsel %vm1749, %v1752, %v1754
        %v1756 = vsel %vm1748, %v1735, %v1738
        %v1757 = vsel %vm1751, %v1744, 920167782
        %v1758 = vsel %vm1750, %v1741, %v1757
        %v1759 = vsel %vm1749, %v1756, %v1758
        %v1760 = vsel %vm1748, %v1738, %v1741
        %v1761 = vsel %vm1751, %v1747, 1326507024
        %v1762 = vsel %vm1750, %v1744, %v1761
        %v1763 = vsel %vm1749, %v1760, %v1762
        %v1764 = vshll.u32 %v1724, 8
        %v1765 = vmul.u32.u64.compose %v1764, %v1763
        %v1766 = vextract.low.u32 %v1765
        %v1767 = vextract.high.u32 %v1765
        %v1768 = vmul.u32.u64.compose %v1764, %v1759
        %v1769 = vextract.low.u32 %v1768
        %v1770 = vextract.high.u32 %v1768
        %v1771 = vmul.u32 %v1764, %v1755
        %v1772 = vadd.s32 %v1767, %v1769
        %vm1773 = vc.u32 %v1767, %v1769
        %v1774 = vadd.s32 %v1770, 1
        %v1775 = vsel %vm1773, %v1774, %v1770
        %v1776 = vadd.s32 %v1771, %v1775
        %v1777 = vadd.s32 %v1776, 536870912
        %v1778 = vshrl.u32 %v1777, 30
        %v1779 = vshll.u32 %v1778, 30
        %v1780 = vsub.s32 %v1776, %v1779
        %vm1781 = vcmp.lt.s32.totalorder %v1780, 0
        %v1782 = vsub.s32 0, %v1780
        %v1783 = vsel %vm1781, %v1782, %v1780
        %v1784 = vclz %v1783
        %v1785 = vsub.s32 %v1784, 2
        %vm1786 = vcmp.gt.s32.totalorder 0, %v1785
        %v1787 = vsel %vm1786, 0, %v1785
        %v1788 = vsub.s32 32, %v1787
        %v1789 = vshll.u32 %v1780, %v1787
        %v1790 = vshrl.u32 %v1772, %v1788
        %v1791 = vor.u32 %v1789, %v1790
        %v1792 = vsub.s32 4294967266, %v1787
        %v1793 = vadd.s32 %v1792, 127
        %v1794 = vshll.u32 %v1793, 23
        %v1795 = vor.u32 4788187, %v1794
        %v1796 = vand.u32 2147483647, %v1795
        %v1798 = vcvt.s32.f32 %v1791
        %v1799 = vmul.f32 %v1798, %v1796
        %v1800 = vxor.u32 %v1799, 2147483648
        %v1801 = vsel %vm1718, %v1800, %v1799
        %v1802 = vsub.s32 4, %v1778
        %v1803 = vsel %vm1718, %v1802, %v1778
        %v1804 = vsel %vm1717, %v472, %v1801
        %v1805 = vsel %vm1717, 0, %v1803
        %v1806 = vcosq.f32.pop %v1804
        %v1807 = vsinq.f32.pop %v1804
        %vm1808 = vweird.f32 %v472
        %v1809 = vand.u32 %v1805, 3
        %vm1810 = vcmp.lt.s32.totalorder %v1809, 2
        %vm1811 = vcmp.eq.s32.totalorder %v1809, 0
        %v1812 = vxor.u32 %v1807, 2147483648
        %v1813 = vsel %vm1811, %v1806, %v1812
        %vm1814 = vcmp.eq.s32.totalorder %v1809, 2
        %v1815 = vxor.u32 %v1806, 2147483648
        %v1816 = vsel %vm1814, %v1815, %v1807
        %v1817 = vsel %vm1810, %v1813, %v1816
        %v1818 = vsel %vm1808, nan, %v1817
        %v1819 = vand.u32 2147483647, %v473
        %vm1820 = vcmp.le.f32.partialorder %v1819, 0.7853982
        %vm1821 = vcmp.lt.s32.totalorder %v473, 0
        %v1822 = vand.u32 %v473, 2139095040
        %v1823 = vshrl.u32 %v1822, 23
        %v1824 = vsub.s32 %v1823, 127
        %v1825 = vand.u32 2147483647, %v473
        %v1826 = vand.u32 %v1825, 8388607
        %v1827 = vor.u32 %v1826, 8388608
        %v1828 = vsub.s32 0, %v1827
        %v1829 = vadd.s32 %v1824, 1
        %vm1830 = vcmp.gt.s32.totalorder %v1829, 0
        %v1831 = vsel %vm1830, %v1829, 0
        %v1832 = vshrl.u32 %v1831, 5
        %v1833 = vand.u32 %v1831, 31
        %v1834 = vsub.s32 32, %v1833
        %v1835 = vshrl.u32 683565275, %v1834
        %v1836 = vshll.u32 683565275, %v1833
        %v1837 = vshrl.u32 2475754826, %v1834
        %v1838 = vor.u32 %v1836, %v1837
        %v1839 = vshll.u32 2475754826, %v1833
        %v1840 = vshrl.u32 2131351028, %v1834
        %v1841 = vor.u32 %v1839, %v1840
        %v1842 = vshll.u32 2131351028, %v1833
        %v1843 = vshrl.u32 2102212464, %v1834
        %v1844 = vor.u32 %v1842, %v1843
        %v1845 = vshll.u32 2102212464, %v1833
        %v1846 = vshrl.u32 920167782, %v1834
        %v1847 = vor.u32 %v1845, %v1846
        %v1848 = vshll.u32 920167782, %v1833
        %v1849 = vshrl.u32 1326507024, %v1834
        %v1850 = vor.u32 %v1848, %v1849
        %vm1851 = vcmp.lt.s32.totalorder %v1832, 1
        %vm1852 = vcmp.lt.s32.totalorder %v1832, 2
        %vm1853 = vcmp.lt.s32.totalorder %v1832, 3
        %vm1854 = vcmp.lt.s32.totalorder %v1832, 4
        %v1855 = vsel %vm1851, %v1835, %v1838
        %v1856 = vsel %vm1854, %v1844, 2102212464
        %v1857 = vsel %vm1853, %v1841, %v1856
        %v1858 = vsel %vm1852, %v1855, %v1857
        %v1859 = vsel %vm1851, %v1838, %v1841
        %v1860 = vsel %vm1854, %v1847, 920167782
        %v1861 = vsel %vm1853, %v1844, %v1860
        %v1862 = vsel %vm1852, %v1859, %v1861
        %v1863 = vsel %vm1851, %v1841, %v1844
        %v1864 = vsel %vm1854, %v1850, 1326507024
        %v1865 = vsel %vm1853, %v1847, %v1864
        %v1866 = vsel %vm1852, %v1863, %v1865
        %v1867 = vshll.u32 %v1827, 8
        %v1868 = vmul.u32.u64.compose %v1867, %v1866
        %v1869 = vextract.low.u32 %v1868
        %v1870 = vextract.high.u32 %v1868
        %v1871 = vmul.u32.u64.compose %v1867, %v1862
        %v1872 = vextract.low.u32 %v1871
        %v1873 = vextract.high.u32 %v1871
        %v1874 = vmul.u32 %v1867, %v1858
        %v1875 = vadd.s32 %v1870, %v1872
        %vm1876 = vc.u32 %v1870, %v1872
        %v1877 = vadd.s32 %v1873, 1
        %v1878 = vsel %vm1876, %v1877, %v1873
        %v1879 = vadd.s32 %v1874, %v1878
        %v1880 = vadd.s32 %v1879, 536870912
        %v1881 = vshrl.u32 %v1880, 30
        %v1882 = vshll.u32 %v1881, 30
        %v1883 = vsub.s32 %v1879, %v1882
        %vm1884 = vcmp.lt.s32.totalorder %v1883, 0
        %v1885 = vsub.s32 0, %v1883
        %v1886 = vsel %vm1884, %v1885, %v1883
        %v1887 = vclz %v1886
        %v1888 = vsub.s32 %v1887, 2
        %vm1889 = vcmp.gt.s32.totalorder 0, %v1888
        %v1890 = vsel %vm1889, 0, %v1888
        %v1891 = vsub.s32 32, %v1890
        %v1892 = vshll.u32 %v1883, %v1890
        %v1893 = vshrl.u32 %v1875, %v1891
        %v1894 = vor.u32 %v1892, %v1893
        %v1895 = vsub.s32 4294967266, %v1890
        %v1896 = vadd.s32 %v1895, 127
        %v1897 = vshll.u32 %v1896, 23
        %v1898 = vor.u32 4788187, %v1897
        %v1899 = vand.u32 2147483647, %v1898
        %v1901 = vcvt.s32.f32 %v1894
        %v1902 = vmul.f32 %v1901, %v1899
        %v1903 = vxor.u32 %v1902, 2147483648
        %v1904 = vsel %vm1821, %v1903, %v1902
        %v1905 = vsub.s32 4, %v1881
        %v1906 = vsel %vm1821, %v1905, %v1881
        %v1907 = vsel %vm1820, %v473, %v1904
        %v1908 = vsel %vm1820, 0, %v1906
        %v1909 = vcosq.f32.pop %v1907
        %v1910 = vsinq.f32.pop %v1907
        %vm1911 = vweird.f32 %v473
        %v1912 = vand.u32 %v1908, 3
        %vm1913 = vcmp.lt.s32.totalorder %v1912, 2
        %vm1914 = vcmp.eq.s32.totalorder %v1912, 0
        %v1915 = vxor.u32 %v1910, 2147483648
        %v1916 = vsel %vm1914, %v1909, %v1915
        %vm1917 = vcmp.eq.s32.totalorder %v1912, 2
        %v1918 = vxor.u32 %v1909, 2147483648
        %v1919 = vsel %vm1917, %v1918, %v1910
        %v1920 = vsel %vm1913, %v1916, %v1919
        %v1921 = vsel %vm1911, nan, %v1920
        %v1922 = vand.u32 2147483647, %v474
        %vm1923 = vcmp.le.f32.partialorder %v1922, 0.7853982
        %vm1924 = vcmp.lt.s32.totalorder %v474, 0
        %v1925 = vand.u32 %v474, 2139095040
        %v1926 = vshrl.u32 %v1925, 23
        %v1927 = vsub.s32 %v1926, 127
        %v1928 = vand.u32 2147483647, %v474
        %v1929 = vand.u32 %v1928, 8388607
        %v1930 = vor.u32 %v1929, 8388608
        %v1931 = vsub.s32 0, %v1930
        %v1932 = vadd.s32 %v1927, 1
        %vm1933 = vcmp.gt.s32.totalorder %v1932, 0
        %v1934 = vsel %vm1933, %v1932, 0
        %v1935 = vshrl.u32 %v1934, 5
        %v1936 = vand.u32 %v1934, 31
        %v1937 = vsub.s32 32, %v1936
        %v1938 = vshrl.u32 683565275, %v1937
        %v1939 = vshll.u32 683565275, %v1936
        %v1940 = vshrl.u32 2475754826, %v1937
        %v1941 = vor.u32 %v1939, %v1940
        %v1942 = vshll.u32 2475754826, %v1936
        %v1943 = vshrl.u32 2131351028, %v1937
        %v1944 = vor.u32 %v1942, %v1943
        %v1945 = vshll.u32 2131351028, %v1936
        %v1946 = vshrl.u32 2102212464, %v1937
        %v1947 = vor.u32 %v1945, %v1946
        %v1948 = vshll.u32 2102212464, %v1936
        %v1949 = vshrl.u32 920167782, %v1937
        %v1950 = vor.u32 %v1948, %v1949
        %v1951 = vshll.u32 920167782, %v1936
        %v1952 = vshrl.u32 1326507024, %v1937
        %v1953 = vor.u32 %v1951, %v1952
        %vm1954 = vcmp.lt.s32.totalorder %v1935, 1
        %vm1955 = vcmp.lt.s32.totalorder %v1935, 2
        %vm1956 = vcmp.lt.s32.totalorder %v1935, 3
        %vm1957 = vcmp.lt.s32.totalorder %v1935, 4
        %v1958 = vsel %vm1954, %v1938, %v1941
        %v1959 = vsel %vm1957, %v1947, 2102212464
        %v1960 = vsel %vm1956, %v1944, %v1959
        %v1961 = vsel %vm1955, %v1958, %v1960
        %v1962 = vsel %vm1954, %v1941, %v1944
        %v1963 = vsel %vm1957, %v1950, 920167782
        %v1964 = vsel %vm1956, %v1947, %v1963
        %v1965 = vsel %vm1955, %v1962, %v1964
        %v1966 = vsel %vm1954, %v1944, %v1947
        %v1967 = vsel %vm1957, %v1953, 1326507024
        %v1968 = vsel %vm1956, %v1950, %v1967
        %v1969 = vsel %vm1955, %v1966, %v1968
        %v1970 = vshll.u32 %v1930, 8
        %v1971 = vmul.u32.u64.compose %v1970, %v1969
        %v1972 = vextract.low.u32 %v1971
        %v1973 = vextract.high.u32 %v1971
        %v1974 = vmul.u32.u64.compose %v1970, %v1965
        %v1975 = vextract.low.u32 %v1974
        %v1976 = vextract.high.u32 %v1974
        %v1977 = vmul.u32 %v1970, %v1961
        %v1978 = vadd.s32 %v1973, %v1975
        %vm1979 = vc.u32 %v1973, %v1975
        %v1980 = vadd.s32 %v1976, 1
        %v1981 = vsel %vm1979, %v1980, %v1976
        %v1982 = vadd.s32 %v1977, %v1981
        %v1983 = vadd.s32 %v1982, 536870912
        %v1984 = vshrl.u32 %v1983, 30
        %v1985 = vshll.u32 %v1984, 30
        %v1986 = vsub.s32 %v1982, %v1985
        %vm1987 = vcmp.lt.s32.totalorder %v1986, 0
        %v1988 = vsub.s32 0, %v1986
        %v1989 = vsel %vm1987, %v1988, %v1986
        %v1990 = vclz %v1989
        %v1991 = vsub.s32 %v1990, 2
        %vm1992 = vcmp.gt.s32.totalorder 0, %v1991
        %v1993 = vsel %vm1992, 0, %v1991
        %v1994 = vsub.s32 32, %v1993
        %v1995 = vshll.u32 %v1986, %v1993
        %v1996 = vshrl.u32 %v1978, %v1994
        %v1997 = vor.u32 %v1995, %v1996
        %v1998 = vsub.s32 4294967266, %v1993
        %v1999 = vadd.s32 %v1998, 127
        %v2000 = vshll.u32 %v1999, 23
        %v2001 = vor.u32 4788187, %v2000
        %v2002 = vand.u32 2147483647, %v2001
        %v2004 = vcvt.s32.f32 %v1997
        %v2005 = vmul.f32 %v2004, %v2002
        %v2006 = vxor.u32 %v2005, 2147483648
        %v2007 = vsel %vm1924, %v2006, %v2005
        %v2008 = vsub.s32 4, %v1984
        %v2009 = vsel %vm1924, %v2008, %v1984
        %v2010 = vsel %vm1923, %v474, %v2007
        %v2011 = vsel %vm1923, 0, %v2009
        %v2012 = vcosq.f32.pop %v2010
        %v2013 = vsinq.f32.pop %v2010
        %vm2014 = vweird.f32 %v474
        %v2015 = vand.u32 %v2011, 3
        %vm2016 = vcmp.lt.s32.totalorder %v2015, 2
        %vm2017 = vcmp.eq.s32.totalorder %v2015, 0
        %v2018 = vxor.u32 %v2013, 2147483648
        %v2019 = vsel %vm2017, %v2012, %v2018
        %vm2020 = vcmp.eq.s32.totalorder %v2015, 2
        %v2021 = vxor.u32 %v2012, 2147483648
        %v2022 = vsel %vm2020, %v2021, %v2013
        %v2023 = vsel %vm2016, %v2019, %v2022
        %v2024 = vsel %vm2014, nan, %v2023
        %v2025 = vand.u32 2147483647, %v475
        %vm2026 = vcmp.le.f32.partialorder %v2025, 0.7853982
        %vm2027 = vcmp.lt.s32.totalorder %v475, 0
        %v2028 = vand.u32 %v475, 2139095040
        %v2029 = vshrl.u32 %v2028, 23
        %v2030 = vsub.s32 %v2029, 127
        %v2031 = vand.u32 2147483647, %v475
        %v2032 = vand.u32 %v2031, 8388607
        %v2033 = vor.u32 %v2032, 8388608
        %v2034 = vsub.s32 0, %v2033
        %v2035 = vadd.s32 %v2030, 1
        %vm2036 = vcmp.gt.s32.totalorder %v2035, 0
        %v2037 = vsel %vm2036, %v2035, 0
        %v2038 = vshrl.u32 %v2037, 5
        %v2039 = vand.u32 %v2037, 31
        %v2040 = vsub.s32 32, %v2039
        %v2041 = vshrl.u32 683565275, %v2040
        %v2042 = vshll.u32 683565275, %v2039
        %v2043 = vshrl.u32 2475754826, %v2040
        %v2044 = vor.u32 %v2042, %v2043
        %v2045 = vshll.u32 2475754826, %v2039
        %v2046 = vshrl.u32 2131351028, %v2040
        %v2047 = vor.u32 %v2045, %v2046
        %v2048 = vshll.u32 2131351028, %v2039
        %v2049 = vshrl.u32 2102212464, %v2040
        %v2050 = vor.u32 %v2048, %v2049
        %v2051 = vshll.u32 2102212464, %v2039
        %v2052 = vshrl.u32 920167782, %v2040
        %v2053 = vor.u32 %v2051, %v2052
        %v2054 = vshll.u32 920167782, %v2039
        %v2055 = vshrl.u32 1326507024, %v2040
        %v2056 = vor.u32 %v2054, %v2055
        %vm2057 = vcmp.lt.s32.totalorder %v2038, 1
        %vm2058 = vcmp.lt.s32.totalorder %v2038, 2
        %vm2059 = vcmp.lt.s32.totalorder %v2038, 3
        %vm2060 = vcmp.lt.s32.totalorder %v2038, 4
        %v2061 = vsel %vm2057, %v2041, %v2044
        %v2062 = vsel %vm2060, %v2050, 2102212464
        %v2063 = vsel %vm2059, %v2047, %v2062
        %v2064 = vsel %vm2058, %v2061, %v2063
        %v2065 = vsel %vm2057, %v2044, %v2047
        %v2066 = vsel %vm2060, %v2053, 920167782
        %v2067 = vsel %vm2059, %v2050, %v2066
        %v2068 = vsel %vm2058, %v2065, %v2067
        %v2069 = vsel %vm2057, %v2047, %v2050
        %v2070 = vsel %vm2060, %v2056, 1326507024
        %v2071 = vsel %vm2059, %v2053, %v2070
        %v2072 = vsel %vm2058, %v2069, %v2071
        %v2073 = vshll.u32 %v2033, 8
        %v2074 = vmul.u32.u64.compose %v2073, %v2072
        %v2075 = vextract.low.u32 %v2074
        %v2076 = vextract.high.u32 %v2074
        %v2077 = vmul.u32.u64.compose %v2073, %v2068
        %v2078 = vextract.low.u32 %v2077
        %v2079 = vextract.high.u32 %v2077
        %v2080 = vmul.u32 %v2073, %v2064
        %v2081 = vadd.s32 %v2076, %v2078
        %vm2082 = vc.u32 %v2076, %v2078
        %v2083 = vadd.s32 %v2079, 1
        %v2084 = vsel %vm2082, %v2083, %v2079
        %v2085 = vadd.s32 %v2080, %v2084
        %v2086 = vadd.s32 %v2085, 536870912
        %v2087 = vshrl.u32 %v2086, 30
        %v2088 = vshll.u32 %v2087, 30
        %v2089 = vsub.s32 %v2085, %v2088
        %vm2090 = vcmp.lt.s32.totalorder %v2089, 0
        %v2091 = vsub.s32 0, %v2089
        %v2092 = vsel %vm2090, %v2091, %v2089
        %v2093 = vclz %v2092
        %v2094 = vsub.s32 %v2093, 2
        %vm2095 = vcmp.gt.s32.totalorder 0, %v2094
        %v2096 = vsel %vm2095, 0, %v2094
        %v2097 = vsub.s32 32, %v2096
        %v2098 = vshll.u32 %v2089, %v2096
        %v2099 = vshrl.u32 %v2081, %v2097
        %v2100 = vor.u32 %v2098, %v2099
        %v2101 = vsub.s32 4294967266, %v2096
        %v2102 = vadd.s32 %v2101, 127
        %v2103 = vshll.u32 %v2102, 23
        %v2104 = vor.u32 4788187, %v2103
        %v2105 = vand.u32 2147483647, %v2104
        %v2107 = vcvt.s32.f32 %v2100
        %v2108 = vmul.f32 %v2107, %v2105
        %v2109 = vxor.u32 %v2108, 2147483648
        %v2110 = vsel %vm2027, %v2109, %v2108
        %v2111 = vsub.s32 4, %v2087
        %v2112 = vsel %vm2027, %v2111, %v2087
        %v2113 = vsel %vm2026, %v475, %v2110
        %v2114 = vsel %vm2026, 0, %v2112
        %v2115 = vcosq.f32.pop %v2113
        %v2116 = vsinq.f32.pop %v2113
        %vm2117 = vweird.f32 %v475
        %v2118 = vand.u32 %v2114, 3
        %vm2119 = vcmp.lt.s32.totalorder %v2118, 2
        %vm2120 = vcmp.eq.s32.totalorder %v2118, 0
        %v2121 = vxor.u32 %v2116, 2147483648
        %v2122 = vsel %vm2120, %v2115, %v2121
        %vm2123 = vcmp.eq.s32.totalorder %v2118, 2
        %v2124 = vxor.u32 %v2115, 2147483648
        %v2125 = vsel %vm2123, %v2124, %v2116
        %v2126 = vsel %vm2119, %v2122, %v2125
        %v2127 = vsel %vm2117, nan, %v2126
        %v2128 = vand.u32 2147483647, %v476
        %vm2129 = vcmp.le.f32.partialorder %v2128, 0.7853982
        %vm2130 = vcmp.lt.s32.totalorder %v476, 0
        %v2131 = vand.u32 %v476, 2139095040
        %v2132 = vshrl.u32 %v2131, 23
        %v2133 = vsub.s32 %v2132, 127
        %v2134 = vand.u32 2147483647, %v476
        %v2135 = vand.u32 %v2134, 8388607
        %v2136 = vor.u32 %v2135, 8388608
        %v2137 = vsub.s32 0, %v2136
        %v2138 = vadd.s32 %v2133, 1
        %vm2139 = vcmp.gt.s32.totalorder %v2138, 0
        %v2140 = vsel %vm2139, %v2138, 0
        %v2141 = vshrl.u32 %v2140, 5
        %v2142 = vand.u32 %v2140, 31
        %v2143 = vsub.s32 32, %v2142
        %v2144 = vshrl.u32 683565275, %v2143
        %v2145 = vshll.u32 683565275, %v2142
        %v2146 = vshrl.u32 2475754826, %v2143
        %v2147 = vor.u32 %v2145, %v2146
        %v2148 = vshll.u32 2475754826, %v2142
        %v2149 = vshrl.u32 2131351028, %v2143
        %v2150 = vor.u32 %v2148, %v2149
        %v2151 = vshll.u32 2131351028, %v2142
        %v2152 = vshrl.u32 2102212464, %v2143
        %v2153 = vor.u32 %v2151, %v2152
        %v2154 = vshll.u32 2102212464, %v2142
        %v2155 = vshrl.u32 920167782, %v2143
        %v2156 = vor.u32 %v2154, %v2155
        %v2157 = vshll.u32 920167782, %v2142
        %v2158 = vshrl.u32 1326507024, %v2143
        %v2159 = vor.u32 %v2157, %v2158
        %vm2160 = vcmp.lt.s32.totalorder %v2141, 1
        %vm2161 = vcmp.lt.s32.totalorder %v2141, 2
        %vm2162 = vcmp.lt.s32.totalorder %v2141, 3
        %vm2163 = vcmp.lt.s32.totalorder %v2141, 4
        %v2164 = vsel %vm2160, %v2144, %v2147
        %v2165 = vsel %vm2163, %v2153, 2102212464
        %v2166 = vsel %vm2162, %v2150, %v2165
        %v2167 = vsel %vm2161, %v2164, %v2166
        %v2168 = vsel %vm2160, %v2147, %v2150
        %v2169 = vsel %vm2163, %v2156, 920167782
        %v2170 = vsel %vm2162, %v2153, %v2169
        %v2171 = vsel %vm2161, %v2168, %v2170
        %v2172 = vsel %vm2160, %v2150, %v2153
        %v2173 = vsel %vm2163, %v2159, 1326507024
        %v2174 = vsel %vm2162, %v2156, %v2173
        %v2175 = vsel %vm2161, %v2172, %v2174
        %v2176 = vshll.u32 %v2136, 8
        %v2177 = vmul.u32.u64.compose %v2176, %v2175
        %v2178 = vextract.low.u32 %v2177
        %v2179 = vextract.high.u32 %v2177
        %v2180 = vmul.u32.u64.compose %v2176, %v2171
        %v2181 = vextract.low.u32 %v2180
        %v2182 = vextract.high.u32 %v2180
        %v2183 = vmul.u32 %v2176, %v2167
        %v2184 = vadd.s32 %v2179, %v2181
        %vm2185 = vc.u32 %v2179, %v2181
        %v2186 = vadd.s32 %v2182, 1
        %v2187 = vsel %vm2185, %v2186, %v2182
        %v2188 = vadd.s32 %v2183, %v2187
        %v2189 = vadd.s32 %v2188, 536870912
        %v2190 = vshrl.u32 %v2189, 30
        %v2191 = vshll.u32 %v2190, 30
        %v2192 = vsub.s32 %v2188, %v2191
        %vm2193 = vcmp.lt.s32.totalorder %v2192, 0
        %v2194 = vsub.s32 0, %v2192
        %v2195 = vsel %vm2193, %v2194, %v2192
        %v2196 = vclz %v2195
        %v2197 = vsub.s32 %v2196, 2
        %vm2198 = vcmp.gt.s32.totalorder 0, %v2197
        %v2199 = vsel %vm2198, 0, %v2197
        %v2200 = vsub.s32 32, %v2199
        %v2201 = vshll.u32 %v2192, %v2199
        %v2202 = vshrl.u32 %v2184, %v2200
        %v2203 = vor.u32 %v2201, %v2202
        %v2204 = vsub.s32 4294967266, %v2199
        %v2205 = vadd.s32 %v2204, 127
        %v2206 = vshll.u32 %v2205, 23
        %v2207 = vor.u32 4788187, %v2206
        %v2208 = vand.u32 2147483647, %v2207
        %v2210 = vcvt.s32.f32 %v2203
        %v2211 = vmul.f32 %v2210, %v2208
        %v2212 = vxor.u32 %v2211, 2147483648
        %v2213 = vsel %vm2130, %v2212, %v2211
        %v2214 = vsub.s32 4, %v2190
        %v2215 = vsel %vm2130, %v2214, %v2190
        %v2216 = vsel %vm2129, %v476, %v2213
        %v2217 = vsel %vm2129, 0, %v2215
        %v2218 = vcosq.f32.pop %v2216
        %v2219 = vsinq.f32.pop %v2216
        %vm2220 = vweird.f32 %v476
        %v2221 = vand.u32 %v2217, 3
        %vm2222 = vcmp.lt.s32.totalorder %v2221, 2
        %vm2223 = vcmp.eq.s32.totalorder %v2221, 0
        %v2224 = vxor.u32 %v2219, 2147483648
        %v2225 = vsel %vm2223, %v2218, %v2224
        %vm2226 = vcmp.eq.s32.totalorder %v2221, 2
        %v2227 = vxor.u32 %v2218, 2147483648
        %v2228 = vsel %vm2226, %v2227, %v2219
        %v2229 = vsel %vm2222, %v2225, %v2228
        %v2230 = vsel %vm2220, nan, %v2229
        %v2231 = vand.u32 2147483647, %v477
        %vm2232 = vcmp.le.f32.partialorder %v2231, 0.7853982
        %vm2233 = vcmp.lt.s32.totalorder %v477, 0
        %v2234 = vand.u32 %v477, 2139095040
        %v2235 = vshrl.u32 %v2234, 23
        %v2236 = vsub.s32 %v2235, 127
        %v2237 = vand.u32 2147483647, %v477
        %v2238 = vand.u32 %v2237, 8388607
        %v2239 = vor.u32 %v2238, 8388608
        %v2240 = vsub.s32 0, %v2239
        %v2241 = vadd.s32 %v2236, 1
        %vm2242 = vcmp.gt.s32.totalorder %v2241, 0
        %v2243 = vsel %vm2242, %v2241, 0
        %v2244 = vshrl.u32 %v2243, 5
        %v2245 = vand.u32 %v2243, 31
        %v2246 = vsub.s32 32, %v2245
        %v2247 = vshrl.u32 683565275, %v2246
        %v2248 = vshll.u32 683565275, %v2245
        %v2249 = vshrl.u32 2475754826, %v2246
        %v2250 = vor.u32 %v2248, %v2249
        %v2251 = vshll.u32 2475754826, %v2245
        %v2252 = vshrl.u32 2131351028, %v2246
        %v2253 = vor.u32 %v2251, %v2252
        %v2254 = vshll.u32 2131351028, %v2245
        %v2255 = vshrl.u32 2102212464, %v2246
        %v2256 = vor.u32 %v2254, %v2255
        %v2257 = vshll.u32 2102212464, %v2245
        %v2258 = vshrl.u32 920167782, %v2246
        %v2259 = vor.u32 %v2257, %v2258
        %v2260 = vshll.u32 920167782, %v2245
        %v2261 = vshrl.u32 1326507024, %v2246
        %v2262 = vor.u32 %v2260, %v2261
        %vm2263 = vcmp.lt.s32.totalorder %v2244, 1
        %vm2264 = vcmp.lt.s32.totalorder %v2244, 2
        %vm2265 = vcmp.lt.s32.totalorder %v2244, 3
        %vm2266 = vcmp.lt.s32.totalorder %v2244, 4
        %v2267 = vsel %vm2263, %v2247, %v2250
        %v2268 = vsel %vm2266, %v2256, 2102212464
        %v2269 = vsel %vm2265, %v2253, %v2268
        %v2270 = vsel %vm2264, %v2267, %v2269
        %v2271 = vsel %vm2263, %v2250, %v2253
        %v2272 = vsel %vm2266, %v2259, 920167782
        %v2273 = vsel %vm2265, %v2256, %v2272
        %v2274 = vsel %vm2264, %v2271, %v2273
        %v2275 = vsel %vm2263, %v2253, %v2256
        %v2276 = vsel %vm2266, %v2262, 1326507024
        %v2277 = vsel %vm2265, %v2259, %v2276
        %v2278 = vsel %vm2264, %v2275, %v2277
        %v2279 = vshll.u32 %v2239, 8
        %v2280 = vmul.u32.u64.compose %v2279, %v2278
        %v2281 = vextract.low.u32 %v2280
        %v2282 = vextract.high.u32 %v2280
        %v2283 = vmul.u32.u64.compose %v2279, %v2274
        %v2284 = vextract.low.u32 %v2283
        %v2285 = vextract.high.u32 %v2283
        %v2286 = vmul.u32 %v2279, %v2270
        %v2287 = vadd.s32 %v2282, %v2284
        %vm2288 = vc.u32 %v2282, %v2284
        %v2289 = vadd.s32 %v2285, 1
        %v2290 = vsel %vm2288, %v2289, %v2285
        %v2291 = vadd.s32 %v2286, %v2290
        %v2292 = vadd.s32 %v2291, 536870912
        %v2293 = vshrl.u32 %v2292, 30
        %v2294 = vshll.u32 %v2293, 30
        %v2295 = vsub.s32 %v2291, %v2294
        %vm2296 = vcmp.lt.s32.totalorder %v2295, 0
        %v2297 = vsub.s32 0, %v2295
        %v2298 = vsel %vm2296, %v2297, %v2295
        %v2299 = vclz %v2298
        %v2300 = vsub.s32 %v2299, 2
        %vm2301 = vcmp.gt.s32.totalorder 0, %v2300
        %v2302 = vsel %vm2301, 0, %v2300
        %v2303 = vsub.s32 32, %v2302
        %v2304 = vshll.u32 %v2295, %v2302
        %v2305 = vshrl.u32 %v2287, %v2303
        %v2306 = vor.u32 %v2304, %v2305
        %v2307 = vsub.s32 4294967266, %v2302
        %v2308 = vadd.s32 %v2307, 127
        %v2309 = vshll.u32 %v2308, 23
        %v2310 = vor.u32 4788187, %v2309
        %v2311 = vand.u32 2147483647, %v2310
        %v2313 = vcvt.s32.f32 %v2306
        %v2314 = vmul.f32 %v2313, %v2311
        %v2315 = vxor.u32 %v2314, 2147483648
        %v2316 = vsel %vm2233, %v2315, %v2314
        %v2317 = vsub.s32 4, %v2293
        %v2318 = vsel %vm2233, %v2317, %v2293
        %v2319 = vsel %vm2232, %v477, %v2316
        %v2320 = vsel %vm2232, 0, %v2318
        %v2321 = vcosq.f32.pop %v2319
        %v2322 = vsinq.f32.pop %v2319
        %vm2323 = vweird.f32 %v477
        %v2324 = vand.u32 %v2320, 3
        %vm2325 = vcmp.lt.s32.totalorder %v2324, 2
        %vm2326 = vcmp.eq.s32.totalorder %v2324, 0
        %v2327 = vxor.u32 %v2322, 2147483648
        %v2328 = vsel %vm2326, %v2321, %v2327
        %vm2329 = vcmp.eq.s32.totalorder %v2324, 2
        %v2330 = vxor.u32 %v2321, 2147483648
        %v2331 = vsel %vm2329, %v2330, %v2322
        %v2332 = vsel %vm2325, %v2328, %v2331
        %v2333 = vsel %vm2323, nan, %v2332
        %v2334 = vand.u32 2147483647, %v478
        %vm2335 = vcmp.le.f32.partialorder %v2334, 0.7853982
        %vm2336 = vcmp.lt.s32.totalorder %v478, 0
        %v2337 = vand.u32 %v478, 2139095040
        %v2338 = vshrl.u32 %v2337, 23
        %v2339 = vsub.s32 %v2338, 127
        %v2340 = vand.u32 2147483647, %v478
        %v2341 = vand.u32 %v2340, 8388607
        %v2342 = vor.u32 %v2341, 8388608
        %v2343 = vsub.s32 0, %v2342
        %v2344 = vadd.s32 %v2339, 1
        %vm2345 = vcmp.gt.s32.totalorder %v2344, 0
        %v2346 = vsel %vm2345, %v2344, 0
        %v2347 = vshrl.u32 %v2346, 5
        %v2348 = vand.u32 %v2346, 31
        %v2349 = vsub.s32 32, %v2348
        %v2350 = vshrl.u32 683565275, %v2349
        %v2351 = vshll.u32 683565275, %v2348
        %v2352 = vshrl.u32 2475754826, %v2349
        %v2353 = vor.u32 %v2351, %v2352
        %v2354 = vshll.u32 2475754826, %v2348
        %v2355 = vshrl.u32 2131351028, %v2349
        %v2356 = vor.u32 %v2354, %v2355
        %v2357 = vshll.u32 2131351028, %v2348
        %v2358 = vshrl.u32 2102212464, %v2349
        %v2359 = vor.u32 %v2357, %v2358
        %v2360 = vshll.u32 2102212464, %v2348
        %v2361 = vshrl.u32 920167782, %v2349
        %v2362 = vor.u32 %v2360, %v2361
        %v2363 = vshll.u32 920167782, %v2348
        %v2364 = vshrl.u32 1326507024, %v2349
        %v2365 = vor.u32 %v2363, %v2364
        %vm2366 = vcmp.lt.s32.totalorder %v2347, 1
        %vm2367 = vcmp.lt.s32.totalorder %v2347, 2
        %vm2368 = vcmp.lt.s32.totalorder %v2347, 3
        %vm2369 = vcmp.lt.s32.totalorder %v2347, 4
        %v2370 = vsel %vm2366, %v2350, %v2353
        %v2371 = vsel %vm2369, %v2359, 2102212464
        %v2372 = vsel %vm2368, %v2356, %v2371
        %v2373 = vsel %vm2367, %v2370, %v2372
        %v2374 = vsel %vm2366, %v2353, %v2356
        %v2375 = vsel %vm2369, %v2362, 920167782
        %v2376 = vsel %vm2368, %v2359, %v2375
        %v2377 = vsel %vm2367, %v2374, %v2376
        %v2378 = vsel %vm2366, %v2356, %v2359
        %v2379 = vsel %vm2369, %v2365, 1326507024
        %v2380 = vsel %vm2368, %v2362, %v2379
        %v2381 = vsel %vm2367, %v2378, %v2380
        %v2382 = vshll.u32 %v2342, 8
        %v2383 = vmul.u32.u64.compose %v2382, %v2381
        %v2384 = vextract.low.u32 %v2383
        %v2385 = vextract.high.u32 %v2383
        %v2386 = vmul.u32.u64.compose %v2382, %v2377
        %v2387 = vextract.low.u32 %v2386
        %v2388 = vextract.high.u32 %v2386
        %v2389 = vmul.u32 %v2382, %v2373
        %v2390 = vadd.s32 %v2385, %v2387
        %vm2391 = vc.u32 %v2385, %v2387
        %v2392 = vadd.s32 %v2388, 1
        %v2393 = vsel %vm2391, %v2392, %v2388
        %v2394 = vadd.s32 %v2389, %v2393
        %v2395 = vadd.s32 %v2394, 536870912
        %v2396 = vshrl.u32 %v2395, 30
        %v2397 = vshll.u32 %v2396, 30
        %v2398 = vsub.s32 %v2394, %v2397
        %vm2399 = vcmp.lt.s32.totalorder %v2398, 0
        %v2400 = vsub.s32 0, %v2398
        %v2401 = vsel %vm2399, %v2400, %v2398
        %v2402 = vclz %v2401
        %v2403 = vsub.s32 %v2402, 2
        %vm2404 = vcmp.gt.s32.totalorder 0, %v2403
        %v2405 = vsel %vm2404, 0, %v2403
        %v2406 = vsub.s32 32, %v2405
        %v2407 = vshll.u32 %v2398, %v2405
        %v2408 = vshrl.u32 %v2390, %v2406
        %v2409 = vor.u32 %v2407, %v2408
        %v2410 = vsub.s32 4294967266, %v2405
        %v2411 = vadd.s32 %v2410, 127
        %v2412 = vshll.u32 %v2411, 23
        %v2413 = vor.u32 4788187, %v2412
        %v2414 = vand.u32 2147483647, %v2413
        %v2416 = vcvt.s32.f32 %v2409
        %v2417 = vmul.f32 %v2416, %v2414
        %v2418 = vxor.u32 %v2417, 2147483648
        %v2419 = vsel %vm2336, %v2418, %v2417
        %v2420 = vsub.s32 4, %v2396
        %v2421 = vsel %vm2336, %v2420, %v2396
        %v2422 = vsel %vm2335, %v478, %v2419
        %v2423 = vsel %vm2335, 0, %v2421
        %v2424 = vcosq.f32.pop %v2422
        %v2425 = vsinq.f32.pop %v2422
        %vm2426 = vweird.f32 %v478
        %v2427 = vand.u32 %v2423, 3
        %vm2428 = vcmp.lt.s32.totalorder %v2427, 2
        %vm2429 = vcmp.eq.s32.totalorder %v2427, 0
        %v2430 = vxor.u32 %v2425, 2147483648
        %v2431 = vsel %vm2429, %v2424, %v2430
        %vm2432 = vcmp.eq.s32.totalorder %v2427, 2
        %v2433 = vxor.u32 %v2424, 2147483648
        %v2434 = vsel %vm2432, %v2433, %v2425
        %v2435 = vsel %vm2428, %v2431, %v2434
        %v2436 = vsel %vm2426, nan, %v2435
        %v2437 = vand.u32 2147483647, %v479
        %vm2438 = vcmp.le.f32.partialorder %v2437, 0.7853982
        %vm2439 = vcmp.lt.s32.totalorder %v479, 0
        %v2440 = vand.u32 %v479, 2139095040
        %v2441 = vshrl.u32 %v2440, 23
        %v2442 = vsub.s32 %v2441, 127
        %v2443 = vand.u32 2147483647, %v479
        %v2444 = vand.u32 %v2443, 8388607
        %v2445 = vor.u32 %v2444, 8388608
        %v2446 = vsub.s32 0, %v2445
        %v2447 = vadd.s32 %v2442, 1
        %vm2448 = vcmp.gt.s32.totalorder %v2447, 0
        %v2449 = vsel %vm2448, %v2447, 0
        %v2450 = vshrl.u32 %v2449, 5
        %v2451 = vand.u32 %v2449, 31
        %v2452 = vsub.s32 32, %v2451
        %v2453 = vshrl.u32 683565275, %v2452
        %v2454 = vshll.u32 683565275, %v2451
        %v2455 = vshrl.u32 2475754826, %v2452
        %v2456 = vor.u32 %v2454, %v2455
        %v2457 = vshll.u32 2475754826, %v2451
        %v2458 = vshrl.u32 2131351028, %v2452
        %v2459 = vor.u32 %v2457, %v2458
        %v2460 = vshll.u32 2131351028, %v2451
        %v2461 = vshrl.u32 2102212464, %v2452
        %v2462 = vor.u32 %v2460, %v2461
        %v2463 = vshll.u32 2102212464, %v2451
        %v2464 = vshrl.u32 920167782, %v2452
        %v2465 = vor.u32 %v2463, %v2464
        %v2466 = vshll.u32 920167782, %v2451
        %v2467 = vshrl.u32 1326507024, %v2452
        %v2468 = vor.u32 %v2466, %v2467
        %vm2469 = vcmp.lt.s32.totalorder %v2450, 1
        %vm2470 = vcmp.lt.s32.totalorder %v2450, 2
        %vm2471 = vcmp.lt.s32.totalorder %v2450, 3
        %vm2472 = vcmp.lt.s32.totalorder %v2450, 4
        %v2473 = vsel %vm2469, %v2453, %v2456
        %v2474 = vsel %vm2472, %v2462, 2102212464
        %v2475 = vsel %vm2471, %v2459, %v2474
        %v2476 = vsel %vm2470, %v2473, %v2475
        %v2477 = vsel %vm2469, %v2456, %v2459
        %v2478 = vsel %vm2472, %v2465, 920167782
        %v2479 = vsel %vm2471, %v2462, %v2478
        %v2480 = vsel %vm2470, %v2477, %v2479
        %v2481 = vsel %vm2469, %v2459, %v2462
        %v2482 = vsel %vm2472, %v2468, 1326507024
        %v2483 = vsel %vm2471, %v2465, %v2482
        %v2484 = vsel %vm2470, %v2481, %v2483
        %v2485 = vshll.u32 %v2445, 8
        %v2486 = vmul.u32.u64.compose %v2485, %v2484
        %v2487 = vextract.low.u32 %v2486
        %v2488 = vextract.high.u32 %v2486
        %v2489 = vmul.u32.u64.compose %v2485, %v2480
        %v2490 = vextract.low.u32 %v2489
        %v2491 = vextract.high.u32 %v2489
        %v2492 = vmul.u32 %v2485, %v2476
        %v2493 = vadd.s32 %v2488, %v2490
        %vm2494 = vc.u32 %v2488, %v2490
        %v2495 = vadd.s32 %v2491, 1
        %v2496 = vsel %vm2494, %v2495, %v2491
        %v2497 = vadd.s32 %v2492, %v2496
        %v2498 = vadd.s32 %v2497, 536870912
        %v2499 = vshrl.u32 %v2498, 30
        %v2500 = vshll.u32 %v2499, 30
        %v2501 = vsub.s32 %v2497, %v2500
        %vm2502 = vcmp.lt.s32.totalorder %v2501, 0
        %v2503 = vsub.s32 0, %v2501
        %v2504 = vsel %vm2502, %v2503, %v2501
        %v2505 = vclz %v2504
        %v2506 = vsub.s32 %v2505, 2
        %vm2507 = vcmp.gt.s32.totalorder 0, %v2506
        %v2508 = vsel %vm2507, 0, %v2506
        %v2509 = vsub.s32 32, %v2508
        %v2510 = vshll.u32 %v2501, %v2508
        %v2511 = vshrl.u32 %v2493, %v2509
        %v2512 = vor.u32 %v2510, %v2511
        %v2513 = vsub.s32 4294967266, %v2508
        %v2514 = vadd.s32 %v2513, 127
        %v2515 = vshll.u32 %v2514, 23
        %v2516 = vor.u32 4788187, %v2515
        %v2517 = vand.u32 2147483647, %v2516
        %v2519 = vcvt.s32.f32 %v2512
        %v2520 = vmul.f32 %v2519, %v2517
        %v2521 = vxor.u32 %v2520, 2147483648
        %v2522 = vsel %vm2439, %v2521, %v2520
        %v2523 = vsub.s32 4, %v2499
        %v2524 = vsel %vm2439, %v2523, %v2499
        %v2525 = vsel %vm2438, %v479, %v2522
        %v2526 = vsel %vm2438, 0, %v2524
        %v2527 = vcosq.f32.pop %v2525
        %v2528 = vsinq.f32.pop %v2525
        %vm2529 = vweird.f32 %v479
        %v2530 = vand.u32 %v2526, 3
        %vm2531 = vcmp.lt.s32.totalorder %v2530, 2
        %vm2532 = vcmp.eq.s32.totalorder %v2530, 0
        %v2533 = vxor.u32 %v2528, 2147483648
        %v2534 = vsel %vm2532, %v2527, %v2533
        %vm2535 = vcmp.eq.s32.totalorder %v2530, 2
        %v2536 = vxor.u32 %v2527, 2147483648
        %v2537 = vsel %vm2535, %v2536, %v2528
        %v2538 = vsel %vm2531, %v2534, %v2537
        %v2539 = vsel %vm2529, nan, %v2538
        %v2540 = vmul.f32 %v420, %v582
        %v2541 = vmul.f32 %v421, %v685
        %v2542 = vmul.f32 %v422, %v788
        %v2543 = vmul.f32 %v423, %v891
        %v2544 = vmul.f32 %v424, %v994
        %v2545 = vmul.f32 %v425, %v1097
        %v2546 = vmul.f32 %v426, %v1200
        %v2547 = vmul.f32 %v427, %v1303
        %v2548 = vmul.f32 %v428, %v1406
        %v2549 = vmul.f32 %v429, %v1509
        %v2550 = vmul.f32 %v430, %v1612
        %v2551 = vmul.f32 %v431, %v1715
        %v2552 = vmul.f32 %v432, %v1818
        %v2553 = vmul.f32 %v433, %v1921
        %v2554 = vmul.f32 %v434, %v2024
        %v2555 = vmul.f32 %v435, %v2127
        %v2556 = vmul.f32 %v436, %v2230
        %v2557 = vmul.f32 %v437, %v2333
        %v2558 = vmul.f32 %v438, %v2436
        %v2559 = vmul.f32 %v439, %v2539
        %v2560 = vand.u32 2147483647, %v460
        %vm2561 = vcmp.le.f32.partialorder %v2560, 0.7853982
        %vm2562 = vcmp.lt.s32.totalorder %v460, 0
        %v2563 = vand.u32 %v460, 2139095040
        %v2564 = vshrl.u32 %v2563, 23
        %v2565 = vsub.s32 %v2564, 127
        %v2566 = vand.u32 2147483647, %v460
        %v2567 = vand.u32 %v2566, 8388607
        %v2568 = vor.u32 %v2567, 8388608
        %v2569 = vsub.s32 0, %v2568
        %v2570 = vadd.s32 %v2565, 1
        %vm2571 = vcmp.gt.s32.totalorder %v2570, 0
        %v2572 = vsel %vm2571, %v2570, 0
        %v2573 = vshrl.u32 %v2572, 5
        %v2574 = vand.u32 %v2572, 31
        %v2575 = vsub.s32 32, %v2574
        %v2576 = vshrl.u32 683565275, %v2575
        %v2577 = vshll.u32 683565275, %v2574
        %v2578 = vshrl.u32 2475754826, %v2575
        %v2579 = vor.u32 %v2577, %v2578
        %v2580 = vshll.u32 2475754826, %v2574
        %v2581 = vshrl.u32 2131351028, %v2575
        %v2582 = vor.u32 %v2580, %v2581
        %v2583 = vshll.u32 2131351028, %v2574
        %v2584 = vshrl.u32 2102212464, %v2575
        %v2585 = vor.u32 %v2583, %v2584
        %v2586 = vshll.u32 2102212464, %v2574
        %v2587 = vshrl.u32 920167782, %v2575
        %v2588 = vor.u32 %v2586, %v2587
        %v2589 = vshll.u32 920167782, %v2574
        %v2590 = vshrl.u32 1326507024, %v2575
        %v2591 = vor.u32 %v2589, %v2590
        %vm2592 = vcmp.lt.s32.totalorder %v2573, 1
        %vm2593 = vcmp.lt.s32.totalorder %v2573, 2
        %vm2594 = vcmp.lt.s32.totalorder %v2573, 3
        %vm2595 = vcmp.lt.s32.totalorder %v2573, 4
        %v2596 = vsel %vm2592, %v2576, %v2579
        %v2597 = vsel %vm2595, %v2585, 2102212464
        %v2598 = vsel %vm2594, %v2582, %v2597
        %v2599 = vsel %vm2593, %v2596, %v2598
        %v2600 = vsel %vm2592, %v2579, %v2582
        %v2601 = vsel %vm2595, %v2588, 920167782
        %v2602 = vsel %vm2594, %v2585, %v2601
        %v2603 = vsel %vm2593, %v2600, %v2602
        %v2604 = vsel %vm2592, %v2582, %v2585
        %v2605 = vsel %vm2595, %v2591, 1326507024
        %v2606 = vsel %vm2594, %v2588, %v2605
        %v2607 = vsel %vm2593, %v2604, %v2606
        %v2608 = vshll.u32 %v2568, 8
        %v2609 = vmul.u32.u64.compose %v2608, %v2607
        %v2610 = vextract.low.u32 %v2609
        %v2611 = vextract.high.u32 %v2609
        %v2612 = vmul.u32.u64.compose %v2608, %v2603
        %v2613 = vextract.low.u32 %v2612
        %v2614 = vextract.high.u32 %v2612
        %v2615 = vmul.u32 %v2608, %v2599
        %v2616 = vadd.s32 %v2611, %v2613
        %vm2617 = vc.u32 %v2611, %v2613
        %v2618 = vadd.s32 %v2614, 1
        %v2619 = vsel %vm2617, %v2618, %v2614
        %v2620 = vadd.s32 %v2615, %v2619
        %v2621 = vadd.s32 %v2620, 536870912
        %v2622 = vshrl.u32 %v2621, 30
        %v2623 = vshll.u32 %v2622, 30
        %v2624 = vsub.s32 %v2620, %v2623
        %vm2625 = vcmp.lt.s32.totalorder %v2624, 0
        %v2626 = vsub.s32 0, %v2624
        %v2627 = vsel %vm2625, %v2626, %v2624
        %v2628 = vclz %v2627
        %v2629 = vsub.s32 %v2628, 2
        %vm2630 = vcmp.gt.s32.totalorder 0, %v2629
        %v2631 = vsel %vm2630, 0, %v2629
        %v2632 = vsub.s32 32, %v2631
        %v2633 = vshll.u32 %v2624, %v2631
        %v2634 = vshrl.u32 %v2616, %v2632
        %v2635 = vor.u32 %v2633, %v2634
        %v2636 = vsub.s32 4294967266, %v2631
        %v2637 = vadd.s32 %v2636, 127
        %v2638 = vshll.u32 %v2637, 23
        %v2639 = vor.u32 4788187, %v2638
        %v2640 = vand.u32 2147483647, %v2639
        %v2642 = vcvt.s32.f32 %v2635
        %v2643 = vmul.f32 %v2642, %v2640
        %v2644 = vxor.u32 %v2643, 2147483648
        %v2645 = vsel %vm2562, %v2644, %v2643
        %v2646 = vsub.s32 4, %v2622
        %v2647 = vsel %vm2562, %v2646, %v2622
        %v2648 = vsel %vm2561, %v460, %v2645
        %v2649 = vsel %vm2561, 0, %v2647
        %v2650 = vcosq.f32.pop %v2648
        %v2651 = vsinq.f32.pop %v2648
        %vm2652 = vweird.f32 %v460
        %v2653 = vadd.s32 %v2649, 3
        %v2654 = vand.u32 %v2653, 3
        %vm2655 = vcmp.lt.s32.totalorder %v2654, 2
        %vm2656 = vcmp.eq.s32.totalorder %v2654, 0
        %v2657 = vxor.u32 %v2651, 2147483648
        %v2658 = vsel %vm2656, %v2650, %v2657
        %vm2659 = vcmp.eq.s32.totalorder %v2654, 2
        %v2660 = vxor.u32 %v2650, 2147483648
        %v2661 = vsel %vm2659, %v2660, %v2651
        %v2662 = vsel %vm2655, %v2658, %v2661
        %v2663 = vsel %vm2652, nan, %v2662
        %v2664 = vand.u32 2147483647, %v461
        %vm2665 = vcmp.le.f32.partialorder %v2664, 0.7853982
        %vm2666 = vcmp.lt.s32.totalorder %v461, 0
        %v2667 = vand.u32 %v461, 2139095040
        %v2668 = vshrl.u32 %v2667, 23
        %v2669 = vsub.s32 %v2668, 127
        %v2670 = vand.u32 2147483647, %v461
        %v2671 = vand.u32 %v2670, 8388607
        %v2672 = vor.u32 %v2671, 8388608
        %v2673 = vsub.s32 0, %v2672
        %v2674 = vadd.s32 %v2669, 1
        %vm2675 = vcmp.gt.s32.totalorder %v2674, 0
        %v2676 = vsel %vm2675, %v2674, 0
        %v2677 = vshrl.u32 %v2676, 5
        %v2678 = vand.u32 %v2676, 31
        %v2679 = vsub.s32 32, %v2678
        %v2680 = vshrl.u32 683565275, %v2679
        %v2681 = vshll.u32 683565275, %v2678
        %v2682 = vshrl.u32 2475754826, %v2679
        %v2683 = vor.u32 %v2681, %v2682
        %v2684 = vshll.u32 2475754826, %v2678
        %v2685 = vshrl.u32 2131351028, %v2679
        %v2686 = vor.u32 %v2684, %v2685
        %v2687 = vshll.u32 2131351028, %v2678
        %v2688 = vshrl.u32 2102212464, %v2679
        %v2689 = vor.u32 %v2687, %v2688
        %v2690 = vshll.u32 2102212464, %v2678
        %v2691 = vshrl.u32 920167782, %v2679
        %v2692 = vor.u32 %v2690, %v2691
        %v2693 = vshll.u32 920167782, %v2678
        %v2694 = vshrl.u32 1326507024, %v2679
        %v2695 = vor.u32 %v2693, %v2694
        %vm2696 = vcmp.lt.s32.totalorder %v2677, 1
        %vm2697 = vcmp.lt.s32.totalorder %v2677, 2
        %vm2698 = vcmp.lt.s32.totalorder %v2677, 3
        %vm2699 = vcmp.lt.s32.totalorder %v2677, 4
        %v2700 = vsel %vm2696, %v2680, %v2683
        %v2701 = vsel %vm2699, %v2689, 2102212464
        %v2702 = vsel %vm2698, %v2686, %v2701
        %v2703 = vsel %vm2697, %v2700, %v2702
        %v2704 = vsel %vm2696, %v2683, %v2686
        %v2705 = vsel %vm2699, %v2692, 920167782
        %v2706 = vsel %vm2698, %v2689, %v2705
        %v2707 = vsel %vm2697, %v2704, %v2706
        %v2708 = vsel %vm2696, %v2686, %v2689
        %v2709 = vsel %vm2699, %v2695, 1326507024
        %v2710 = vsel %vm2698, %v2692, %v2709
        %v2711 = vsel %vm2697, %v2708, %v2710
        %v2712 = vshll.u32 %v2672, 8
        %v2713 = vmul.u32.u64.compose %v2712, %v2711
        %v2714 = vextract.low.u32 %v2713
        %v2715 = vextract.high.u32 %v2713
        %v2716 = vmul.u32.u64.compose %v2712, %v2707
        %v2717 = vextract.low.u32 %v2716
        %v2718 = vextract.high.u32 %v2716
        %v2719 = vmul.u32 %v2712, %v2703
        %v2720 = vadd.s32 %v2715, %v2717
        %vm2721 = vc.u32 %v2715, %v2717
        %v2722 = vadd.s32 %v2718, 1
        %v2723 = vsel %vm2721, %v2722, %v2718
        %v2724 = vadd.s32 %v2719, %v2723
        %v2725 = vadd.s32 %v2724, 536870912
        %v2726 = vshrl.u32 %v2725, 30
        %v2727 = vshll.u32 %v2726, 30
        %v2728 = vsub.s32 %v2724, %v2727
        %vm2729 = vcmp.lt.s32.totalorder %v2728, 0
        %v2730 = vsub.s32 0, %v2728
        %v2731 = vsel %vm2729, %v2730, %v2728
        %v2732 = vclz %v2731
        %v2733 = vsub.s32 %v2732, 2
        %vm2734 = vcmp.gt.s32.totalorder 0, %v2733
        %v2735 = vsel %vm2734, 0, %v2733
        %v2736 = vsub.s32 32, %v2735
        %v2737 = vshll.u32 %v2728, %v2735
        %v2738 = vshrl.u32 %v2720, %v2736
        %v2739 = vor.u32 %v2737, %v2738
        %v2740 = vsub.s32 4294967266, %v2735
        %v2741 = vadd.s32 %v2740, 127
        %v2742 = vshll.u32 %v2741, 23
        %v2743 = vor.u32 4788187, %v2742
        %v2744 = vand.u32 2147483647, %v2743
        %v2746 = vcvt.s32.f32 %v2739
        %v2747 = vmul.f32 %v2746, %v2744
        %v2748 = vxor.u32 %v2747, 2147483648
        %v2749 = vsel %vm2666, %v2748, %v2747
        %v2750 = vsub.s32 4, %v2726
        %v2751 = vsel %vm2666, %v2750, %v2726
        %v2752 = vsel %vm2665, %v461, %v2749
        %v2753 = vsel %vm2665, 0, %v2751
        %v2754 = vcosq.f32.pop %v2752
        %v2755 = vsinq.f32.pop %v2752
        %vm2756 = vweird.f32 %v461
        %v2757 = vadd.s32 %v2753, 3
        %v2758 = vand.u32 %v2757, 3
        %vm2759 = vcmp.lt.s32.totalorder %v2758, 2
        %vm2760 = vcmp.eq.s32.totalorder %v2758, 0
        %v2761 = vxor.u32 %v2755, 2147483648
        %v2762 = vsel %vm2760, %v2754, %v2761
        %vm2763 = vcmp.eq.s32.totalorder %v2758, 2
        %v2764 = vxor.u32 %v2754, 2147483648
        %v2765 = vsel %vm2763, %v2764, %v2755
        %v2766 = vsel %vm2759, %v2762, %v2765
        %v2767 = vsel %vm2756, nan, %v2766
        %v2768 = vand.u32 2147483647, %v462
        %vm2769 = vcmp.le.f32.partialorder %v2768, 0.7853982
        %vm2770 = vcmp.lt.s32.totalorder %v462, 0
        %v2771 = vand.u32 %v462, 2139095040
        %v2772 = vshrl.u32 %v2771, 23
        %v2773 = vsub.s32 %v2772, 127
        %v2774 = vand.u32 2147483647, %v462
        %v2775 = vand.u32 %v2774, 8388607
        %v2776 = vor.u32 %v2775, 8388608
        %v2777 = vsub.s32 0, %v2776
        %v2778 = vadd.s32 %v2773, 1
        %vm2779 = vcmp.gt.s32.totalorder %v2778, 0
        %v2780 = vsel %vm2779, %v2778, 0
        %v2781 = vshrl.u32 %v2780, 5
        %v2782 = vand.u32 %v2780, 31
        %v2783 = vsub.s32 32, %v2782
        %v2784 = vshrl.u32 683565275, %v2783
        %v2785 = vshll.u32 683565275, %v2782
        %v2786 = vshrl.u32 2475754826, %v2783
        %v2787 = vor.u32 %v2785, %v2786
        %v2788 = vshll.u32 2475754826, %v2782
        %v2789 = vshrl.u32 2131351028, %v2783
        %v2790 = vor.u32 %v2788, %v2789
        %v2791 = vshll.u32 2131351028, %v2782
        %v2792 = vshrl.u32 2102212464, %v2783
        %v2793 = vor.u32 %v2791, %v2792
        %v2794 = vshll.u32 2102212464, %v2782
        %v2795 = vshrl.u32 920167782, %v2783
        %v2796 = vor.u32 %v2794, %v2795
        %v2797 = vshll.u32 920167782, %v2782
        %v2798 = vshrl.u32 1326507024, %v2783
        %v2799 = vor.u32 %v2797, %v2798
        %vm2800 = vcmp.lt.s32.totalorder %v2781, 1
        %vm2801 = vcmp.lt.s32.totalorder %v2781, 2
        %vm2802 = vcmp.lt.s32.totalorder %v2781, 3
        %vm2803 = vcmp.lt.s32.totalorder %v2781, 4
        %v2804 = vsel %vm2800, %v2784, %v2787
        %v2805 = vsel %vm2803, %v2793, 2102212464
        %v2806 = vsel %vm2802, %v2790, %v2805
        %v2807 = vsel %vm2801, %v2804, %v2806
        %v2808 = vsel %vm2800, %v2787, %v2790
        %v2809 = vsel %vm2803, %v2796, 920167782
        %v2810 = vsel %vm2802, %v2793, %v2809
        %v2811 = vsel %vm2801, %v2808, %v2810
        %v2812 = vsel %vm2800, %v2790, %v2793
        %v2813 = vsel %vm2803, %v2799, 1326507024
        %v2814 = vsel %vm2802, %v2796, %v2813
        %v2815 = vsel %vm2801, %v2812, %v2814
        %v2816 = vshll.u32 %v2776, 8
        %v2817 = vmul.u32.u64.compose %v2816, %v2815
        %v2818 = vextract.low.u32 %v2817
        %v2819 = vextract.high.u32 %v2817
        %v2820 = vmul.u32.u64.compose %v2816, %v2811
        %v2821 = vextract.low.u32 %v2820
        %v2822 = vextract.high.u32 %v2820
        %v2823 = vmul.u32 %v2816, %v2807
        %v2824 = vadd.s32 %v2819, %v2821
        %vm2825 = vc.u32 %v2819, %v2821
        %v2826 = vadd.s32 %v2822, 1
        %v2827 = vsel %vm2825, %v2826, %v2822
        %v2828 = vadd.s32 %v2823, %v2827
        %v2829 = vadd.s32 %v2828, 536870912
        %v2830 = vshrl.u32 %v2829, 30
        %v2831 = vshll.u32 %v2830, 30
        %v2832 = vsub.s32 %v2828, %v2831
        %vm2833 = vcmp.lt.s32.totalorder %v2832, 0
        %v2834 = vsub.s32 0, %v2832
        %v2835 = vsel %vm2833, %v2834, %v2832
        %v2836 = vclz %v2835
        %v2837 = vsub.s32 %v2836, 2
        %vm2838 = vcmp.gt.s32.totalorder 0, %v2837
        %v2839 = vsel %vm2838, 0, %v2837
        %v2840 = vsub.s32 32, %v2839
        %v2841 = vshll.u32 %v2832, %v2839
        %v2842 = vshrl.u32 %v2824, %v2840
        %v2843 = vor.u32 %v2841, %v2842
        %v2844 = vsub.s32 4294967266, %v2839
        %v2845 = vadd.s32 %v2844, 127
        %v2846 = vshll.u32 %v2845, 23
        %v2847 = vor.u32 4788187, %v2846
        %v2848 = vand.u32 2147483647, %v2847
        %v2850 = vcvt.s32.f32 %v2843
        %v2851 = vmul.f32 %v2850, %v2848
        %v2852 = vxor.u32 %v2851, 2147483648
        %v2853 = vsel %vm2770, %v2852, %v2851
        %v2854 = vsub.s32 4, %v2830
        %v2855 = vsel %vm2770, %v2854, %v2830
        %v2856 = vsel %vm2769, %v462, %v2853
        %v2857 = vsel %vm2769, 0, %v2855
        %v2858 = vcosq.f32.pop %v2856
        %v2859 = vsinq.f32.pop %v2856
        %vm2860 = vweird.f32 %v462
        %v2861 = vadd.s32 %v2857, 3
        %v2862 = vand.u32 %v2861, 3
        %vm2863 = vcmp.lt.s32.totalorder %v2862, 2
        %vm2864 = vcmp.eq.s32.totalorder %v2862, 0
        %v2865 = vxor.u32 %v2859, 2147483648
        %v2866 = vsel %vm2864, %v2858, %v2865
        %vm2867 = vcmp.eq.s32.totalorder %v2862, 2
        %v2868 = vxor.u32 %v2858, 2147483648
        %v2869 = vsel %vm2867, %v2868, %v2859
        %v2870 = vsel %vm2863, %v2866, %v2869
        %v2871 = vsel %vm2860, nan, %v2870
        %v2872 = vand.u32 2147483647, %v463
        %vm2873 = vcmp.le.f32.partialorder %v2872, 0.7853982
        %vm2874 = vcmp.lt.s32.totalorder %v463, 0
        %v2875 = vand.u32 %v463, 2139095040
        %v2876 = vshrl.u32 %v2875, 23
        %v2877 = vsub.s32 %v2876, 127
        %v2878 = vand.u32 2147483647, %v463
        %v2879 = vand.u32 %v2878, 8388607
        %v2880 = vor.u32 %v2879, 8388608
        %v2881 = vsub.s32 0, %v2880
        %v2882 = vadd.s32 %v2877, 1
        %vm2883 = vcmp.gt.s32.totalorder %v2882, 0
        %v2884 = vsel %vm2883, %v2882, 0
        %v2885 = vshrl.u32 %v2884, 5
        %v2886 = vand.u32 %v2884, 31
        %v2887 = vsub.s32 32, %v2886
        %v2888 = vshrl.u32 683565275, %v2887
        %v2889 = vshll.u32 683565275, %v2886
        %v2890 = vshrl.u32 2475754826, %v2887
        %v2891 = vor.u32 %v2889, %v2890
        %v2892 = vshll.u32 2475754826, %v2886
        %v2893 = vshrl.u32 2131351028, %v2887
        %v2894 = vor.u32 %v2892, %v2893
        %v2895 = vshll.u32 2131351028, %v2886
        %v2896 = vshrl.u32 2102212464, %v2887
        %v2897 = vor.u32 %v2895, %v2896
        %v2898 = vshll.u32 2102212464, %v2886
        %v2899 = vshrl.u32 920167782, %v2887
        %v2900 = vor.u32 %v2898, %v2899
        %v2901 = vshll.u32 920167782, %v2886
        %v2902 = vshrl.u32 1326507024, %v2887
        %v2903 = vor.u32 %v2901, %v2902
        %vm2904 = vcmp.lt.s32.totalorder %v2885, 1
        %vm2905 = vcmp.lt.s32.totalorder %v2885, 2
        %vm2906 = vcmp.lt.s32.totalorder %v2885, 3
        %vm2907 = vcmp.lt.s32.totalorder %v2885, 4
        %v2908 = vsel %vm2904, %v2888, %v2891
        %v2909 = vsel %vm2907, %v2897, 2102212464
        %v2910 = vsel %vm2906, %v2894, %v2909
        %v2911 = vsel %vm2905, %v2908, %v2910
        %v2912 = vsel %vm2904, %v2891, %v2894
        %v2913 = vsel %vm2907, %v2900, 920167782
        %v2914 = vsel %vm2906, %v2897, %v2913
        %v2915 = vsel %vm2905, %v2912, %v2914
        %v2916 = vsel %vm2904, %v2894, %v2897
        %v2917 = vsel %vm2907, %v2903, 1326507024
        %v2918 = vsel %vm2906, %v2900, %v2917
        %v2919 = vsel %vm2905, %v2916, %v2918
        %v2920 = vshll.u32 %v2880, 8
        %v2921 = vmul.u32.u64.compose %v2920, %v2919
        %v2922 = vextract.low.u32 %v2921
        %v2923 = vextract.high.u32 %v2921
        %v2924 = vmul.u32.u64.compose %v2920, %v2915
        %v2925 = vextract.low.u32 %v2924
        %v2926 = vextract.high.u32 %v2924
        %v2927 = vmul.u32 %v2920, %v2911
        %v2928 = vadd.s32 %v2923, %v2925
        %vm2929 = vc.u32 %v2923, %v2925
        %v2930 = vadd.s32 %v2926, 1
        %v2931 = vsel %vm2929, %v2930, %v2926
        %v2932 = vadd.s32 %v2927, %v2931
        %v2933 = vadd.s32 %v2932, 536870912
        %v2934 = vshrl.u32 %v2933, 30
        %v2935 = vshll.u32 %v2934, 30
        %v2936 = vsub.s32 %v2932, %v2935
        %vm2937 = vcmp.lt.s32.totalorder %v2936, 0
        %v2938 = vsub.s32 0, %v2936
        %v2939 = vsel %vm2937, %v2938, %v2936
        %v2940 = vclz %v2939
        %v2941 = vsub.s32 %v2940, 2
        %vm2942 = vcmp.gt.s32.totalorder 0, %v2941
        %v2943 = vsel %vm2942, 0, %v2941
        %v2944 = vsub.s32 32, %v2943
        %v2945 = vshll.u32 %v2936, %v2943
        %v2946 = vshrl.u32 %v2928, %v2944
        %v2947 = vor.u32 %v2945, %v2946
        %v2948 = vsub.s32 4294967266, %v2943
        %v2949 = vadd.s32 %v2948, 127
        %v2950 = vshll.u32 %v2949, 23
        %v2951 = vor.u32 4788187, %v2950
        %v2952 = vand.u32 2147483647, %v2951
        %v2954 = vcvt.s32.f32 %v2947
        %v2955 = vmul.f32 %v2954, %v2952
        %v2956 = vxor.u32 %v2955, 2147483648
        %v2957 = vsel %vm2874, %v2956, %v2955
        %v2958 = vsub.s32 4, %v2934
        %v2959 = vsel %vm2874, %v2958, %v2934
        %v2960 = vsel %vm2873, %v463, %v2957
        %v2961 = vsel %vm2873, 0, %v2959
        %v2962 = vcosq.f32.pop %v2960
        %v2963 = vsinq.f32.pop %v2960
        %vm2964 = vweird.f32 %v463
        %v2965 = vadd.s32 %v2961, 3
        %v2966 = vand.u32 %v2965, 3
        %vm2967 = vcmp.lt.s32.totalorder %v2966, 2
        %vm2968 = vcmp.eq.s32.totalorder %v2966, 0
        %v2969 = vxor.u32 %v2963, 2147483648
        %v2970 = vsel %vm2968, %v2962, %v2969
        %vm2971 = vcmp.eq.s32.totalorder %v2966, 2
        %v2972 = vxor.u32 %v2962, 2147483648
        %v2973 = vsel %vm2971, %v2972, %v2963
        %v2974 = vsel %vm2967, %v2970, %v2973
        %v2975 = vsel %vm2964, nan, %v2974
        %v2976 = vand.u32 2147483647, %v464
        %vm2977 = vcmp.le.f32.partialorder %v2976, 0.7853982
        %vm2978 = vcmp.lt.s32.totalorder %v464, 0
        %v2979 = vand.u32 %v464, 2139095040
        %v2980 = vshrl.u32 %v2979, 23
        %v2981 = vsub.s32 %v2980, 127
        %v2982 = vand.u32 2147483647, %v464
        %v2983 = vand.u32 %v2982, 8388607
        %v2984 = vor.u32 %v2983, 8388608
        %v2985 = vsub.s32 0, %v2984
        %v2986 = vadd.s32 %v2981, 1
        %vm2987 = vcmp.gt.s32.totalorder %v2986, 0
        %v2988 = vsel %vm2987, %v2986, 0
        %v2989 = vshrl.u32 %v2988, 5
        %v2990 = vand.u32 %v2988, 31
        %v2991 = vsub.s32 32, %v2990
        %v2992 = vshrl.u32 683565275, %v2991
        %v2993 = vshll.u32 683565275, %v2990
        %v2994 = vshrl.u32 2475754826, %v2991
        %v2995 = vor.u32 %v2993, %v2994
        %v2996 = vshll.u32 2475754826, %v2990
        %v2997 = vshrl.u32 2131351028, %v2991
        %v2998 = vor.u32 %v2996, %v2997
        %v2999 = vshll.u32 2131351028, %v2990
        %v3000 = vshrl.u32 2102212464, %v2991
        %v3001 = vor.u32 %v2999, %v3000
        %v3002 = vshll.u32 2102212464, %v2990
        %v3003 = vshrl.u32 920167782, %v2991
        %v3004 = vor.u32 %v3002, %v3003
        %v3005 = vshll.u32 920167782, %v2990
        %v3006 = vshrl.u32 1326507024, %v2991
        %v3007 = vor.u32 %v3005, %v3006
        %vm3008 = vcmp.lt.s32.totalorder %v2989, 1
        %vm3009 = vcmp.lt.s32.totalorder %v2989, 2
        %vm3010 = vcmp.lt.s32.totalorder %v2989, 3
        %vm3011 = vcmp.lt.s32.totalorder %v2989, 4
        %v3012 = vsel %vm3008, %v2992, %v2995
        %v3013 = vsel %vm3011, %v3001, 2102212464
        %v3014 = vsel %vm3010, %v2998, %v3013
        %v3015 = vsel %vm3009, %v3012, %v3014
        %v3016 = vsel %vm3008, %v2995, %v2998
        %v3017 = vsel %vm3011, %v3004, 920167782
        %v3018 = vsel %vm3010, %v3001, %v3017
        %v3019 = vsel %vm3009, %v3016, %v3018
        %v3020 = vsel %vm3008, %v2998, %v3001
        %v3021 = vsel %vm3011, %v3007, 1326507024
        %v3022 = vsel %vm3010, %v3004, %v3021
        %v3023 = vsel %vm3009, %v3020, %v3022
        %v3024 = vshll.u32 %v2984, 8
        %v3025 = vmul.u32.u64.compose %v3024, %v3023
        %v3026 = vextract.low.u32 %v3025
        %v3027 = vextract.high.u32 %v3025
        %v3028 = vmul.u32.u64.compose %v3024, %v3019
        %v3029 = vextract.low.u32 %v3028
        %v3030 = vextract.high.u32 %v3028
        %v3031 = vmul.u32 %v3024, %v3015
        %v3032 = vadd.s32 %v3027, %v3029
        %vm3033 = vc.u32 %v3027, %v3029
        %v3034 = vadd.s32 %v3030, 1
        %v3035 = vsel %vm3033, %v3034, %v3030
        %v3036 = vadd.s32 %v3031, %v3035
        %v3037 = vadd.s32 %v3036, 536870912
        %v3038 = vshrl.u32 %v3037, 30
        %v3039 = vshll.u32 %v3038, 30
        %v3040 = vsub.s32 %v3036, %v3039
        %vm3041 = vcmp.lt.s32.totalorder %v3040, 0
        %v3042 = vsub.s32 0, %v3040
        %v3043 = vsel %vm3041, %v3042, %v3040
        %v3044 = vclz %v3043
        %v3045 = vsub.s32 %v3044, 2
        %vm3046 = vcmp.gt.s32.totalorder 0, %v3045
        %v3047 = vsel %vm3046, 0, %v3045
        %v3048 = vsub.s32 32, %v3047
        %v3049 = vshll.u32 %v3040, %v3047
        %v3050 = vshrl.u32 %v3032, %v3048
        %v3051 = vor.u32 %v3049, %v3050
        %v3052 = vsub.s32 4294967266, %v3047
        %v3053 = vadd.s32 %v3052, 127
        %v3054 = vshll.u32 %v3053, 23
        %v3055 = vor.u32 4788187, %v3054
        %v3056 = vand.u32 2147483647, %v3055
        %v3058 = vcvt.s32.f32 %v3051
        %v3059 = vmul.f32 %v3058, %v3056
        %v3060 = vxor.u32 %v3059, 2147483648
        %v3061 = vsel %vm2978, %v3060, %v3059
        %v3062 = vsub.s32 4, %v3038
        %v3063 = vsel %vm2978, %v3062, %v3038
        %v3064 = vsel %vm2977, %v464, %v3061
        %v3065 = vsel %vm2977, 0, %v3063
        %v3066 = vcosq.f32.pop %v3064
        %v3067 = vsinq.f32.pop %v3064
        %vm3068 = vweird.f32 %v464
        %v3069 = vadd.s32 %v3065, 3
        %v3070 = vand.u32 %v3069, 3
        %vm3071 = vcmp.lt.s32.totalorder %v3070, 2
        %vm3072 = vcmp.eq.s32.totalorder %v3070, 0
        %v3073 = vxor.u32 %v3067, 2147483648
        %v3074 = vsel %vm3072, %v3066, %v3073
        %vm3075 = vcmp.eq.s32.totalorder %v3070, 2
        %v3076 = vxor.u32 %v3066, 2147483648
        %v3077 = vsel %vm3075, %v3076, %v3067
        %v3078 = vsel %vm3071, %v3074, %v3077
        %v3079 = vsel %vm3068, nan, %v3078
        %v3080 = vand.u32 2147483647, %v465
        %vm3081 = vcmp.le.f32.partialorder %v3080, 0.7853982
        %vm3082 = vcmp.lt.s32.totalorder %v465, 0
        %v3083 = vand.u32 %v465, 2139095040
        %v3084 = vshrl.u32 %v3083, 23
        %v3085 = vsub.s32 %v3084, 127
        %v3086 = vand.u32 2147483647, %v465
        %v3087 = vand.u32 %v3086, 8388607
        %v3088 = vor.u32 %v3087, 8388608
        %v3089 = vsub.s32 0, %v3088
        %v3090 = vadd.s32 %v3085, 1
        %vm3091 = vcmp.gt.s32.totalorder %v3090, 0
        %v3092 = vsel %vm3091, %v3090, 0
        %v3093 = vshrl.u32 %v3092, 5
        %v3094 = vand.u32 %v3092, 31
        %v3095 = vsub.s32 32, %v3094
        %v3096 = vshrl.u32 683565275, %v3095
        %v3097 = vshll.u32 683565275, %v3094
        %v3098 = vshrl.u32 2475754826, %v3095
        %v3099 = vor.u32 %v3097, %v3098
        %v3100 = vshll.u32 2475754826, %v3094
        %v3101 = vshrl.u32 2131351028, %v3095
        %v3102 = vor.u32 %v3100, %v3101
        %v3103 = vshll.u32 2131351028, %v3094
        %v3104 = vshrl.u32 2102212464, %v3095
        %v3105 = vor.u32 %v3103, %v3104
        %v3106 = vshll.u32 2102212464, %v3094
        %v3107 = vshrl.u32 920167782, %v3095
        %v3108 = vor.u32 %v3106, %v3107
        %v3109 = vshll.u32 920167782, %v3094
        %v3110 = vshrl.u32 1326507024, %v3095
        %v3111 = vor.u32 %v3109, %v3110
        %vm3112 = vcmp.lt.s32.totalorder %v3093, 1
        %vm3113 = vcmp.lt.s32.totalorder %v3093, 2
        %vm3114 = vcmp.lt.s32.totalorder %v3093, 3
        %vm3115 = vcmp.lt.s32.totalorder %v3093, 4
        %v3116 = vsel %vm3112, %v3096, %v3099
        %v3117 = vsel %vm3115, %v3105, 2102212464
        %v3118 = vsel %vm3114, %v3102, %v3117
        %v3119 = vsel %vm3113, %v3116, %v3118
        %v3120 = vsel %vm3112, %v3099, %v3102
        %v3121 = vsel %vm3115, %v3108, 920167782
        %v3122 = vsel %vm3114, %v3105, %v3121
        %v3123 = vsel %vm3113, %v3120, %v3122
        %v3124 = vsel %vm3112, %v3102, %v3105
        %v3125 = vsel %vm3115, %v3111, 1326507024
        %v3126 = vsel %vm3114, %v3108, %v3125
        %v3127 = vsel %vm3113, %v3124, %v3126
        %v3128 = vshll.u32 %v3088, 8
        %v3129 = vmul.u32.u64.compose %v3128, %v3127
        %v3130 = vextract.low.u32 %v3129
        %v3131 = vextract.high.u32 %v3129
        %v3132 = vmul.u32.u64.compose %v3128, %v3123
        %v3133 = vextract.low.u32 %v3132
        %v3134 = vextract.high.u32 %v3132
        %v3135 = vmul.u32 %v3128, %v3119
        %v3136 = vadd.s32 %v3131, %v3133
        %vm3137 = vc.u32 %v3131, %v3133
        %v3138 = vadd.s32 %v3134, 1
        %v3139 = vsel %vm3137, %v3138, %v3134
        %v3140 = vadd.s32 %v3135, %v3139
        %v3141 = vadd.s32 %v3140, 536870912
        %v3142 = vshrl.u32 %v3141, 30
        %v3143 = vshll.u32 %v3142, 30
        %v3144 = vsub.s32 %v3140, %v3143
        %vm3145 = vcmp.lt.s32.totalorder %v3144, 0
        %v3146 = vsub.s32 0, %v3144
        %v3147 = vsel %vm3145, %v3146, %v3144
        %v3148 = vclz %v3147
        %v3149 = vsub.s32 %v3148, 2
        %vm3150 = vcmp.gt.s32.totalorder 0, %v3149
        %v3151 = vsel %vm3150, 0, %v3149
        %v3152 = vsub.s32 32, %v3151
        %v3153 = vshll.u32 %v3144, %v3151
        %v3154 = vshrl.u32 %v3136, %v3152
        %v3155 = vor.u32 %v3153, %v3154
        %v3156 = vsub.s32 4294967266, %v3151
        %v3157 = vadd.s32 %v3156, 127
        %v3158 = vshll.u32 %v3157, 23
        %v3159 = vor.u32 4788187, %v3158
        %v3160 = vand.u32 2147483647, %v3159
        %v3162 = vcvt.s32.f32 %v3155
        %v3163 = vmul.f32 %v3162, %v3160
        %v3164 = vxor.u32 %v3163, 2147483648
        %v3165 = vsel %vm3082, %v3164, %v3163
        %v3166 = vsub.s32 4, %v3142
        %v3167 = vsel %vm3082, %v3166, %v3142
        %v3168 = vsel %vm3081, %v465, %v3165
        %v3169 = vsel %vm3081, 0, %v3167
        %v3170 = vcosq.f32.pop %v3168
        %v3171 = vsinq.f32.pop %v3168
        %vm3172 = vweird.f32 %v465
        %v3173 = vadd.s32 %v3169, 3
        %v3174 = vand.u32 %v3173, 3
        %vm3175 = vcmp.lt.s32.totalorder %v3174, 2
        %vm3176 = vcmp.eq.s32.totalorder %v3174, 0
        %v3177 = vxor.u32 %v3171, 2147483648
        %v3178 = vsel %vm3176, %v3170, %v3177
        %vm3179 = vcmp.eq.s32.totalorder %v3174, 2
        %v3180 = vxor.u32 %v3170, 2147483648
        %v3181 = vsel %vm3179, %v3180, %v3171
        %v3182 = vsel %vm3175, %v3178, %v3181
        %v3183 = vsel %vm3172, nan, %v3182
        %v3184 = vand.u32 2147483647, %v466
        %vm3185 = vcmp.le.f32.partialorder %v3184, 0.7853982
        %vm3186 = vcmp.lt.s32.totalorder %v466, 0
        %v3187 = vand.u32 %v466, 2139095040
        %v3188 = vshrl.u32 %v3187, 23
        %v3189 = vsub.s32 %v3188, 127
        %v3190 = vand.u32 2147483647, %v466
        %v3191 = vand.u32 %v3190, 8388607
        %v3192 = vor.u32 %v3191, 8388608
        %v3193 = vsub.s32 0, %v3192
        %v3194 = vadd.s32 %v3189, 1
        %vm3195 = vcmp.gt.s32.totalorder %v3194, 0
        %v3196 = vsel %vm3195, %v3194, 0
        %v3197 = vshrl.u32 %v3196, 5
        %v3198 = vand.u32 %v3196, 31
        %v3199 = vsub.s32 32, %v3198
        %v3200 = vshrl.u32 683565275, %v3199
        %v3201 = vshll.u32 683565275, %v3198
        %v3202 = vshrl.u32 2475754826, %v3199
        %v3203 = vor.u32 %v3201, %v3202
        %v3204 = vshll.u32 2475754826, %v3198
        %v3205 = vshrl.u32 2131351028, %v3199
        %v3206 = vor.u32 %v3204, %v3205
        %v3207 = vshll.u32 2131351028, %v3198
        %v3208 = vshrl.u32 2102212464, %v3199
        %v3209 = vor.u32 %v3207, %v3208
        %v3210 = vshll.u32 2102212464, %v3198
        %v3211 = vshrl.u32 920167782, %v3199
        %v3212 = vor.u32 %v3210, %v3211
        %v3213 = vshll.u32 920167782, %v3198
        %v3214 = vshrl.u32 1326507024, %v3199
        %v3215 = vor.u32 %v3213, %v3214
        %vm3216 = vcmp.lt.s32.totalorder %v3197, 1
        %vm3217 = vcmp.lt.s32.totalorder %v3197, 2
        %vm3218 = vcmp.lt.s32.totalorder %v3197, 3
        %vm3219 = vcmp.lt.s32.totalorder %v3197, 4
        %v3220 = vsel %vm3216, %v3200, %v3203
        %v3221 = vsel %vm3219, %v3209, 2102212464
        %v3222 = vsel %vm3218, %v3206, %v3221
        %v3223 = vsel %vm3217, %v3220, %v3222
        %v3224 = vsel %vm3216, %v3203, %v3206
        %v3225 = vsel %vm3219, %v3212, 920167782
        %v3226 = vsel %vm3218, %v3209, %v3225
        %v3227 = vsel %vm3217, %v3224, %v3226
        %v3228 = vsel %vm3216, %v3206, %v3209
        %v3229 = vsel %vm3219, %v3215, 1326507024
        %v3230 = vsel %vm3218, %v3212, %v3229
        %v3231 = vsel %vm3217, %v3228, %v3230
        %v3232 = vshll.u32 %v3192, 8
        %v3233 = vmul.u32.u64.compose %v3232, %v3231
        %v3234 = vextract.low.u32 %v3233
        %v3235 = vextract.high.u32 %v3233
        %v3236 = vmul.u32.u64.compose %v3232, %v3227
        %v3237 = vextract.low.u32 %v3236
        %v3238 = vextract.high.u32 %v3236
        %v3239 = vmul.u32 %v3232, %v3223
        %v3240 = vadd.s32 %v3235, %v3237
        %vm3241 = vc.u32 %v3235, %v3237
        %v3242 = vadd.s32 %v3238, 1
        %v3243 = vsel %vm3241, %v3242, %v3238
        %v3244 = vadd.s32 %v3239, %v3243
        %v3245 = vadd.s32 %v3244, 536870912
        %v3246 = vshrl.u32 %v3245, 30
        %v3247 = vshll.u32 %v3246, 30
        %v3248 = vsub.s32 %v3244, %v3247
        %vm3249 = vcmp.lt.s32.totalorder %v3248, 0
        %v3250 = vsub.s32 0, %v3248
        %v3251 = vsel %vm3249, %v3250, %v3248
        %v3252 = vclz %v3251
        %v3253 = vsub.s32 %v3252, 2
        %vm3254 = vcmp.gt.s32.totalorder 0, %v3253
        %v3255 = vsel %vm3254, 0, %v3253
        %v3256 = vsub.s32 32, %v3255
        %v3257 = vshll.u32 %v3248, %v3255
        %v3258 = vshrl.u32 %v3240, %v3256
        %v3259 = vor.u32 %v3257, %v3258
        %v3260 = vsub.s32 4294967266, %v3255
        %v3261 = vadd.s32 %v3260, 127
        %v3262 = vshll.u32 %v3261, 23
        %v3263 = vor.u32 4788187, %v3262
        %v3264 = vand.u32 2147483647, %v3263
        %v3266 = vcvt.s32.f32 %v3259
        %v3267 = vmul.f32 %v3266, %v3264
        %v3268 = vxor.u32 %v3267, 2147483648
        %v3269 = vsel %vm3186, %v3268, %v3267
        %v3270 = vsub.s32 4, %v3246
        %v3271 = vsel %vm3186, %v3270, %v3246
        %v3272 = vsel %vm3185, %v466, %v3269
        %v3273 = vsel %vm3185, 0, %v3271
        %v3274 = vcosq.f32.pop %v3272
        %v3275 = vsinq.f32.pop %v3272
        %vm3276 = vweird.f32 %v466
        %v3277 = vadd.s32 %v3273, 3
        %v3278 = vand.u32 %v3277, 3
        %vm3279 = vcmp.lt.s32.totalorder %v3278, 2
        %vm3280 = vcmp.eq.s32.totalorder %v3278, 0
        %v3281 = vxor.u32 %v3275, 2147483648
        %v3282 = vsel %vm3280, %v3274, %v3281
        %vm3283 = vcmp.eq.s32.totalorder %v3278, 2
        %v3284 = vxor.u32 %v3274, 2147483648
        %v3285 = vsel %vm3283, %v3284, %v3275
        %v3286 = vsel %vm3279, %v3282, %v3285
        %v3287 = vsel %vm3276, nan, %v3286
        %v3288 = vand.u32 2147483647, %v467
        %vm3289 = vcmp.le.f32.partialorder %v3288, 0.7853982
        %vm3290 = vcmp.lt.s32.totalorder %v467, 0
        %v3291 = vand.u32 %v467, 2139095040
        %v3292 = vshrl.u32 %v3291, 23
        %v3293 = vsub.s32 %v3292, 127
        %v3294 = vand.u32 2147483647, %v467
        %v3295 = vand.u32 %v3294, 8388607
        %v3296 = vor.u32 %v3295, 8388608
        %v3297 = vsub.s32 0, %v3296
        %v3298 = vadd.s32 %v3293, 1
        %vm3299 = vcmp.gt.s32.totalorder %v3298, 0
        %v3300 = vsel %vm3299, %v3298, 0
        %v3301 = vshrl.u32 %v3300, 5
        %v3302 = vand.u32 %v3300, 31
        %v3303 = vsub.s32 32, %v3302
        %v3304 = vshrl.u32 683565275, %v3303
        %v3305 = vshll.u32 683565275, %v3302
        %v3306 = vshrl.u32 2475754826, %v3303
        %v3307 = vor.u32 %v3305, %v3306
        %v3308 = vshll.u32 2475754826, %v3302
        %v3309 = vshrl.u32 2131351028, %v3303
        %v3310 = vor.u32 %v3308, %v3309
        %v3311 = vshll.u32 2131351028, %v3302
        %v3312 = vshrl.u32 2102212464, %v3303
        %v3313 = vor.u32 %v3311, %v3312
        %v3314 = vshll.u32 2102212464, %v3302
        %v3315 = vshrl.u32 920167782, %v3303
        %v3316 = vor.u32 %v3314, %v3315
        %v3317 = vshll.u32 920167782, %v3302
        %v3318 = vshrl.u32 1326507024, %v3303
        %v3319 = vor.u32 %v3317, %v3318
        %vm3320 = vcmp.lt.s32.totalorder %v3301, 1
        %vm3321 = vcmp.lt.s32.totalorder %v3301, 2
        %vm3322 = vcmp.lt.s32.totalorder %v3301, 3
        %vm3323 = vcmp.lt.s32.totalorder %v3301, 4
        %v3324 = vsel %vm3320, %v3304, %v3307
        %v3325 = vsel %vm3323, %v3313, 2102212464
        %v3326 = vsel %vm3322, %v3310, %v3325
        %v3327 = vsel %vm3321, %v3324, %v3326
        %v3328 = vsel %vm3320, %v3307, %v3310
        %v3329 = vsel %vm3323, %v3316, 920167782
        %v3330 = vsel %vm3322, %v3313, %v3329
        %v3331 = vsel %vm3321, %v3328, %v3330
        %v3332 = vsel %vm3320, %v3310, %v3313
        %v3333 = vsel %vm3323, %v3319, 1326507024
        %v3334 = vsel %vm3322, %v3316, %v3333
        %v3335 = vsel %vm3321, %v3332, %v3334
        %v3336 = vshll.u32 %v3296, 8
        %v3337 = vmul.u32.u64.compose %v3336, %v3335
        %v3338 = vextract.low.u32 %v3337
        %v3339 = vextract.high.u32 %v3337
        %v3340 = vmul.u32.u64.compose %v3336, %v3331
        %v3341 = vextract.low.u32 %v3340
        %v3342 = vextract.high.u32 %v3340
        %v3343 = vmul.u32 %v3336, %v3327
        %v3344 = vadd.s32 %v3339, %v3341
        %vm3345 = vc.u32 %v3339, %v3341
        %v3346 = vadd.s32 %v3342, 1
        %v3347 = vsel %vm3345, %v3346, %v3342
        %v3348 = vadd.s32 %v3343, %v3347
        %v3349 = vadd.s32 %v3348, 536870912
        %v3350 = vshrl.u32 %v3349, 30
        %v3351 = vshll.u32 %v3350, 30
        %v3352 = vsub.s32 %v3348, %v3351
        %vm3353 = vcmp.lt.s32.totalorder %v3352, 0
        %v3354 = vsub.s32 0, %v3352
        %v3355 = vsel %vm3353, %v3354, %v3352
        %v3356 = vclz %v3355
        %v3357 = vsub.s32 %v3356, 2
        %vm3358 = vcmp.gt.s32.totalorder 0, %v3357
        %v3359 = vsel %vm3358, 0, %v3357
        %v3360 = vsub.s32 32, %v3359
        %v3361 = vshll.u32 %v3352, %v3359
        %v3362 = vshrl.u32 %v3344, %v3360
        %v3363 = vor.u32 %v3361, %v3362
        %v3364 = vsub.s32 4294967266, %v3359
        %v3365 = vadd.s32 %v3364, 127
        %v3366 = vshll.u32 %v3365, 23
        %v3367 = vor.u32 4788187, %v3366
        %v3368 = vand.u32 2147483647, %v3367
        %v3370 = vcvt.s32.f32 %v3363
        %v3371 = vmul.f32 %v3370, %v3368
        %v3372 = vxor.u32 %v3371, 2147483648
        %v3373 = vsel %vm3290, %v3372, %v3371
        %v3374 = vsub.s32 4, %v3350
        %v3375 = vsel %vm3290, %v3374, %v3350
        %v3376 = vsel %vm3289, %v467, %v3373
        %v3377 = vsel %vm3289, 0, %v3375
        %v3378 = vcosq.f32.pop %v3376
        %v3379 = vsinq.f32.pop %v3376
        %vm3380 = vweird.f32 %v467
        %v3381 = vadd.s32 %v3377, 3
        %v3382 = vand.u32 %v3381, 3
        %vm3383 = vcmp.lt.s32.totalorder %v3382, 2
        %vm3384 = vcmp.eq.s32.totalorder %v3382, 0
        %v3385 = vxor.u32 %v3379, 2147483648
        %v3386 = vsel %vm3384, %v3378, %v3385
        %vm3387 = vcmp.eq.s32.totalorder %v3382, 2
        %v3388 = vxor.u32 %v3378, 2147483648
        %v3389 = vsel %vm3387, %v3388, %v3379
        %v3390 = vsel %vm3383, %v3386, %v3389
        %v3391 = vsel %vm3380, nan, %v3390
        %v3392 = vand.u32 2147483647, %v468
        %vm3393 = vcmp.le.f32.partialorder %v3392, 0.7853982
        %vm3394 = vcmp.lt.s32.totalorder %v468, 0
        %v3395 = vand.u32 %v468, 2139095040
        %v3396 = vshrl.u32 %v3395, 23
        %v3397 = vsub.s32 %v3396, 127
        %v3398 = vand.u32 2147483647, %v468
        %v3399 = vand.u32 %v3398, 8388607
        %v3400 = vor.u32 %v3399, 8388608
        %v3401 = vsub.s32 0, %v3400
        %v3402 = vadd.s32 %v3397, 1
        %vm3403 = vcmp.gt.s32.totalorder %v3402, 0
        %v3404 = vsel %vm3403, %v3402, 0
        %v3405 = vshrl.u32 %v3404, 5
        %v3406 = vand.u32 %v3404, 31
        %v3407 = vsub.s32 32, %v3406
        %v3408 = vshrl.u32 683565275, %v3407
        %v3409 = vshll.u32 683565275, %v3406
        %v3410 = vshrl.u32 2475754826, %v3407
        %v3411 = vor.u32 %v3409, %v3410
        %v3412 = vshll.u32 2475754826, %v3406
        %v3413 = vshrl.u32 2131351028, %v3407
        %v3414 = vor.u32 %v3412, %v3413
        %v3415 = vshll.u32 2131351028, %v3406
        %v3416 = vshrl.u32 2102212464, %v3407
        %v3417 = vor.u32 %v3415, %v3416
        %v3418 = vshll.u32 2102212464, %v3406
        %v3419 = vshrl.u32 920167782, %v3407
        %v3420 = vor.u32 %v3418, %v3419
        %v3421 = vshll.u32 920167782, %v3406
        %v3422 = vshrl.u32 1326507024, %v3407
        %v3423 = vor.u32 %v3421, %v3422
        %vm3424 = vcmp.lt.s32.totalorder %v3405, 1
        %vm3425 = vcmp.lt.s32.totalorder %v3405, 2
        %vm3426 = vcmp.lt.s32.totalorder %v3405, 3
        %vm3427 = vcmp.lt.s32.totalorder %v3405, 4
        %v3428 = vsel %vm3424, %v3408, %v3411
        %v3429 = vsel %vm3427, %v3417, 2102212464
        %v3430 = vsel %vm3426, %v3414, %v3429
        %v3431 = vsel %vm3425, %v3428, %v3430
        %v3432 = vsel %vm3424, %v3411, %v3414
        %v3433 = vsel %vm3427, %v3420, 920167782
        %v3434 = vsel %vm3426, %v3417, %v3433
        %v3435 = vsel %vm3425, %v3432, %v3434
        %v3436 = vsel %vm3424, %v3414, %v3417
        %v3437 = vsel %vm3427, %v3423, 1326507024
        %v3438 = vsel %vm3426, %v3420, %v3437
        %v3439 = vsel %vm3425, %v3436, %v3438
        %v3440 = vshll.u32 %v3400, 8
        %v3441 = vmul.u32.u64.compose %v3440, %v3439
        %v3442 = vextract.low.u32 %v3441
        %v3443 = vextract.high.u32 %v3441
        %v3444 = vmul.u32.u64.compose %v3440, %v3435
        %v3445 = vextract.low.u32 %v3444
        %v3446 = vextract.high.u32 %v3444
        %v3447 = vmul.u32 %v3440, %v3431
        %v3448 = vadd.s32 %v3443, %v3445
        %vm3449 = vc.u32 %v3443, %v3445
        %v3450 = vadd.s32 %v3446, 1
        %v3451 = vsel %vm3449, %v3450, %v3446
        %v3452 = vadd.s32 %v3447, %v3451
        %v3453 = vadd.s32 %v3452, 536870912
        %v3454 = vshrl.u32 %v3453, 30
        %v3455 = vshll.u32 %v3454, 30
        %v3456 = vsub.s32 %v3452, %v3455
        %vm3457 = vcmp.lt.s32.totalorder %v3456, 0
        %v3458 = vsub.s32 0, %v3456
        %v3459 = vsel %vm3457, %v3458, %v3456
        %v3460 = vclz %v3459
        %v3461 = vsub.s32 %v3460, 2
        %vm3462 = vcmp.gt.s32.totalorder 0, %v3461
        %v3463 = vsel %vm3462, 0, %v3461
        %v3464 = vsub.s32 32, %v3463
        %v3465 = vshll.u32 %v3456, %v3463
        %v3466 = vshrl.u32 %v3448, %v3464
        %v3467 = vor.u32 %v3465, %v3466
        %v3468 = vsub.s32 4294967266, %v3463
        %v3469 = vadd.s32 %v3468, 127
        %v3470 = vshll.u32 %v3469, 23
        %v3471 = vor.u32 4788187, %v3470
        %v3472 = vand.u32 2147483647, %v3471
        %v3474 = vcvt.s32.f32 %v3467
        %v3475 = vmul.f32 %v3474, %v3472
        %v3476 = vxor.u32 %v3475, 2147483648
        %v3477 = vsel %vm3394, %v3476, %v3475
        %v3478 = vsub.s32 4, %v3454
        %v3479 = vsel %vm3394, %v3478, %v3454
        %v3480 = vsel %vm3393, %v468, %v3477
        %v3481 = vsel %vm3393, 0, %v3479
        %v3482 = vcosq.f32.pop %v3480
        %v3483 = vsinq.f32.pop %v3480
        %vm3484 = vweird.f32 %v468
        %v3485 = vadd.s32 %v3481, 3
        %v3486 = vand.u32 %v3485, 3
        %vm3487 = vcmp.lt.s32.totalorder %v3486, 2
        %vm3488 = vcmp.eq.s32.totalorder %v3486, 0
        %v3489 = vxor.u32 %v3483, 2147483648
        %v3490 = vsel %vm3488, %v3482, %v3489
        %vm3491 = vcmp.eq.s32.totalorder %v3486, 2
        %v3492 = vxor.u32 %v3482, 2147483648
        %v3493 = vsel %vm3491, %v3492, %v3483
        %v3494 = vsel %vm3487, %v3490, %v3493
        %v3495 = vsel %vm3484, nan, %v3494
        %v3496 = vand.u32 2147483647, %v469
        %vm3497 = vcmp.le.f32.partialorder %v3496, 0.7853982
        %vm3498 = vcmp.lt.s32.totalorder %v469, 0
        %v3499 = vand.u32 %v469, 2139095040
        %v3500 = vshrl.u32 %v3499, 23
        %v3501 = vsub.s32 %v3500, 127
        %v3502 = vand.u32 2147483647, %v469
        %v3503 = vand.u32 %v3502, 8388607
        %v3504 = vor.u32 %v3503, 8388608
        %v3505 = vsub.s32 0, %v3504
        %v3506 = vadd.s32 %v3501, 1
        %vm3507 = vcmp.gt.s32.totalorder %v3506, 0
        %v3508 = vsel %vm3507, %v3506, 0
        %v3509 = vshrl.u32 %v3508, 5
        %v3510 = vand.u32 %v3508, 31
        %v3511 = vsub.s32 32, %v3510
        %v3512 = vshrl.u32 683565275, %v3511
        %v3513 = vshll.u32 683565275, %v3510
        %v3514 = vshrl.u32 2475754826, %v3511
        %v3515 = vor.u32 %v3513, %v3514
        %v3516 = vshll.u32 2475754826, %v3510
        %v3517 = vshrl.u32 2131351028, %v3511
        %v3518 = vor.u32 %v3516, %v3517
        %v3519 = vshll.u32 2131351028, %v3510
        %v3520 = vshrl.u32 2102212464, %v3511
        %v3521 = vor.u32 %v3519, %v3520
        %v3522 = vshll.u32 2102212464, %v3510
        %v3523 = vshrl.u32 920167782, %v3511
        %v3524 = vor.u32 %v3522, %v3523
        %v3525 = vshll.u32 920167782, %v3510
        %v3526 = vshrl.u32 1326507024, %v3511
        %v3527 = vor.u32 %v3525, %v3526
        %vm3528 = vcmp.lt.s32.totalorder %v3509, 1
        %vm3529 = vcmp.lt.s32.totalorder %v3509, 2
        %vm3530 = vcmp.lt.s32.totalorder %v3509, 3
        %vm3531 = vcmp.lt.s32.totalorder %v3509, 4
        %v3532 = vsel %vm3528, %v3512, %v3515
        %v3533 = vsel %vm3531, %v3521, 2102212464
        %v3534 = vsel %vm3530, %v3518, %v3533
        %v3535 = vsel %vm3529, %v3532, %v3534
        %v3536 = vsel %vm3528, %v3515, %v3518
        %v3537 = vsel %vm3531, %v3524, 920167782
        %v3538 = vsel %vm3530, %v3521, %v3537
        %v3539 = vsel %vm3529, %v3536, %v3538
        %v3540 = vsel %vm3528, %v3518, %v3521
        %v3541 = vsel %vm3531, %v3527, 1326507024
        %v3542 = vsel %vm3530, %v3524, %v3541
        %v3543 = vsel %vm3529, %v3540, %v3542
        %v3544 = vshll.u32 %v3504, 8
        %v3545 = vmul.u32.u64.compose %v3544, %v3543
        %v3546 = vextract.low.u32 %v3545
        %v3547 = vextract.high.u32 %v3545
        %v3548 = vmul.u32.u64.compose %v3544, %v3539
        %v3549 = vextract.low.u32 %v3548
        %v3550 = vextract.high.u32 %v3548
        %v3551 = vmul.u32 %v3544, %v3535
        %v3552 = vadd.s32 %v3547, %v3549
        %vm3553 = vc.u32 %v3547, %v3549
        %v3554 = vadd.s32 %v3550, 1
        %v3555 = vsel %vm3553, %v3554, %v3550
        %v3556 = vadd.s32 %v3551, %v3555
        %v3557 = vadd.s32 %v3556, 536870912
        %v3558 = vshrl.u32 %v3557, 30
        %v3559 = vshll.u32 %v3558, 30
        %v3560 = vsub.s32 %v3556, %v3559
        %vm3561 = vcmp.lt.s32.totalorder %v3560, 0
        %v3562 = vsub.s32 0, %v3560
        %v3563 = vsel %vm3561, %v3562, %v3560
        %v3564 = vclz %v3563
        %v3565 = vsub.s32 %v3564, 2
        %vm3566 = vcmp.gt.s32.totalorder 0, %v3565
        %v3567 = vsel %vm3566, 0, %v3565
        %v3568 = vsub.s32 32, %v3567
        %v3569 = vshll.u32 %v3560, %v3567
        %v3570 = vshrl.u32 %v3552, %v3568
        %v3571 = vor.u32 %v3569, %v3570
        %v3572 = vsub.s32 4294967266, %v3567
        %v3573 = vadd.s32 %v3572, 127
        %v3574 = vshll.u32 %v3573, 23
        %v3575 = vor.u32 4788187, %v3574
        %v3576 = vand.u32 2147483647, %v3575
        %v3578 = vcvt.s32.f32 %v3571
        %v3579 = vmul.f32 %v3578, %v3576
        %v3580 = vxor.u32 %v3579, 2147483648
        %v3581 = vsel %vm3498, %v3580, %v3579
        %v3582 = vsub.s32 4, %v3558
        %v3583 = vsel %vm3498, %v3582, %v3558
        %v3584 = vsel %vm3497, %v469, %v3581
        %v3585 = vsel %vm3497, 0, %v3583
        %v3586 = vcosq.f32.pop %v3584
        %v3587 = vsinq.f32.pop %v3584
        %vm3588 = vweird.f32 %v469
        %v3589 = vadd.s32 %v3585, 3
        %v3590 = vand.u32 %v3589, 3
        %vm3591 = vcmp.lt.s32.totalorder %v3590, 2
        %vm3592 = vcmp.eq.s32.totalorder %v3590, 0
        %v3593 = vxor.u32 %v3587, 2147483648
        %v3594 = vsel %vm3592, %v3586, %v3593
        %vm3595 = vcmp.eq.s32.totalorder %v3590, 2
        %v3596 = vxor.u32 %v3586, 2147483648
        %v3597 = vsel %vm3595, %v3596, %v3587
        %v3598 = vsel %vm3591, %v3594, %v3597
        %v3599 = vsel %vm3588, nan, %v3598
        %v3600 = vand.u32 2147483647, %v470
        %vm3601 = vcmp.le.f32.partialorder %v3600, 0.7853982
        %vm3602 = vcmp.lt.s32.totalorder %v470, 0
        %v3603 = vand.u32 %v470, 2139095040
        %v3604 = vshrl.u32 %v3603, 23
        %v3605 = vsub.s32 %v3604, 127
        %v3606 = vand.u32 2147483647, %v470
        %v3607 = vand.u32 %v3606, 8388607
        %v3608 = vor.u32 %v3607, 8388608
        %v3609 = vsub.s32 0, %v3608
        %v3610 = vadd.s32 %v3605, 1
        %vm3611 = vcmp.gt.s32.totalorder %v3610, 0
        %v3612 = vsel %vm3611, %v3610, 0
        %v3613 = vshrl.u32 %v3612, 5
        %v3614 = vand.u32 %v3612, 31
        %v3615 = vsub.s32 32, %v3614
        %v3616 = vshrl.u32 683565275, %v3615
        %v3617 = vshll.u32 683565275, %v3614
        %v3618 = vshrl.u32 2475754826, %v3615
        %v3619 = vor.u32 %v3617, %v3618
        %v3620 = vshll.u32 2475754826, %v3614
        %v3621 = vshrl.u32 2131351028, %v3615
        %v3622 = vor.u32 %v3620, %v3621
        %v3623 = vshll.u32 2131351028, %v3614
        %v3624 = vshrl.u32 2102212464, %v3615
        %v3625 = vor.u32 %v3623, %v3624
        %v3626 = vshll.u32 2102212464, %v3614
        %v3627 = vshrl.u32 920167782, %v3615
        %v3628 = vor.u32 %v3626, %v3627
        %v3629 = vshll.u32 920167782, %v3614
        %v3630 = vshrl.u32 1326507024, %v3615
        %v3631 = vor.u32 %v3629, %v3630
        %vm3632 = vcmp.lt.s32.totalorder %v3613, 1
        %vm3633 = vcmp.lt.s32.totalorder %v3613, 2
        %vm3634 = vcmp.lt.s32.totalorder %v3613, 3
        %vm3635 = vcmp.lt.s32.totalorder %v3613, 4
        %v3636 = vsel %vm3632, %v3616, %v3619
        %v3637 = vsel %vm3635, %v3625, 2102212464
        %v3638 = vsel %vm3634, %v3622, %v3637
        %v3639 = vsel %vm3633, %v3636, %v3638
        %v3640 = vsel %vm3632, %v3619, %v3622
        %v3641 = vsel %vm3635, %v3628, 920167782
        %v3642 = vsel %vm3634, %v3625, %v3641
        %v3643 = vsel %vm3633, %v3640, %v3642
        %v3644 = vsel %vm3632, %v3622, %v3625
        %v3645 = vsel %vm3635, %v3631, 1326507024
        %v3646 = vsel %vm3634, %v3628, %v3645
        %v3647 = vsel %vm3633, %v3644, %v3646
        %v3648 = vshll.u32 %v3608, 8
        %v3649 = vmul.u32.u64.compose %v3648, %v3647
        %v3650 = vextract.low.u32 %v3649
        %v3651 = vextract.high.u32 %v3649
        %v3652 = vmul.u32.u64.compose %v3648, %v3643
        %v3653 = vextract.low.u32 %v3652
        %v3654 = vextract.high.u32 %v3652
        %v3655 = vmul.u32 %v3648, %v3639
        %v3656 = vadd.s32 %v3651, %v3653
        %vm3657 = vc.u32 %v3651, %v3653
        %v3658 = vadd.s32 %v3654, 1
        %v3659 = vsel %vm3657, %v3658, %v3654
        %v3660 = vadd.s32 %v3655, %v3659
        %v3661 = vadd.s32 %v3660, 536870912
        %v3662 = vshrl.u32 %v3661, 30
        %v3663 = vshll.u32 %v3662, 30
        %v3664 = vsub.s32 %v3660, %v3663
        %vm3665 = vcmp.lt.s32.totalorder %v3664, 0
        %v3666 = vsub.s32 0, %v3664
        %v3667 = vsel %vm3665, %v3666, %v3664
        %v3668 = vclz %v3667
        %v3669 = vsub.s32 %v3668, 2
        %vm3670 = vcmp.gt.s32.totalorder 0, %v3669
        %v3671 = vsel %vm3670, 0, %v3669
        %v3672 = vsub.s32 32, %v3671
        %v3673 = vshll.u32 %v3664, %v3671
        %v3674 = vshrl.u32 %v3656, %v3672
        %v3675 = vor.u32 %v3673, %v3674
        %v3676 = vsub.s32 4294967266, %v3671
        %v3677 = vadd.s32 %v3676, 127
        %v3678 = vshll.u32 %v3677, 23
        %v3679 = vor.u32 4788187, %v3678
        %v3680 = vand.u32 2147483647, %v3679
        %v3682 = vcvt.s32.f32 %v3675
        %v3683 = vmul.f32 %v3682, %v3680
        %v3684 = vxor.u32 %v3683, 2147483648
        %v3685 = vsel %vm3602, %v3684, %v3683
        %v3686 = vsub.s32 4, %v3662
        %v3687 = vsel %vm3602, %v3686, %v3662
        %v3688 = vsel %vm3601, %v470, %v3685
        %v3689 = vsel %vm3601, 0, %v3687
        %v3690 = vcosq.f32.pop %v3688
        %v3691 = vsinq.f32.pop %v3688
        %vm3692 = vweird.f32 %v470
        %v3693 = vadd.s32 %v3689, 3
        %v3694 = vand.u32 %v3693, 3
        %vm3695 = vcmp.lt.s32.totalorder %v3694, 2
        %vm3696 = vcmp.eq.s32.totalorder %v3694, 0
        %v3697 = vxor.u32 %v3691, 2147483648
        %v3698 = vsel %vm3696, %v3690, %v3697
        %vm3699 = vcmp.eq.s32.totalorder %v3694, 2
        %v3700 = vxor.u32 %v3690, 2147483648
        %v3701 = vsel %vm3699, %v3700, %v3691
        %v3702 = vsel %vm3695, %v3698, %v3701
        %v3703 = vsel %vm3692, nan, %v3702
        %v3704 = vand.u32 2147483647, %v471
        %vm3705 = vcmp.le.f32.partialorder %v3704, 0.7853982
        %vm3706 = vcmp.lt.s32.totalorder %v471, 0
        %v3707 = vand.u32 %v471, 2139095040
        %v3708 = vshrl.u32 %v3707, 23
        %v3709 = vsub.s32 %v3708, 127
        %v3710 = vand.u32 2147483647, %v471
        %v3711 = vand.u32 %v3710, 8388607
        %v3712 = vor.u32 %v3711, 8388608
        %v3713 = vsub.s32 0, %v3712
        %v3714 = vadd.s32 %v3709, 1
        %vm3715 = vcmp.gt.s32.totalorder %v3714, 0
        %v3716 = vsel %vm3715, %v3714, 0
        %v3717 = vshrl.u32 %v3716, 5
        %v3718 = vand.u32 %v3716, 31
        %v3719 = vsub.s32 32, %v3718
        %v3720 = vshrl.u32 683565275, %v3719
        %v3721 = vshll.u32 683565275, %v3718
        %v3722 = vshrl.u32 2475754826, %v3719
        %v3723 = vor.u32 %v3721, %v3722
        %v3724 = vshll.u32 2475754826, %v3718
        %v3725 = vshrl.u32 2131351028, %v3719
        %v3726 = vor.u32 %v3724, %v3725
        %v3727 = vshll.u32 2131351028, %v3718
        %v3728 = vshrl.u32 2102212464, %v3719
        %v3729 = vor.u32 %v3727, %v3728
        %v3730 = vshll.u32 2102212464, %v3718
        %v3731 = vshrl.u32 920167782, %v3719
        %v3732 = vor.u32 %v3730, %v3731
        %v3733 = vshll.u32 920167782, %v3718
        %v3734 = vshrl.u32 1326507024, %v3719
        %v3735 = vor.u32 %v3733, %v3734
        %vm3736 = vcmp.lt.s32.totalorder %v3717, 1
        %vm3737 = vcmp.lt.s32.totalorder %v3717, 2
        %vm3738 = vcmp.lt.s32.totalorder %v3717, 3
        %vm3739 = vcmp.lt.s32.totalorder %v3717, 4
        %v3740 = vsel %vm3736, %v3720, %v3723
        %v3741 = vsel %vm3739, %v3729, 2102212464
        %v3742 = vsel %vm3738, %v3726, %v3741
        %v3743 = vsel %vm3737, %v3740, %v3742
        %v3744 = vsel %vm3736, %v3723, %v3726
        %v3745 = vsel %vm3739, %v3732, 920167782
        %v3746 = vsel %vm3738, %v3729, %v3745
        %v3747 = vsel %vm3737, %v3744, %v3746
        %v3748 = vsel %vm3736, %v3726, %v3729
        %v3749 = vsel %vm3739, %v3735, 1326507024
        %v3750 = vsel %vm3738, %v3732, %v3749
        %v3751 = vsel %vm3737, %v3748, %v3750
        %v3752 = vshll.u32 %v3712, 8
        %v3753 = vmul.u32.u64.compose %v3752, %v3751
        %v3754 = vextract.low.u32 %v3753
        %v3755 = vextract.high.u32 %v3753
        %v3756 = vmul.u32.u64.compose %v3752, %v3747
        %v3757 = vextract.low.u32 %v3756
        %v3758 = vextract.high.u32 %v3756
        %v3759 = vmul.u32 %v3752, %v3743
        %v3760 = vadd.s32 %v3755, %v3757
        %vm3761 = vc.u32 %v3755, %v3757
        %v3762 = vadd.s32 %v3758, 1
        %v3763 = vsel %vm3761, %v3762, %v3758
        %v3764 = vadd.s32 %v3759, %v3763
        %v3765 = vadd.s32 %v3764, 536870912
        %v3766 = vshrl.u32 %v3765, 30
        %v3767 = vshll.u32 %v3766, 30
        %v3768 = vsub.s32 %v3764, %v3767
        %vm3769 = vcmp.lt.s32.totalorder %v3768, 0
        %v3770 = vsub.s32 0, %v3768
        %v3771 = vsel %vm3769, %v3770, %v3768
        %v3772 = vclz %v3771
        %v3773 = vsub.s32 %v3772, 2
        %vm3774 = vcmp.gt.s32.totalorder 0, %v3773
        %v3775 = vsel %vm3774, 0, %v3773
        %v3776 = vsub.s32 32, %v3775
        %v3777 = vshll.u32 %v3768, %v3775
        %v3778 = vshrl.u32 %v3760, %v3776
        %v3779 = vor.u32 %v3777, %v3778
        %v3780 = vsub.s32 4294967266, %v3775
        %v3781 = vadd.s32 %v3780, 127
        %v3782 = vshll.u32 %v3781, 23
        %v3783 = vor.u32 4788187, %v3782
        %v3784 = vand.u32 2147483647, %v3783
        %v3786 = vcvt.s32.f32 %v3779
        %v3787 = vmul.f32 %v3786, %v3784
        %v3788 = vxor.u32 %v3787, 2147483648
        %v3789 = vsel %vm3706, %v3788, %v3787
        %v3790 = vsub.s32 4, %v3766
        %v3791 = vsel %vm3706, %v3790, %v3766
        %v3792 = vsel %vm3705, %v471, %v3789
        %v3793 = vsel %vm3705, 0, %v3791
        %v3794 = vcosq.f32.pop %v3792
        %v3795 = vsinq.f32.pop %v3792
        %vm3796 = vweird.f32 %v471
        %v3797 = vadd.s32 %v3793, 3
        %v3798 = vand.u32 %v3797, 3
        %vm3799 = vcmp.lt.s32.totalorder %v3798, 2
        %vm3800 = vcmp.eq.s32.totalorder %v3798, 0
        %v3801 = vxor.u32 %v3795, 2147483648
        %v3802 = vsel %vm3800, %v3794, %v3801
        %vm3803 = vcmp.eq.s32.totalorder %v3798, 2
        %v3804 = vxor.u32 %v3794, 2147483648
        %v3805 = vsel %vm3803, %v3804, %v3795
        %v3806 = vsel %vm3799, %v3802, %v3805
        %v3807 = vsel %vm3796, nan, %v3806
        %v3808 = vand.u32 2147483647, %v472
        %vm3809 = vcmp.le.f32.partialorder %v3808, 0.7853982
        %vm3810 = vcmp.lt.s32.totalorder %v472, 0
        %v3811 = vand.u32 %v472, 2139095040
        %v3812 = vshrl.u32 %v3811, 23
        %v3813 = vsub.s32 %v3812, 127
        %v3814 = vand.u32 2147483647, %v472
        %v3815 = vand.u32 %v3814, 8388607
        %v3816 = vor.u32 %v3815, 8388608
        %v3817 = vsub.s32 0, %v3816
        %v3818 = vadd.s32 %v3813, 1
        %vm3819 = vcmp.gt.s32.totalorder %v3818, 0
        %v3820 = vsel %vm3819, %v3818, 0
        %v3821 = vshrl.u32 %v3820, 5
        %v3822 = vand.u32 %v3820, 31
        %v3823 = vsub.s32 32, %v3822
        %v3824 = vshrl.u32 683565275, %v3823
        %v3825 = vshll.u32 683565275, %v3822
        %v3826 = vshrl.u32 2475754826, %v3823
        %v3827 = vor.u32 %v3825, %v3826
        %v3828 = vshll.u32 2475754826, %v3822
        %v3829 = vshrl.u32 2131351028, %v3823
        %v3830 = vor.u32 %v3828, %v3829
        %v3831 = vshll.u32 2131351028, %v3822
        %v3832 = vshrl.u32 2102212464, %v3823
        %v3833 = vor.u32 %v3831, %v3832
        %v3834 = vshll.u32 2102212464, %v3822
        %v3835 = vshrl.u32 920167782, %v3823
        %v3836 = vor.u32 %v3834, %v3835
        %v3837 = vshll.u32 920167782, %v3822
        %v3838 = vshrl.u32 1326507024, %v3823
        %v3839 = vor.u32 %v3837, %v3838
        %vm3840 = vcmp.lt.s32.totalorder %v3821, 1
        %vm3841 = vcmp.lt.s32.totalorder %v3821, 2
        %vm3842 = vcmp.lt.s32.totalorder %v3821, 3
        %vm3843 = vcmp.lt.s32.totalorder %v3821, 4
        %v3844 = vsel %vm3840, %v3824, %v3827
        %v3845 = vsel %vm3843, %v3833, 2102212464
        %v3846 = vsel %vm3842, %v3830, %v3845
        %v3847 = vsel %vm3841, %v3844, %v3846
        %v3848 = vsel %vm3840, %v3827, %v3830
        %v3849 = vsel %vm3843, %v3836, 920167782
        %v3850 = vsel %vm3842, %v3833, %v3849
        %v3851 = vsel %vm3841, %v3848, %v3850
        %v3852 = vsel %vm3840, %v3830, %v3833
        %v3853 = vsel %vm3843, %v3839, 1326507024
        %v3854 = vsel %vm3842, %v3836, %v3853
        %v3855 = vsel %vm3841, %v3852, %v3854
        %v3856 = vshll.u32 %v3816, 8
        %v3857 = vmul.u32.u64.compose %v3856, %v3855
        %v3858 = vextract.low.u32 %v3857
        %v3859 = vextract.high.u32 %v3857
        %v3860 = vmul.u32.u64.compose %v3856, %v3851
        %v3861 = vextract.low.u32 %v3860
        %v3862 = vextract.high.u32 %v3860
        %v3863 = vmul.u32 %v3856, %v3847
        %v3864 = vadd.s32 %v3859, %v3861
        %vm3865 = vc.u32 %v3859, %v3861
        %v3866 = vadd.s32 %v3862, 1
        %v3867 = vsel %vm3865, %v3866, %v3862
        %v3868 = vadd.s32 %v3863, %v3867
        %v3869 = vadd.s32 %v3868, 536870912
        %v3870 = vshrl.u32 %v3869, 30
        %v3871 = vshll.u32 %v3870, 30
        %v3872 = vsub.s32 %v3868, %v3871
        %vm3873 = vcmp.lt.s32.totalorder %v3872, 0
        %v3874 = vsub.s32 0, %v3872
        %v3875 = vsel %vm3873, %v3874, %v3872
        %v3876 = vclz %v3875
        %v3877 = vsub.s32 %v3876, 2
        %vm3878 = vcmp.gt.s32.totalorder 0, %v3877
        %v3879 = vsel %vm3878, 0, %v3877
        %v3880 = vsub.s32 32, %v3879
        %v3881 = vshll.u32 %v3872, %v3879
        %v3882 = vshrl.u32 %v3864, %v3880
        %v3883 = vor.u32 %v3881, %v3882
        %v3884 = vsub.s32 4294967266, %v3879
        %v3885 = vadd.s32 %v3884, 127
        %v3886 = vshll.u32 %v3885, 23
        %v3887 = vor.u32 4788187, %v3886
        %v3888 = vand.u32 2147483647, %v3887
        %v3890 = vcvt.s32.f32 %v3883
        %v3891 = vmul.f32 %v3890, %v3888
        %v3892 = vxor.u32 %v3891, 2147483648
        %v3893 = vsel %vm3810, %v3892, %v3891
        %v3894 = vsub.s32 4, %v3870
        %v3895 = vsel %vm3810, %v3894, %v3870
        %v3896 = vsel %vm3809, %v472, %v3893
        %v3897 = vsel %vm3809, 0, %v3895
        %v3898 = vcosq.f32.pop %v3896
        %v3899 = vsinq.f32.pop %v3896
        %vm3900 = vweird.f32 %v472
        %v3901 = vadd.s32 %v3897, 3
        %v3902 = vand.u32 %v3901, 3
        %vm3903 = vcmp.lt.s32.totalorder %v3902, 2
        %vm3904 = vcmp.eq.s32.totalorder %v3902, 0
        %v3905 = vxor.u32 %v3899, 2147483648
        %v3906 = vsel %vm3904, %v3898, %v3905
        %vm3907 = vcmp.eq.s32.totalorder %v3902, 2
        %v3908 = vxor.u32 %v3898, 2147483648
        %v3909 = vsel %vm3907, %v3908, %v3899
        %v3910 = vsel %vm3903, %v3906, %v3909
        %v3911 = vsel %vm3900, nan, %v3910
        %v3912 = vand.u32 2147483647, %v473
        %vm3913 = vcmp.le.f32.partialorder %v3912, 0.7853982
        %vm3914 = vcmp.lt.s32.totalorder %v473, 0
        %v3915 = vand.u32 %v473, 2139095040
        %v3916 = vshrl.u32 %v3915, 23
        %v3917 = vsub.s32 %v3916, 127
        %v3918 = vand.u32 2147483647, %v473
        %v3919 = vand.u32 %v3918, 8388607
        %v3920 = vor.u32 %v3919, 8388608
        %v3921 = vsub.s32 0, %v3920
        %v3922 = vadd.s32 %v3917, 1
        %vm3923 = vcmp.gt.s32.totalorder %v3922, 0
        %v3924 = vsel %vm3923, %v3922, 0
        %v3925 = vshrl.u32 %v3924, 5
        %v3926 = vand.u32 %v3924, 31
        %v3927 = vsub.s32 32, %v3926
        %v3928 = vshrl.u32 683565275, %v3927
        %v3929 = vshll.u32 683565275, %v3926
        %v3930 = vshrl.u32 2475754826, %v3927
        %v3931 = vor.u32 %v3929, %v3930
        %v3932 = vshll.u32 2475754826, %v3926
        %v3933 = vshrl.u32 2131351028, %v3927
        %v3934 = vor.u32 %v3932, %v3933
        %v3935 = vshll.u32 2131351028, %v3926
        %v3936 = vshrl.u32 2102212464, %v3927
        %v3937 = vor.u32 %v3935, %v3936
        %v3938 = vshll.u32 2102212464, %v3926
        %v3939 = vshrl.u32 920167782, %v3927
        %v3940 = vor.u32 %v3938, %v3939
        %v3941 = vshll.u32 920167782, %v3926
        %v3942 = vshrl.u32 1326507024, %v3927
        %v3943 = vor.u32 %v3941, %v3942
        %vm3944 = vcmp.lt.s32.totalorder %v3925, 1
        %vm3945 = vcmp.lt.s32.totalorder %v3925, 2
        %vm3946 = vcmp.lt.s32.totalorder %v3925, 3
        %vm3947 = vcmp.lt.s32.totalorder %v3925, 4
        %v3948 = vsel %vm3944, %v3928, %v3931
        %v3949 = vsel %vm3947, %v3937, 2102212464
        %v3950 = vsel %vm3946, %v3934, %v3949
        %v3951 = vsel %vm3945, %v3948, %v3950
        %v3952 = vsel %vm3944, %v3931, %v3934
        %v3953 = vsel %vm3947, %v3940, 920167782
        %v3954 = vsel %vm3946, %v3937, %v3953
        %v3955 = vsel %vm3945, %v3952, %v3954
        %v3956 = vsel %vm3944, %v3934, %v3937
        %v3957 = vsel %vm3947, %v3943, 1326507024
        %v3958 = vsel %vm3946, %v3940, %v3957
        %v3959 = vsel %vm3945, %v3956, %v3958
        %v3960 = vshll.u32 %v3920, 8
        %v3961 = vmul.u32.u64.compose %v3960, %v3959
        %v3962 = vextract.low.u32 %v3961
        %v3963 = vextract.high.u32 %v3961
        %v3964 = vmul.u32.u64.compose %v3960, %v3955
        %v3965 = vextract.low.u32 %v3964
        %v3966 = vextract.high.u32 %v3964
        %v3967 = vmul.u32 %v3960, %v3951
        %v3968 = vadd.s32 %v3963, %v3965
        %vm3969 = vc.u32 %v3963, %v3965
        %v3970 = vadd.s32 %v3966, 1
        %v3971 = vsel %vm3969, %v3970, %v3966
        %v3972 = vadd.s32 %v3967, %v3971
        %v3973 = vadd.s32 %v3972, 536870912
        %v3974 = vshrl.u32 %v3973, 30
        %v3975 = vshll.u32 %v3974, 30
        %v3976 = vsub.s32 %v3972, %v3975
        %vm3977 = vcmp.lt.s32.totalorder %v3976, 0
        %v3978 = vsub.s32 0, %v3976
        %v3979 = vsel %vm3977, %v3978, %v3976
        %v3980 = vclz %v3979
        %v3981 = vsub.s32 %v3980, 2
        %vm3982 = vcmp.gt.s32.totalorder 0, %v3981
        %v3983 = vsel %vm3982, 0, %v3981
        %v3984 = vsub.s32 32, %v3983
        %v3985 = vshll.u32 %v3976, %v3983
        %v3986 = vshrl.u32 %v3968, %v3984
        %v3987 = vor.u32 %v3985, %v3986
        %v3988 = vsub.s32 4294967266, %v3983
        %v3989 = vadd.s32 %v3988, 127
        %v3990 = vshll.u32 %v3989, 23
        %v3991 = vor.u32 4788187, %v3990
        %v3992 = vand.u32 2147483647, %v3991
        %v3994 = vcvt.s32.f32 %v3987
        %v3995 = vmul.f32 %v3994, %v3992
        %v3996 = vxor.u32 %v3995, 2147483648
        %v3997 = vsel %vm3914, %v3996, %v3995
        %v3998 = vsub.s32 4, %v3974
        %v3999 = vsel %vm3914, %v3998, %v3974
        %v4000 = vsel %vm3913, %v473, %v3997
        %v4001 = vsel %vm3913, 0, %v3999
        %v4002 = vcosq.f32.pop %v4000
        %v4003 = vsinq.f32.pop %v4000
        %vm4004 = vweird.f32 %v473
        %v4005 = vadd.s32 %v4001, 3
        %v4006 = vand.u32 %v4005, 3
        %vm4007 = vcmp.lt.s32.totalorder %v4006, 2
        %vm4008 = vcmp.eq.s32.totalorder %v4006, 0
        %v4009 = vxor.u32 %v4003, 2147483648
        %v4010 = vsel %vm4008, %v4002, %v4009
        %vm4011 = vcmp.eq.s32.totalorder %v4006, 2
        %v4012 = vxor.u32 %v4002, 2147483648
        %v4013 = vsel %vm4011, %v4012, %v4003
        %v4014 = vsel %vm4007, %v4010, %v4013
        %v4015 = vsel %vm4004, nan, %v4014
        %v4016 = vand.u32 2147483647, %v474
        %vm4017 = vcmp.le.f32.partialorder %v4016, 0.7853982
        %vm4018 = vcmp.lt.s32.totalorder %v474, 0
        %v4019 = vand.u32 %v474, 2139095040
        %v4020 = vshrl.u32 %v4019, 23
        %v4021 = vsub.s32 %v4020, 127
        %v4022 = vand.u32 2147483647, %v474
        %v4023 = vand.u32 %v4022, 8388607
        %v4024 = vor.u32 %v4023, 8388608
        %v4025 = vsub.s32 0, %v4024
        %v4026 = vadd.s32 %v4021, 1
        %vm4027 = vcmp.gt.s32.totalorder %v4026, 0
        %v4028 = vsel %vm4027, %v4026, 0
        %v4029 = vshrl.u32 %v4028, 5
        %v4030 = vand.u32 %v4028, 31
        %v4031 = vsub.s32 32, %v4030
        %v4032 = vshrl.u32 683565275, %v4031
        %v4033 = vshll.u32 683565275, %v4030
        %v4034 = vshrl.u32 2475754826, %v4031
        %v4035 = vor.u32 %v4033, %v4034
        %v4036 = vshll.u32 2475754826, %v4030
        %v4037 = vshrl.u32 2131351028, %v4031
        %v4038 = vor.u32 %v4036, %v4037
        %v4039 = vshll.u32 2131351028, %v4030
        %v4040 = vshrl.u32 2102212464, %v4031
        %v4041 = vor.u32 %v4039, %v4040
        %v4042 = vshll.u32 2102212464, %v4030
        %v4043 = vshrl.u32 920167782, %v4031
        %v4044 = vor.u32 %v4042, %v4043
        %v4045 = vshll.u32 920167782, %v4030
        %v4046 = vshrl.u32 1326507024, %v4031
        %v4047 = vor.u32 %v4045, %v4046
        %vm4048 = vcmp.lt.s32.totalorder %v4029, 1
        %vm4049 = vcmp.lt.s32.totalorder %v4029, 2
        %vm4050 = vcmp.lt.s32.totalorder %v4029, 3
        %vm4051 = vcmp.lt.s32.totalorder %v4029, 4
        %v4052 = vsel %vm4048, %v4032, %v4035
        %v4053 = vsel %vm4051, %v4041, 2102212464
        %v4054 = vsel %vm4050, %v4038, %v4053
        %v4055 = vsel %vm4049, %v4052, %v4054
        %v4056 = vsel %vm4048, %v4035, %v4038
        %v4057 = vsel %vm4051, %v4044, 920167782
        %v4058 = vsel %vm4050, %v4041, %v4057
        %v4059 = vsel %vm4049, %v4056, %v4058
        %v4060 = vsel %vm4048, %v4038, %v4041
        %v4061 = vsel %vm4051, %v4047, 1326507024
        %v4062 = vsel %vm4050, %v4044, %v4061
        %v4063 = vsel %vm4049, %v4060, %v4062
        %v4064 = vshll.u32 %v4024, 8
        %v4065 = vmul.u32.u64.compose %v4064, %v4063
        %v4066 = vextract.low.u32 %v4065
        %v4067 = vextract.high.u32 %v4065
        %v4068 = vmul.u32.u64.compose %v4064, %v4059
        %v4069 = vextract.low.u32 %v4068
        %v4070 = vextract.high.u32 %v4068
        %v4071 = vmul.u32 %v4064, %v4055
        %v4072 = vadd.s32 %v4067, %v4069
        %vm4073 = vc.u32 %v4067, %v4069
        %v4074 = vadd.s32 %v4070, 1
        %v4075 = vsel %vm4073, %v4074, %v4070
        %v4076 = vadd.s32 %v4071, %v4075
        %v4077 = vadd.s32 %v4076, 536870912
        %v4078 = vshrl.u32 %v4077, 30
        %v4079 = vshll.u32 %v4078, 30
        %v4080 = vsub.s32 %v4076, %v4079
        %vm4081 = vcmp.lt.s32.totalorder %v4080, 0
        %v4082 = vsub.s32 0, %v4080
        %v4083 = vsel %vm4081, %v4082, %v4080
        %v4084 = vclz %v4083
        %v4085 = vsub.s32 %v4084, 2
        %vm4086 = vcmp.gt.s32.totalorder 0, %v4085
        %v4087 = vsel %vm4086, 0, %v4085
        %v4088 = vsub.s32 32, %v4087
        %v4089 = vshll.u32 %v4080, %v4087
        %v4090 = vshrl.u32 %v4072, %v4088
        %v4091 = vor.u32 %v4089, %v4090
        %v4092 = vsub.s32 4294967266, %v4087
        %v4093 = vadd.s32 %v4092, 127
        %v4094 = vshll.u32 %v4093, 23
        %v4095 = vor.u32 4788187, %v4094
        %v4096 = vand.u32 2147483647, %v4095
        %v4098 = vcvt.s32.f32 %v4091
        %v4099 = vmul.f32 %v4098, %v4096
        %v4100 = vxor.u32 %v4099, 2147483648
        %v4101 = vsel %vm4018, %v4100, %v4099
        %v4102 = vsub.s32 4, %v4078
        %v4103 = vsel %vm4018, %v4102, %v4078
        %v4104 = vsel %vm4017, %v474, %v4101
        %v4105 = vsel %vm4017, 0, %v4103
        %v4106 = vcosq.f32.pop %v4104
        %v4107 = vsinq.f32.pop %v4104
        %vm4108 = vweird.f32 %v474
        %v4109 = vadd.s32 %v4105, 3
        %v4110 = vand.u32 %v4109, 3
        %vm4111 = vcmp.lt.s32.totalorder %v4110, 2
        %vm4112 = vcmp.eq.s32.totalorder %v4110, 0
        %v4113 = vxor.u32 %v4107, 2147483648
        %v4114 = vsel %vm4112, %v4106, %v4113
        %vm4115 = vcmp.eq.s32.totalorder %v4110, 2
        %v4116 = vxor.u32 %v4106, 2147483648
        %v4117 = vsel %vm4115, %v4116, %v4107
        %v4118 = vsel %vm4111, %v4114, %v4117
        %v4119 = vsel %vm4108, nan, %v4118
        %v4120 = vand.u32 2147483647, %v475
        %vm4121 = vcmp.le.f32.partialorder %v4120, 0.7853982
        %vm4122 = vcmp.lt.s32.totalorder %v475, 0
        %v4123 = vand.u32 %v475, 2139095040
        %v4124 = vshrl.u32 %v4123, 23
        %v4125 = vsub.s32 %v4124, 127
        %v4126 = vand.u32 2147483647, %v475
        %v4127 = vand.u32 %v4126, 8388607
        %v4128 = vor.u32 %v4127, 8388608
        %v4129 = vsub.s32 0, %v4128
        %v4130 = vadd.s32 %v4125, 1
        %vm4131 = vcmp.gt.s32.totalorder %v4130, 0
        %v4132 = vsel %vm4131, %v4130, 0
        %v4133 = vshrl.u32 %v4132, 5
        %v4134 = vand.u32 %v4132, 31
        %v4135 = vsub.s32 32, %v4134
        %v4136 = vshrl.u32 683565275, %v4135
        %v4137 = vshll.u32 683565275, %v4134
        %v4138 = vshrl.u32 2475754826, %v4135
        %v4139 = vor.u32 %v4137, %v4138
        %v4140 = vshll.u32 2475754826, %v4134
        %v4141 = vshrl.u32 2131351028, %v4135
        %v4142 = vor.u32 %v4140, %v4141
        %v4143 = vshll.u32 2131351028, %v4134
        %v4144 = vshrl.u32 2102212464, %v4135
        %v4145 = vor.u32 %v4143, %v4144
        %v4146 = vshll.u32 2102212464, %v4134
        %v4147 = vshrl.u32 920167782, %v4135
        %v4148 = vor.u32 %v4146, %v4147
        %v4149 = vshll.u32 920167782, %v4134
        %v4150 = vshrl.u32 1326507024, %v4135
        %v4151 = vor.u32 %v4149, %v4150
        %vm4152 = vcmp.lt.s32.totalorder %v4133, 1
        %vm4153 = vcmp.lt.s32.totalorder %v4133, 2
        %vm4154 = vcmp.lt.s32.totalorder %v4133, 3
        %vm4155 = vcmp.lt.s32.totalorder %v4133, 4
        %v4156 = vsel %vm4152, %v4136, %v4139
        %v4157 = vsel %vm4155, %v4145, 2102212464
        %v4158 = vsel %vm4154, %v4142, %v4157
        %v4159 = vsel %vm4153, %v4156, %v4158
        %v4160 = vsel %vm4152, %v4139, %v4142
        %v4161 = vsel %vm4155, %v4148, 920167782
        %v4162 = vsel %vm4154, %v4145, %v4161
        %v4163 = vsel %vm4153, %v4160, %v4162
        %v4164 = vsel %vm4152, %v4142, %v4145
        %v4165 = vsel %vm4155, %v4151, 1326507024
        %v4166 = vsel %vm4154, %v4148, %v4165
        %v4167 = vsel %vm4153, %v4164, %v4166
        %v4168 = vshll.u32 %v4128, 8
        %v4169 = vmul.u32.u64.compose %v4168, %v4167
        %v4170 = vextract.low.u32 %v4169
        %v4171 = vextract.high.u32 %v4169
        %v4172 = vmul.u32.u64.compose %v4168, %v4163
        %v4173 = vextract.low.u32 %v4172
        %v4174 = vextract.high.u32 %v4172
        %v4175 = vmul.u32 %v4168, %v4159
        %v4176 = vadd.s32 %v4171, %v4173
        %vm4177 = vc.u32 %v4171, %v4173
        %v4178 = vadd.s32 %v4174, 1
        %v4179 = vsel %vm4177, %v4178, %v4174
        %v4180 = vadd.s32 %v4175, %v4179
        %v4181 = vadd.s32 %v4180, 536870912
        %v4182 = vshrl.u32 %v4181, 30
        %v4183 = vshll.u32 %v4182, 30
        %v4184 = vsub.s32 %v4180, %v4183
        %vm4185 = vcmp.lt.s32.totalorder %v4184, 0
        %v4186 = vsub.s32 0, %v4184
        %v4187 = vsel %vm4185, %v4186, %v4184
        %v4188 = vclz %v4187
        %v4189 = vsub.s32 %v4188, 2
        %vm4190 = vcmp.gt.s32.totalorder 0, %v4189
        %v4191 = vsel %vm4190, 0, %v4189
        %v4192 = vsub.s32 32, %v4191
        %v4193 = vshll.u32 %v4184, %v4191
        %v4194 = vshrl.u32 %v4176, %v4192
        %v4195 = vor.u32 %v4193, %v4194
        %v4196 = vsub.s32 4294967266, %v4191
        %v4197 = vadd.s32 %v4196, 127
        %v4198 = vshll.u32 %v4197, 23
        %v4199 = vor.u32 4788187, %v4198
        %v4200 = vand.u32 2147483647, %v4199
        %v4202 = vcvt.s32.f32 %v4195
        %v4203 = vmul.f32 %v4202, %v4200
        %v4204 = vxor.u32 %v4203, 2147483648
        %v4205 = vsel %vm4122, %v4204, %v4203
        %v4206 = vsub.s32 4, %v4182
        %v4207 = vsel %vm4122, %v4206, %v4182
        %v4208 = vsel %vm4121, %v475, %v4205
        %v4209 = vsel %vm4121, 0, %v4207
        %v4210 = vcosq.f32.pop %v4208
        %v4211 = vsinq.f32.pop %v4208
        %vm4212 = vweird.f32 %v475
        %v4213 = vadd.s32 %v4209, 3
        %v4214 = vand.u32 %v4213, 3
        %vm4215 = vcmp.lt.s32.totalorder %v4214, 2
        %vm4216 = vcmp.eq.s32.totalorder %v4214, 0
        %v4217 = vxor.u32 %v4211, 2147483648
        %v4218 = vsel %vm4216, %v4210, %v4217
        %vm4219 = vcmp.eq.s32.totalorder %v4214, 2
        %v4220 = vxor.u32 %v4210, 2147483648
        %v4221 = vsel %vm4219, %v4220, %v4211
        %v4222 = vsel %vm4215, %v4218, %v4221
        %v4223 = vsel %vm4212, nan, %v4222
        %v4224 = vand.u32 2147483647, %v476
        %vm4225 = vcmp.le.f32.partialorder %v4224, 0.7853982
        %vm4226 = vcmp.lt.s32.totalorder %v476, 0
        %v4227 = vand.u32 %v476, 2139095040
        %v4228 = vshrl.u32 %v4227, 23
        %v4229 = vsub.s32 %v4228, 127
        %v4230 = vand.u32 2147483647, %v476
        %v4231 = vand.u32 %v4230, 8388607
        %v4232 = vor.u32 %v4231, 8388608
        %v4233 = vsub.s32 0, %v4232
        %v4234 = vadd.s32 %v4229, 1
        %vm4235 = vcmp.gt.s32.totalorder %v4234, 0
        %v4236 = vsel %vm4235, %v4234, 0
        %v4237 = vshrl.u32 %v4236, 5
        %v4238 = vand.u32 %v4236, 31
        %v4239 = vsub.s32 32, %v4238
        %v4240 = vshrl.u32 683565275, %v4239
        %v4241 = vshll.u32 683565275, %v4238
        %v4242 = vshrl.u32 2475754826, %v4239
        %v4243 = vor.u32 %v4241, %v4242
        %v4244 = vshll.u32 2475754826, %v4238
        %v4245 = vshrl.u32 2131351028, %v4239
        %v4246 = vor.u32 %v4244, %v4245
        %v4247 = vshll.u32 2131351028, %v4238
        %v4248 = vshrl.u32 2102212464, %v4239
        %v4249 = vor.u32 %v4247, %v4248
        %v4250 = vshll.u32 2102212464, %v4238
        %v4251 = vshrl.u32 920167782, %v4239
        %v4252 = vor.u32 %v4250, %v4251
        %v4253 = vshll.u32 920167782, %v4238
        %v4254 = vshrl.u32 1326507024, %v4239
        %v4255 = vor.u32 %v4253, %v4254
        %vm4256 = vcmp.lt.s32.totalorder %v4237, 1
        %vm4257 = vcmp.lt.s32.totalorder %v4237, 2
        %vm4258 = vcmp.lt.s32.totalorder %v4237, 3
        %vm4259 = vcmp.lt.s32.totalorder %v4237, 4
        %v4260 = vsel %vm4256, %v4240, %v4243
        %v4261 = vsel %vm4259, %v4249, 2102212464
        %v4262 = vsel %vm4258, %v4246, %v4261
        %v4263 = vsel %vm4257, %v4260, %v4262
        %v4264 = vsel %vm4256, %v4243, %v4246
        %v4265 = vsel %vm4259, %v4252, 920167782
        %v4266 = vsel %vm4258, %v4249, %v4265
        %v4267 = vsel %vm4257, %v4264, %v4266
        %v4268 = vsel %vm4256, %v4246, %v4249
        %v4269 = vsel %vm4259, %v4255, 1326507024
        %v4270 = vsel %vm4258, %v4252, %v4269
        %v4271 = vsel %vm4257, %v4268, %v4270
        %v4272 = vshll.u32 %v4232, 8
        %v4273 = vmul.u32.u64.compose %v4272, %v4271
        %v4274 = vextract.low.u32 %v4273
        %v4275 = vextract.high.u32 %v4273
        %v4276 = vmul.u32.u64.compose %v4272, %v4267
        %v4277 = vextract.low.u32 %v4276
        %v4278 = vextract.high.u32 %v4276
        %v4279 = vmul.u32 %v4272, %v4263
        %v4280 = vadd.s32 %v4275, %v4277
        %vm4281 = vc.u32 %v4275, %v4277
        %v4282 = vadd.s32 %v4278, 1
        %v4283 = vsel %vm4281, %v4282, %v4278
        %v4284 = vadd.s32 %v4279, %v4283
        %v4285 = vadd.s32 %v4284, 536870912
        %v4286 = vshrl.u32 %v4285, 30
        %v4287 = vshll.u32 %v4286, 30
        %v4288 = vsub.s32 %v4284, %v4287
        %vm4289 = vcmp.lt.s32.totalorder %v4288, 0
        %v4290 = vsub.s32 0, %v4288
        %v4291 = vsel %vm4289, %v4290, %v4288
        %v4292 = vclz %v4291
        %v4293 = vsub.s32 %v4292, 2
        %vm4294 = vcmp.gt.s32.totalorder 0, %v4293
        %v4295 = vsel %vm4294, 0, %v4293
        %v4296 = vsub.s32 32, %v4295
        %v4297 = vshll.u32 %v4288, %v4295
        %v4298 = vshrl.u32 %v4280, %v4296
        %v4299 = vor.u32 %v4297, %v4298
        %v4300 = vsub.s32 4294967266, %v4295
        %v4301 = vadd.s32 %v4300, 127
        %v4302 = vshll.u32 %v4301, 23
        %v4303 = vor.u32 4788187, %v4302
        %v4304 = vand.u32 2147483647, %v4303
        %v4306 = vcvt.s32.f32 %v4299
        %v4307 = vmul.f32 %v4306, %v4304
        %v4308 = vxor.u32 %v4307, 2147483648
        %v4309 = vsel %vm4226, %v4308, %v4307
        %v4310 = vsub.s32 4, %v4286
        %v4311 = vsel %vm4226, %v4310, %v4286
        %v4312 = vsel %vm4225, %v476, %v4309
        %v4313 = vsel %vm4225, 0, %v4311
        %v4314 = vcosq.f32.pop %v4312
        %v4315 = vsinq.f32.pop %v4312
        %vm4316 = vweird.f32 %v476
        %v4317 = vadd.s32 %v4313, 3
        %v4318 = vand.u32 %v4317, 3
        %vm4319 = vcmp.lt.s32.totalorder %v4318, 2
        %vm4320 = vcmp.eq.s32.totalorder %v4318, 0
        %v4321 = vxor.u32 %v4315, 2147483648
        %v4322 = vsel %vm4320, %v4314, %v4321
        %vm4323 = vcmp.eq.s32.totalorder %v4318, 2
        %v4324 = vxor.u32 %v4314, 2147483648
        %v4325 = vsel %vm4323, %v4324, %v4315
        %v4326 = vsel %vm4319, %v4322, %v4325
        %v4327 = vsel %vm4316, nan, %v4326
        %v4328 = vand.u32 2147483647, %v477
        %vm4329 = vcmp.le.f32.partialorder %v4328, 0.7853982
        %vm4330 = vcmp.lt.s32.totalorder %v477, 0
        %v4331 = vand.u32 %v477, 2139095040
        %v4332 = vshrl.u32 %v4331, 23
        %v4333 = vsub.s32 %v4332, 127
        %v4334 = vand.u32 2147483647, %v477
        %v4335 = vand.u32 %v4334, 8388607
        %v4336 = vor.u32 %v4335, 8388608
        %v4337 = vsub.s32 0, %v4336
        %v4338 = vadd.s32 %v4333, 1
        %vm4339 = vcmp.gt.s32.totalorder %v4338, 0
        %v4340 = vsel %vm4339, %v4338, 0
        %v4341 = vshrl.u32 %v4340, 5
        %v4342 = vand.u32 %v4340, 31
        %v4343 = vsub.s32 32, %v4342
        %v4344 = vshrl.u32 683565275, %v4343
        %v4345 = vshll.u32 683565275, %v4342
        %v4346 = vshrl.u32 2475754826, %v4343
        %v4347 = vor.u32 %v4345, %v4346
        %v4348 = vshll.u32 2475754826, %v4342
        %v4349 = vshrl.u32 2131351028, %v4343
        %v4350 = vor.u32 %v4348, %v4349
        %v4351 = vshll.u32 2131351028, %v4342
        %v4352 = vshrl.u32 2102212464, %v4343
        %v4353 = vor.u32 %v4351, %v4352
        %v4354 = vshll.u32 2102212464, %v4342
        %v4355 = vshrl.u32 920167782, %v4343
        %v4356 = vor.u32 %v4354, %v4355
        %v4357 = vshll.u32 920167782, %v4342
        %v4358 = vshrl.u32 1326507024, %v4343
        %v4359 = vor.u32 %v4357, %v4358
        %vm4360 = vcmp.lt.s32.totalorder %v4341, 1
        %vm4361 = vcmp.lt.s32.totalorder %v4341, 2
        %vm4362 = vcmp.lt.s32.totalorder %v4341, 3
        %vm4363 = vcmp.lt.s32.totalorder %v4341, 4
        %v4364 = vsel %vm4360, %v4344, %v4347
        %v4365 = vsel %vm4363, %v4353, 2102212464
        %v4366 = vsel %vm4362, %v4350, %v4365
        %v4367 = vsel %vm4361, %v4364, %v4366
        %v4368 = vsel %vm4360, %v4347, %v4350
        %v4369 = vsel %vm4363, %v4356, 920167782
        %v4370 = vsel %vm4362, %v4353, %v4369
        %v4371 = vsel %vm4361, %v4368, %v4370
        %v4372 = vsel %vm4360, %v4350, %v4353
        %v4373 = vsel %vm4363, %v4359, 1326507024
        %v4374 = vsel %vm4362, %v4356, %v4373
        %v4375 = vsel %vm4361, %v4372, %v4374
        %v4376 = vshll.u32 %v4336, 8
        %v4377 = vmul.u32.u64.compose %v4376, %v4375
        %v4378 = vextract.low.u32 %v4377
        %v4379 = vextract.high.u32 %v4377
        %v4380 = vmul.u32.u64.compose %v4376, %v4371
        %v4381 = vextract.low.u32 %v4380
        %v4382 = vextract.high.u32 %v4380
        %v4383 = vmul.u32 %v4376, %v4367
        %v4384 = vadd.s32 %v4379, %v4381
        %vm4385 = vc.u32 %v4379, %v4381
        %v4386 = vadd.s32 %v4382, 1
        %v4387 = vsel %vm4385, %v4386, %v4382
        %v4388 = vadd.s32 %v4383, %v4387
        %v4389 = vadd.s32 %v4388, 536870912
        %v4390 = vshrl.u32 %v4389, 30
        %v4391 = vshll.u32 %v4390, 30
        %v4392 = vsub.s32 %v4388, %v4391
        %vm4393 = vcmp.lt.s32.totalorder %v4392, 0
        %v4394 = vsub.s32 0, %v4392
        %v4395 = vsel %vm4393, %v4394, %v4392
        %v4396 = vclz %v4395
        %v4397 = vsub.s32 %v4396, 2
        %vm4398 = vcmp.gt.s32.totalorder 0, %v4397
        %v4399 = vsel %vm4398, 0, %v4397
        %v4400 = vsub.s32 32, %v4399
        %v4401 = vshll.u32 %v4392, %v4399
        %v4402 = vshrl.u32 %v4384, %v4400
        %v4403 = vor.u32 %v4401, %v4402
        %v4404 = vsub.s32 4294967266, %v4399
        %v4405 = vadd.s32 %v4404, 127
        %v4406 = vshll.u32 %v4405, 23
        %v4407 = vor.u32 4788187, %v4406
        %v4408 = vand.u32 2147483647, %v4407
        %v4410 = vcvt.s32.f32 %v4403
        %v4411 = vmul.f32 %v4410, %v4408
        %v4412 = vxor.u32 %v4411, 2147483648
        %v4413 = vsel %vm4330, %v4412, %v4411
        %v4414 = vsub.s32 4, %v4390
        %v4415 = vsel %vm4330, %v4414, %v4390
        %v4416 = vsel %vm4329, %v477, %v4413
        %v4417 = vsel %vm4329, 0, %v4415
        %v4418 = vcosq.f32.pop %v4416
        %v4419 = vsinq.f32.pop %v4416
        %vm4420 = vweird.f32 %v477
        %v4421 = vadd.s32 %v4417, 3
        %v4422 = vand.u32 %v4421, 3
        %vm4423 = vcmp.lt.s32.totalorder %v4422, 2
        %vm4424 = vcmp.eq.s32.totalorder %v4422, 0
        %v4425 = vxor.u32 %v4419, 2147483648
        %v4426 = vsel %vm4424, %v4418, %v4425
        %vm4427 = vcmp.eq.s32.totalorder %v4422, 2
        %v4428 = vxor.u32 %v4418, 2147483648
        %v4429 = vsel %vm4427, %v4428, %v4419
        %v4430 = vsel %vm4423, %v4426, %v4429
        %v4431 = vsel %vm4420, nan, %v4430
        %v4432 = vand.u32 2147483647, %v478
        %vm4433 = vcmp.le.f32.partialorder %v4432, 0.7853982
        %vm4434 = vcmp.lt.s32.totalorder %v478, 0
        %v4435 = vand.u32 %v478, 2139095040
        %v4436 = vshrl.u32 %v4435, 23
        %v4437 = vsub.s32 %v4436, 127
        %v4438 = vand.u32 2147483647, %v478
        %v4439 = vand.u32 %v4438, 8388607
        %v4440 = vor.u32 %v4439, 8388608
        %v4441 = vsub.s32 0, %v4440
        %v4442 = vadd.s32 %v4437, 1
        %vm4443 = vcmp.gt.s32.totalorder %v4442, 0
        %v4444 = vsel %vm4443, %v4442, 0
        %v4445 = vshrl.u32 %v4444, 5
        %v4446 = vand.u32 %v4444, 31
        %v4447 = vsub.s32 32, %v4446
        %v4448 = vshrl.u32 683565275, %v4447
        %v4449 = vshll.u32 683565275, %v4446
        %v4450 = vshrl.u32 2475754826, %v4447
        %v4451 = vor.u32 %v4449, %v4450
        %v4452 = vshll.u32 2475754826, %v4446
        %v4453 = vshrl.u32 2131351028, %v4447
        %v4454 = vor.u32 %v4452, %v4453
        %v4455 = vshll.u32 2131351028, %v4446
        %v4456 = vshrl.u32 2102212464, %v4447
        %v4457 = vor.u32 %v4455, %v4456
        %v4458 = vshll.u32 2102212464, %v4446
        %v4459 = vshrl.u32 920167782, %v4447
        %v4460 = vor.u32 %v4458, %v4459
        %v4461 = vshll.u32 920167782, %v4446
        %v4462 = vshrl.u32 1326507024, %v4447
        %v4463 = vor.u32 %v4461, %v4462
        %vm4464 = vcmp.lt.s32.totalorder %v4445, 1
        %vm4465 = vcmp.lt.s32.totalorder %v4445, 2
        %vm4466 = vcmp.lt.s32.totalorder %v4445, 3
        %vm4467 = vcmp.lt.s32.totalorder %v4445, 4
        %v4468 = vsel %vm4464, %v4448, %v4451
        %v4469 = vsel %vm4467, %v4457, 2102212464
        %v4470 = vsel %vm4466, %v4454, %v4469
        %v4471 = vsel %vm4465, %v4468, %v4470
        %v4472 = vsel %vm4464, %v4451, %v4454
        %v4473 = vsel %vm4467, %v4460, 920167782
        %v4474 = vsel %vm4466, %v4457, %v4473
        %v4475 = vsel %vm4465, %v4472, %v4474
        %v4476 = vsel %vm4464, %v4454, %v4457
        %v4477 = vsel %vm4467, %v4463, 1326507024
        %v4478 = vsel %vm4466, %v4460, %v4477
        %v4479 = vsel %vm4465, %v4476, %v4478
        %v4480 = vshll.u32 %v4440, 8
        %v4481 = vmul.u32.u64.compose %v4480, %v4479
        %v4482 = vextract.low.u32 %v4481
        %v4483 = vextract.high.u32 %v4481
        %v4484 = vmul.u32.u64.compose %v4480, %v4475
        %v4485 = vextract.low.u32 %v4484
        %v4486 = vextract.high.u32 %v4484
        %v4487 = vmul.u32 %v4480, %v4471
        %v4488 = vadd.s32 %v4483, %v4485
        %vm4489 = vc.u32 %v4483, %v4485
        %v4490 = vadd.s32 %v4486, 1
        %v4491 = vsel %vm4489, %v4490, %v4486
        %v4492 = vadd.s32 %v4487, %v4491
        %v4493 = vadd.s32 %v4492, 536870912
        %v4494 = vshrl.u32 %v4493, 30
        %v4495 = vshll.u32 %v4494, 30
        %v4496 = vsub.s32 %v4492, %v4495
        %vm4497 = vcmp.lt.s32.totalorder %v4496, 0
        %v4498 = vsub.s32 0, %v4496
        %v4499 = vsel %vm4497, %v4498, %v4496
        %v4500 = vclz %v4499
        %v4501 = vsub.s32 %v4500, 2
        %vm4502 = vcmp.gt.s32.totalorder 0, %v4501
        %v4503 = vsel %vm4502, 0, %v4501
        %v4504 = vsub.s32 32, %v4503
        %v4505 = vshll.u32 %v4496, %v4503
        %v4506 = vshrl.u32 %v4488, %v4504
        %v4507 = vor.u32 %v4505, %v4506
        %v4508 = vsub.s32 4294967266, %v4503
        %v4509 = vadd.s32 %v4508, 127
        %v4510 = vshll.u32 %v4509, 23
        %v4511 = vor.u32 4788187, %v4510
        %v4512 = vand.u32 2147483647, %v4511
        %v4514 = vcvt.s32.f32 %v4507
        %v4515 = vmul.f32 %v4514, %v4512
        %v4516 = vxor.u32 %v4515, 2147483648
        %v4517 = vsel %vm4434, %v4516, %v4515
        %v4518 = vsub.s32 4, %v4494
        %v4519 = vsel %vm4434, %v4518, %v4494
        %v4520 = vsel %vm4433, %v478, %v4517
        %v4521 = vsel %vm4433, 0, %v4519
        %v4522 = vcosq.f32.pop %v4520
        %v4523 = vsinq.f32.pop %v4520
        %vm4524 = vweird.f32 %v478
        %v4525 = vadd.s32 %v4521, 3
        %v4526 = vand.u32 %v4525, 3
        %vm4527 = vcmp.lt.s32.totalorder %v4526, 2
        %vm4528 = vcmp.eq.s32.totalorder %v4526, 0
        %v4529 = vxor.u32 %v4523, 2147483648
        %v4530 = vsel %vm4528, %v4522, %v4529
        %vm4531 = vcmp.eq.s32.totalorder %v4526, 2
        %v4532 = vxor.u32 %v4522, 2147483648
        %v4533 = vsel %vm4531, %v4532, %v4523
        %v4534 = vsel %vm4527, %v4530, %v4533
        %v4535 = vsel %vm4524, nan, %v4534
        %v4536 = vand.u32 2147483647, %v479
        %vm4537 = vcmp.le.f32.partialorder %v4536, 0.7853982
        %vm4538 = vcmp.lt.s32.totalorder %v479, 0
        %v4539 = vand.u32 %v479, 2139095040
        %v4540 = vshrl.u32 %v4539, 23
        %v4541 = vsub.s32 %v4540, 127
        %v4542 = vand.u32 2147483647, %v479
        %v4543 = vand.u32 %v4542, 8388607
        %v4544 = vor.u32 %v4543, 8388608
        %v4545 = vsub.s32 0, %v4544
        %v4546 = vadd.s32 %v4541, 1
        %vm4547 = vcmp.gt.s32.totalorder %v4546, 0
        %v4548 = vsel %vm4547, %v4546, 0
        %v4549 = vshrl.u32 %v4548, 5
        %v4550 = vand.u32 %v4548, 31
        %v4551 = vsub.s32 32, %v4550
        %v4552 = vshrl.u32 683565275, %v4551
        %v4553 = vshll.u32 683565275, %v4550
        %v4554 = vshrl.u32 2475754826, %v4551
        %v4555 = vor.u32 %v4553, %v4554
        %v4556 = vshll.u32 2475754826, %v4550
        %v4557 = vshrl.u32 2131351028, %v4551
        %v4558 = vor.u32 %v4556, %v4557
        %v4559 = vshll.u32 2131351028, %v4550
        %v4560 = vshrl.u32 2102212464, %v4551
        %v4561 = vor.u32 %v4559, %v4560
        %v4562 = vshll.u32 2102212464, %v4550
        %v4563 = vshrl.u32 920167782, %v4551
        %v4564 = vor.u32 %v4562, %v4563
        %v4565 = vshll.u32 920167782, %v4550
        %v4566 = vshrl.u32 1326507024, %v4551
        %v4567 = vor.u32 %v4565, %v4566
        %vm4568 = vcmp.lt.s32.totalorder %v4549, 1
        %vm4569 = vcmp.lt.s32.totalorder %v4549, 2
        %vm4570 = vcmp.lt.s32.totalorder %v4549, 3
        %vm4571 = vcmp.lt.s32.totalorder %v4549, 4
        %v4572 = vsel %vm4568, %v4552, %v4555
        %v4573 = vsel %vm4571, %v4561, 2102212464
        %v4574 = vsel %vm4570, %v4558, %v4573
        %v4575 = vsel %vm4569, %v4572, %v4574
        %v4576 = vsel %vm4568, %v4555, %v4558
        %v4577 = vsel %vm4571, %v4564, 920167782
        %v4578 = vsel %vm4570, %v4561, %v4577
        %v4579 = vsel %vm4569, %v4576, %v4578
        %v4580 = vsel %vm4568, %v4558, %v4561
        %v4581 = vsel %vm4571, %v4567, 1326507024
        %v4582 = vsel %vm4570, %v4564, %v4581
        %v4583 = vsel %vm4569, %v4580, %v4582
        %v4584 = vshll.u32 %v4544, 8
        %v4585 = vmul.u32.u64.compose %v4584, %v4583
        %v4586 = vextract.low.u32 %v4585
        %v4587 = vextract.high.u32 %v4585
        %v4588 = vmul.u32.u64.compose %v4584, %v4579
        %v4589 = vextract.low.u32 %v4588
        %v4590 = vextract.high.u32 %v4588
        %v4591 = vmul.u32 %v4584, %v4575
        %v4592 = vadd.s32 %v4587, %v4589
        %vm4593 = vc.u32 %v4587, %v4589
        %v4594 = vadd.s32 %v4590, 1
        %v4595 = vsel %vm4593, %v4594, %v4590
        %v4596 = vadd.s32 %v4591, %v4595
        %v4597 = vadd.s32 %v4596, 536870912
        %v4598 = vshrl.u32 %v4597, 30
        %v4599 = vshll.u32 %v4598, 30
        %v4600 = vsub.s32 %v4596, %v4599
        %vm4601 = vcmp.lt.s32.totalorder %v4600, 0
        %v4602 = vsub.s32 0, %v4600
        %v4603 = vsel %vm4601, %v4602, %v4600
        %v4604 = vclz %v4603
        %v4605 = vsub.s32 %v4604, 2
        %vm4606 = vcmp.gt.s32.totalorder 0, %v4605
        %v4607 = vsel %vm4606, 0, %v4605
        %v4608 = vsub.s32 32, %v4607
        %v4609 = vshll.u32 %v4600, %v4607
        %v4610 = vshrl.u32 %v4592, %v4608
        %v4611 = vor.u32 %v4609, %v4610
        %v4612 = vsub.s32 4294967266, %v4607
        %v4613 = vadd.s32 %v4612, 127
        %v4614 = vshll.u32 %v4613, 23
        %v4615 = vor.u32 4788187, %v4614
        %v4616 = vand.u32 2147483647, %v4615
        %v4618 = vcvt.s32.f32 %v4611
        %v4619 = vmul.f32 %v4618, %v4616
        %v4620 = vxor.u32 %v4619, 2147483648
        %v4621 = vsel %vm4538, %v4620, %v4619
        %v4622 = vsub.s32 4, %v4598
        %v4623 = vsel %vm4538, %v4622, %v4598
        %v4624 = vsel %vm4537, %v479, %v4621
        %v4625 = vsel %vm4537, 0, %v4623
        %v4626 = vcosq.f32.pop %v4624
        %v4627 = vsinq.f32.pop %v4624
        %vm4628 = vweird.f32 %v479
        %v4629 = vadd.s32 %v4625, 3
        %v4630 = vand.u32 %v4629, 3
        %vm4631 = vcmp.lt.s32.totalorder %v4630, 2
        %vm4632 = vcmp.eq.s32.totalorder %v4630, 0
        %v4633 = vxor.u32 %v4627, 2147483648
        %v4634 = vsel %vm4632, %v4626, %v4633
        %vm4635 = vcmp.eq.s32.totalorder %v4630, 2
        %v4636 = vxor.u32 %v4626, 2147483648
        %v4637 = vsel %vm4635, %v4636, %v4627
        %v4638 = vsel %vm4631, %v4634, %v4637
        %v4639 = vsel %vm4628, nan, %v4638
        %v4640 = vmul.f32 %v420, %v2663
        %v4641 = vmul.f32 %v421, %v2767
        %v4642 = vmul.f32 %v422, %v2871
        %v4643 = vmul.f32 %v423, %v2975
        %v4644 = vmul.f32 %v424, %v3079
        %v4645 = vmul.f32 %v425, %v3183
        %v4646 = vmul.f32 %v426, %v3287
        %v4647 = vmul.f32 %v427, %v3391
        %v4648 = vmul.f32 %v428, %v3495
        %v4649 = vmul.f32 %v429, %v3599
        %v4650 = vmul.f32 %v430, %v3703
        %v4651 = vmul.f32 %v431, %v3807
        %v4652 = vmul.f32 %v432, %v3911
        %v4653 = vmul.f32 %v433, %v4015
        %v4654 = vmul.f32 %v434, %v4119
        %v4655 = vmul.f32 %v435, %v4223
        %v4656 = vmul.f32 %v436, %v4327
        %v4657 = vmul.f32 %v437, %v4431
        %v4658 = vmul.f32 %v438, %v4535
        %v4659 = vmul.f32 %v439, %v4639
        %v4660 = vld [vmem:[%s4] sm:$0xff]
        %v4661 = vld [vmem:[%s4 + $0x8] sm:$0xff]
        %v4662 = vld [vmem:[%s4 + $0x10] sm:$0xff]
        %v4663 = vld [vmem:[%s4 + $0x18] sm:$0xff]
        %v4664 = vld [vmem:[%s4 + $0x20] sm:$0xff]
        %v4665 = vld [vmem:[%s4 + $0x28] sm:$0xff]
        %v4666 = vld [vmem:[%s4 + $0x30] sm:$0xff]
        %v4667 = vld [vmem:[%s4 + $0x38] sm:$0xff]
        %v4668 = vld [vmem:[%s4 + $0x40] sm:$0xff]
        %v4669 = vld [vmem:[%s4 + $0x48] sm:$0xff]
        %v4670 = vld [vmem:[%s4 + $0x50] sm:$0xff]
        %v4671 = vld [vmem:[%s4 + $0x58] sm:$0xff]
        %v4672 = vld [vmem:[%s4 + $0x60] sm:$0xff]
        %v4673 = vld [vmem:[%s4 + $0x68] sm:$0xff]
        %v4674 = vld [vmem:[%s4 + $0x70] sm:$0xff]
        %v4675 = vld [vmem:[%s4 + $0x78] sm:$0xff]
        %v4676 = vld [vmem:[%s4 + $0x80] sm:$0xff]
        %v4677 = vld [vmem:[%s4 + $0x88] sm:$0xff]
        %v4678 = vld [vmem:[%s4 + $0x90] sm:$0xff]
        %v4679 = vld [vmem:[%s4 + $0x98] sm:$0xff]
        %v4680 = vld [vmem:[%s4 + $0xa0] sm:$0xff]
        %v4681 = vld [vmem:[%s4 + $0xa8] sm:$0xff]
        %v4682 = vld [vmem:[%s4 + $0xb0] sm:$0xff]
        %v4683 = vld [vmem:[%s4 + $0xb8] sm:$0xff]
        %v4684 = vld [vmem:[%s4 + $0xc0] sm:$0xff]
        %v4685 = vld [vmem:[%s4 + $0xc8] sm:$0xff]
        %v4686 = vld [vmem:[%s4 + $0xd0] sm:$0xff]
        %v4687 = vld [vmem:[%s4 + $0xd8] sm:$0xff]
        %v4688 = vld [vmem:[%s4 + $0xe0] sm:$0xff]
        %v4689 = vld [vmem:[%s4 + $0xe8] sm:$0xff]
        %v4690 = vld [vmem:[%s4 + $0xf0] sm:$0xff]
        %v4691 = vld [vmem:[%s4 + $0xf8] sm:$0xff]
        %v4692 = vld [vmem:[%s4 + $0x100] sm:$0xff]
        %v4693 = vld [vmem:[%s4 + $0x108] sm:$0xff]
        %v4694 = vld [vmem:[%s4 + $0x110] sm:$0xff]
        %v4695 = vld [vmem:[%s4 + $0x118] sm:$0xff]
        %v4696 = vld [vmem:[%s4 + $0x120] sm:$0xff]
        %v4697 = vld [vmem:[%s4 + $0x128] sm:$0xff]
        %v4698 = vld [vmem:[%s4 + $0x130] sm:$0xff]
        %v4699 = vld [vmem:[%s4 + $0x138] sm:$0xff]
        %v4700 = vld [vmem:[%s4 + $0x140] sm:$0xff]
        %v4701 = vld [vmem:[%s4 + $0x148] sm:$0xff]
        %v4702 = vld [vmem:[%s4 + $0x150] sm:$0xff]
        %v4703 = vld [vmem:[%s4 + $0x158] sm:$0xff]
        %v4704 = vld [vmem:[%s4 + $0x160] sm:$0xff]
        %v4705 = vld [vmem:[%s4 + $0x168] sm:$0xff]
        %v4706 = vld [vmem:[%s4 + $0x170] sm:$0xff]
        %v4707 = vld [vmem:[%s4 + $0x178] sm:$0xff]
        %v4708 = vld [vmem:[%s4 + $0x180] sm:$0xff]
        %v4709 = vld [vmem:[%s4 + $0x188] sm:$0xff]
        %v4710 = vld [vmem:[%s4 + $0x190] sm:$0xff]
        %v4711 = vld [vmem:[%s4 + $0x198] sm:$0xff]
        %v4712 = vld [vmem:[%s4 + $0x1a0] sm:$0xff]
        %v4713 = vld [vmem:[%s4 + $0x1a8] sm:$0xff]
        %v4714 = vld [vmem:[%s4 + $0x1b0] sm:$0xff]
        %v4715 = vld [vmem:[%s4 + $0x1b8] sm:$0xff]
        %v4716 = vld [vmem:[%s4 + $0x1c0] sm:$0xff]
        %v4717 = vld [vmem:[%s4 + $0x1c8] sm:$0xff]
        %v4718 = vld [vmem:[%s4 + $0x1d0] sm:$0xff]
        %v4719 = vld [vmem:[%s4 + $0x1d8] sm:$0xff]
        %v4720 = vld [vmem:[%s4 + $0x1e0] sm:$0xff]
        %v4721 = vld [vmem:[%s4 + $0x1e8] sm:$0xff]
        %v4722 = vld [vmem:[%s4 + $0x1f0] sm:$0xff]
        %v4723 = vld [vmem:[%s4 + $0x1f8] sm:$0xff]
        %v4724 = vld [vmem:[%s4 + $0x200] sm:$0xff]
        %v4725 = vld [vmem:[%s4 + $0x208] sm:$0xff]
        %v4726 = vld [vmem:[%s4 + $0x210] sm:$0xff]
        %v4727 = vld [vmem:[%s4 + $0x218] sm:$0xff]
        %v4728 = vld [vmem:[%s4 + $0x220] sm:$0xff]
        %v4729 = vld [vmem:[%s4 + $0x228] sm:$0xff]
        %v4730 = vld [vmem:[%s4 + $0x230] sm:$0xff]
        %v4731 = vld [vmem:[%s4 + $0x238] sm:$0xff]
        %v4732 = vld [vmem:[%s4 + $0x240] sm:$0xff]
        %v4733 = vld [vmem:[%s4 + $0x248] sm:$0xff]
        %v4734 = vld [vmem:[%s4 + $0x250] sm:$0xff]
        %v4735 = vld [vmem:[%s4 + $0x258] sm:$0xff]
        %v4736 = vld [vmem:[%s5] sm:$0xff]
        %v4737 = vld [vmem:[%s5 + $0x8] sm:$0xff]
        %v4738 = vld [vmem:[%s5 + $0x10] sm:$0xff]
        %v4739 = vld [vmem:[%s5 + $0x18] sm:$0xff]
        %v4740 = vld [vmem:[%s5 + $0x20] sm:$0xff]
        %v4741 = vld [vmem:[%s5 + $0x28] sm:$0xff]
        %v4742 = vld [vmem:[%s5 + $0x30] sm:$0xff]
        %v4743 = vld [vmem:[%s5 + $0x38] sm:$0xff]
        %v4744 = vld [vmem:[%s5 + $0x40] sm:$0xff]
        %v4745 = vld [vmem:[%s5 + $0x48] sm:$0xff]
        %v4746 = vld [vmem:[%s5 + $0x50] sm:$0xff]
        %v4747 = vld [vmem:[%s5 + $0x58] sm:$0xff]
        %v4748 = vld [vmem:[%s5 + $0x60] sm:$0xff]
        %v4749 = vld [vmem:[%s5 + $0x68] sm:$0xff]
        %v4750 = vld [vmem:[%s5 + $0x70] sm:$0xff]
        %v4751 = vld [vmem:[%s5 + $0x78] sm:$0xff]
        %v4752 = vld [vmem:[%s5 + $0x80] sm:$0xff]
        %v4753 = vld [vmem:[%s5 + $0x88] sm:$0xff]
        %v4754 = vld [vmem:[%s5 + $0x90] sm:$0xff]
        %v4755 = vld [vmem:[%s5 + $0x98] sm:$0xff]
        %v4756 = vld [vmem:[%s5 + $0xa0] sm:$0xff]
        %v4757 = vld [vmem:[%s5 + $0xa8] sm:$0xff]
        %v4758 = vld [vmem:[%s5 + $0xb0] sm:$0xff]
        %v4759 = vld [vmem:[%s5 + $0xb8] sm:$0xff]
        %v4760 = vld [vmem:[%s5 + $0xc0] sm:$0xff]
        %v4761 = vld [vmem:[%s5 + $0xc8] sm:$0xff]
        %v4762 = vld [vmem:[%s5 + $0xd0] sm:$0xff]
        %v4763 = vld [vmem:[%s5 + $0xd8] sm:$0xff]
        %v4764 = vld [vmem:[%s5 + $0xe0] sm:$0xff]
        %v4765 = vld [vmem:[%s5 + $0xe8] sm:$0xff]
        %v4766 = vld [vmem:[%s5 + $0xf0] sm:$0xff]
        %v4767 = vld [vmem:[%s5 + $0xf8] sm:$0xff]
        %v4768 = vld [vmem:[%s5 + $0x100] sm:$0xff]
        %v4769 = vld [vmem:[%s5 + $0x108] sm:$0xff]
        %v4770 = vld [vmem:[%s5 + $0x110] sm:$0xff]
        %v4771 = vld [vmem:[%s5 + $0x118] sm:$0xff]
        %v4772 = vld [vmem:[%s5 + $0x120] sm:$0xff]
        %v4773 = vld [vmem:[%s5 + $0x128] sm:$0xff]
        %v4774 = vld [vmem:[%s5 + $0x130] sm:$0xff]
        %v4775 = vld [vmem:[%s5 + $0x138] sm:$0xff]
        %v4776 = vld [vmem:[%s5 + $0x140] sm:$0xff]
        %v4777 = vld [vmem:[%s5 + $0x148] sm:$0xff]
        %v4778 = vld [vmem:[%s5 + $0x150] sm:$0xff]
        %v4779 = vld [vmem:[%s5 + $0x158] sm:$0xff]
        %v4780 = vld [vmem:[%s5 + $0x160] sm:$0xff]
        %v4781 = vld [vmem:[%s5 + $0x168] sm:$0xff]
        %v4782 = vld [vmem:[%s5 + $0x170] sm:$0xff]
        %v4783 = vld [vmem:[%s5 + $0x178] sm:$0xff]
        %v4784 = vld [vmem:[%s5 + $0x180] sm:$0xff]
        %v4785 = vld [vmem:[%s5 + $0x188] sm:$0xff]
        %v4786 = vld [vmem:[%s5 + $0x190] sm:$0xff]
        %v4787 = vld [vmem:[%s5 + $0x198] sm:$0xff]
        %v4788 = vld [vmem:[%s5 + $0x1a0] sm:$0xff]
        %v4789 = vld [vmem:[%s5 + $0x1a8] sm:$0xff]
        %v4790 = vld [vmem:[%s5 + $0x1b0] sm:$0xff]
        %v4791 = vld [vmem:[%s5 + $0x1b8] sm:$0xff]
        %v4792 = vld [vmem:[%s5 + $0x1c0] sm:$0xff]
        %v4793 = vld [vmem:[%s5 + $0x1c8] sm:$0xff]
        %v4794 = vld [vmem:[%s5 + $0x1d0] sm:$0xff]
        %v4795 = vld [vmem:[%s5 + $0x1d8] sm:$0xff]
        %v4796 = vld [vmem:[%s5 + $0x1e0] sm:$0xff]
        %v4797 = vld [vmem:[%s5 + $0x1e8] sm:$0xff]
        %v4798 = vld [vmem:[%s5 + $0x1f0] sm:$0xff]
        %v4799 = vld [vmem:[%s5 + $0x1f8] sm:$0xff]
        %v4800 = vld [vmem:[%s5 + $0x200] sm:$0xff]
        %v4801 = vld [vmem:[%s5 + $0x208] sm:$0xff]
        %v4802 = vld [vmem:[%s5 + $0x210] sm:$0xff]
        %v4803 = vld [vmem:[%s5 + $0x218] sm:$0xff]
        %v4804 = vld [vmem:[%s5 + $0x220] sm:$0xff]
        %v4805 = vld [vmem:[%s5 + $0x228] sm:$0xff]
        %v4806 = vld [vmem:[%s5 + $0x230] sm:$0xff]
        %v4807 = vld [vmem:[%s5 + $0x238] sm:$0xff]
        %v4808 = vld [vmem:[%s5 + $0x240] sm:$0xff]
        %v4809 = vld [vmem:[%s5 + $0x248] sm:$0xff]
        %v4810 = vld [vmem:[%s5 + $0x250] sm:$0xff]
        %v4811 = vld [vmem:[%s5 + $0x258] sm:$0xff]
        %vm4812 = vcmask 203776
        %v4814 = vsel %vm4812, %v4737, 0
        %v4817 = vsel %vm4812, %v4739, 0
        %v4820 = vsel %vm4812, %v4741, 0
        %v4823 = vsel %vm4812, %v4743, 0
        %v4826 = vsel %vm4812, %v4745, 0
        %v4829 = vsel %vm4812, %v4747, 0
        %v4832 = vsel %vm4812, %v4749, 0
        %v4835 = vsel %vm4812, %v4751, 0
        %v4838 = vsel %vm4812, %v4753, 0
        %v4841 = vsel %vm4812, %v4755, 0
        %v4844 = vsel %vm4812, %v4757, 0
        %v4847 = vsel %vm4812, %v4759, 0
        %v4850 = vsel %vm4812, %v4761, 0
        %v4853 = vsel %vm4812, %v4763, 0
        %v4856 = vsel %vm4812, %v4765, 0
        %v4859 = vsel %vm4812, %v4767, 0
        %v4862 = vsel %vm4812, %v4769, 0
        %v4865 = vsel %vm4812, %v4771, 0
        %v4868 = vsel %vm4812, %v4773, 0
        %v4871 = vsel %vm4812, %v4775, 0
        %v4874 = vsel %vm4812, %v4777, 0
        %v4877 = vsel %vm4812, %v4779, 0
        %v4880 = vsel %vm4812, %v4781, 0
        %v4883 = vsel %vm4812, %v4783, 0
        %v4886 = vsel %vm4812, %v4785, 0
        %v4889 = vsel %vm4812, %v4787, 0
        %v4892 = vsel %vm4812, %v4789, 0
        %v4895 = vsel %vm4812, %v4791, 0
        %v4898 = vsel %vm4812, %v4793, 0
        %v4901 = vsel %vm4812, %v4795, 0
        %v4904 = vsel %vm4812, %v4797, 0
        %v4907 = vsel %vm4812, %v4799, 0
        %v4910 = vsel %vm4812, %v4801, 0
        %v4913 = vsel %vm4812, %v4803, 0
        %v4916 = vsel %vm4812, %v4805, 0
        %v4919 = vsel %vm4812, %v4807, 0
        %v4922 = vsel %vm4812, %v4809, 0
        %v4925 = vsel %vm4812, %v4811, 0
        %vm4927 = vcmask 1040384
        %v4929 = vsel %vm4927, %v4659, 0
        %4931 = vmatprep.subr.mxu0 0.0
        %v4932 = vand.u32 %v4640, 4294901760
        %4933 = vmatpush1.msra.mxu0 %v4932
        %4934 = vmatprep.subr.mxu0 0.0
        %v4935 = vand.u32 %v4641, 4294901760
        %4936 = vmatpush1.msra.mxu0 %v4935
        %4937 = vmatprep.subr.mxu0 0.0
        %v4938 = vand.u32 %v4642, 4294901760
        %4939 = vmatpush1.msra.mxu0 %v4938
        %4940 = vmatprep.subr.mxu0 0.0
        %v4941 = vand.u32 %v4643, 4294901760
        %4942 = vmatpush1.msra.mxu0 %v4941
        %4943 = vmatprep.subr.mxu0 0.0
        %v4944 = vand.u32 %v4644, 4294901760
        %4945 = vmatpush1.msra.mxu0 %v4944
        %4946 = vmatprep.subr.mxu0 0.0
        %v4947 = vand.u32 %v4645, 4294901760
        %4948 = vmatpush1.msra.mxu0 %v4947
        %4949 = vmatprep.subr.mxu0 0.0
        %v4950 = vand.u32 %v4646, 4294901760
        %4951 = vmatpush1.msra.mxu0 %v4950
        %4952 = vmatprep.subr.mxu0 0.0
        %v4953 = vand.u32 %v4647, 4294901760
        %4954 = vmatpush1.msra.mxu0 %v4953
        %4955 = vmatprep.subr.mxu0 0.0
        %v4956 = vand.u32 %v4648, 4294901760
        %4957 = vmatpush1.msra.mxu0 %v4956
        %4958 = vmatprep.subr.mxu0 0.0
        %v4959 = vand.u32 %v4649, 4294901760
        %4960 = vmatpush1.msra.mxu0 %v4959
        %4961 = vmatprep.subr.mxu0 0.0
        %v4962 = vand.u32 %v4650, 4294901760
        %4963 = vmatpush1.msra.mxu0 %v4962
        %4964 = vmatprep.subr.mxu0 0.0
        %v4965 = vand.u32 %v4651, 4294901760
        %4966 = vmatpush1.msra.mxu0 %v4965
        %4967 = vmatprep.subr.mxu0 0.0
        %v4968 = vand.u32 %v4652, 4294901760
        %4969 = vmatpush1.msra.mxu0 %v4968
        %4970 = vmatprep.subr.mxu0 0.0
        %v4971 = vand.u32 %v4653, 4294901760
        %4972 = vmatpush1.msra.mxu0 %v4971
        %4973 = vmatprep.subr.mxu0 0.0
        %v4974 = vand.u32 %v4654, 4294901760
        %4975 = vmatpush1.msra.mxu0 %v4974
        %4976 = vmatprep.subr.mxu0 0.0
        %v4977 = vand.u32 %v4655, 4294901760
        %4978 = vmatpush1.msra.mxu0 %v4977
        %4979 = vmatprep.subr.mxu0 0.0
        %v4980 = vand.u32 %v4656, 4294901760
        %4981 = vmatpush1.msra.mxu0 %v4980
        %4982 = vmatprep.subr.mxu0 0.0
        %v4983 = vand.u32 %v4657, 4294901760
        %4984 = vmatpush1.msra.mxu0 %v4983
        %4985 = vmatprep.subr.mxu0 0.0
        %v4986 = vand.u32 %v4658, 4294901760
        %4987 = vmatpush1.msra.mxu0 %v4986
        %4988 = vmatprep.subr.mxu0 0.0
        %v4989 = vand.u32 %v4929, 4294901760
        %4990 = vmatpush1.msra.mxu0 %v4989
        %4991 = vmatprep.subr.mxu0 0.0
        %4992 = vmatpush1.msra.mxu0 0.0
        %4993 = vmatprep.subr.mxu0 0.0
        %4994 = vmatpush1.msra.mxu0 0.0
        %4995 = vmatprep.subr.mxu0 0.0
        %4996 = vmatpush1.msra.mxu0 0.0
        %4997 = vmatprep.subr.mxu0 0.0
        %4998 = vmatpush1.msra.mxu0 0.0
        %4999 = vmatprep.subr.mxu0 0.0
        %5000 = vmatpush1.msra.mxu0 0.0
        %5001 = vmatprep.subr.mxu0 0.0
        %5002 = vmatpush1.msra.mxu0 0.0
        %5003 = vmatprep.subr.mxu0 0.0
        %5004 = vmatpush1.msra.mxu0 0.0
        %5005 = vmatprep.subr.mxu0 0.0
        %5006 = vmatpush1.msra.mxu0 0.0
        %5007 = vmatprep.subr.mxu0 0.0
        %5008 = vmatpush1.msra.mxu0 0.0
        %5009 = vmatprep.subr.mxu0 0.0
        %5010 = vmatpush1.msra.mxu0 0.0
        %5011 = vmatprep.subr.mxu0 0.0
        %5012 = vmatpush1.msra.mxu0 0.0
        %5013 = vmatprep.subr.mxu0 0.0
        %5014 = vmatpush1.msra.mxu0 0.0
        %v5015 = vand.u32 %v4814, 4294901760
        %v5016 = vsub.f32 %v4814, %v5015
        %v5017 = vand.u32 %v5016, 4294901760
        %v5018 = vsub.f32 %v5016, %v5017
        %v5019 = vand.u32 %v5018, 4294901760
        %5020 = vmatprep.mubr.f32.mxu0 %v5019
        %v5021 = vand.u32 %v4736, 4294901760
        %v5022 = vsub.f32 %v4736, %v5021
        %v5023 = vand.u32 %v5022, 4294901760
        %v5024 = vsub.f32 %v5022, %v5023
        %v5025 = vand.u32 %v5024, 4294901760
        %5026 = vmatmul.mubr.f32.gmra.mrb[0].mxu0 %v5025
        %v5027 = vpop.f32.mrb[0].mxu0
        %v5028 = vadd.f32 0.0, %v5027
        %v5029 = vpop.f32.mrb[0].mxu0
        %v5030 = vand.u32 %v4817, 4294901760
        %v5031 = vsub.f32 %v4817, %v5030
        %v5032 = vand.u32 %v5031, 4294901760
        %v5033 = vsub.f32 %v5031, %v5032
        %v5034 = vand.u32 %v5033, 4294901760
        %5035 = vmatprep.mubr.f32.mxu0 %v5034
        %v5036 = vand.u32 %v4738, 4294901760
        %v5037 = vsub.f32 %v4738, %v5036
        %v5038 = vand.u32 %v5037, 4294901760
        %v5039 = vsub.f32 %v5037, %v5038
        %v5040 = vand.u32 %v5039, 4294901760
        %5041 = vmatmul.mubr.f32.gmra.mrb[0].mxu0 %v5040
        %v5042 = vpop.f32.mrb[0].mxu0
        %v5043 = vadd.f32 0.0, %v5042
        %v5044 = vpop.f32.mrb[0].mxu0
        %v5045 = vand.u32 %v4820, 4294901760
        %v5046 = vsub.f32 %v4820, %v5045
        %v5047 = vand.u32 %v5046, 4294901760
        %v5048 = vsub.f32 %v5046, %v5047
        %v5049 = vand.u32 %v5048, 4294901760
        %5050 = vmatprep.mubr.f32.mxu0 %v5049
        %v5051 = vand.u32 %v4740, 4294901760
        %v5052 = vsub.f32 %v4740, %v5051
        %v5053 = vand.u32 %v5052, 4294901760
        %v5054 = vsub.f32 %v5052, %v5053
        %v5055 = vand.u32 %v5054, 4294901760
        %5056 = vmatmul.mubr.f32.gmra.mrb[0].mxu0 %v5055
        %v5057 = vpop.f32.mrb[0].mxu0
        %v5058 = vadd.f32 0.0, %v5057
        %v5059 = vpop.f32.mrb[0].mxu0
        %v5060 = vand.u32 %v4823, 4294901760
        %v5061 = vsub.f32 %v4823, %v5060
        %v5062 = vand.u32 %v5061, 4294901760
        %v5063 = vsub.f32 %v5061, %v5062
        %v5064 = vand.u32 %v5063, 4294901760
        %5065 = vmatprep.mubr.f32.mxu0 %v5064
        %v5066 = vand.u32 %v4742, 4294901760
        %v5067 = vsub.f32 %v4742, %v5066
        %v5068 = vand.u32 %v5067, 4294901760
        %v5069 = vsub.f32 %v5067, %v5068
        %v5070 = vand.u32 %v5069, 4294901760
        %5071 = vmatmul.mubr.f32.gmra.mrb[0].mxu0 %v5070
        %v5072 = vpop.f32.mrb[0].mxu0
        %v5073 = vadd.f32 0.0, %v5072
        %v5074 = vpop.f32.mrb[0].mxu0
        %v5075 = vand.u32 %v4826, 4294901760
        %v5076 = vsub.f32 %v4826, %v5075
        %v5077 = vand.u32 %v5076, 4294901760
        %v5078 = vsub.f32 %v5076, %v5077
        %v5079 = vand.u32 %v5078, 4294901760
        %5080 = vmatprep.mubr.f32.mxu0 %v5079
        %v5081 = vand.u32 %v4744, 4294901760
        %v5082 = vsub.f32 %v4744, %v5081
        %v5083 = vand.u32 %v5082, 4294901760
        %v5084 = vsub.f32 %v5082, %v5083
        %v5085 = vand.u32 %v5084, 4294901760
        %5086 = vmatmul.mubr.f32.gmra.mrb[0].mxu0 %v5085
        %v5087 = vpop.f32.mrb[0].mxu0
        %v5088 = vadd.f32 0.0, %v5087
        %v5089 = vpop.f32.mrb[0].mxu0
        %v5090 = vand.u32 %v4829, 4294901760
        %v5091 = vsub.f32 %v4829, %v5090
        %v5092 = vand.u32 %v5091, 4294901760
        %v5093 = vsub.f32 %v5091, %v5092
        %v5094 = vand.u32 %v5093, 4294901760
        %5095 = vmatprep.mubr.f32.mxu0 %v5094
        %v5096 = vand.u32 %v4746, 4294901760
        %v5097 = vsub.f32 %v4746, %v5096
        %v5098 = vand.u32 %v5097, 4294901760
        %v5099 = vsub.f32 %v5097, %v5098
        %v5100 = vand.u32 %v5099, 4294901760
        %5101 = vmatmul.mubr.f32.gmra.mrb[0].mxu0 %v5100
        %v5102 = vpop.f32.mrb[0].mxu0
        %v5103 = vadd.f32 0.0, %v5102
        %v5104 = vpop.f32.mrb[0].mxu0
        %v5105 = vand.u32 %v4832, 4294901760
        %v5106 = vsub.f32 %v4832, %v5105
        %v5107 = vand.u32 %v5106, 4294901760
        %v5108 = vsub.f32 %v5106, %v5107
        %v5109 = vand.u32 %v5108, 4294901760
        %5110 = vmatprep.mubr.f32.mxu0 %v5109
        %v5111 = vand.u32 %v4748, 4294901760
        %v5112 = vsub.f32 %v4748, %v5111
        %v5113 = vand.u32 %v5112, 4294901760
        %v5114 = vsub.f32 %v5112, %v5113
        %v5115 = vand.u32 %v5114, 4294901760
        %5116 = vmatmul.mubr.f32.gmra.mrb[0].mxu0 %v5115
        %v5117 = vpop.f32.mrb[0].mxu0
        %v5118 = vadd.f32 0.0, %v5117
        %v5119 = vpop.f32.mrb[0].mxu0
        %v5120 = vand.u32 %v4835, 4294901760
        %v5121 = vsub.f32 %v4835, %v5120
        %v5122 = vand.u32 %v5121, 4294901760
        %v5123 = vsub.f32 %v5121, %v5122
        %v5124 = vand.u32 %v5123, 4294901760
        %5125 = vmatprep.mubr.f32.mxu0 %v5124
        %v5126 = vand.u32 %v4750, 4294901760
        %v5127 = vsub.f32 %v4750, %v5126
        %v5128 = vand.u32 %v5127, 4294901760
        %v5129 = vsub.f32 %v5127, %v5128
        %v5130 = vand.u32 %v5129, 4294901760
        %5131 = vmatmul.mubr.f32.gmra.mrb[0].mxu0 %v5130
        %v5132 = vpop.f32.mrb[0].mxu0
        %v5133 = vadd.f32 0.0, %v5132
        %v5134 = vpop.f32.mrb[0].mxu0
        %v5135 = vand.u32 %v4838, 4294901760
        %v5136 = vsub.f32 %v4838, %v5135
        %v5137 = vand.u32 %v5136, 4294901760
        %v5138 = vsub.f32 %v5136, %v5137
        %v5139 = vand.u32 %v5138, 4294901760
        %5140 = vmatprep.mubr.f32.mxu0 %v5139
        %v5141 = vand.u32 %v4752, 4294901760
        %v5142 = vsub.f32 %v4752, %v5141
        %v5143 = vand.u32 %v5142, 4294901760
        %v5144 = vsub.f32 %v5142, %v5143
        %v5145 = vand.u32 %v5144, 4294901760
        %5146 = vmatmul.mubr.f32.gmra.mrb[0].mxu0 %v5145
        %v5147 = vpop.f32.mrb[0].mxu0
        %v5148 = vadd.f32 0.0, %v5147
        %v5149 = vpop.f32.mrb[0].mxu0
        %v5150 = vand.u32 %v4841, 4294901760
        %v5151 = vsub.f32 %v4841, %v5150
        %v5152 = vand.u32 %v5151, 4294901760
        %v5153 = vsub.f32 %v5151, %v5152
        %v5154 = vand.u32 %v5153, 4294901760
        %5155 = vmatprep.mubr.f32.mxu0 %v5154
        %v5156 = vand.u32 %v4754, 4294901760
        %v5157 = vsub.f32 %v4754, %v5156
        %v5158 = vand.u32 %v5157, 4294901760
        %v5159 = vsub.f32 %v5157, %v5158
        %v5160 = vand.u32 %v5159, 4294901760
        %5161 = vmatmul.mubr.f32.gmra.mrb[0].mxu0 %v5160
        %v5162 = vpop.f32.mrb[0].mxu0
        %v5163 = vadd.f32 0.0, %v5162
        %v5164 = vpop.f32.mrb[0].mxu0
        %v5165 = vand.u32 %v4844, 4294901760
        %v5166 = vsub.f32 %v4844, %v5165
        %v5167 = vand.u32 %v5166, 4294901760
        %v5168 = vsub.f32 %v5166, %v5167
        %v5169 = vand.u32 %v5168, 4294901760
        %5170 = vmatprep.mubr.f32.mxu0 %v5169
        %v5171 = vand.u32 %v4756, 4294901760
        %v5172 = vsub.f32 %v4756, %v5171
        %v5173 = vand.u32 %v5172, 4294901760
        %v5174 = vsub.f32 %v5172, %v5173
        %v5175 = vand.u32 %v5174, 4294901760
        %5176 = vmatmul.mubr.f32.gmra.mrb[0].mxu0 %v5175
        %v5177 = vpop.f32.mrb[0].mxu0
        %v5178 = vadd.f32 0.0, %v5177
        %v5179 = vpop.f32.mrb[0].mxu0
        %v5180 = vand.u32 %v4847, 4294901760
        %v5181 = vsub.f32 %v4847, %v5180
        %v5182 = vand.u32 %v5181, 4294901760
        %v5183 = vsub.f32 %v5181, %v5182
        %v5184 = vand.u32 %v5183, 4294901760
        %5185 = vmatprep.mubr.f32.mxu0 %v5184
        %v5186 = vand.u32 %v4758, 4294901760
        %v5187 = vsub.f32 %v4758, %v5186
        %v5188 = vand.u32 %v5187, 4294901760
        %v5189 = vsub.f32 %v5187, %v5188
        %v5190 = vand.u32 %v5189, 4294901760
        %5191 = vmatmul.mubr.f32.gmra.mrb[0].mxu0 %v5190
        %v5192 = vpop.f32.mrb[0].mxu0
        %v5193 = vadd.f32 0.0, %v5192
        %v5194 = vpop.f32.mrb[0].mxu0
        %v5195 = vand.u32 %v4850, 4294901760
        %v5196 = vsub.f32 %v4850, %v5195
        %v5197 = vand.u32 %v5196, 4294901760
        %v5198 = vsub.f32 %v5196, %v5197
        %v5199 = vand.u32 %v5198, 4294901760
        %5200 = vmatprep.mubr.f32.mxu0 %v5199
        %v5201 = vand.u32 %v4760, 4294901760
        %v5202 = vsub.f32 %v4760, %v5201
        %v5203 = vand.u32 %v5202, 4294901760
        %v5204 = vsub.f32 %v5202, %v5203
        %v5205 = vand.u32 %v5204, 4294901760
        %5206 = vmatmul.mubr.f32.gmra.mrb[0].mxu0 %v5205
        %v5207 = vpop.f32.mrb[0].mxu0
        %v5208 = vadd.f32 0.0, %v5207
        %v5209 = vpop.f32.mrb[0].mxu0
        %v5210 = vand.u32 %v4853, 4294901760
        %v5211 = vsub.f32 %v4853, %v5210
        %v5212 = vand.u32 %v5211, 4294901760
        %v5213 = vsub.f32 %v5211, %v5212
        %v5214 = vand.u32 %v5213, 4294901760
        %5215 = vmatprep.mubr.f32.mxu0 %v5214
        %v5216 = vand.u32 %v4762, 4294901760
        %v5217 = vsub.f32 %v4762, %v5216
        %v5218 = vand.u32 %v5217, 4294901760
        %v5219 = vsub.f32 %v5217, %v5218
        %v5220 = vand.u32 %v5219, 4294901760
        %5221 = vmatmul.mubr.f32.gmra.mrb[0].mxu0 %v5220
        %v5222 = vpop.f32.mrb[0].mxu0
        %v5223 = vadd.f32 0.0, %v5222
        %v5224 = vpop.f32.mrb[0].mxu0
        %v5225 = vand.u32 %v4856, 4294901760
        %v5226 = vsub.f32 %v4856, %v5225
        %v5227 = vand.u32 %v5226, 4294901760
        %v5228 = vsub.f32 %v5226, %v5227
        %v5229 = vand.u32 %v5228, 4294901760
        %5230 = vmatprep.mubr.f32.mxu0 %v5229
        %v5231 = vand.u32 %v4764, 4294901760
        %v5232 = vsub.f32 %v4764, %v5231
        %v5233 = vand.u32 %v5232, 4294901760
        %v5234 = vsub.f32 %v5232, %v5233
        %v5235 = vand.u32 %v5234, 4294901760
        %5236 = vmatmul.mubr.f32.gmra.mrb[0].mxu0 %v5235
        %v5237 = vpop.f32.mrb[0].mxu0
        %v5238 = vadd.f32 0.0, %v5237
        %v5239 = vpop.f32.mrb[0].mxu0
        %v5240 = vand.u32 %v4859, 4294901760
        %v5241 = vsub.f32 %v4859, %v5240
        %v5242 = vand.u32 %v5241, 4294901760
        %v5243 = vsub.f32 %v5241, %v5242
        %v5244 = vand.u32 %v5243, 4294901760
        %5245 = vmatprep.mubr.f32.mxu0 %v5244
        %v5246 = vand.u32 %v4766, 4294901760
        %v5247 = vsub.f32 %v4766, %v5246
        %v5248 = vand.u32 %v5247, 4294901760
        %v5249 = vsub.f32 %v5247, %v5248
        %v5250 = vand.u32 %v5249, 4294901760
        %5251 = vmatmul.mubr.f32.gmra.mrb[0].mxu0 %v5250
        %v5252 = vpop.f32.mrb[0].mxu0
        %v5253 = vadd.f32 0.0, %v5252
        %v5254 = vpop.f32.mrb[0].mxu0
        %v5255 = vand.u32 %v4862, 4294901760
        %v5256 = vsub.f32 %v4862, %v5255
        %v5257 = vand.u32 %v5256, 4294901760
        %v5258 = vsub.f32 %v5256, %v5257
        %v5259 = vand.u32 %v5258, 4294901760
        %5260 = vmatprep.mubr.f32.mxu0 %v5259
        %v5261 = vand.u32 %v4768, 4294901760
        %v5262 = vsub.f32 %v4768, %v5261
        %v5263 = vand.u32 %v5262, 4294901760
        %v5264 = vsub.f32 %v5262, %v5263
        %v5265 = vand.u32 %v5264, 4294901760
        %5266 = vmatmul.mubr.f32.gmra.mrb[0].mxu0 %v5265
        %v5267 = vpop.f32.mrb[0].mxu0
        %v5268 = vadd.f32 0.0, %v5267
        %v5269 = vpop.f32.mrb[0].mxu0
        %v5270 = vand.u32 %v4865, 4294901760
        %v5271 = vsub.f32 %v4865, %v5270
        %v5272 = vand.u32 %v5271, 4294901760
        %v5273 = vsub.f32 %v5271, %v5272
        %v5274 = vand.u32 %v5273, 4294901760
        %5275 = vmatprep.mubr.f32.mxu0 %v5274
        %v5276 = vand.u32 %v4770, 4294901760
        %v5277 = vsub.f32 %v4770, %v5276
        %v5278 = vand.u32 %v5277, 4294901760
        %v5279 = vsub.f32 %v5277, %v5278
        %v5280 = vand.u32 %v5279, 4294901760
        %5281 = vmatmul.mubr.f32.gmra.mrb[0].mxu0 %v5280
        %v5282 = vpop.f32.mrb[0].mxu0
        %v5283 = vadd.f32 0.0, %v5282
        %v5284 = vpop.f32.mrb[0].mxu0
        %v5285 = vand.u32 %v4868, 4294901760
        %v5286 = vsub.f32 %v4868, %v5285
        %v5287 = vand.u32 %v5286, 4294901760
        %v5288 = vsub.f32 %v5286, %v5287
        %v5289 = vand.u32 %v5288, 4294901760
        %5290 = vmatprep.mubr.f32.mxu0 %v5289
        %v5291 = vand.u32 %v4772, 4294901760
        %v5292 = vsub.f32 %v4772, %v5291
        %v5293 = vand.u32 %v5292, 4294901760
        %v5294 = vsub.f32 %v5292, %v5293
        %v5295 = vand.u32 %v5294, 4294901760
        %5296 = vmatmul.mubr.f32.gmra.mrb[0].mxu0 %v5295
        %v5297 = vpop.f32.mrb[0].mxu0
        %v5298 = vadd.f32 0.0, %v5297
        %v5299 = vpop.f32.mrb[0].mxu0
        %v5300 = vand.u32 %v4871, 4294901760
        %v5301 = vsub.f32 %v4871, %v5300
        %v5302 = vand.u32 %v5301, 4294901760
        %v5303 = vsub.f32 %v5301, %v5302
        %v5304 = vand.u32 %v5303, 4294901760
        %5305 = vmatprep.mubr.f32.mxu0 %v5304
        %v5306 = vand.u32 %v4774, 4294901760
        %v5307 = vsub.f32 %v4774, %v5306
        %v5308 = vand.u32 %v5307, 4294901760
        %v5309 = vsub.f32 %v5307, %v5308
        %v5310 = vand.u32 %v5309, 4294901760
        %5311 = vmatmul.mubr.f32.gmra.mrb[0].mxu0 %v5310
        %v5312 = vpop.f32.mrb[0].mxu0
        %v5313 = vadd.f32 0.0, %v5312
        %v5314 = vpop.f32.mrb[0].mxu0
        %v5315 = vand.u32 %v4874, 4294901760
        %v5316 = vsub.f32 %v4874, %v5315
        %v5317 = vand.u32 %v5316, 4294901760
        %v5318 = vsub.f32 %v5316, %v5317
        %v5319 = vand.u32 %v5318, 4294901760
        %5320 = vmatprep.mubr.f32.mxu0 %v5319
        %v5321 = vand.u32 %v4776, 4294901760
        %v5322 = vsub.f32 %v4776, %v5321
        %v5323 = vand.u32 %v5322, 4294901760
        %v5324 = vsub.f32 %v5322, %v5323
        %v5325 = vand.u32 %v5324, 4294901760
        %5326 = vmatmul.mubr.f32.gmra.mrb[0].mxu0 %v5325
        %v5327 = vpop.f32.mrb[0].mxu0
        %v5328 = vadd.f32 0.0, %v5327
        %v5329 = vpop.f32.mrb[0].mxu0
        %v5330 = vand.u32 %v4877, 4294901760
        %v5331 = vsub.f32 %v4877, %v5330
        %v5332 = vand.u32 %v5331, 4294901760
        %v5333 = vsub.f32 %v5331, %v5332
        %v5334 = vand.u32 %v5333, 4294901760
        %5335 = vmatprep.mubr.f32.mxu0 %v5334
        %v5336 = vand.u32 %v4778, 4294901760
        %v5337 = vsub.f32 %v4778, %v5336
        %v5338 = vand.u32 %v5337, 4294901760
        %v5339 = vsub.f32 %v5337, %v5338
        %v5340 = vand.u32 %v5339, 4294901760
        %5341 = vmatmul.mubr.f32.gmra.mrb[0].mxu0 %v5340
        %v5342 = vpop.f32.mrb[0].mxu0
        %v5343 = vadd.f32 0.0, %v5342
        %v5344 = vpop.f32.mrb[0].mxu0
        %v5345 = vand.u32 %v4880, 4294901760
        %v5346 = vsub.f32 %v4880, %v5345
        %v5347 = vand.u32 %v5346, 4294901760
        %v5348 = vsub.f32 %v5346, %v5347
        %v5349 = vand.u32 %v5348, 4294901760
        %5350 = vmatprep.mubr.f32.mxu0 %v5349
        %v5351 = vand.u32 %v4780, 4294901760
        %v5352 = vsub.f32 %v4780, %v5351
        %v5353 = vand.u32 %v5352, 4294901760
        %v5354 = vsub.f32 %v5352, %v5353
        %v5355 = vand.u32 %v5354, 4294901760
        %5356 = vmatmul.mubr.f32.gmra.mrb[0].mxu0 %v5355
        %v5357 = vpop.f32.mrb[0].mxu0
        %v5358 = vadd.f32 0.0, %v5357
        %v5359 = vpop.f32.mrb[0].mxu0
        %v5360 = vand.u32 %v4883, 4294901760
        %v5361 = vsub.f32 %v4883, %v5360
        %v5362 = vand.u32 %v5361, 4294901760
        %v5363 = vsub.f32 %v5361, %v5362
        %v5364 = vand.u32 %v5363, 4294901760
        %5365 = vmatprep.mubr.f32.mxu0 %v5364
        %v5366 = vand.u32 %v4782, 4294901760
        %v5367 = vsub.f32 %v4782, %v5366
        %v5368 = vand.u32 %v5367, 4294901760
        %v5369 = vsub.f32 %v5367, %v5368
        %v5370 = vand.u32 %v5369, 4294901760
        %5371 = vmatmul.mubr.f32.gmra.mrb[0].mxu0 %v5370
        %v5372 = vpop.f32.mrb[0].mxu0
        %v5373 = vadd.f32 0.0, %v5372
        %v5374 = vpop.f32.mrb[0].mxu0
        %v5375 = vand.u32 %v4886, 4294901760
        %v5376 = vsub.f32 %v4886, %v5375
        %v5377 = vand.u32 %v5376, 4294901760
        %v5378 = vsub.f32 %v5376, %v5377
        %v5379 = vand.u32 %v5378, 4294901760
        %5380 = vmatprep.mubr.f32.mxu0 %v5379
        %v5381 = vand.u32 %v4784, 4294901760
        %v5382 = vsub.f32 %v4784, %v5381
        %v5383 = vand.u32 %v5382, 4294901760
        %v5384 = vsub.f32 %v5382, %v5383
        %v5385 = vand.u32 %v5384, 4294901760
        %5386 = vmatmul.mubr.f32.gmra.mrb[0].mxu0 %v5385
        %v5387 = vpop.f32.mrb[0].mxu0
        %v5388 = vadd.f32 0.0, %v5387
        %v5389 = vpop.f32.mrb[0].mxu0
        %v5390 = vand.u32 %v4889, 4294901760
        %v5391 = vsub.f32 %v4889, %v5390
        %v5392 = vand.u32 %v5391, 4294901760
        %v5393 = vsub.f32 %v5391, %v5392
        %v5394 = vand.u32 %v5393, 4294901760
        %5395 = vmatprep.mubr.f32.mxu0 %v5394
        %v5396 = vand.u32 %v4786, 4294901760
        %v5397 = vsub.f32 %v4786, %v5396
        %v5398 = vand.u32 %v5397, 4294901760
        %v5399 = vsub.f32 %v5397, %v5398
        %v5400 = vand.u32 %v5399, 4294901760
        %5401 = vmatmul.mubr.f32.gmra.mrb[0].mxu0 %v5400
        %v5402 = vpop.f32.mrb[0].mxu0
        %v5403 = vadd.f32 0.0, %v5402
        %v5404 = vpop.f32.mrb[0].mxu0
        %v5405 = vand.u32 %v4892, 4294901760
        %v5406 = vsub.f32 %v4892, %v5405
        %v5407 = vand.u32 %v5406, 4294901760
        %v5408 = vsub.f32 %v5406, %v5407
        %v5409 = vand.u32 %v5408, 4294901760
        %5410 = vmatprep.mubr.f32.mxu0 %v5409
        %v5411 = vand.u32 %v4788, 4294901760
        %v5412 = vsub.f32 %v4788, %v5411
        %v5413 = vand.u32 %v5412, 4294901760
        %v5414 = vsub.f32 %v5412, %v5413
        %v5415 = vand.u32 %v5414, 4294901760
        %5416 = vmatmul.mubr.f32.gmra.mrb[0].mxu0 %v5415
        %v5417 = vpop.f32.mrb[0].mxu0
        %v5418 = vadd.f32 0.0, %v5417
        %v5419 = vpop.f32.mrb[0].mxu0
        %v5420 = vand.u32 %v4895, 4294901760
        %v5421 = vsub.f32 %v4895, %v5420
        %v5422 = vand.u32 %v5421, 4294901760
        %v5423 = vsub.f32 %v5421, %v5422
        %v5424 = vand.u32 %v5423, 4294901760
        %5425 = vmatprep.mubr.f32.mxu0 %v5424
        %v5426 = vand.u32 %v4790, 4294901760
        %v5427 = vsub.f32 %v4790, %v5426
        %v5428 = vand.u32 %v5427, 4294901760
        %v5429 = vsub.f32 %v5427, %v5428
        %v5430 = vand.u32 %v5429, 4294901760
        %5431 = vmatmul.mubr.f32.gmra.mrb[0].mxu0 %v5430
        %v5432 = vpop.f32.mrb[0].mxu0
        %v5433 = vadd.f32 0.0, %v5432
        %v5434 = vpop.f32.mrb[0].mxu0
        %v5435 = vand.u32 %v4898, 4294901760
        %v5436 = vsub.f32 %v4898, %v5435
        %v5437 = vand.u32 %v5436, 4294901760
        %v5438 = vsub.f32 %v5436, %v5437
        %v5439 = vand.u32 %v5438, 4294901760
        %5440 = vmatprep.mubr.f32.mxu0 %v5439
        %v5441 = vand.u32 %v4792, 4294901760
        %v5442 = vsub.f32 %v4792, %v5441
        %v5443 = vand.u32 %v5442, 4294901760
        %v5444 = vsub.f32 %v5442, %v5443
        %v5445 = vand.u32 %v5444, 4294901760
        %5446 = vmatmul.mubr.f32.gmra.mrb[0].mxu0 %v5445
        %v5447 = vpop.f32.mrb[0].mxu0
        %v5448 = vadd.f32 0.0, %v5447
        %v5449 = vpop.f32.mrb[0].mxu0
        %v5450 = vand.u32 %v4901, 4294901760
        %v5451 = vsub.f32 %v4901, %v5450
        %v5452 = vand.u32 %v5451, 4294901760
        %v5453 = vsub.f32 %v5451, %v5452
        %v5454 = vand.u32 %v5453, 4294901760
        %5455 = vmatprep.mubr.f32.mxu0 %v5454
        %v5456 = vand.u32 %v4794, 4294901760
        %v5457 = vsub.f32 %v4794, %v5456
        %v5458 = vand.u32 %v5457, 4294901760
        %v5459 = vsub.f32 %v5457, %v5458
        %v5460 = vand.u32 %v5459, 4294901760
        %5461 = vmatmul.mubr.f32.gmra.mrb[0].mxu0 %v5460
        %v5462 = vpop.f32.mrb[0].mxu0
        %v5463 = vadd.f32 0.0, %v5462
        %v5464 = vpop.f32.mrb[0].mxu0
        %v5465 = vand.u32 %v4904, 4294901760
        %v5466 = vsub.f32 %v4904, %v5465
        %v5467 = vand.u32 %v5466, 4294901760
        %v5468 = vsub.f32 %v5466, %v5467
        %v5469 = vand.u32 %v5468, 4294901760
        %5470 = vmatprep.mubr.f32.mxu0 %v5469
        %v5471 = vand.u32 %v4796, 4294901760
        %v5472 = vsub.f32 %v4796, %v5471
        %v5473 = vand.u32 %v5472, 4294901760
        %v5474 = vsub.f32 %v5472, %v5473
        %v5475 = vand.u32 %v5474, 4294901760
        %5476 = vmatmul.mubr.f32.gmra.mrb[0].mxu0 %v5475
        %v5477 = vpop.f32.mrb[0].mxu0
        %v5478 = vadd.f32 0.0, %v5477
        %v5479 = vpop.f32.mrb[0].mxu0
        %v5480 = vand.u32 %v4907, 4294901760
        %v5481 = vsub.f32 %v4907, %v5480
        %v5482 = vand.u32 %v5481, 4294901760
        %v5483 = vsub.f32 %v5481, %v5482
        %v5484 = vand.u32 %v5483, 4294901760
        %5485 = vmatprep.mubr.f32.mxu0 %v5484
        %v5486 = vand.u32 %v4798, 4294901760
        %v5487 = vsub.f32 %v4798, %v5486
        %v5488 = vand.u32 %v5487, 4294901760
        %v5489 = vsub.f32 %v5487, %v5488
        %v5490 = vand.u32 %v5489, 4294901760
        %5491 = vmatmul.mubr.f32.gmra.mrb[0].mxu0 %v5490
        %v5492 = vpop.f32.mrb[0].mxu0
        %v5493 = vadd.f32 0.0, %v5492
        %v5494 = vpop.f32.mrb[0].mxu0
        %v5495 = vand.u32 %v4910, 4294901760
        %v5496 = vsub.f32 %v4910, %v5495
        %v5497 = vand.u32 %v5496, 4294901760
        %v5498 = vsub.f32 %v5496, %v5497
        %v5499 = vand.u32 %v5498, 4294901760
        %5500 = vmatprep.mubr.f32.mxu0 %v5499
        %v5501 = vand.u32 %v4800, 4294901760
        %v5502 = vsub.f32 %v4800, %v5501
        %v5503 = vand.u32 %v5502, 4294901760
        %v5504 = vsub.f32 %v5502, %v5503
        %v5505 = vand.u32 %v5504, 4294901760
        %5506 = vmatmul.mubr.f32.gmra.mrb[0].mxu0 %v5505
        %v5507 = vpop.f32.mrb[0].mxu0
        %v5508 = vadd.f32 0.0, %v5507
        %v5509 = vpop.f32.mrb[0].mxu0
        %v5510 = vand.u32 %v4913, 4294901760
        %v5511 = vsub.f32 %v4913, %v5510
        %v5512 = vand.u32 %v5511, 4294901760
        %v5513 = vsub.f32 %v5511, %v5512
        %v5514 = vand.u32 %v5513, 4294901760
        %5515 = vmatprep.mubr.f32.mxu0 %v5514
        %v5516 = vand.u32 %v4802, 4294901760
        %v5517 = vsub.f32 %v4802, %v5516
        %v5518 = vand.u32 %v5517, 4294901760
        %v5519 = vsub.f32 %v5517, %v5518
        %v5520 = vand.u32 %v5519, 4294901760
        %5521 = vmatmul.mubr.f32.gmra.mrb[0].mxu0 %v5520
        %v5522 = vpop.f32.mrb[0].mxu0
        %v5523 = vadd.f32 0.0, %v5522
        %v5524 = vpop.f32.mrb[0].mxu0
        %v5525 = vand.u32 %v4916, 4294901760
        %v5526 = vsub.f32 %v4916, %v5525
        %v5527 = vand.u32 %v5526, 4294901760
        %v5528 = vsub.f32 %v5526, %v5527
        %v5529 = vand.u32 %v5528, 4294901760
        %5530 = vmatprep.mubr.f32.mxu0 %v5529
        %v5531 = vand.u32 %v4804, 4294901760
        %v5532 = vsub.f32 %v4804, %v5531
        %v5533 = vand.u32 %v5532, 4294901760
        %v5534 = vsub.f32 %v5532, %v5533
        %v5535 = vand.u32 %v5534, 4294901760
        %5536 = vmatmul.mubr.f32.gmra.mrb[0].mxu0 %v5535
        %v5537 = vpop.f32.mrb[0].mxu0
        %v5538 = vadd.f32 0.0, %v5537
        %v5539 = vpop.f32.mrb[0].mxu0
        %v5540 = vand.u32 %v4919, 4294901760
        %v5541 = vsub.f32 %v4919, %v5540
        %v5542 = vand.u32 %v5541, 4294901760
        %v5543 = vsub.f32 %v5541, %v5542
        %v5544 = vand.u32 %v5543, 4294901760
        %5545 = vmatprep.mubr.f32.mxu0 %v5544
        %v5546 = vand.u32 %v4806, 4294901760
        %v5547 = vsub.f32 %v4806, %v5546
        %v5548 = vand.u32 %v5547, 4294901760
        %v5549 = vsub.f32 %v5547, %v5548
        %v5550 = vand.u32 %v5549, 4294901760
        %5551 = vmatmul.mubr.f32.gmra.mrb[0].mxu0 %v5550
        %v5552 = vpop.f32.mrb[0].mxu0
        %v5553 = vadd.f32 0.0, %v5552
        %v5554 = vpop.f32.mrb[0].mxu0
        %v5555 = vand.u32 %v4922, 4294901760
        %v5556 = vsub.f32 %v4922, %v5555
        %v5557 = vand.u32 %v5556, 4294901760
        %v5558 = vsub.f32 %v5556, %v5557
        %v5559 = vand.u32 %v5558, 4294901760
        %5560 = vmatprep.mubr.f32.mxu0 %v5559
        %v5561 = vand.u32 %v4808, 4294901760
        %v5562 = vsub.f32 %v4808, %v5561
        %v5563 = vand.u32 %v5562, 4294901760
        %v5564 = vsub.f32 %v5562, %v5563
        %v5565 = vand.u32 %v5564, 4294901760
        %5566 = vmatmul.mubr.f32.gmra.mrb[0].mxu0 %v5565
        %v5567 = vpop.f32.mrb[0].mxu0
        %v5568 = vadd.f32 0.0, %v5567
        %v5569 = vpop.f32.mrb[0].mxu0
        %v5570 = vand.u32 %v4925, 4294901760
        %v5571 = vsub.f32 %v4925, %v5570
        %v5572 = vand.u32 %v5571, 4294901760
        %v5573 = vsub.f32 %v5571, %v5572
        %v5574 = vand.u32 %v5573, 4294901760
        %5575 = vmatprep.mubr.f32.mxu0 %v5574
        %v5576 = vand.u32 %v4810, 4294901760
        %v5577 = vsub.f32 %v4810, %v5576
        %v5578 = vand.u32 %v5577, 4294901760
        %v5579 = vsub.f32 %v5577, %v5578
        %v5580 = vand.u32 %v5579, 4294901760
        %5581 = vmatmul.mubr.f32.gmra.mrb[0].mxu0 %v5580
        %v5582 = vpop.f32.mrb[0].mxu0
        %v5583 = vadd.f32 0.0, %v5582
        %v5584 = vpop.f32.mrb[0].mxu0
        %5585 = vdwg.mxu0
        %5586 = vmatprep.subr.mxu0 0.0
        %v5587 = vand.u32 %v4640, 4294901760
        %v5588 = vsub.f32 %v4640, %v5587
        %v5589 = vand.u32 %v5588, 4294901760
        %v5590 = vsub.f32 %v5588, %v5589
        %v5591 = vand.u32 %v5590, 4294901760
        %5592 = vmatpush1.msra.mxu0 %v5591
        %5593 = vmatprep.subr.mxu0 0.0
        %v5594 = vand.u32 %v4641, 4294901760
        %v5595 = vsub.f32 %v4641, %v5594
        %v5596 = vand.u32 %v5595, 4294901760
        %v5597 = vsub.f32 %v5595, %v5596
        %v5598 = vand.u32 %v5597, 4294901760
        %5599 = vmatpush1.msra.mxu0 %v5598
        %5600 = vmatprep.subr.mxu0 0.0
        %v5601 = vand.u32 %v4642, 4294901760
        %v5602 = vsub.f32 %v4642, %v5601
        %v5603 = vand.u32 %v5602, 4294901760
        %v5604 = vsub.f32 %v5602, %v5603
        %v5605 = vand.u32 %v5604, 4294901760
        %5606 = vmatpush1.msra.mxu0 %v5605
        %5607 = vmatprep.subr.mxu0 0.0
        %v5608 = vand.u32 %v4643, 4294901760
        %v5609 = vsub.f32 %v4643, %v5608
        %v5610 = vand.u32 %v5609, 4294901760
        %v5611 = vsub.f32 %v5609, %v5610
        %v5612 = vand.u32 %v5611, 4294901760
        %5613 = vmatpush1.msra.mxu0 %v5612
        %5614 = vmatprep.subr.mxu0 0.0
        %v5615 = vand.u32 %v4644, 4294901760
        %v5616 = vsub.f32 %v4644, %v5615
        %v5617 = vand.u32 %v5616, 4294901760
        %v5618 = vsub.f32 %v5616, %v5617
        %v5619 = vand.u32 %v5618, 4294901760
        %5620 = vmatpush1.msra.mxu0 %v5619
        %5621 = vmatprep.subr.mxu0 0.0
        %v5622 = vand.u32 %v4645, 4294901760
        %v5623 = vsub.f32 %v4645, %v5622
        %v5624 = vand.u32 %v5623, 4294901760
        %v5625 = vsub.f32 %v5623, %v5624
        %v5626 = vand.u32 %v5625, 4294901760
        %5627 = vmatpush1.msra.mxu0 %v5626
        %5628 = vmatprep.subr.mxu0 0.0
        %v5629 = vand.u32 %v4646, 4294901760
        %v5630 = vsub.f32 %v4646, %v5629
        %v5631 = vand.u32 %v5630, 4294901760
        %v5632 = vsub.f32 %v5630, %v5631
        %v5633 = vand.u32 %v5632, 4294901760
        %5634 = vmatpush1.msra.mxu0 %v5633
        %5635 = vmatprep.subr.mxu0 0.0
        %v5636 = vand.u32 %v4647, 4294901760
        %v5637 = vsub.f32 %v4647, %v5636
        %v5638 = vand.u32 %v5637, 4294901760
        %v5639 = vsub.f32 %v5637, %v5638
        %v5640 = vand.u32 %v5639, 4294901760
        %5641 = vmatpush1.msra.mxu0 %v5640
        %5642 = vmatprep.subr.mxu0 0.0
        %v5643 = vand.u32 %v4648, 4294901760
        %v5644 = vsub.f32 %v4648, %v5643
        %v5645 = vand.u32 %v5644, 4294901760
        %v5646 = vsub.f32 %v5644, %v5645
        %v5647 = vand.u32 %v5646, 4294901760
        %5648 = vmatpush1.msra.mxu0 %v5647
        %5649 = vmatprep.subr.mxu0 0.0
        %v5650 = vand.u32 %v4649, 4294901760
        %v5651 = vsub.f32 %v4649, %v5650
        %v5652 = vand.u32 %v5651, 4294901760
        %v5653 = vsub.f32 %v5651, %v5652
        %v5654 = vand.u32 %v5653, 4294901760
        %5655 = vmatpush1.msra.mxu0 %v5654
        %5656 = vmatprep.subr.mxu0 0.0
        %v5657 = vand.u32 %v4650, 4294901760
        %v5658 = vsub.f32 %v4650, %v5657
        %v5659 = vand.u32 %v5658, 4294901760
        %v5660 = vsub.f32 %v5658, %v5659
        %v5661 = vand.u32 %v5660, 4294901760
        %5662 = vmatpush1.msra.mxu0 %v5661
        %5663 = vmatprep.subr.mxu0 0.0
        %v5664 = vand.u32 %v4651, 4294901760
        %v5665 = vsub.f32 %v4651, %v5664
        %v5666 = vand.u32 %v5665, 4294901760
        %v5667 = vsub.f32 %v5665, %v5666
        %v5668 = vand.u32 %v5667, 4294901760
        %5669 = vmatpush1.msra.mxu0 %v5668
        %5670 = vmatprep.subr.mxu0 0.0
        %v5671 = vand.u32 %v4652, 4294901760
        %v5672 = vsub.f32 %v4652, %v5671
        %v5673 = vand.u32 %v5672, 4294901760
        %v5674 = vsub.f32 %v5672, %v5673
        %v5675 = vand.u32 %v5674, 4294901760
        %5676 = vmatpush1.msra.mxu0 %v5675
        %5677 = vmatprep.subr.mxu0 0.0
        %v5678 = vand.u32 %v4653, 4294901760
        %v5679 = vsub.f32 %v4653, %v5678
        %v5680 = vand.u32 %v5679, 4294901760
        %v5681 = vsub.f32 %v5679, %v5680
        %v5682 = vand.u32 %v5681, 4294901760
        %5683 = vmatpush1.msra.mxu0 %v5682
        %5684 = vmatprep.subr.mxu0 0.0
        %v5685 = vand.u32 %v4654, 4294901760
        %v5686 = vsub.f32 %v4654, %v5685
        %v5687 = vand.u32 %v5686, 4294901760
        %v5688 = vsub.f32 %v5686, %v5687
        %v5689 = vand.u32 %v5688, 4294901760
        %5690 = vmatpush1.msra.mxu0 %v5689
        %5691 = vmatprep.subr.mxu0 0.0
        %v5692 = vand.u32 %v4655, 4294901760
        %v5693 = vsub.f32 %v4655, %v5692
        %v5694 = vand.u32 %v5693, 4294901760
        %v5695 = vsub.f32 %v5693, %v5694
        %v5696 = vand.u32 %v5695, 4294901760
        %5697 = vmatpush1.msra.mxu0 %v5696
        %5698 = vmatprep.subr.mxu0 0.0
        %v5699 = vand.u32 %v4656, 4294901760
        %v5700 = vsub.f32 %v4656, %v5699
        %v5701 = vand.u32 %v5700, 4294901760
        %v5702 = vsub.f32 %v5700, %v5701
        %v5703 = vand.u32 %v5702, 4294901760
        %5704 = vmatpush1.msra.mxu0 %v5703
        %5705 = vmatprep.subr.mxu0 0.0
        %v5706 = vand.u32 %v4657, 4294901760
        %v5707 = vsub.f32 %v4657, %v5706
        %v5708 = vand.u32 %v5707, 4294901760
        %v5709 = vsub.f32 %v5707, %v5708
        %v5710 = vand.u32 %v5709, 4294901760
        %5711 = vmatpush1.msra.mxu0 %v5710
        %5712 = vmatprep.subr.mxu0 0.0
        %v5713 = vand.u32 %v4658, 4294901760
        %v5714 = vsub.f32 %v4658, %v5713
        %v5715 = vand.u32 %v5714, 4294901760
        %v5716 = vsub.f32 %v5714, %v5715
        %v5717 = vand.u32 %v5716, 4294901760
        %5718 = vmatpush1.msra.mxu0 %v5717
        %5719 = vmatprep.subr.mxu0 0.0
        %v5720 = vand.u32 %v4929, 4294901760
        %v5721 = vsub.f32 %v4929, %v5720
        %v5722 = vand.u32 %v5721, 4294901760
        %v5723 = vsub.f32 %v5721, %v5722
        %v5724 = vand.u32 %v5723, 4294901760
        %5725 = vmatpush1.msra.mxu0 %v5724
        %5726 = vmatprep.subr.mxu0 0.0
        %5727 = vmatpush1.msra.mxu0 0.0
        %5728 = vmatprep.subr.mxu0 0.0
        %5729 = vmatpush1.msra.mxu0 0.0
        %5730 = vmatprep.subr.mxu0 0.0
        %5731 = vmatpush1.msra.mxu0 0.0
        %5732 = vmatprep.subr.mxu0 0.0
        %5733 = vmatpush1.msra.mxu0 0.0
        %5734 = vmatprep.subr.mxu0 0.0
        %5735 = vmatpush1.msra.mxu0 0.0
        %5736 = vmatprep.subr.mxu0 0.0
        %5737 = vmatpush1.msra.mxu0 0.0
        %5738 = vmatprep.subr.mxu0 0.0
        %5739 = vmatpush1.msra.mxu0 0.0
        %5740 = vmatprep.subr.mxu0 0.0
        %5741 = vmatpush1.msra.mxu0 0.0
        %5742 = vmatprep.subr.mxu0 0.0
        %5743 = vmatpush1.msra.mxu0 0.0
        %5744 = vmatprep.subr.mxu0 0.0
        %5745 = vmatpush1.msra.mxu0 0.0
        %5746 = vmatprep.subr.mxu0 0.0
        %5747 = vmatpush1.msra.mxu0 0.0
        %5748 = vmatprep.subr.mxu0 0.0
        %5749 = vmatpush1.msra.mxu0 0.0
        %v5750 = vand.u32 %v4814, 4294901760
        %5751 = vmatprep.mubr.f32.mxu0 %v5750
        %v5752 = vand.u32 %v4736, 4294901760
        %5753 = vmatmul.mubr.f32.gmra.mrb[0].mxu0 %v5752
        %v5754 = vpop.f32.mrb[0].mxu0
        %v5755 = vadd.f32 %v5028, %v5754
        %v5756 = vpop.f32.mrb[0].mxu0
        %v5757 = vand.u32 %v4817, 4294901760
        %5758 = vmatprep.mubr.f32.mxu0 %v5757
        %v5759 = vand.u32 %v4738, 4294901760
        %5760 = vmatmul.mubr.f32.gmra.mrb[0].mxu0 %v5759
        %v5761 = vpop.f32.mrb[0].mxu0
        %v5762 = vadd.f32 %v5043, %v5761
        %v5763 = vpop.f32.mrb[0].mxu0
        %v5764 = vand.u32 %v4820, 4294901760
        %5765 = vmatprep.mubr.f32.mxu0 %v5764
        %v5766 = vand.u32 %v4740, 4294901760
        %5767 = vmatmul.mubr.f32.gmra.mrb[0].mxu0 %v5766
        %v5768 = vpop.f32.mrb[0].mxu0
        %v5769 = vadd.f32 %v5058, %v5768
        %v5770 = vpop.f32.mrb[0].mxu0
        %v5771 = vand.u32 %v4823, 4294901760
        %5772 = vmatprep.mubr.f32.mxu0 %v5771
        %v5773 = vand.u32 %v4742, 4294901760
        %5774 = vmatmul.mubr.f32.gmra.mrb[0].mxu0 %v5773
        %v5775 = vpop.f32.mrb[0].mxu0
        %v5776 = vadd.f32 %v5073, %v5775
        %v5777 = vpop.f32.mrb[0].mxu0
        %v5778 = vand.u32 %v4826, 4294901760
        %5779 = vmatprep.mubr.f32.mxu0 %v5778
        %v5780 = vand.u32 %v4744, 4294901760
        %5781 = vmatmul.mubr.f32.gmra.mrb[0].mxu0 %v5780
        %v5782 = vpop.f32.mrb[0].mxu0
        %v5783 = vadd.f32 %v5088, %v5782
        %v5784 = vpop.f32.mrb[0].mxu0
        %v5785 = vand.u32 %v4829, 4294901760
        %5786 = vmatprep.mubr.f32.mxu0 %v5785
        %v5787 = vand.u32 %v4746, 4294901760
        %5788 = vmatmul.mubr.f32.gmra.mrb[0].mxu0 %v5787
        %v5789 = vpop.f32.mrb[0].mxu0
        %v5790 = vadd.f32 %v5103, %v5789
        %v5791 = vpop.f32.mrb[0].mxu0
        %v5792 = vand.u32 %v4832, 4294901760
        %5793 = vmatprep.mubr.f32.mxu0 %v5792
        %v5794 = vand.u32 %v4748, 4294901760
        %5795 = vmatmul.mubr.f32.gmra.mrb[0].mxu0 %v5794
        %v5796 = vpop.f32.mrb[0].mxu0
        %v5797 = vadd.f32 %v5118, %v5796
        %v5798 = vpop.f32.mrb[0].mxu0
        %v5799 = vand.u32 %v4835, 4294901760
        %5800 = vmatprep.mubr.f32.mxu0 %v5799
        %v5801 = vand.u32 %v4750, 4294901760
        %5802 = vmatmul.mubr.f32.gmra.mrb[0].mxu0 %v5801
        %v5803 = vpop.f32.mrb[0].mxu0
        %v5804 = vadd.f32 %v5133, %v5803
        %v5805 = vpop.f32.mrb[0].mxu0
        %v5806 = vand.u32 %v4838, 4294901760
        %5807 = vmatprep.mubr.f32.mxu0 %v5806
        %v5808 = vand.u32 %v4752, 4294901760
        %5809 = vmatmul.mubr.f32.gmra.mrb[0].mxu0 %v5808
        %v5810 = vpop.f32.mrb[0].mxu0
        %v5811 = vadd.f32 %v5148, %v5810
        %v5812 = vpop.f32.mrb[0].mxu0
        %v5813 = vand.u32 %v4841, 4294901760
        %5814 = vmatprep.mubr.f32.mxu0 %v5813
        %v5815 = vand.u32 %v4754, 4294901760
        %5816 = vmatmul.mubr.f32.gmra.mrb[0].mxu0 %v5815
        %v5817 = vpop.f32.mrb[0].mxu0
        %v5818 = vadd.f32 %v5163, %v5817
        %v5819 = vpop.f32.mrb[0].mxu0
        %v5820 = vand.u32 %v4844, 4294901760
        %5821 = vmatprep.mubr.f32.mxu0 %v5820
        %v5822 = vand.u32 %v4756, 4294901760
        %5823 = vmatmul.mubr.f32.gmra.mrb[0].mxu0 %v5822
        %v5824 = vpop.f32.mrb[0].mxu0
        %v5825 = vadd.f32 %v5178, %v5824
        %v5826 = vpop.f32.mrb[0].mxu0
        %v5827 = vand.u32 %v4847, 4294901760
        %5828 = vmatprep.mubr.f32.mxu0 %v5827
        %v5829 = vand.u32 %v4758, 4294901760
        %5830 = vmatmul.mubr.f32.gmra.mrb[0].mxu0 %v5829
        %v5831 = vpop.f32.mrb[0].mxu0
        %v5832 = vadd.f32 %v5193, %v5831
        %v5833 = vpop.f32.mrb[0].mxu0
        %v5834 = vand.u32 %v4850, 4294901760
        %5835 = vmatprep.mubr.f32.mxu0 %v5834
        %v5836 = vand.u32 %v4760, 4294901760
        %5837 = vmatmul.mubr.f32.gmra.mrb[0].mxu0 %v5836
        %v5838 = vpop.f32.mrb[0].mxu0
        %v5839 = vadd.f32 %v5208, %v5838
        %v5840 = vpop.f32.mrb[0].mxu0
        %v5841 = vand.u32 %v4853, 4294901760
        %5842 = vmatprep.mubr.f32.mxu0 %v5841
        %v5843 = vand.u32 %v4762, 4294901760
        %5844 = vmatmul.mubr.f32.gmra.mrb[0].mxu0 %v5843
        %v5845 = vpop.f32.mrb[0].mxu0
        %v5846 = vadd.f32 %v5223, %v5845
        %v5847 = vpop.f32.mrb[0].mxu0
        %v5848 = vand.u32 %v4856, 4294901760
        %5849 = vmatprep.mubr.f32.mxu0 %v5848
        %v5850 = vand.u32 %v4764, 4294901760
        %5851 = vmatmul.mubr.f32.gmra.mrb[0].mxu0 %v5850
        %v5852 = vpop.f32.mrb[0].mxu0
        %v5853 = vadd.f32 %v5238, %v5852
        %v5854 = vpop.f32.mrb[0].mxu0
        %v5855 = vand.u32 %v4859, 4294901760
        %5856 = vmatprep.mubr.f32.mxu0 %v5855
        %v5857 = vand.u32 %v4766, 4294901760
        %5858 = vmatmul.mubr.f32.gmra.mrb[0].mxu0 %v5857
        %v5859 = vpop.f32.mrb[0].mxu0
        %v5860 = vadd.f32 %v5253, %v5859
        %v5861 = vpop.f32.mrb[0].mxu0
        %v5862 = vand.u32 %v4862, 4294901760
        %5863 = vmatprep.mubr.f32.mxu0 %v5862
        %v5864 = vand.u32 %v4768, 4294901760
        %5865 = vmatmul.mubr.f32.gmra.mrb[0].mxu0 %v5864
        %v5866 = vpop.f32.mrb[0].mxu0
        %v5867 = vadd.f32 %v5268, %v5866
        %v5868 = vpop.f32.mrb[0].mxu0
        %v5869 = vand.u32 %v4865, 4294901760
        %5870 = vmatprep.mubr.f32.mxu0 %v5869
        %v5871 = vand.u32 %v4770, 4294901760
        %5872 = vmatmul.mubr.f32.gmra.mrb[0].mxu0 %v5871
        %v5873 = vpop.f32.mrb[0].mxu0
        %v5874 = vadd.f32 %v5283, %v5873
        %v5875 = vpop.f32.mrb[0].mxu0
        %v5876 = vand.u32 %v4868, 4294901760
        %5877 = vmatprep.mubr.f32.mxu0 %v5876
        %v5878 = vand.u32 %v4772, 4294901760
        %5879 = vmatmul.mubr.f32.gmra.mrb[0].mxu0 %v5878
        %v5880 = vpop.f32.mrb[0].mxu0
        %v5881 = vadd.f32 %v5298, %v5880
        %v5882 = vpop.f32.mrb[0].mxu0
        %v5883 = vand.u32 %v4871, 4294901760
        %5884 = vmatprep.mubr.f32.mxu0 %v5883
        %v5885 = vand.u32 %v4774, 4294901760
        %5886 = vmatmul.mubr.f32.gmra.mrb[0].mxu0 %v5885
        %v5887 = vpop.f32.mrb[0].mxu0
        %v5888 = vadd.f32 %v5313, %v5887
        %v5889 = vpop.f32.mrb[0].mxu0
        %v5890 = vand.u32 %v4874, 4294901760
        %5891 = vmatprep.mubr.f32.mxu0 %v5890
        %v5892 = vand.u32 %v4776, 4294901760
        %5893 = vmatmul.mubr.f32.gmra.mrb[0].mxu0 %v5892
        %v5894 = vpop.f32.mrb[0].mxu0
        %v5895 = vadd.f32 %v5328, %v5894
        %v5896 = vpop.f32.mrb[0].mxu0
        %v5897 = vand.u32 %v4877, 4294901760
        %5898 = vmatprep.mubr.f32.mxu0 %v5897
        %v5899 = vand.u32 %v4778, 4294901760
        %5900 = vmatmul.mubr.f32.gmra.mrb[0].mxu0 %v5899
        %v5901 = vpop.f32.mrb[0].mxu0
        %v5902 = vadd.f32 %v5343, %v5901
        %v5903 = vpop.f32.mrb[0].mxu0
        %v5904 = vand.u32 %v4880, 4294901760
        %5905 = vmatprep.mubr.f32.mxu0 %v5904
        %v5906 = vand.u32 %v4780, 4294901760
        %5907 = vmatmul.mubr.f32.gmra.mrb[0].mxu0 %v5906
        %v5908 = vpop.f32.mrb[0].mxu0
        %v5909 = vadd.f32 %v5358, %v5908
        %v5910 = vpop.f32.mrb[0].mxu0
        %v5911 = vand.u32 %v4883, 4294901760
        %5912 = vmatprep.mubr.f32.mxu0 %v5911
        %v5913 = vand.u32 %v4782, 4294901760
        %5914 = vmatmul.mubr.f32.gmra.mrb[0].mxu0 %v5913
        %v5915 = vpop.f32.mrb[0].mxu0
        %v5916 = vadd.f32 %v5373, %v5915
        %v5917 = vpop.f32.mrb[0].mxu0
        %v5918 = vand.u32 %v4886, 4294901760
        %5919 = vmatprep.mubr.f32.mxu0 %v5918
        %v5920 = vand.u32 %v4784, 4294901760
        %5921 = vmatmul.mubr.f32.gmra.mrb[0].mxu0 %v5920
        %v5922 = vpop.f32.mrb[0].mxu0
        %v5923 = vadd.f32 %v5388, %v5922
        %v5924 = vpop.f32.mrb[0].mxu0
        %v5925 = vand.u32 %v4889, 4294901760
        %5926 = vmatprep.mubr.f32.mxu0 %v5925
        %v5927 = vand.u32 %v4786, 4294901760
        %5928 = vmatmul.mubr.f32.gmra.mrb[0].mxu0 %v5927
        %v5929 = vpop.f32.mrb[0].mxu0
        %v5930 = vadd.f32 %v5403, %v5929
        %v5931 = vpop.f32.mrb[0].mxu0
        %v5932 = vand.u32 %v4892, 4294901760
        %5933 = vmatprep.mubr.f32.mxu0 %v5932
        %v5934 = vand.u32 %v4788, 4294901760
        %5935 = vmatmul.mubr.f32.gmra.mrb[0].mxu0 %v5934
        %v5936 = vpop.f32.mrb[0].mxu0
        %v5937 = vadd.f32 %v5418, %v5936
        %v5938 = vpop.f32.mrb[0].mxu0
        %v5939 = vand.u32 %v4895, 4294901760
        %5940 = vmatprep.mubr.f32.mxu0 %v5939
        %v5941 = vand.u32 %v4790, 4294901760
        %5942 = vmatmul.mubr.f32.gmra.mrb[0].mxu0 %v5941
        %v5943 = vpop.f32.mrb[0].mxu0
        %v5944 = vadd.f32 %v5433, %v5943
        %v5945 = vpop.f32.mrb[0].mxu0
        %v5946 = vand.u32 %v4898, 4294901760
        %5947 = vmatprep.mubr.f32.mxu0 %v5946
        %v5948 = vand.u32 %v4792, 4294901760
        %5949 = vmatmul.mubr.f32.gmra.mrb[0].mxu0 %v5948
        %v5950 = vpop.f32.mrb[0].mxu0
        %v5951 = vadd.f32 %v5448, %v5950
        %v5952 = vpop.f32.mrb[0].mxu0
        %v5953 = vand.u32 %v4901, 4294901760
        %5954 = vmatprep.mubr.f32.mxu0 %v5953
        %v5955 = vand.u32 %v4794, 4294901760
        %5956 = vmatmul.mubr.f32.gmra.mrb[0].mxu0 %v5955
        %v5957 = vpop.f32.mrb[0].mxu0
        %v5958 = vadd.f32 %v5463, %v5957
        %v5959 = vpop.f32.mrb[0].mxu0
        %v5960 = vand.u32 %v4904, 4294901760
        %5961 = vmatprep.mubr.f32.mxu0 %v5960
        %v5962 = vand.u32 %v4796, 4294901760
        %5963 = vmatmul.mubr.f32.gmra.mrb[0].mxu0 %v5962
        %v5964 = vpop.f32.mrb[0].mxu0
        %v5965 = vadd.f32 %v5478, %v5964
        %v5966 = vpop.f32.mrb[0].mxu0
        %v5967 = vand.u32 %v4907, 4294901760
        %5968 = vmatprep.mubr.f32.mxu0 %v5967
        %v5969 = vand.u32 %v4798, 4294901760
        %5970 = vmatmul.mubr.f32.gmra.mrb[0].mxu0 %v5969
        %v5971 = vpop.f32.mrb[0].mxu0
        %v5972 = vadd.f32 %v5493, %v5971
        %v5973 = vpop.f32.mrb[0].mxu0
        %v5974 = vand.u32 %v4910, 4294901760
        %5975 = vmatprep.mubr.f32.mxu0 %v5974
        %v5976 = vand.u32 %v4800, 4294901760
        %5977 = vmatmul.mubr.f32.gmra.mrb[0].mxu0 %v5976
        %v5978 = vpop.f32.mrb[0].mxu0
        %v5979 = vadd.f32 %v5508, %v5978
        %v5980 = vpop.f32.mrb[0].mxu0
        %v5981 = vand.u32 %v4913, 4294901760
        %5982 = vmatprep.mubr.f32.mxu0 %v5981
        %v5983 = vand.u32 %v4802, 4294901760
        %5984 = vmatmul.mubr.f32.gmra.mrb[0].mxu0 %v5983
        %v5985 = vpop.f32.mrb[0].mxu0
        %v5986 = vadd.f32 %v5523, %v5985
        %v5987 = vpop.f32.mrb[0].mxu0
        %v5988 = vand.u32 %v4916, 4294901760
        %5989 = vmatprep.mubr.f32.mxu0 %v5988
        %v5990 = vand.u32 %v4804, 4294901760
        %5991 = vmatmul.mubr.f32.gmra.mrb[0].mxu0 %v5990
        %v5992 = vpop.f32.mrb[0].mxu0
        %v5993 = vadd.f32 %v5538, %v5992
        %v5994 = vpop.f32.mrb[0].mxu0
        %v5995 = vand.u32 %v4919, 4294901760
        %5996 = vmatprep.mubr.f32.mxu0 %v5995
        %v5997 = vand.u32 %v4806, 4294901760
        %5998 = vmatmul.mubr.f32.gmra.mrb[0].mxu0 %v5997
        %v5999 = vpop.f32.mrb[0].mxu0
        %v6000 = vadd.f32 %v5553, %v5999
        %v6001 = vpop.f32.mrb[0].mxu0
        %v6002 = vand.u32 %v4922, 4294901760
        %6003 = vmatprep.mubr.f32.mxu0 %v6002
        %v6004 = vand.u32 %v4808, 4294901760
        %6005 = vmatmul.mubr.f32.gmra.mrb[0].mxu0 %v6004
        %v6006 = vpop.f32.mrb[0].mxu0
        %v6007 = vadd.f32 %v5568, %v6006
        %v6008 = vpop.f32.mrb[0].mxu0
        %v6009 = vand.u32 %v4925, 4294901760
        %6010 = vmatprep.mubr.f32.mxu0 %v6009
        %v6011 = vand.u32 %v4810, 4294901760
        %6012 = vmatmul.mubr.f32.gmra.mrb[0].mxu0 %v6011
        %v6013 = vpop.f32.mrb[0].mxu0
        %v6014 = vadd.f32 %v5583, %v6013
        %v6015 = vpop.f32.mrb[0].mxu0
        %6016 = vdwg.mxu0
        %6017 = vmatprep.subr.mxu0 0.0
        %v6018 = vand.u32 %v4640, 4294901760
        %v6019 = vsub.f32 %v4640, %v6018
        %6020 = vmatpush1.msra.mxu0 %v6019
        %6021 = vmatprep.subr.mxu0 0.0
        %v6022 = vand.u32 %v4641, 4294901760
        %v6023 = vsub.f32 %v4641, %v6022
        %6024 = vmatpush1.msra.mxu0 %v6023
        %6025 = vmatprep.subr.mxu0 0.0
        %v6026 = vand.u32 %v4642, 4294901760
        %v6027 = vsub.f32 %v4642, %v6026
        %6028 = vmatpush1.msra.mxu0 %v6027
        %6029 = vmatprep.subr.mxu0 0.0
        %v6030 = vand.u32 %v4643, 4294901760
        %v6031 = vsub.f32 %v4643, %v6030
        %6032 = vmatpush1.msra.mxu0 %v6031
        %6033 = vmatprep.subr.mxu0 0.0
        %v6034 = vand.u32 %v4644, 4294901760
        %v6035 = vsub.f32 %v4644, %v6034
        %6036 = vmatpush1.msra.mxu0 %v6035
        %6037 = vmatprep.subr.mxu0 0.0
        %v6038 = vand.u32 %v4645, 4294901760
        %v6039 = vsub.f32 %v4645, %v6038
        %6040 = vmatpush1.msra.mxu0 %v6039
        %6041 = vmatprep.subr.mxu0 0.0
        %v6042 = vand.u32 %v4646, 4294901760
        %v6043 = vsub.f32 %v4646, %v6042
        %6044 = vmatpush1.msra.mxu0 %v6043
        %6045 = vmatprep.subr.mxu0 0.0
        %v6046 = vand.u32 %v4647, 4294901760
        %v6047 = vsub.f32 %v4647, %v6046
        %6048 = vmatpush1.msra.mxu0 %v6047
        %6049 = vmatprep.subr.mxu0 0.0
        %v6050 = vand.u32 %v4648, 4294901760
        %v6051 = vsub.f32 %v4648, %v6050
        %6052 = vmatpush1.msra.mxu0 %v6051
        %6053 = vmatprep.subr.mxu0 0.0
        %v6054 = vand.u32 %v4649, 4294901760
        %v6055 = vsub.f32 %v4649, %v6054
        %6056 = vmatpush1.msra.mxu0 %v6055
        %6057 = vmatprep.subr.mxu0 0.0
        %v6058 = vand.u32 %v4650, 4294901760
        %v6059 = vsub.f32 %v4650, %v6058
        %6060 = vmatpush1.msra.mxu0 %v6059
        %6061 = vmatprep.subr.mxu0 0.0
        %v6062 = vand.u32 %v4651, 4294901760
        %v6063 = vsub.f32 %v4651, %v6062
        %6064 = vmatpush1.msra.mxu0 %v6063
        %6065 = vmatprep.subr.mxu0 0.0
        %v6066 = vand.u32 %v4652, 4294901760
        %v6067 = vsub.f32 %v4652, %v6066
        %6068 = vmatpush1.msra.mxu0 %v6067
        %6069 = vmatprep.subr.mxu0 0.0
        %v6070 = vand.u32 %v4653, 4294901760
        %v6071 = vsub.f32 %v4653, %v6070
        %6072 = vmatpush1.msra.mxu0 %v6071
        %6073 = vmatprep.subr.mxu0 0.0
        %v6074 = vand.u32 %v4654, 4294901760
        %v6075 = vsub.f32 %v4654, %v6074
        %6076 = vmatpush1.msra.mxu0 %v6075
        %6077 = vmatprep.subr.mxu0 0.0
        %v6078 = vand.u32 %v4655, 4294901760
        %v6079 = vsub.f32 %v4655, %v6078
        %6080 = vmatpush1.msra.mxu0 %v6079
        %6081 = vmatprep.subr.mxu0 0.0
        %v6082 = vand.u32 %v4656, 4294901760
        %v6083 = vsub.f32 %v4656, %v6082
        %6084 = vmatpush1.msra.mxu0 %v6083
        %6085 = vmatprep.subr.mxu0 0.0
        %v6086 = vand.u32 %v4657, 4294901760
        %v6087 = vsub.f32 %v4657, %v6086
        %6088 = vmatpush1.msra.mxu0 %v6087
        %6089 = vmatprep.subr.mxu0 0.0
        %v6090 = vand.u32 %v4658, 4294901760
        %v6091 = vsub.f32 %v4658, %v6090
        %6092 = vmatpush1.msra.mxu0 %v6091
        %6093 = vmatprep.subr.mxu0 0.0
        %v6094 = vand.u32 %v4929, 4294901760
        %v6095 = vsub.f32 %v4929, %v6094
        %6096 = vmatpush1.msra.mxu0 %v6095
        %6097 = vmatprep.subr.mxu0 0.0
        %6098 = vmatpush1.msra.mxu0 0.0
        %6099 = vmatprep.subr.mxu0 0.0
        %6100 = vmatpush1.msra.mxu0 0.0
        %6101 = vmatprep.subr.mxu0 0.0
        %6102 = vmatpush1.msra.mxu0 0.0
        %6103 = vmatprep.subr.mxu0 0.0
        %6104 = vmatpush1.msra.mxu0 0.0
        %6105 = vmatprep.subr.mxu0 0.0
        %6106 = vmatpush1.msra.mxu0 0.0
        %6107 = vmatprep.subr.mxu0 0.0
        %6108 = vmatpush1.msra.mxu0 0.0
        %6109 = vmatprep.subr.mxu0 0.0
        %6110 = vmatpush1.msra.mxu0 0.0
        %6111 = vmatprep.subr.mxu0 0.0
        %6112 = vmatpush1.msra.mxu0 0.0
        %6113 = vmatprep.subr.mxu0 0.0
        %6114 = vmatpush1.msra.mxu0 0.0
        %6115 = vmatprep.subr.mxu0 0.0
        %6116 = vmatpush1.msra.mxu0 0.0
        %6117 = vmatprep.subr.mxu0 0.0
        %6118 = vmatpush1.msra.mxu0 0.0
        %6119 = vmatprep.subr.mxu0 0.0
        %6120 = vmatpush1.msra.mxu0 0.0
        %v6121 = vand.u32 %v4814, 4294901760
        %v6122 = vsub.f32 %v4814, %v6121
        %6123 = vmatprep.mubr.f32.mxu0 %v6122
        %v6124 = vand.u32 %v4736, 4294901760
        %v6125 = vsub.f32 %v4736, %v6124
        %6126 = vmatmul.mubr.f32.gmra.mrb[0].mxu0 %v6125
        %v6127 = vpop.f32.mrb[0].mxu0
        %v6128 = vadd.f32 %v5755, %v6127
        %v6129 = vpop.f32.mrb[0].mxu0
        %v6130 = vand.u32 %v4817, 4294901760
        %v6131 = vsub.f32 %v4817, %v6130
        %6132 = vmatprep.mubr.f32.mxu0 %v6131
        %v6133 = vand.u32 %v4738, 4294901760
        %v6134 = vsub.f32 %v4738, %v6133
        %6135 = vmatmul.mubr.f32.gmra.mrb[0].mxu0 %v6134
        %v6136 = vpop.f32.mrb[0].mxu0
        %v6137 = vadd.f32 %v5762, %v6136
        %v6138 = vpop.f32.mrb[0].mxu0
        %v6139 = vand.u32 %v4820, 4294901760
        %v6140 = vsub.f32 %v4820, %v6139
        %6141 = vmatprep.mubr.f32.mxu0 %v6140
        %v6142 = vand.u32 %v4740, 4294901760
        %v6143 = vsub.f32 %v4740, %v6142
        %6144 = vmatmul.mubr.f32.gmra.mrb[0].mxu0 %v6143
        %v6145 = vpop.f32.mrb[0].mxu0
        %v6146 = vadd.f32 %v5769, %v6145
        %v6147 = vpop.f32.mrb[0].mxu0
        %v6148 = vand.u32 %v4823, 4294901760
        %v6149 = vsub.f32 %v4823, %v6148
        %6150 = vmatprep.mubr.f32.mxu0 %v6149
        %v6151 = vand.u32 %v4742, 4294901760
        %v6152 = vsub.f32 %v4742, %v6151
        %6153 = vmatmul.mubr.f32.gmra.mrb[0].mxu0 %v6152
        %v6154 = vpop.f32.mrb[0].mxu0
        %v6155 = vadd.f32 %v5776, %v6154
        %v6156 = vpop.f32.mrb[0].mxu0
        %v6157 = vand.u32 %v4826, 4294901760
        %v6158 = vsub.f32 %v4826, %v6157
        %6159 = vmatprep.mubr.f32.mxu0 %v6158
        %v6160 = vand.u32 %v4744, 4294901760
        %v6161 = vsub.f32 %v4744, %v6160
        %6162 = vmatmul.mubr.f32.gmra.mrb[0].mxu0 %v6161
        %v6163 = vpop.f32.mrb[0].mxu0
        %v6164 = vadd.f32 %v5783, %v6163
        %v6165 = vpop.f32.mrb[0].mxu0
        %v6166 = vand.u32 %v4829, 4294901760
        %v6167 = vsub.f32 %v4829, %v6166
        %6168 = vmatprep.mubr.f32.mxu0 %v6167
        %v6169 = vand.u32 %v4746, 4294901760
        %v6170 = vsub.f32 %v4746, %v6169
        %6171 = vmatmul.mubr.f32.gmra.mrb[0].mxu0 %v6170
        %v6172 = vpop.f32.mrb[0].mxu0
        %v6173 = vadd.f32 %v5790, %v6172
        %v6174 = vpop.f32.mrb[0].mxu0
        %v6175 = vand.u32 %v4832, 4294901760
        %v6176 = vsub.f32 %v4832, %v6175
        %6177 = vmatprep.mubr.f32.mxu0 %v6176
        %v6178 = vand.u32 %v4748, 4294901760
        %v6179 = vsub.f32 %v4748, %v6178
        %6180 = vmatmul.mubr.f32.gmra.mrb[0].mxu0 %v6179
        %v6181 = vpop.f32.mrb[0].mxu0
        %v6182 = vadd.f32 %v5797, %v6181
        %v6183 = vpop.f32.mrb[0].mxu0
        %v6184 = vand.u32 %v4835, 4294901760
        %v6185 = vsub.f32 %v4835, %v6184
        %6186 = vmatprep.mubr.f32.mxu0 %v6185
        %v6187 = vand.u32 %v4750, 4294901760
        %v6188 = vsub.f32 %v4750, %v6187
        %6189 = vmatmul.mubr.f32.gmra.mrb[0].mxu0 %v6188
        %v6190 = vpop.f32.mrb[0].mxu0
        %v6191 = vadd.f32 %v5804, %v6190
        %v6192 = vpop.f32.mrb[0].mxu0
        %v6193 = vand.u32 %v4838, 4294901760
        %v6194 = vsub.f32 %v4838, %v6193
        %6195 = vmatprep.mubr.f32.mxu0 %v6194
        %v6196 = vand.u32 %v4752, 4294901760
        %v6197 = vsub.f32 %v4752, %v6196
        %6198 = vmatmul.mubr.f32.gmra.mrb[0].mxu0 %v6197
        %v6199 = vpop.f32.mrb[0].mxu0
        %v6200 = vadd.f32 %v5811, %v6199
        %v6201 = vpop.f32.mrb[0].mxu0
        %v6202 = vand.u32 %v4841, 4294901760
        %v6203 = vsub.f32 %v4841, %v6202
        %6204 = vmatprep.mubr.f32.mxu0 %v6203
        %v6205 = vand.u32 %v4754, 4294901760
        %v6206 = vsub.f32 %v4754, %v6205
        %6207 = vmatmul.mubr.f32.gmra.mrb[0].mxu0 %v6206
        %v6208 = vpop.f32.mrb[0].mxu0
        %v6209 = vadd.f32 %v5818, %v6208
        %v6210 = vpop.f32.mrb[0].mxu0
        %v6211 = vand.u32 %v4844, 4294901760
        %v6212 = vsub.f32 %v4844, %v6211
        %6213 = vmatprep.mubr.f32.mxu0 %v6212
        %v6214 = vand.u32 %v4756, 4294901760
        %v6215 = vsub.f32 %v4756, %v6214
        %6216 = vmatmul.mubr.f32.gmra.mrb[0].mxu0 %v6215
        %v6217 = vpop.f32.mrb[0].mxu0
        %v6218 = vadd.f32 %v5825, %v6217
        %v6219 = vpop.f32.mrb[0].mxu0
        %v6220 = vand.u32 %v4847, 4294901760
        %v6221 = vsub.f32 %v4847, %v6220
        %6222 = vmatprep.mubr.f32.mxu0 %v6221
        %v6223 = vand.u32 %v4758, 4294901760
        %v6224 = vsub.f32 %v4758, %v6223
        %6225 = vmatmul.mubr.f32.gmra.mrb[0].mxu0 %v6224
        %v6226 = vpop.f32.mrb[0].mxu0
        %v6227 = vadd.f32 %v5832, %v6226
        %v6228 = vpop.f32.mrb[0].mxu0
        %v6229 = vand.u32 %v4850, 4294901760
        %v6230 = vsub.f32 %v4850, %v6229
        %6231 = vmatprep.mubr.f32.mxu0 %v6230
        %v6232 = vand.u32 %v4760, 4294901760
        %v6233 = vsub.f32 %v4760, %v6232
        %6234 = vmatmul.mubr.f32.gmra.mrb[0].mxu0 %v6233
        %v6235 = vpop.f32.mrb[0].mxu0
        %v6236 = vadd.f32 %v5839, %v6235
        %v6237 = vpop.f32.mrb[0].mxu0
        %v6238 = vand.u32 %v4853, 4294901760
        %v6239 = vsub.f32 %v4853, %v6238
        %6240 = vmatprep.mubr.f32.mxu0 %v6239
        %v6241 = vand.u32 %v4762, 4294901760
        %v6242 = vsub.f32 %v4762, %v6241
        %6243 = vmatmul.mubr.f32.gmra.mrb[0].mxu0 %v6242
        %v6244 = vpop.f32.mrb[0].mxu0
        %v6245 = vadd.f32 %v5846, %v6244
        %v6246 = vpop.f32.mrb[0].mxu0
        %v6247 = vand.u32 %v4856, 4294901760
        %v6248 = vsub.f32 %v4856, %v6247
        %6249 = vmatprep.mubr.f32.mxu0 %v6248
        %v6250 = vand.u32 %v4764, 4294901760
        %v6251 = vsub.f32 %v4764, %v6250
        %6252 = vmatmul.mubr.f32.gmra.mrb[0].mxu0 %v6251
        %v6253 = vpop.f32.mrb[0].mxu0
        %v6254 = vadd.f32 %v5853, %v6253
        %v6255 = vpop.f32.mrb[0].mxu0
        %v6256 = vand.u32 %v4859, 4294901760
        %v6257 = vsub.f32 %v4859, %v6256
        %6258 = vmatprep.mubr.f32.mxu0 %v6257
        %v6259 = vand.u32 %v4766, 4294901760
        %v6260 = vsub.f32 %v4766, %v6259
        %6261 = vmatmul.mubr.f32.gmra.mrb[0].mxu0 %v6260
        %v6262 = vpop.f32.mrb[0].mxu0
        %v6263 = vadd.f32 %v5860, %v6262
        %v6264 = vpop.f32.mrb[0].mxu0
        %v6265 = vand.u32 %v4862, 4294901760
        %v6266 = vsub.f32 %v4862, %v6265
        %6267 = vmatprep.mubr.f32.mxu0 %v6266
        %v6268 = vand.u32 %v4768, 4294901760
        %v6269 = vsub.f32 %v4768, %v6268
        %6270 = vmatmul.mubr.f32.gmra.mrb[0].mxu0 %v6269
        %v6271 = vpop.f32.mrb[0].mxu0
        %v6272 = vadd.f32 %v5867, %v6271
        %v6273 = vpop.f32.mrb[0].mxu0
        %v6274 = vand.u32 %v4865, 4294901760
        %v6275 = vsub.f32 %v4865, %v6274
        %6276 = vmatprep.mubr.f32.mxu0 %v6275
        %v6277 = vand.u32 %v4770, 4294901760
        %v6278 = vsub.f32 %v4770, %v6277
        %6279 = vmatmul.mubr.f32.gmra.mrb[0].mxu0 %v6278
        %v6280 = vpop.f32.mrb[0].mxu0
        %v6281 = vadd.f32 %v5874, %v6280
        %v6282 = vpop.f32.mrb[0].mxu0
        %v6283 = vand.u32 %v4868, 4294901760
        %v6284 = vsub.f32 %v4868, %v6283
        %6285 = vmatprep.mubr.f32.mxu0 %v6284
        %v6286 = vand.u32 %v4772, 4294901760
        %v6287 = vsub.f32 %v4772, %v6286
        %6288 = vmatmul.mubr.f32.gmra.mrb[0].mxu0 %v6287
        %v6289 = vpop.f32.mrb[0].mxu0
        %v6290 = vadd.f32 %v5881, %v6289
        %v6291 = vpop.f32.mrb[0].mxu0
        %v6292 = vand.u32 %v4871, 4294901760
        %v6293 = vsub.f32 %v4871, %v6292
        %6294 = vmatprep.mubr.f32.mxu0 %v6293
        %v6295 = vand.u32 %v4774, 4294901760
        %v6296 = vsub.f32 %v4774, %v6295
        %6297 = vmatmul.mubr.f32.gmra.mrb[0].mxu0 %v6296
        %v6298 = vpop.f32.mrb[0].mxu0
        %v6299 = vadd.f32 %v5888, %v6298
        %v6300 = vpop.f32.mrb[0].mxu0
        %v6301 = vand.u32 %v4874, 4294901760
        %v6302 = vsub.f32 %v4874, %v6301
        %6303 = vmatprep.mubr.f32.mxu0 %v6302
        %v6304 = vand.u32 %v4776, 4294901760
        %v6305 = vsub.f32 %v4776, %v6304
        %6306 = vmatmul.mubr.f32.gmra.mrb[0].mxu0 %v6305
        %v6307 = vpop.f32.mrb[0].mxu0
        %v6308 = vadd.f32 %v5895, %v6307
        %v6309 = vpop.f32.mrb[0].mxu0
        %v6310 = vand.u32 %v4877, 4294901760
        %v6311 = vsub.f32 %v4877, %v6310
        %6312 = vmatprep.mubr.f32.mxu0 %v6311
        %v6313 = vand.u32 %v4778, 4294901760
        %v6314 = vsub.f32 %v4778, %v6313
        %6315 = vmatmul.mubr.f32.gmra.mrb[0].mxu0 %v6314
        %v6316 = vpop.f32.mrb[0].mxu0
        %v6317 = vadd.f32 %v5902, %v6316
        %v6318 = vpop.f32.mrb[0].mxu0
        %v6319 = vand.u32 %v4880, 4294901760
        %v6320 = vsub.f32 %v4880, %v6319
        %6321 = vmatprep.mubr.f32.mxu0 %v6320
        %v6322 = vand.u32 %v4780, 4294901760
        %v6323 = vsub.f32 %v4780, %v6322
        %6324 = vmatmul.mubr.f32.gmra.mrb[0].mxu0 %v6323
        %v6325 = vpop.f32.mrb[0].mxu0
        %v6326 = vadd.f32 %v5909, %v6325
        %v6327 = vpop.f32.mrb[0].mxu0
        %v6328 = vand.u32 %v4883, 4294901760
        %v6329 = vsub.f32 %v4883, %v6328
        %6330 = vmatprep.mubr.f32.mxu0 %v6329
        %v6331 = vand.u32 %v4782, 4294901760
        %v6332 = vsub.f32 %v4782, %v6331
        %6333 = vmatmul.mubr.f32.gmra.mrb[0].mxu0 %v6332
        %v6334 = vpop.f32.mrb[0].mxu0
        %v6335 = vadd.f32 %v5916, %v6334
        %v6336 = vpop.f32.mrb[0].mxu0
        %v6337 = vand.u32 %v4886, 4294901760
        %v6338 = vsub.f32 %v4886, %v6337
        %6339 = vmatprep.mubr.f32.mxu0 %v6338
        %v6340 = vand.u32 %v4784, 4294901760
        %v6341 = vsub.f32 %v4784, %v6340
        %6342 = vmatmul.mubr.f32.gmra.mrb[0].mxu0 %v6341
        %v6343 = vpop.f32.mrb[0].mxu0
        %v6344 = vadd.f32 %v5923, %v6343
        %v6345 = vpop.f32.mrb[0].mxu0
        %v6346 = vand.u32 %v4889, 4294901760
        %v6347 = vsub.f32 %v4889, %v6346
        %6348 = vmatprep.mubr.f32.mxu0 %v6347
        %v6349 = vand.u32 %v4786, 4294901760
        %v6350 = vsub.f32 %v4786, %v6349
        %6351 = vmatmul.mubr.f32.gmra.mrb[0].mxu0 %v6350
        %v6352 = vpop.f32.mrb[0].mxu0
        %v6353 = vadd.f32 %v5930, %v6352
        %v6354 = vpop.f32.mrb[0].mxu0
        %v6355 = vand.u32 %v4892, 4294901760
        %v6356 = vsub.f32 %v4892, %v6355
        %6357 = vmatprep.mubr.f32.mxu0 %v6356
        %v6358 = vand.u32 %v4788, 4294901760
        %v6359 = vsub.f32 %v4788, %v6358
        %6360 = vmatmul.mubr.f32.gmra.mrb[0].mxu0 %v6359
        %v6361 = vpop.f32.mrb[0].mxu0
        %v6362 = vadd.f32 %v5937, %v6361
        %v6363 = vpop.f32.mrb[0].mxu0
        %v6364 = vand.u32 %v4895, 4294901760
        %v6365 = vsub.f32 %v4895, %v6364
        %6366 = vmatprep.mubr.f32.mxu0 %v6365
        %v6367 = vand.u32 %v4790, 4294901760
        %v6368 = vsub.f32 %v4790, %v6367
        %6369 = vmatmul.mubr.f32.gmra.mrb[0].mxu0 %v6368
        %v6370 = vpop.f32.mrb[0].mxu0
        %v6371 = vadd.f32 %v5944, %v6370
        %v6372 = vpop.f32.mrb[0].mxu0
        %v6373 = vand.u32 %v4898, 4294901760
        %v6374 = vsub.f32 %v4898, %v6373
        %6375 = vmatprep.mubr.f32.mxu0 %v6374
        %v6376 = vand.u32 %v4792, 4294901760
        %v6377 = vsub.f32 %v4792, %v6376
        %6378 = vmatmul.mubr.f32.gmra.mrb[0].mxu0 %v6377
        %v6379 = vpop.f32.mrb[0].mxu0
        %v6380 = vadd.f32 %v5951, %v6379
        %v6381 = vpop.f32.mrb[0].mxu0
        %v6382 = vand.u32 %v4901, 4294901760
        %v6383 = vsub.f32 %v4901, %v6382
        %6384 = vmatprep.mubr.f32.mxu0 %v6383
        %v6385 = vand.u32 %v4794, 4294901760
        %v6386 = vsub.f32 %v4794, %v6385
        %6387 = vmatmul.mubr.f32.gmra.mrb[0].mxu0 %v6386
        %v6388 = vpop.f32.mrb[0].mxu0
        %v6389 = vadd.f32 %v5958, %v6388
        %v6390 = vpop.f32.mrb[0].mxu0
        %v6391 = vand.u32 %v4904, 4294901760
        %v6392 = vsub.f32 %v4904, %v6391
        %6393 = vmatprep.mubr.f32.mxu0 %v6392
        %v6394 = vand.u32 %v4796, 4294901760
        %v6395 = vsub.f32 %v4796, %v6394
        %6396 = vmatmul.mubr.f32.gmra.mrb[0].mxu0 %v6395
        %v6397 = vpop.f32.mrb[0].mxu0
        %v6398 = vadd.f32 %v5965, %v6397
        %v6399 = vpop.f32.mrb[0].mxu0
        %v6400 = vand.u32 %v4907, 4294901760
        %v6401 = vsub.f32 %v4907, %v6400
        %6402 = vmatprep.mubr.f32.mxu0 %v6401
        %v6403 = vand.u32 %v4798, 4294901760
        %v6404 = vsub.f32 %v4798, %v6403
        %6405 = vmatmul.mubr.f32.gmra.mrb[0].mxu0 %v6404
        %v6406 = vpop.f32.mrb[0].mxu0
        %v6407 = vadd.f32 %v5972, %v6406
        %v6408 = vpop.f32.mrb[0].mxu0
        %v6409 = vand.u32 %v4910, 4294901760
        %v6410 = vsub.f32 %v4910, %v6409
        %6411 = vmatprep.mubr.f32.mxu0 %v6410
        %v6412 = vand.u32 %v4800, 4294901760
        %v6413 = vsub.f32 %v4800, %v6412
        %6414 = vmatmul.mubr.f32.gmra.mrb[0].mxu0 %v6413
        %v6415 = vpop.f32.mrb[0].mxu0
        %v6416 = vadd.f32 %v5979, %v6415
        %v6417 = vpop.f32.mrb[0].mxu0
        %v6418 = vand.u32 %v4913, 4294901760
        %v6419 = vsub.f32 %v4913, %v6418
        %6420 = vmatprep.mubr.f32.mxu0 %v6419
        %v6421 = vand.u32 %v4802, 4294901760
        %v6422 = vsub.f32 %v4802, %v6421
        %6423 = vmatmul.mubr.f32.gmra.mrb[0].mxu0 %v6422
        %v6424 = vpop.f32.mrb[0].mxu0
        %v6425 = vadd.f32 %v5986, %v6424
        %v6426 = vpop.f32.mrb[0].mxu0
        %v6427 = vand.u32 %v4916, 4294901760
        %v6428 = vsub.f32 %v4916, %v6427
        %6429 = vmatprep.mubr.f32.mxu0 %v6428
        %v6430 = vand.u32 %v4804, 4294901760
        %v6431 = vsub.f32 %v4804, %v6430
        %6432 = vmatmul.mubr.f32.gmra.mrb[0].mxu0 %v6431
        %v6433 = vpop.f32.mrb[0].mxu0
        %v6434 = vadd.f32 %v5993, %v6433
        %v6435 = vpop.f32.mrb[0].mxu0
        %v6436 = vand.u32 %v4919, 4294901760
        %v6437 = vsub.f32 %v4919, %v6436
        %6438 = vmatprep.mubr.f32.mxu0 %v6437
        %v6439 = vand.u32 %v4806, 4294901760
        %v6440 = vsub.f32 %v4806, %v6439
        %6441 = vmatmul.mubr.f32.gmra.mrb[0].mxu0 %v6440
        %v6442 = vpop.f32.mrb[0].mxu0
        %v6443 = vadd.f32 %v6000, %v6442
        %v6444 = vpop.f32.mrb[0].mxu0
        %v6445 = vand.u32 %v4922, 4294901760
        %v6446 = vsub.f32 %v4922, %v6445
        %6447 = vmatprep.mubr.f32.mxu0 %v6446
        %v6448 = vand.u32 %v4808, 4294901760
        %v6449 = vsub.f32 %v4808, %v6448
        %6450 = vmatmul.mubr.f32.gmra.mrb[0].mxu0 %v6449
        %v6451 = vpop.f32.mrb[0].mxu0
        %v6452 = vadd.f32 %v6007, %v6451
        %v6453 = vpop.f32.mrb[0].mxu0
        %v6454 = vand.u32 %v4925, 4294901760
        %v6455 = vsub.f32 %v4925, %v6454
        %6456 = vmatprep.mubr.f32.mxu0 %v6455
        %v6457 = vand.u32 %v4810, 4294901760
        %v6458 = vsub.f32 %v4810, %v6457
        %6459 = vmatmul.mubr.f32.gmra.mrb[0].mxu0 %v6458
        %v6460 = vpop.f32.mrb[0].mxu0
        %v6461 = vadd.f32 %v6014, %v6460
        %v6462 = vpop.f32.mrb[0].mxu0
        %6463 = vdwg.mxu0
        %6464 = vmatprep.subr.mxu0 0.0
        %v6465 = vand.u32 %v4640, 4294901760
        %6466 = vmatpush1.msra.mxu0 %v6465
        %6467 = vmatprep.subr.mxu0 0.0
        %v6468 = vand.u32 %v4641, 4294901760
        %6469 = vmatpush1.msra.mxu0 %v6468
        %6470 = vmatprep.subr.mxu0 0.0
        %v6471 = vand.u32 %v4642, 4294901760
        %6472 = vmatpush1.msra.mxu0 %v6471
        %6473 = vmatprep.subr.mxu0 0.0
        %v6474 = vand.u32 %v4643, 4294901760
        %6475 = vmatpush1.msra.mxu0 %v6474
        %6476 = vmatprep.subr.mxu0 0.0
        %v6477 = vand.u32 %v4644, 4294901760
        %6478 = vmatpush1.msra.mxu0 %v6477
        %6479 = vmatprep.subr.mxu0 0.0
        %v6480 = vand.u32 %v4645, 4294901760
        %6481 = vmatpush1.msra.mxu0 %v6480
        %6482 = vmatprep.subr.mxu0 0.0
        %v6483 = vand.u32 %v4646, 4294901760
        %6484 = vmatpush1.msra.mxu0 %v6483
        %6485 = vmatprep.subr.mxu0 0.0
        %v6486 = vand.u32 %v4647, 4294901760
        %6487 = vmatpush1.msra.mxu0 %v6486
        %6488 = vmatprep.subr.mxu0 0.0
        %v6489 = vand.u32 %v4648, 4294901760
        %6490 = vmatpush1.msra.mxu0 %v6489
        %6491 = vmatprep.subr.mxu0 0.0
        %v6492 = vand.u32 %v4649, 4294901760
        %6493 = vmatpush1.msra.mxu0 %v6492
        %6494 = vmatprep.subr.mxu0 0.0
        %v6495 = vand.u32 %v4650, 4294901760
        %6496 = vmatpush1.msra.mxu0 %v6495
        %6497 = vmatprep.subr.mxu0 0.0
        %v6498 = vand.u32 %v4651, 4294901760
        %6499 = vmatpush1.msra.mxu0 %v6498
        %6500 = vmatprep.subr.mxu0 0.0
        %v6501 = vand.u32 %v4652, 4294901760
        %6502 = vmatpush1.msra.mxu0 %v6501
        %6503 = vmatprep.subr.mxu0 0.0
        %v6504 = vand.u32 %v4653, 4294901760
        %6505 = vmatpush1.msra.mxu0 %v6504
        %6506 = vmatprep.subr.mxu0 0.0
        %v6507 = vand.u32 %v4654, 4294901760
        %6508 = vmatpush1.msra.mxu0 %v6507
        %6509 = vmatprep.subr.mxu0 0.0
        %v6510 = vand.u32 %v4655, 4294901760
        %6511 = vmatpush1.msra.mxu0 %v6510
        %6512 = vmatprep.subr.mxu0 0.0
        %v6513 = vand.u32 %v4656, 4294901760
        %6514 = vmatpush1.msra.mxu0 %v6513
        %6515 = vmatprep.subr.mxu0 0.0
        %v6516 = vand.u32 %v4657, 4294901760
        %6517 = vmatpush1.msra.mxu0 %v6516
        %6518 = vmatprep.subr.mxu0 0.0
        %v6519 = vand.u32 %v4658, 4294901760
        %6520 = vmatpush1.msra.mxu0 %v6519
        %6521 = vmatprep.subr.mxu0 0.0
        %v6522 = vand.u32 %v4929, 4294901760
        %6523 = vmatpush1.msra.mxu0 %v6522
        %6524 = vmatprep.subr.mxu0 0.0
        %6525 = vmatpush1.msra.mxu0 0.0
        %6526 = vmatprep.subr.mxu0 0.0
        %6527 = vmatpush1.msra.mxu0 0.0
        %6528 = vmatprep.subr.mxu0 0.0
        %6529 = vmatpush1.msra.mxu0 0.0
        %6530 = vmatprep.subr.mxu0 0.0
        %6531 = vmatpush1.msra.mxu0 0.0
        %6532 = vmatprep.subr.mxu0 0.0
        %6533 = vmatpush1.msra.mxu0 0.0
        %6534 = vmatprep.subr.mxu0 0.0
        %6535 = vmatpush1.msra.mxu0 0.0
        %6536 = vmatprep.subr.mxu0 0.0
        %6537 = vmatpush1.msra.mxu0 0.0
        %6538 = vmatprep.subr.mxu0 0.0
        %6539 = vmatpush1.msra.mxu0 0.0
        %6540 = vmatprep.subr.mxu0 0.0
        %6541 = vmatpush1.msra.mxu0 0.0
        %6542 = vmatprep.subr.mxu0 0.0
        %6543 = vmatpush1.msra.mxu0 0.0
        %6544 = vmatprep.subr.mxu0 0.0
        %6545 = vmatpush1.msra.mxu0 0.0
        %6546 = vmatprep.subr.mxu0 0.0
        %6547 = vmatpush1.msra.mxu0 0.0
        %v6548 = vand.u32 %v4814, 4294901760
        %v6549 = vsub.f32 %v4814, %v6548
        %v6550 = vand.u32 %v6549, 4294901760
        %6551 = vmatprep.mubr.f32.mxu0 %v6550
        %v6552 = vand.u32 %v4736, 4294901760
        %v6553 = vsub.f32 %v4736, %v6552
        %v6554 = vand.u32 %v6553, 4294901760
        %6555 = vmatmul.mubr.f32.gmra.mrb[0].mxu0 %v6554
        %v6556 = vpop.f32.mrb[0].mxu0
        %v6557 = vadd.f32 %v6128, %v6556
        %v6558 = vpop.f32.mrb[0].mxu0
        %v6559 = vand.u32 %v4817, 4294901760
        %v6560 = vsub.f32 %v4817, %v6559
        %v6561 = vand.u32 %v6560, 4294901760
        %6562 = vmatprep.mubr.f32.mxu0 %v6561
        %v6563 = vand.u32 %v4738, 4294901760
        %v6564 = vsub.f32 %v4738, %v6563
        %v6565 = vand.u32 %v6564, 4294901760
        %6566 = vmatmul.mubr.f32.gmra.mrb[0].mxu0 %v6565
        %v6567 = vpop.f32.mrb[0].mxu0
        %v6568 = vadd.f32 %v6137, %v6567
        %v6569 = vpop.f32.mrb[0].mxu0
        %v6570 = vand.u32 %v4820, 4294901760
        %v6571 = vsub.f32 %v4820, %v6570
        %v6572 = vand.u32 %v6571, 4294901760
        %6573 = vmatprep.mubr.f32.mxu0 %v6572
        %v6574 = vand.u32 %v4740, 4294901760
        %v6575 = vsub.f32 %v4740, %v6574
        %v6576 = vand.u32 %v6575, 4294901760
        %6577 = vmatmul.mubr.f32.gmra.mrb[0].mxu0 %v6576
        %v6578 = vpop.f32.mrb[0].mxu0
        %v6579 = vadd.f32 %v6146, %v6578
        %v6580 = vpop.f32.mrb[0].mxu0
        %v6581 = vand.u32 %v4823, 4294901760
        %v6582 = vsub.f32 %v4823, %v6581
        %v6583 = vand.u32 %v6582, 4294901760
        %6584 = vmatprep.mubr.f32.mxu0 %v6583
        %v6585 = vand.u32 %v4742, 4294901760
        %v6586 = vsub.f32 %v4742, %v6585
        %v6587 = vand.u32 %v6586, 4294901760
        %6588 = vmatmul.mubr.f32.gmra.mrb[0].mxu0 %v6587
        %v6589 = vpop.f32.mrb[0].mxu0
        %v6590 = vadd.f32 %v6155, %v6589
        %v6591 = vpop.f32.mrb[0].mxu0
        %v6592 = vand.u32 %v4826, 4294901760
        %v6593 = vsub.f32 %v4826, %v6592
        %v6594 = vand.u32 %v6593, 4294901760
        %6595 = vmatprep.mubr.f32.mxu0 %v6594
        %v6596 = vand.u32 %v4744, 4294901760
        %v6597 = vsub.f32 %v4744, %v6596
        %v6598 = vand.u32 %v6597, 4294901760
        %6599 = vmatmul.mubr.f32.gmra.mrb[0].mxu0 %v6598
        %v6600 = vpop.f32.mrb[0].mxu0
        %v6601 = vadd.f32 %v6164, %v6600
        %v6602 = vpop.f32.mrb[0].mxu0
        %v6603 = vand.u32 %v4829, 4294901760
        %v6604 = vsub.f32 %v4829, %v6603
        %v6605 = vand.u32 %v6604, 4294901760
        %6606 = vmatprep.mubr.f32.mxu0 %v6605
        %v6607 = vand.u32 %v4746, 4294901760
        %v6608 = vsub.f32 %v4746, %v6607
        %v6609 = vand.u32 %v6608, 4294901760
        %6610 = vmatmul.mubr.f32.gmra.mrb[0].mxu0 %v6609
        %v6611 = vpop.f32.mrb[0].mxu0
        %v6612 = vadd.f32 %v6173, %v6611
        %v6613 = vpop.f32.mrb[0].mxu0
        %v6614 = vand.u32 %v4832, 4294901760
        %v6615 = vsub.f32 %v4832, %v6614
        %v6616 = vand.u32 %v6615, 4294901760
        %6617 = vmatprep.mubr.f32.mxu0 %v6616
        %v6618 = vand.u32 %v4748, 4294901760
        %v6619 = vsub.f32 %v4748, %v6618
        %v6620 = vand.u32 %v6619, 4294901760
        %6621 = vmatmul.mubr.f32.gmra.mrb[0].mxu0 %v6620
        %v6622 = vpop.f32.mrb[0].mxu0
        %v6623 = vadd.f32 %v6182, %v6622
        %v6624 = vpop.f32.mrb[0].mxu0
        %v6625 = vand.u32 %v4835, 4294901760
        %v6626 = vsub.f32 %v4835, %v6625
        %v6627 = vand.u32 %v6626, 4294901760
        %6628 = vmatprep.mubr.f32.mxu0 %v6627
        %v6629 = vand.u32 %v4750, 4294901760
        %v6630 = vsub.f32 %v4750, %v6629
        %v6631 = vand.u32 %v6630, 4294901760
        %6632 = vmatmul.mubr.f32.gmra.mrb[0].mxu0 %v6631
        %v6633 = vpop.f32.mrb[0].mxu0
        %v6634 = vadd.f32 %v6191, %v6633
        %v6635 = vpop.f32.mrb[0].mxu0
        %v6636 = vand.u32 %v4838, 4294901760
        %v6637 = vsub.f32 %v4838, %v6636
        %v6638 = vand.u32 %v6637, 4294901760
        %6639 = vmatprep.mubr.f32.mxu0 %v6638
        %v6640 = vand.u32 %v4752, 4294901760
        %v6641 = vsub.f32 %v4752, %v6640
        %v6642 = vand.u32 %v6641, 4294901760
        %6643 = vmatmul.mubr.f32.gmra.mrb[0].mxu0 %v6642
        %v6644 = vpop.f32.mrb[0].mxu0
        %v6645 = vadd.f32 %v6200, %v6644
        %v6646 = vpop.f32.mrb[0].mxu0
        %v6647 = vand.u32 %v4841, 4294901760
        %v6648 = vsub.f32 %v4841, %v6647
        %v6649 = vand.u32 %v6648, 4294901760
        %6650 = vmatprep.mubr.f32.mxu0 %v6649
        %v6651 = vand.u32 %v4754, 4294901760
        %v6652 = vsub.f32 %v4754, %v6651
        %v6653 = vand.u32 %v6652, 4294901760
        %6654 = vmatmul.mubr.f32.gmra.mrb[0].mxu0 %v6653
        %v6655 = vpop.f32.mrb[0].mxu0
        %v6656 = vadd.f32 %v6209, %v6655
        %v6657 = vpop.f32.mrb[0].mxu0
        %v6658 = vand.u32 %v4844, 4294901760
        %v6659 = vsub.f32 %v4844, %v6658
        %v6660 = vand.u32 %v6659, 4294901760
        %6661 = vmatprep.mubr.f32.mxu0 %v6660
        %v6662 = vand.u32 %v4756, 4294901760
        %v6663 = vsub.f32 %v4756, %v6662
        %v6664 = vand.u32 %v6663, 4294901760
        %6665 = vmatmul.mubr.f32.gmra.mrb[0].mxu0 %v6664
        %v6666 = vpop.f32.mrb[0].mxu0
        %v6667 = vadd.f32 %v6218, %v6666
        %v6668 = vpop.f32.mrb[0].mxu0
        %v6669 = vand.u32 %v4847, 4294901760
        %v6670 = vsub.f32 %v4847, %v6669
        %v6671 = vand.u32 %v6670, 4294901760
        %6672 = vmatprep.mubr.f32.mxu0 %v6671
        %v6673 = vand.u32 %v4758, 4294901760
        %v6674 = vsub.f32 %v4758, %v6673
        %v6675 = vand.u32 %v6674, 4294901760
        %6676 = vmatmul.mubr.f32.gmra.mrb[0].mxu0 %v6675
        %v6677 = vpop.f32.mrb[0].mxu0
        %v6678 = vadd.f32 %v6227, %v6677
        %v6679 = vpop.f32.mrb[0].mxu0
        %v6680 = vand.u32 %v4850, 4294901760
        %v6681 = vsub.f32 %v4850, %v6680
        %v6682 = vand.u32 %v6681, 4294901760
        %6683 = vmatprep.mubr.f32.mxu0 %v6682
        %v6684 = vand.u32 %v4760, 4294901760
        %v6685 = vsub.f32 %v4760, %v6684
        %v6686 = vand.u32 %v6685, 4294901760
        %6687 = vmatmul.mubr.f32.gmra.mrb[0].mxu0 %v6686
        %v6688 = vpop.f32.mrb[0].mxu0
        %v6689 = vadd.f32 %v6236, %v6688
        %v6690 = vpop.f32.mrb[0].mxu0
        %v6691 = vand.u32 %v4853, 4294901760
        %v6692 = vsub.f32 %v4853, %v6691
        %v6693 = vand.u32 %v6692, 4294901760
        %6694 = vmatprep.mubr.f32.mxu0 %v6693
        %v6695 = vand.u32 %v4762, 4294901760
        %v6696 = vsub.f32 %v4762, %v6695
        %v6697 = vand.u32 %v6696, 4294901760
        %6698 = vmatmul.mubr.f32.gmra.mrb[0].mxu0 %v6697
        %v6699 = vpop.f32.mrb[0].mxu0
        %v6700 = vadd.f32 %v6245, %v6699
        %v6701 = vpop.f32.mrb[0].mxu0
        %v6702 = vand.u32 %v4856, 4294901760
        %v6703 = vsub.f32 %v4856, %v6702
        %v6704 = vand.u32 %v6703, 4294901760
        %6705 = vmatprep.mubr.f32.mxu0 %v6704
        %v6706 = vand.u32 %v4764, 4294901760
        %v6707 = vsub.f32 %v4764, %v6706
        %v6708 = vand.u32 %v6707, 4294901760
        %6709 = vmatmul.mubr.f32.gmra.mrb[0].mxu0 %v6708
        %v6710 = vpop.f32.mrb[0].mxu0
        %v6711 = vadd.f32 %v6254, %v6710
        %v6712 = vpop.f32.mrb[0].mxu0
        %v6713 = vand.u32 %v4859, 4294901760
        %v6714 = vsub.f32 %v4859, %v6713
        %v6715 = vand.u32 %v6714, 4294901760
        %6716 = vmatprep.mubr.f32.mxu0 %v6715
        %v6717 = vand.u32 %v4766, 4294901760
        %v6718 = vsub.f32 %v4766, %v6717
        %v6719 = vand.u32 %v6718, 4294901760
        %6720 = vmatmul.mubr.f32.gmra.mrb[0].mxu0 %v6719
        %v6721 = vpop.f32.mrb[0].mxu0
        %v6722 = vadd.f32 %v6263, %v6721
        %v6723 = vpop.f32.mrb[0].mxu0
        %v6724 = vand.u32 %v4862, 4294901760
        %v6725 = vsub.f32 %v4862, %v6724
        %v6726 = vand.u32 %v6725, 4294901760
        %6727 = vmatprep.mubr.f32.mxu0 %v6726
        %v6728 = vand.u32 %v4768, 4294901760
        %v6729 = vsub.f32 %v4768, %v6728
        %v6730 = vand.u32 %v6729, 4294901760
        %6731 = vmatmul.mubr.f32.gmra.mrb[0].mxu0 %v6730
        %v6732 = vpop.f32.mrb[0].mxu0
        %v6733 = vadd.f32 %v6272, %v6732
        %v6734 = vpop.f32.mrb[0].mxu0
        %v6735 = vand.u32 %v4865, 4294901760
        %v6736 = vsub.f32 %v4865, %v6735
        %v6737 = vand.u32 %v6736, 4294901760
        %6738 = vmatprep.mubr.f32.mxu0 %v6737
        %v6739 = vand.u32 %v4770, 4294901760
        %v6740 = vsub.f32 %v4770, %v6739
        %v6741 = vand.u32 %v6740, 4294901760
        %6742 = vmatmul.mubr.f32.gmra.mrb[0].mxu0 %v6741
        %v6743 = vpop.f32.mrb[0].mxu0
        %v6744 = vadd.f32 %v6281, %v6743
        %v6745 = vpop.f32.mrb[0].mxu0
        %v6746 = vand.u32 %v4868, 4294901760
        %v6747 = vsub.f32 %v4868, %v6746
        %v6748 = vand.u32 %v6747, 4294901760
        %6749 = vmatprep.mubr.f32.mxu0 %v6748
        %v6750 = vand.u32 %v4772, 4294901760
        %v6751 = vsub.f32 %v4772, %v6750
        %v6752 = vand.u32 %v6751, 4294901760
        %6753 = vmatmul.mubr.f32.gmra.mrb[0].mxu0 %v6752
        %v6754 = vpop.f32.mrb[0].mxu0
        %v6755 = vadd.f32 %v6290, %v6754
        %v6756 = vpop.f32.mrb[0].mxu0
        %v6757 = vand.u32 %v4871, 4294901760
        %v6758 = vsub.f32 %v4871, %v6757
        %v6759 = vand.u32 %v6758, 4294901760
        %6760 = vmatprep.mubr.f32.mxu0 %v6759
        %v6761 = vand.u32 %v4774, 4294901760
        %v6762 = vsub.f32 %v4774, %v6761
        %v6763 = vand.u32 %v6762, 4294901760
        %6764 = vmatmul.mubr.f32.gmra.mrb[0].mxu0 %v6763
        %v6765 = vpop.f32.mrb[0].mxu0
        %v6766 = vadd.f32 %v6299, %v6765
        %v6767 = vpop.f32.mrb[0].mxu0
        %v6768 = vand.u32 %v4874, 4294901760
        %v6769 = vsub.f32 %v4874, %v6768
        %v6770 = vand.u32 %v6769, 4294901760
        %6771 = vmatprep.mubr.f32.mxu0 %v6770
        %v6772 = vand.u32 %v4776, 4294901760
        %v6773 = vsub.f32 %v4776, %v6772
        %v6774 = vand.u32 %v6773, 4294901760
        %6775 = vmatmul.mubr.f32.gmra.mrb[0].mxu0 %v6774
        %v6776 = vpop.f32.mrb[0].mxu0
        %v6777 = vadd.f32 %v6308, %v6776
        %v6778 = vpop.f32.mrb[0].mxu0
        %v6779 = vand.u32 %v4877, 4294901760
        %v6780 = vsub.f32 %v4877, %v6779
        %v6781 = vand.u32 %v6780, 4294901760
        %6782 = vmatprep.mubr.f32.mxu0 %v6781
        %v6783 = vand.u32 %v4778, 4294901760
        %v6784 = vsub.f32 %v4778, %v6783
        %v6785 = vand.u32 %v6784, 4294901760
        %6786 = vmatmul.mubr.f32.gmra.mrb[0].mxu0 %v6785
        %v6787 = vpop.f32.mrb[0].mxu0
        %v6788 = vadd.f32 %v6317, %v6787
        %v6789 = vpop.f32.mrb[0].mxu0
        %v6790 = vand.u32 %v4880, 4294901760
        %v6791 = vsub.f32 %v4880, %v6790
        %v6792 = vand.u32 %v6791, 4294901760
        %6793 = vmatprep.mubr.f32.mxu0 %v6792
        %v6794 = vand.u32 %v4780, 4294901760
        %v6795 = vsub.f32 %v4780, %v6794
        %v6796 = vand.u32 %v6795, 4294901760
        %6797 = vmatmul.mubr.f32.gmra.mrb[0].mxu0 %v6796
        %v6798 = vpop.f32.mrb[0].mxu0
        %v6799 = vadd.f32 %v6326, %v6798
        %v6800 = vpop.f32.mrb[0].mxu0
        %v6801 = vand.u32 %v4883, 4294901760
        %v6802 = vsub.f32 %v4883, %v6801
        %v6803 = vand.u32 %v6802, 4294901760
        %6804 = vmatprep.mubr.f32.mxu0 %v6803
        %v6805 = vand.u32 %v4782, 4294901760
        %v6806 = vsub.f32 %v4782, %v6805
        %v6807 = vand.u32 %v6806, 4294901760
        %6808 = vmatmul.mubr.f32.gmra.mrb[0].mxu0 %v6807
        %v6809 = vpop.f32.mrb[0].mxu0
        %v6810 = vadd.f32 %v6335, %v6809
        %v6811 = vpop.f32.mrb[0].mxu0
        %v6812 = vand.u32 %v4886, 4294901760
        %v6813 = vsub.f32 %v4886, %v6812
        %v6814 = vand.u32 %v6813, 4294901760
        %6815 = vmatprep.mubr.f32.mxu0 %v6814
        %v6816 = vand.u32 %v4784, 4294901760
        %v6817 = vsub.f32 %v4784, %v6816
        %v6818 = vand.u32 %v6817, 4294901760
        %6819 = vmatmul.mubr.f32.gmra.mrb[0].mxu0 %v6818
        %v6820 = vpop.f32.mrb[0].mxu0
        %v6821 = vadd.f32 %v6344, %v6820
        %v6822 = vpop.f32.mrb[0].mxu0
        %v6823 = vand.u32 %v4889, 4294901760
        %v6824 = vsub.f32 %v4889, %v6823
        %v6825 = vand.u32 %v6824, 4294901760
        %6826 = vmatprep.mubr.f32.mxu0 %v6825
        %v6827 = vand.u32 %v4786, 4294901760
        %v6828 = vsub.f32 %v4786, %v6827
        %v6829 = vand.u32 %v6828, 4294901760
        %6830 = vmatmul.mubr.f32.gmra.mrb[0].mxu0 %v6829
        %v6831 = vpop.f32.mrb[0].mxu0
        %v6832 = vadd.f32 %v6353, %v6831
        %v6833 = vpop.f32.mrb[0].mxu0
        %v6834 = vand.u32 %v4892, 4294901760
        %v6835 = vsub.f32 %v4892, %v6834
        %v6836 = vand.u32 %v6835, 4294901760
        %6837 = vmatprep.mubr.f32.mxu0 %v6836
        %v6838 = vand.u32 %v4788, 4294901760
        %v6839 = vsub.f32 %v4788, %v6838
        %v6840 = vand.u32 %v6839, 4294901760
        %6841 = vmatmul.mubr.f32.gmra.mrb[0].mxu0 %v6840
        %v6842 = vpop.f32.mrb[0].mxu0
        %v6843 = vadd.f32 %v6362, %v6842
        %v6844 = vpop.f32.mrb[0].mxu0
        %v6845 = vand.u32 %v4895, 4294901760
        %v6846 = vsub.f32 %v4895, %v6845
        %v6847 = vand.u32 %v6846, 4294901760
        %6848 = vmatprep.mubr.f32.mxu0 %v6847
        %v6849 = vand.u32 %v4790, 4294901760
        %v6850 = vsub.f32 %v4790, %v6849
        %v6851 = vand.u32 %v6850, 4294901760
        %6852 = vmatmul.mubr.f32.gmra.mrb[0].mxu0 %v6851
        %v6853 = vpop.f32.mrb[0].mxu0
        %v6854 = vadd.f32 %v6371, %v6853
        %v6855 = vpop.f32.mrb[0].mxu0
        %v6856 = vand.u32 %v4898, 4294901760
        %v6857 = vsub.f32 %v4898, %v6856
        %v6858 = vand.u32 %v6857, 4294901760
        %6859 = vmatprep.mubr.f32.mxu0 %v6858
        %v6860 = vand.u32 %v4792, 4294901760
        %v6861 = vsub.f32 %v4792, %v6860
        %v6862 = vand.u32 %v6861, 4294901760
        %6863 = vmatmul.mubr.f32.gmra.mrb[0].mxu0 %v6862
        %v6864 = vpop.f32.mrb[0].mxu0
        %v6865 = vadd.f32 %v6380, %v6864
        %v6866 = vpop.f32.mrb[0].mxu0
        %v6867 = vand.u32 %v4901, 4294901760
        %v6868 = vsub.f32 %v4901, %v6867
        %v6869 = vand.u32 %v6868, 4294901760
        %6870 = vmatprep.mubr.f32.mxu0 %v6869
        %v6871 = vand.u32 %v4794, 4294901760
        %v6872 = vsub.f32 %v4794, %v6871
        %v6873 = vand.u32 %v6872, 4294901760
        %6874 = vmatmul.mubr.f32.gmra.mrb[0].mxu0 %v6873
        %v6875 = vpop.f32.mrb[0].mxu0
        %v6876 = vadd.f32 %v6389, %v6875
        %v6877 = vpop.f32.mrb[0].mxu0
        %v6878 = vand.u32 %v4904, 4294901760
        %v6879 = vsub.f32 %v4904, %v6878
        %v6880 = vand.u32 %v6879, 4294901760
        %6881 = vmatprep.mubr.f32.mxu0 %v6880
        %v6882 = vand.u32 %v4796, 4294901760
        %v6883 = vsub.f32 %v4796, %v6882
        %v6884 = vand.u32 %v6883, 4294901760
        %6885 = vmatmul.mubr.f32.gmra.mrb[0].mxu0 %v6884
        %v6886 = vpop.f32.mrb[0].mxu0
        %v6887 = vadd.f32 %v6398, %v6886
        %v6888 = vpop.f32.mrb[0].mxu0
        %v6889 = vand.u32 %v4907, 4294901760
        %v6890 = vsub.f32 %v4907, %v6889
        %v6891 = vand.u32 %v6890, 4294901760
        %6892 = vmatprep.mubr.f32.mxu0 %v6891
        %v6893 = vand.u32 %v4798, 4294901760
        %v6894 = vsub.f32 %v4798, %v6893
        %v6895 = vand.u32 %v6894, 4294901760
        %6896 = vmatmul.mubr.f32.gmra.mrb[0].mxu0 %v6895
        %v6897 = vpop.f32.mrb[0].mxu0
        %v6898 = vadd.f32 %v6407, %v6897
        %v6899 = vpop.f32.mrb[0].mxu0
        %v6900 = vand.u32 %v4910, 4294901760
        %v6901 = vsub.f32 %v4910, %v6900
        %v6902 = vand.u32 %v6901, 4294901760
        %6903 = vmatprep.mubr.f32.mxu0 %v6902
        %v6904 = vand.u32 %v4800, 4294901760
        %v6905 = vsub.f32 %v4800, %v6904
        %v6906 = vand.u32 %v6905, 4294901760
        %6907 = vmatmul.mubr.f32.gmra.mrb[0].mxu0 %v6906
        %v6908 = vpop.f32.mrb[0].mxu0
        %v6909 = vadd.f32 %v6416, %v6908
        %v6910 = vpop.f32.mrb[0].mxu0
        %v6911 = vand.u32 %v4913, 4294901760
        %v6912 = vsub.f32 %v4913, %v6911
        %v6913 = vand.u32 %v6912, 4294901760
        %6914 = vmatprep.mubr.f32.mxu0 %v6913
        %v6915 = vand.u32 %v4802, 4294901760
        %v6916 = vsub.f32 %v4802, %v6915
        %v6917 = vand.u32 %v6916, 4294901760
        %6918 = vmatmul.mubr.f32.gmra.mrb[0].mxu0 %v6917
        %v6919 = vpop.f32.mrb[0].mxu0
        %v6920 = vadd.f32 %v6425, %v6919
        %v6921 = vpop.f32.mrb[0].mxu0
        %v6922 = vand.u32 %v4916, 4294901760
        %v6923 = vsub.f32 %v4916, %v6922
        %v6924 = vand.u32 %v6923, 4294901760
        %6925 = vmatprep.mubr.f32.mxu0 %v6924
        %v6926 = vand.u32 %v4804, 4294901760
        %v6927 = vsub.f32 %v4804, %v6926
        %v6928 = vand.u32 %v6927, 4294901760
        %6929 = vmatmul.mubr.f32.gmra.mrb[0].mxu0 %v6928
        %v6930 = vpop.f32.mrb[0].mxu0
        %v6931 = vadd.f32 %v6434, %v6930
        %v6932 = vpop.f32.mrb[0].mxu0
        %v6933 = vand.u32 %v4919, 4294901760
        %v6934 = vsub.f32 %v4919, %v6933
        %v6935 = vand.u32 %v6934, 4294901760
        %6936 = vmatprep.mubr.f32.mxu0 %v6935
        %v6937 = vand.u32 %v4806, 4294901760
        %v6938 = vsub.f32 %v4806, %v6937
        %v6939 = vand.u32 %v6938, 4294901760
        %6940 = vmatmul.mubr.f32.gmra.mrb[0].mxu0 %v6939
        %v6941 = vpop.f32.mrb[0].mxu0
        %v6942 = vadd.f32 %v6443, %v6941
        %v6943 = vpop.f32.mrb[0].mxu0
        %v6944 = vand.u32 %v4922, 4294901760
        %v6945 = vsub.f32 %v4922, %v6944
        %v6946 = vand.u32 %v6945, 4294901760
        %6947 = vmatprep.mubr.f32.mxu0 %v6946
        %v6948 = vand.u32 %v4808, 4294901760
        %v6949 = vsub.f32 %v4808, %v6948
        %v6950 = vand.u32 %v6949, 4294901760
        %6951 = vmatmul.mubr.f32.gmra.mrb[0].mxu0 %v6950
        %v6952 = vpop.f32.mrb[0].mxu0
        %v6953 = vadd.f32 %v6452, %v6952
        %v6954 = vpop.f32.mrb[0].mxu0
        %v6955 = vand.u32 %v4925, 4294901760
        %v6956 = vsub.f32 %v4925, %v6955
        %v6957 = vand.u32 %v6956, 4294901760
        %6958 = vmatprep.mubr.f32.mxu0 %v6957
        %v6959 = vand.u32 %v4810, 4294901760
        %v6960 = vsub.f32 %v4810, %v6959
        %v6961 = vand.u32 %v6960, 4294901760
        %6962 = vmatmul.mubr.f32.gmra.mrb[0].mxu0 %v6961
        %v6963 = vpop.f32.mrb[0].mxu0
        %v6964 = vadd.f32 %v6461, %v6963
        %v6965 = vpop.f32.mrb[0].mxu0
        %6966 = vdwg.mxu0
        %6967 = vmatprep.subr.mxu0 0.0
        %v6968 = vand.u32 %v4640, 4294901760
        %v6969 = vsub.f32 %v4640, %v6968
        %v6970 = vand.u32 %v6969, 4294901760
        %6971 = vmatpush1.msra.mxu0 %v6970
        %6972 = vmatprep.subr.mxu0 0.0
        %v6973 = vand.u32 %v4641, 4294901760
        %v6974 = vsub.f32 %v4641, %v6973
        %v6975 = vand.u32 %v6974, 4294901760
        %6976 = vmatpush1.msra.mxu0 %v6975
        %6977 = vmatprep.subr.mxu0 0.0
        %v6978 = vand.u32 %v4642, 4294901760
        %v6979 = vsub.f32 %v4642, %v6978
        %v6980 = vand.u32 %v6979, 4294901760
        %6981 = vmatpush1.msra.mxu0 %v6980
        %6982 = vmatprep.subr.mxu0 0.0
        %v6983 = vand.u32 %v4643, 4294901760
        %v6984 = vsub.f32 %v4643, %v6983
        %v6985 = vand.u32 %v6984, 4294901760
        %6986 = vmatpush1.msra.mxu0 %v6985
        %6987 = vmatprep.subr.mxu0 0.0
        %v6988 = vand.u32 %v4644, 4294901760
        %v6989 = vsub.f32 %v4644, %v6988
        %v6990 = vand.u32 %v6989, 4294901760
        %6991 = vmatpush1.msra.mxu0 %v6990
        %6992 = vmatprep.subr.mxu0 0.0
        %v6993 = vand.u32 %v4645, 4294901760
        %v6994 = vsub.f32 %v4645, %v6993
        %v6995 = vand.u32 %v6994, 4294901760
        %6996 = vmatpush1.msra.mxu0 %v6995
        %6997 = vmatprep.subr.mxu0 0.0
        %v6998 = vand.u32 %v4646, 4294901760
        %v6999 = vsub.f32 %v4646, %v6998
        %v7000 = vand.u32 %v6999, 4294901760
        %7001 = vmatpush1.msra.mxu0 %v7000
        %7002 = vmatprep.subr.mxu0 0.0
        %v7003 = vand.u32 %v4647, 4294901760
        %v7004 = vsub.f32 %v4647, %v7003
        %v7005 = vand.u32 %v7004, 4294901760
        %7006 = vmatpush1.msra.mxu0 %v7005
        %7007 = vmatprep.subr.mxu0 0.0
        %v7008 = vand.u32 %v4648, 4294901760
        %v7009 = vsub.f32 %v4648, %v7008
        %v7010 = vand.u32 %v7009, 4294901760
        %7011 = vmatpush1.msra.mxu0 %v7010
        %7012 = vmatprep.subr.mxu0 0.0
        %v7013 = vand.u32 %v4649, 4294901760
        %v7014 = vsub.f32 %v4649, %v7013
        %v7015 = vand.u32 %v7014, 4294901760
        %7016 = vmatpush1.msra.mxu0 %v7015
        %7017 = vmatprep.subr.mxu0 0.0
        %v7018 = vand.u32 %v4650, 4294901760
        %v7019 = vsub.f32 %v4650, %v7018
        %v7020 = vand.u32 %v7019, 4294901760
        %7021 = vmatpush1.msra.mxu0 %v7020
        %7022 = vmatprep.subr.mxu0 0.0
        %v7023 = vand.u32 %v4651, 4294901760
        %v7024 = vsub.f32 %v4651, %v7023
        %v7025 = vand.u32 %v7024, 4294901760
        %7026 = vmatpush1.msra.mxu0 %v7025
        %7027 = vmatprep.subr.mxu0 0.0
        %v7028 = vand.u32 %v4652, 4294901760
        %v7029 = vsub.f32 %v4652, %v7028
        %v7030 = vand.u32 %v7029, 4294901760
        %7031 = vmatpush1.msra.mxu0 %v7030
        %7032 = vmatprep.subr.mxu0 0.0
        %v7033 = vand.u32 %v4653, 4294901760
        %v7034 = vsub.f32 %v4653, %v7033
        %v7035 = vand.u32 %v7034, 4294901760
        %7036 = vmatpush1.msra.mxu0 %v7035
        %7037 = vmatprep.subr.mxu0 0.0
        %v7038 = vand.u32 %v4654, 4294901760
        %v7039 = vsub.f32 %v4654, %v7038
        %v7040 = vand.u32 %v7039, 4294901760
        %7041 = vmatpush1.msra.mxu0 %v7040
        %7042 = vmatprep.subr.mxu0 0.0
        %v7043 = vand.u32 %v4655, 4294901760
        %v7044 = vsub.f32 %v4655, %v7043
        %v7045 = vand.u32 %v7044, 4294901760
        %7046 = vmatpush1.msra.mxu0 %v7045
        %7047 = vmatprep.subr.mxu0 0.0
        %v7048 = vand.u32 %v4656, 4294901760
        %v7049 = vsub.f32 %v4656, %v7048
        %v7050 = vand.u32 %v7049, 4294901760
        %7051 = vmatpush1.msra.mxu0 %v7050
        %7052 = vmatprep.subr.mxu0 0.0
        %v7053 = vand.u32 %v4657, 4294901760
        %v7054 = vsub.f32 %v4657, %v7053
        %v7055 = vand.u32 %v7054, 4294901760
        %7056 = vmatpush1.msra.mxu0 %v7055
        %7057 = vmatprep.subr.mxu0 0.0
        %v7058 = vand.u32 %v4658, 4294901760
        %v7059 = vsub.f32 %v4658, %v7058
        %v7060 = vand.u32 %v7059, 4294901760
        %7061 = vmatpush1.msra.mxu0 %v7060
        %7062 = vmatprep.subr.mxu0 0.0
        %v7063 = vand.u32 %v4929, 4294901760
        %v7064 = vsub.f32 %v4929, %v7063
        %v7065 = vand.u32 %v7064, 4294901760
        %7066 = vmatpush1.msra.mxu0 %v7065
        %7067 = vmatprep.subr.mxu0 0.0
        %7068 = vmatpush1.msra.mxu0 0.0
        %7069 = vmatprep.subr.mxu0 0.0
        %7070 = vmatpush1.msra.mxu0 0.0
        %7071 = vmatprep.subr.mxu0 0.0
        %7072 = vmatpush1.msra.mxu0 0.0
        %7073 = vmatprep.subr.mxu0 0.0
        %7074 = vmatpush1.msra.mxu0 0.0
        %7075 = vmatprep.subr.mxu0 0.0
        %7076 = vmatpush1.msra.mxu0 0.0
        %7077 = vmatprep.subr.mxu0 0.0
        %7078 = vmatpush1.msra.mxu0 0.0
        %7079 = vmatprep.subr.mxu0 0.0
        %7080 = vmatpush1.msra.mxu0 0.0
        %7081 = vmatprep.subr.mxu0 0.0
        %7082 = vmatpush1.msra.mxu0 0.0
        %7083 = vmatprep.subr.mxu0 0.0
        %7084 = vmatpush1.msra.mxu0 0.0
        %7085 = vmatprep.subr.mxu0 0.0
        %7086 = vmatpush1.msra.mxu0 0.0
        %7087 = vmatprep.subr.mxu0 0.0
        %7088 = vmatpush1.msra.mxu0 0.0
        %7089 = vmatprep.subr.mxu0 0.0
        %7090 = vmatpush1.msra.mxu0 0.0
        %v7091 = vand.u32 %v4814, 4294901760
        %7092 = vmatprep.mubr.f32.mxu0 %v7091
        %v7093 = vand.u32 %v4736, 4294901760
        %7094 = vmatmul.mubr.f32.gmra.mrb[0].mxu0 %v7093
        %v7095 = vpop.f32.mrb[0].mxu0
        %v7096 = vadd.f32 %v6557, %v7095
        %v7097 = vpop.f32.mrb[0].mxu0
        %v7098 = vand.u32 %v4817, 4294901760
        %7099 = vmatprep.mubr.f32.mxu0 %v7098
        %v7100 = vand.u32 %v4738, 4294901760
        %7101 = vmatmul.mubr.f32.gmra.mrb[0].mxu0 %v7100
        %v7102 = vpop.f32.mrb[0].mxu0
        %v7103 = vadd.f32 %v6568, %v7102
        %v7104 = vpop.f32.mrb[0].mxu0
        %v7105 = vand.u32 %v4820, 4294901760
        %7106 = vmatprep.mubr.f32.mxu0 %v7105
        %v7107 = vand.u32 %v4740, 4294901760
        %7108 = vmatmul.mubr.f32.gmra.mrb[0].mxu0 %v7107
        %v7109 = vpop.f32.mrb[0].mxu0
        %v7110 = vadd.f32 %v6579, %v7109
        %v7111 = vpop.f32.mrb[0].mxu0
        %v7112 = vand.u32 %v4823, 4294901760
        %7113 = vmatprep.mubr.f32.mxu0 %v7112
        %v7114 = vand.u32 %v4742, 4294901760
        %7115 = vmatmul.mubr.f32.gmra.mrb[0].mxu0 %v7114
        %v7116 = vpop.f32.mrb[0].mxu0
        %v7117 = vadd.f32 %v6590, %v7116
        %v7118 = vpop.f32.mrb[0].mxu0
        %v7119 = vand.u32 %v4826, 4294901760
        %7120 = vmatprep.mubr.f32.mxu0 %v7119
        %v7121 = vand.u32 %v4744, 4294901760
        %7122 = vmatmul.mubr.f32.gmra.mrb[0].mxu0 %v7121
        %v7123 = vpop.f32.mrb[0].mxu0
        %v7124 = vadd.f32 %v6601, %v7123
        %v7125 = vpop.f32.mrb[0].mxu0
        %v7126 = vand.u32 %v4829, 4294901760
        %7127 = vmatprep.mubr.f32.mxu0 %v7126
        %v7128 = vand.u32 %v4746, 4294901760
        %7129 = vmatmul.mubr.f32.gmra.mrb[0].mxu0 %v7128
        %v7130 = vpop.f32.mrb[0].mxu0
        %v7131 = vadd.f32 %v6612, %v7130
        %v7132 = vpop.f32.mrb[0].mxu0
        %v7133 = vand.u32 %v4832, 4294901760
        %7134 = vmatprep.mubr.f32.mxu0 %v7133
        %v7135 = vand.u32 %v4748, 4294901760
        %7136 = vmatmul.mubr.f32.gmra.mrb[0].mxu0 %v7135
        %v7137 = vpop.f32.mrb[0].mxu0
        %v7138 = vadd.f32 %v6623, %v7137
        %v7139 = vpop.f32.mrb[0].mxu0
        %v7140 = vand.u32 %v4835, 4294901760
        %7141 = vmatprep.mubr.f32.mxu0 %v7140
        %v7142 = vand.u32 %v4750, 4294901760
        %7143 = vmatmul.mubr.f32.gmra.mrb[0].mxu0 %v7142
        %v7144 = vpop.f32.mrb[0].mxu0
        %v7145 = vadd.f32 %v6634, %v7144
        %v7146 = vpop.f32.mrb[0].mxu0
        %v7147 = vand.u32 %v4838, 4294901760
        %7148 = vmatprep.mubr.f32.mxu0 %v7147
        %v7149 = vand.u32 %v4752, 4294901760
        %7150 = vmatmul.mubr.f32.gmra.mrb[0].mxu0 %v7149
        %v7151 = vpop.f32.mrb[0].mxu0
        %v7152 = vadd.f32 %v6645, %v7151
        %v7153 = vpop.f32.mrb[0].mxu0
        %v7154 = vand.u32 %v4841, 4294901760
        %7155 = vmatprep.mubr.f32.mxu0 %v7154
        %v7156 = vand.u32 %v4754, 4294901760
        %7157 = vmatmul.mubr.f32.gmra.mrb[0].mxu0 %v7156
        %v7158 = vpop.f32.mrb[0].mxu0
        %v7159 = vadd.f32 %v6656, %v7158
        %v7160 = vpop.f32.mrb[0].mxu0
        %v7161 = vand.u32 %v4844, 4294901760
        %7162 = vmatprep.mubr.f32.mxu0 %v7161
        %v7163 = vand.u32 %v4756, 4294901760
        %7164 = vmatmul.mubr.f32.gmra.mrb[0].mxu0 %v7163
        %v7165 = vpop.f32.mrb[0].mxu0
        %v7166 = vadd.f32 %v6667, %v7165
        %v7167 = vpop.f32.mrb[0].mxu0
        %v7168 = vand.u32 %v4847, 4294901760
        %7169 = vmatprep.mubr.f32.mxu0 %v7168
        %v7170 = vand.u32 %v4758, 4294901760
        %7171 = vmatmul.mubr.f32.gmra.mrb[0].mxu0 %v7170
        %v7172 = vpop.f32.mrb[0].mxu0
        %v7173 = vadd.f32 %v6678, %v7172
        %v7174 = vpop.f32.mrb[0].mxu0
        %v7175 = vand.u32 %v4850, 4294901760
        %7176 = vmatprep.mubr.f32.mxu0 %v7175
        %v7177 = vand.u32 %v4760, 4294901760
        %7178 = vmatmul.mubr.f32.gmra.mrb[0].mxu0 %v7177
        %v7179 = vpop.f32.mrb[0].mxu0
        %v7180 = vadd.f32 %v6689, %v7179
        %v7181 = vpop.f32.mrb[0].mxu0
        %v7182 = vand.u32 %v4853, 4294901760
        %7183 = vmatprep.mubr.f32.mxu0 %v7182
        %v7184 = vand.u32 %v4762, 4294901760
        %7185 = vmatmul.mubr.f32.gmra.mrb[0].mxu0 %v7184
        %v7186 = vpop.f32.mrb[0].mxu0
        %v7187 = vadd.f32 %v6700, %v7186
        %v7188 = vpop.f32.mrb[0].mxu0
        %v7189 = vand.u32 %v4856, 4294901760
        %7190 = vmatprep.mubr.f32.mxu0 %v7189
        %v7191 = vand.u32 %v4764, 4294901760
        %7192 = vmatmul.mubr.f32.gmra.mrb[0].mxu0 %v7191
        %v7193 = vpop.f32.mrb[0].mxu0
        %v7194 = vadd.f32 %v6711, %v7193
        %v7195 = vpop.f32.mrb[0].mxu0
        %v7196 = vand.u32 %v4859, 4294901760
        %7197 = vmatprep.mubr.f32.mxu0 %v7196
        %v7198 = vand.u32 %v4766, 4294901760
        %7199 = vmatmul.mubr.f32.gmra.mrb[0].mxu0 %v7198
        %v7200 = vpop.f32.mrb[0].mxu0
        %v7201 = vadd.f32 %v6722, %v7200
        %v7202 = vpop.f32.mrb[0].mxu0
        %v7203 = vand.u32 %v4862, 4294901760
        %7204 = vmatprep.mubr.f32.mxu0 %v7203
        %v7205 = vand.u32 %v4768, 4294901760
        %7206 = vmatmul.mubr.f32.gmra.mrb[0].mxu0 %v7205
        %v7207 = vpop.f32.mrb[0].mxu0
        %v7208 = vadd.f32 %v6733, %v7207
        %v7209 = vpop.f32.mrb[0].mxu0
        %v7210 = vand.u32 %v4865, 4294901760
        %7211 = vmatprep.mubr.f32.mxu0 %v7210
        %v7212 = vand.u32 %v4770, 4294901760
        %7213 = vmatmul.mubr.f32.gmra.mrb[0].mxu0 %v7212
        %v7214 = vpop.f32.mrb[0].mxu0
        %v7215 = vadd.f32 %v6744, %v7214
        %v7216 = vpop.f32.mrb[0].mxu0
        %v7217 = vand.u32 %v4868, 4294901760
        %7218 = vmatprep.mubr.f32.mxu0 %v7217
        %v7219 = vand.u32 %v4772, 4294901760
        %7220 = vmatmul.mubr.f32.gmra.mrb[0].mxu0 %v7219
        %v7221 = vpop.f32.mrb[0].mxu0
        %v7222 = vadd.f32 %v6755, %v7221
        %v7223 = vpop.f32.mrb[0].mxu0
        %v7224 = vand.u32 %v4871, 4294901760
        %7225 = vmatprep.mubr.f32.mxu0 %v7224
        %v7226 = vand.u32 %v4774, 4294901760
        %7227 = vmatmul.mubr.f32.gmra.mrb[0].mxu0 %v7226
        %v7228 = vpop.f32.mrb[0].mxu0
        %v7229 = vadd.f32 %v6766, %v7228
        %v7230 = vpop.f32.mrb[0].mxu0
        %v7231 = vand.u32 %v4874, 4294901760
        %7232 = vmatprep.mubr.f32.mxu0 %v7231
        %v7233 = vand.u32 %v4776, 4294901760
        %7234 = vmatmul.mubr.f32.gmra.mrb[0].mxu0 %v7233
        %v7235 = vpop.f32.mrb[0].mxu0
        %v7236 = vadd.f32 %v6777, %v7235
        %v7237 = vpop.f32.mrb[0].mxu0
        %v7238 = vand.u32 %v4877, 4294901760
        %7239 = vmatprep.mubr.f32.mxu0 %v7238
        %v7240 = vand.u32 %v4778, 4294901760
        %7241 = vmatmul.mubr.f32.gmra.mrb[0].mxu0 %v7240
        %v7242 = vpop.f32.mrb[0].mxu0
        %v7243 = vadd.f32 %v6788, %v7242
        %v7244 = vpop.f32.mrb[0].mxu0
        %v7245 = vand.u32 %v4880, 4294901760
        %7246 = vmatprep.mubr.f32.mxu0 %v7245
        %v7247 = vand.u32 %v4780, 4294901760
        %7248 = vmatmul.mubr.f32.gmra.mrb[0].mxu0 %v7247
        %v7249 = vpop.f32.mrb[0].mxu0
        %v7250 = vadd.f32 %v6799, %v7249
        %v7251 = vpop.f32.mrb[0].mxu0
        %v7252 = vand.u32 %v4883, 4294901760
        %7253 = vmatprep.mubr.f32.mxu0 %v7252
        %v7254 = vand.u32 %v4782, 4294901760
        %7255 = vmatmul.mubr.f32.gmra.mrb[0].mxu0 %v7254
        %v7256 = vpop.f32.mrb[0].mxu0
        %v7257 = vadd.f32 %v6810, %v7256
        %v7258 = vpop.f32.mrb[0].mxu0
        %v7259 = vand.u32 %v4886, 4294901760
        %7260 = vmatprep.mubr.f32.mxu0 %v7259
        %v7261 = vand.u32 %v4784, 4294901760
        %7262 = vmatmul.mubr.f32.gmra.mrb[0].mxu0 %v7261
        %v7263 = vpop.f32.mrb[0].mxu0
        %v7264 = vadd.f32 %v6821, %v7263
        %v7265 = vpop.f32.mrb[0].mxu0
        %v7266 = vand.u32 %v4889, 4294901760
        %7267 = vmatprep.mubr.f32.mxu0 %v7266
        %v7268 = vand.u32 %v4786, 4294901760
        %7269 = vmatmul.mubr.f32.gmra.mrb[0].mxu0 %v7268
        %v7270 = vpop.f32.mrb[0].mxu0
        %v7271 = vadd.f32 %v6832, %v7270
        %v7272 = vpop.f32.mrb[0].mxu0
        %v7273 = vand.u32 %v4892, 4294901760
        %7274 = vmatprep.mubr.f32.mxu0 %v7273
        %v7275 = vand.u32 %v4788, 4294901760
        %7276 = vmatmul.mubr.f32.gmra.mrb[0].mxu0 %v7275
        %v7277 = vpop.f32.mrb[0].mxu0
        %v7278 = vadd.f32 %v6843, %v7277
        %v7279 = vpop.f32.mrb[0].mxu0
        %v7280 = vand.u32 %v4895, 4294901760
        %7281 = vmatprep.mubr.f32.mxu0 %v7280
        %v7282 = vand.u32 %v4790, 4294901760
        %7283 = vmatmul.mubr.f32.gmra.mrb[0].mxu0 %v7282
        %v7284 = vpop.f32.mrb[0].mxu0
        %v7285 = vadd.f32 %v6854, %v7284
        %v7286 = vpop.f32.mrb[0].mxu0
        %v7287 = vand.u32 %v4898, 4294901760
        %7288 = vmatprep.mubr.f32.mxu0 %v7287
        %v7289 = vand.u32 %v4792, 4294901760
        %7290 = vmatmul.mubr.f32.gmra.mrb[0].mxu0 %v7289
        %v7291 = vpop.f32.mrb[0].mxu0
        %v7292 = vadd.f32 %v6865, %v7291
        %v7293 = vpop.f32.mrb[0].mxu0
        %v7294 = vand.u32 %v4901, 4294901760
        %7295 = vmatprep.mubr.f32.mxu0 %v7294
        %v7296 = vand.u32 %v4794, 4294901760
        %7297 = vmatmul.mubr.f32.gmra.mrb[0].mxu0 %v7296
        %v7298 = vpop.f32.mrb[0].mxu0
        %v7299 = vadd.f32 %v6876, %v7298
        %v7300 = vpop.f32.mrb[0].mxu0
        %v7301 = vand.u32 %v4904, 4294901760
        %7302 = vmatprep.mubr.f32.mxu0 %v7301
        %v7303 = vand.u32 %v4796, 4294901760
        %7304 = vmatmul.mubr.f32.gmra.mrb[0].mxu0 %v7303
        %v7305 = vpop.f32.mrb[0].mxu0
        %v7306 = vadd.f32 %v6887, %v7305
        %v7307 = vpop.f32.mrb[0].mxu0
        %v7308 = vand.u32 %v4907, 4294901760
        %7309 = vmatprep.mubr.f32.mxu0 %v7308
        %v7310 = vand.u32 %v4798, 4294901760
        %7311 = vmatmul.mubr.f32.gmra.mrb[0].mxu0 %v7310
        %v7312 = vpop.f32.mrb[0].mxu0
        %v7313 = vadd.f32 %v6898, %v7312
        %v7314 = vpop.f32.mrb[0].mxu0
        %v7315 = vand.u32 %v4910, 4294901760
        %7316 = vmatprep.mubr.f32.mxu0 %v7315
        %v7317 = vand.u32 %v4800, 4294901760
        %7318 = vmatmul.mubr.f32.gmra.mrb[0].mxu0 %v7317
        %v7319 = vpop.f32.mrb[0].mxu0
        %v7320 = vadd.f32 %v6909, %v7319
        %v7321 = vpop.f32.mrb[0].mxu0
        %v7322 = vand.u32 %v4913, 4294901760
        %7323 = vmatprep.mubr.f32.mxu0 %v7322
        %v7324 = vand.u32 %v4802, 4294901760
        %7325 = vmatmul.mubr.f32.gmra.mrb[0].mxu0 %v7324
        %v7326 = vpop.f32.mrb[0].mxu0
        %v7327 = vadd.f32 %v6920, %v7326
        %v7328 = vpop.f32.mrb[0].mxu0
        %v7329 = vand.u32 %v4916, 4294901760
        %7330 = vmatprep.mubr.f32.mxu0 %v7329
        %v7331 = vand.u32 %v4804, 4294901760
        %7332 = vmatmul.mubr.f32.gmra.mrb[0].mxu0 %v7331
        %v7333 = vpop.f32.mrb[0].mxu0
        %v7334 = vadd.f32 %v6931, %v7333
        %v7335 = vpop.f32.mrb[0].mxu0
        %v7336 = vand.u32 %v4919, 4294901760
        %7337 = vmatprep.mubr.f32.mxu0 %v7336
        %v7338 = vand.u32 %v4806, 4294901760
        %7339 = vmatmul.mubr.f32.gmra.mrb[0].mxu0 %v7338
        %v7340 = vpop.f32.mrb[0].mxu0
        %v7341 = vadd.f32 %v6942, %v7340
        %v7342 = vpop.f32.mrb[0].mxu0
        %v7343 = vand.u32 %v4922, 4294901760
        %7344 = vmatprep.mubr.f32.mxu0 %v7343
        %v7345 = vand.u32 %v4808, 4294901760
        %7346 = vmatmul.mubr.f32.gmra.mrb[0].mxu0 %v7345
        %v7347 = vpop.f32.mrb[0].mxu0
        %v7348 = vadd.f32 %v6953, %v7347
        %v7349 = vpop.f32.mrb[0].mxu0
        %v7350 = vand.u32 %v4925, 4294901760
        %7351 = vmatprep.mubr.f32.mxu0 %v7350
        %v7352 = vand.u32 %v4810, 4294901760
        %7353 = vmatmul.mubr.f32.gmra.mrb[0].mxu0 %v7352
        %v7354 = vpop.f32.mrb[0].mxu0
        %v7355 = vadd.f32 %v6964, %v7354
        %v7356 = vpop.f32.mrb[0].mxu0
        %7357 = vdwg.mxu0
        %7358 = vmatprep.subr.mxu0 0.0
        %v7359 = vand.u32 %v4640, 4294901760
        %7360 = vmatpush1.msra.mxu0 %v7359
        %7361 = vmatprep.subr.mxu0 0.0
        %v7362 = vand.u32 %v4641, 4294901760
        %7363 = vmatpush1.msra.mxu0 %v7362
        %7364 = vmatprep.subr.mxu0 0.0
        %v7365 = vand.u32 %v4642, 4294901760
        %7366 = vmatpush1.msra.mxu0 %v7365
        %7367 = vmatprep.subr.mxu0 0.0
        %v7368 = vand.u32 %v4643, 4294901760
        %7369 = vmatpush1.msra.mxu0 %v7368
        %7370 = vmatprep.subr.mxu0 0.0
        %v7371 = vand.u32 %v4644, 4294901760
        %7372 = vmatpush1.msra.mxu0 %v7371
        %7373 = vmatprep.subr.mxu0 0.0
        %v7374 = vand.u32 %v4645, 4294901760
        %7375 = vmatpush1.msra.mxu0 %v7374
        %7376 = vmatprep.subr.mxu0 0.0
        %v7377 = vand.u32 %v4646, 4294901760
        %7378 = vmatpush1.msra.mxu0 %v7377
        %7379 = vmatprep.subr.mxu0 0.0
        %v7380 = vand.u32 %v4647, 4294901760
        %7381 = vmatpush1.msra.mxu0 %v7380
        %7382 = vmatprep.subr.mxu0 0.0
        %v7383 = vand.u32 %v4648, 4294901760
        %7384 = vmatpush1.msra.mxu0 %v7383
        %7385 = vmatprep.subr.mxu0 0.0
        %v7386 = vand.u32 %v4649, 4294901760
        %7387 = vmatpush1.msra.mxu0 %v7386
        %7388 = vmatprep.subr.mxu0 0.0
        %v7389 = vand.u32 %v4650, 4294901760
        %7390 = vmatpush1.msra.mxu0 %v7389
        %7391 = vmatprep.subr.mxu0 0.0
        %v7392 = vand.u32 %v4651, 4294901760
        %7393 = vmatpush1.msra.mxu0 %v7392
        %7394 = vmatprep.subr.mxu0 0.0
        %v7395 = vand.u32 %v4652, 4294901760
        %7396 = vmatpush1.msra.mxu0 %v7395
        %7397 = vmatprep.subr.mxu0 0.0
        %v7398 = vand.u32 %v4653, 4294901760
        %7399 = vmatpush1.msra.mxu0 %v7398
        %7400 = vmatprep.subr.mxu0 0.0
        %v7401 = vand.u32 %v4654, 4294901760
        %7402 = vmatpush1.msra.mxu0 %v7401
        %7403 = vmatprep.subr.mxu0 0.0
        %v7404 = vand.u32 %v4655, 4294901760
        %7405 = vmatpush1.msra.mxu0 %v7404
        %7406 = vmatprep.subr.mxu0 0.0
        %v7407 = vand.u32 %v4656, 4294901760
        %7408 = vmatpush1.msra.mxu0 %v7407
        %7409 = vmatprep.subr.mxu0 0.0
        %v7410 = vand.u32 %v4657, 4294901760
        %7411 = vmatpush1.msra.mxu0 %v7410
        %7412 = vmatprep.subr.mxu0 0.0
        %v7413 = vand.u32 %v4658, 4294901760
        %7414 = vmatpush1.msra.mxu0 %v7413
        %7415 = vmatprep.subr.mxu0 0.0
        %v7416 = vand.u32 %v4929, 4294901760
        %7417 = vmatpush1.msra.mxu0 %v7416
        %7418 = vmatprep.subr.mxu0 0.0
        %7419 = vmatpush1.msra.mxu0 0.0
        %7420 = vmatprep.subr.mxu0 0.0
        %7421 = vmatpush1.msra.mxu0 0.0
        %7422 = vmatprep.subr.mxu0 0.0
        %7423 = vmatpush1.msra.mxu0 0.0
        %7424 = vmatprep.subr.mxu0 0.0
        %7425 = vmatpush1.msra.mxu0 0.0
        %7426 = vmatprep.subr.mxu0 0.0
        %7427 = vmatpush1.msra.mxu0 0.0
        %7428 = vmatprep.subr.mxu0 0.0
        %7429 = vmatpush1.msra.mxu0 0.0
        %7430 = vmatprep.subr.mxu0 0.0
        %7431 = vmatpush1.msra.mxu0 0.0
        %7432 = vmatprep.subr.mxu0 0.0
        %7433 = vmatpush1.msra.mxu0 0.0
        %7434 = vmatprep.subr.mxu0 0.0
        %7435 = vmatpush1.msra.mxu0 0.0
        %7436 = vmatprep.subr.mxu0 0.0
        %7437 = vmatpush1.msra.mxu0 0.0
        %7438 = vmatprep.subr.mxu0 0.0
        %7439 = vmatpush1.msra.mxu0 0.0
        %7440 = vmatprep.subr.mxu0 0.0
        %7441 = vmatpush1.msra.mxu0 0.0
        %v7442 = vand.u32 %v4814, 4294901760
        %7443 = vmatprep.mubr.f32.mxu0 %v7442
        %v7444 = vand.u32 %v4736, 4294901760
        %7445 = vmatmul.mubr.f32.gmra.mrb[0].mxu0 %v7444
        %v7446 = vpop.f32.mrb[0].mxu0
        %v7447 = vadd.f32 %v7096, %v7446
        %v7448 = vpop.f32.mrb[0].mxu0
        %v7449 = vand.u32 %v4817, 4294901760
        %7450 = vmatprep.mubr.f32.mxu0 %v7449
        %v7451 = vand.u32 %v4738, 4294901760
        %7452 = vmatmul.mubr.f32.gmra.mrb[0].mxu0 %v7451
        %v7453 = vpop.f32.mrb[0].mxu0
        %v7454 = vadd.f32 %v7103, %v7453
        %v7455 = vpop.f32.mrb[0].mxu0
        %v7456 = vand.u32 %v4820, 4294901760
        %7457 = vmatprep.mubr.f32.mxu0 %v7456
        %v7458 = vand.u32 %v4740, 4294901760
        %7459 = vmatmul.mubr.f32.gmra.mrb[0].mxu0 %v7458
        %v7460 = vpop.f32.mrb[0].mxu0
        %v7461 = vadd.f32 %v7110, %v7460
        %v7462 = vpop.f32.mrb[0].mxu0
        %v7463 = vand.u32 %v4823, 4294901760
        %7464 = vmatprep.mubr.f32.mxu0 %v7463
        %v7465 = vand.u32 %v4742, 4294901760
        %7466 = vmatmul.mubr.f32.gmra.mrb[0].mxu0 %v7465
        %v7467 = vpop.f32.mrb[0].mxu0
        %v7468 = vadd.f32 %v7117, %v7467
        %v7469 = vpop.f32.mrb[0].mxu0
        %v7470 = vand.u32 %v4826, 4294901760
        %7471 = vmatprep.mubr.f32.mxu0 %v7470
        %v7472 = vand.u32 %v4744, 4294901760
        %7473 = vmatmul.mubr.f32.gmra.mrb[0].mxu0 %v7472
        %v7474 = vpop.f32.mrb[0].mxu0
        %v7475 = vadd.f32 %v7124, %v7474
        %v7476 = vpop.f32.mrb[0].mxu0
        %v7477 = vand.u32 %v4829, 4294901760
        %7478 = vmatprep.mubr.f32.mxu0 %v7477
        %v7479 = vand.u32 %v4746, 4294901760
        %7480 = vmatmul.mubr.f32.gmra.mrb[0].mxu0 %v7479
        %v7481 = vpop.f32.mrb[0].mxu0
        %v7482 = vadd.f32 %v7131, %v7481
        %v7483 = vpop.f32.mrb[0].mxu0
        %v7484 = vand.u32 %v4832, 4294901760
        %7485 = vmatprep.mubr.f32.mxu0 %v7484
        %v7486 = vand.u32 %v4748, 4294901760
        %7487 = vmatmul.mubr.f32.gmra.mrb[0].mxu0 %v7486
        %v7488 = vpop.f32.mrb[0].mxu0
        %v7489 = vadd.f32 %v7138, %v7488
        %v7490 = vpop.f32.mrb[0].mxu0
        %v7491 = vand.u32 %v4835, 4294901760
        %7492 = vmatprep.mubr.f32.mxu0 %v7491
        %v7493 = vand.u32 %v4750, 4294901760
        %7494 = vmatmul.mubr.f32.gmra.mrb[0].mxu0 %v7493
        %v7495 = vpop.f32.mrb[0].mxu0
        %v7496 = vadd.f32 %v7145, %v7495
        %v7497 = vpop.f32.mrb[0].mxu0
        %v7498 = vand.u32 %v4838, 4294901760
        %7499 = vmatprep.mubr.f32.mxu0 %v7498
        %v7500 = vand.u32 %v4752, 4294901760
        %7501 = vmatmul.mubr.f32.gmra.mrb[0].mxu0 %v7500
        %v7502 = vpop.f32.mrb[0].mxu0
        %v7503 = vadd.f32 %v7152, %v7502
        %v7504 = vpop.f32.mrb[0].mxu0
        %v7505 = vand.u32 %v4841, 4294901760
        %7506 = vmatprep.mubr.f32.mxu0 %v7505
        %v7507 = vand.u32 %v4754, 4294901760
        %7508 = vmatmul.mubr.f32.gmra.mrb[0].mxu0 %v7507
        %v7509 = vpop.f32.mrb[0].mxu0
        %v7510 = vadd.f32 %v7159, %v7509
        %v7511 = vpop.f32.mrb[0].mxu0
        %v7512 = vand.u32 %v4844, 4294901760
        %7513 = vmatprep.mubr.f32.mxu0 %v7512
        %v7514 = vand.u32 %v4756, 4294901760
        %7515 = vmatmul.mubr.f32.gmra.mrb[0].mxu0 %v7514
        %v7516 = vpop.f32.mrb[0].mxu0
        %v7517 = vadd.f32 %v7166, %v7516
        %v7518 = vpop.f32.mrb[0].mxu0
        %v7519 = vand.u32 %v4847, 4294901760
        %7520 = vmatprep.mubr.f32.mxu0 %v7519
        %v7521 = vand.u32 %v4758, 4294901760
        %7522 = vmatmul.mubr.f32.gmra.mrb[0].mxu0 %v7521
        %v7523 = vpop.f32.mrb[0].mxu0
        %v7524 = vadd.f32 %v7173, %v7523
        %v7525 = vpop.f32.mrb[0].mxu0
        %v7526 = vand.u32 %v4850, 4294901760
        %7527 = vmatprep.mubr.f32.mxu0 %v7526
        %v7528 = vand.u32 %v4760, 4294901760
        %7529 = vmatmul.mubr.f32.gmra.mrb[0].mxu0 %v7528
        %v7530 = vpop.f32.mrb[0].mxu0
        %v7531 = vadd.f32 %v7180, %v7530
        %v7532 = vpop.f32.mrb[0].mxu0
        %v7533 = vand.u32 %v4853, 4294901760
        %7534 = vmatprep.mubr.f32.mxu0 %v7533
        %v7535 = vand.u32 %v4762, 4294901760
        %7536 = vmatmul.mubr.f32.gmra.mrb[0].mxu0 %v7535
        %v7537 = vpop.f32.mrb[0].mxu0
        %v7538 = vadd.f32 %v7187, %v7537
        %v7539 = vpop.f32.mrb[0].mxu0
        %v7540 = vand.u32 %v4856, 4294901760
        %7541 = vmatprep.mubr.f32.mxu0 %v7540
        %v7542 = vand.u32 %v4764, 4294901760
        %7543 = vmatmul.mubr.f32.gmra.mrb[0].mxu0 %v7542
        %v7544 = vpop.f32.mrb[0].mxu0
        %v7545 = vadd.f32 %v7194, %v7544
        %v7546 = vpop.f32.mrb[0].mxu0
        %v7547 = vand.u32 %v4859, 4294901760
        %7548 = vmatprep.mubr.f32.mxu0 %v7547
        %v7549 = vand.u32 %v4766, 4294901760
        %7550 = vmatmul.mubr.f32.gmra.mrb[0].mxu0 %v7549
        %v7551 = vpop.f32.mrb[0].mxu0
        %v7552 = vadd.f32 %v7201, %v7551
        %v7553 = vpop.f32.mrb[0].mxu0
        %v7554 = vand.u32 %v4862, 4294901760
        %7555 = vmatprep.mubr.f32.mxu0 %v7554
        %v7556 = vand.u32 %v4768, 4294901760
        %7557 = vmatmul.mubr.f32.gmra.mrb[0].mxu0 %v7556
        %v7558 = vpop.f32.mrb[0].mxu0
        %v7559 = vadd.f32 %v7208, %v7558
        %v7560 = vpop.f32.mrb[0].mxu0
        %v7561 = vand.u32 %v4865, 4294901760
        %7562 = vmatprep.mubr.f32.mxu0 %v7561
        %v7563 = vand.u32 %v4770, 4294901760
        %7564 = vmatmul.mubr.f32.gmra.mrb[0].mxu0 %v7563
        %v7565 = vpop.f32.mrb[0].mxu0
        %v7566 = vadd.f32 %v7215, %v7565
        %v7567 = vpop.f32.mrb[0].mxu0
        %v7568 = vand.u32 %v4868, 4294901760
        %7569 = vmatprep.mubr.f32.mxu0 %v7568
        %v7570 = vand.u32 %v4772, 4294901760
        %7571 = vmatmul.mubr.f32.gmra.mrb[0].mxu0 %v7570
        %v7572 = vpop.f32.mrb[0].mxu0
        %v7573 = vadd.f32 %v7222, %v7572
        %v7574 = vpop.f32.mrb[0].mxu0
        %v7575 = vand.u32 %v4871, 4294901760
        %7576 = vmatprep.mubr.f32.mxu0 %v7575
        %v7577 = vand.u32 %v4774, 4294901760
        %7578 = vmatmul.mubr.f32.gmra.mrb[0].mxu0 %v7577
        %v7579 = vpop.f32.mrb[0].mxu0
        %v7580 = vadd.f32 %v7229, %v7579
        %v7581 = vpop.f32.mrb[0].mxu0
        %v7582 = vand.u32 %v4874, 4294901760
        %7583 = vmatprep.mubr.f32.mxu0 %v7582
        %v7584 = vand.u32 %v4776, 4294901760
        %7585 = vmatmul.mubr.f32.gmra.mrb[0].mxu0 %v7584
        %v7586 = vpop.f32.mrb[0].mxu0
        %v7587 = vadd.f32 %v7236, %v7586
        %v7588 = vpop.f32.mrb[0].mxu0
        %v7589 = vand.u32 %v4877, 4294901760
        %7590 = vmatprep.mubr.f32.mxu0 %v7589
        %v7591 = vand.u32 %v4778, 4294901760
        %7592 = vmatmul.mubr.f32.gmra.mrb[0].mxu0 %v7591
        %v7593 = vpop.f32.mrb[0].mxu0
        %v7594 = vadd.f32 %v7243, %v7593
        %v7595 = vpop.f32.mrb[0].mxu0
        %v7596 = vand.u32 %v4880, 4294901760
        %7597 = vmatprep.mubr.f32.mxu0 %v7596
        %v7598 = vand.u32 %v4780, 4294901760
        %7599 = vmatmul.mubr.f32.gmra.mrb[0].mxu0 %v7598
        %v7600 = vpop.f32.mrb[0].mxu0
        %v7601 = vadd.f32 %v7250, %v7600
        %v7602 = vpop.f32.mrb[0].mxu0
        %v7603 = vand.u32 %v4883, 4294901760
        %7604 = vmatprep.mubr.f32.mxu0 %v7603
        %v7605 = vand.u32 %v4782, 4294901760
        %7606 = vmatmul.mubr.f32.gmra.mrb[0].mxu0 %v7605
        %v7607 = vpop.f32.mrb[0].mxu0
        %v7608 = vadd.f32 %v7257, %v7607
        %v7609 = vpop.f32.mrb[0].mxu0
        %v7610 = vand.u32 %v4886, 4294901760
        %7611 = vmatprep.mubr.f32.mxu0 %v7610
        %v7612 = vand.u32 %v4784, 4294901760
        %7613 = vmatmul.mubr.f32.gmra.mrb[0].mxu0 %v7612
        %v7614 = vpop.f32.mrb[0].mxu0
        %v7615 = vadd.f32 %v7264, %v7614
        %v7616 = vpop.f32.mrb[0].mxu0
        %v7617 = vand.u32 %v4889, 4294901760
        %7618 = vmatprep.mubr.f32.mxu0 %v7617
        %v7619 = vand.u32 %v4786, 4294901760
        %7620 = vmatmul.mubr.f32.gmra.mrb[0].mxu0 %v7619
        %v7621 = vpop.f32.mrb[0].mxu0
        %v7622 = vadd.f32 %v7271, %v7621
        %v7623 = vpop.f32.mrb[0].mxu0
        %v7624 = vand.u32 %v4892, 4294901760
        %7625 = vmatprep.mubr.f32.mxu0 %v7624
        %v7626 = vand.u32 %v4788, 4294901760
        %7627 = vmatmul.mubr.f32.gmra.mrb[0].mxu0 %v7626
        %v7628 = vpop.f32.mrb[0].mxu0
        %v7629 = vadd.f32 %v7278, %v7628
        %v7630 = vpop.f32.mrb[0].mxu0
        %v7631 = vand.u32 %v4895, 4294901760
        %7632 = vmatprep.mubr.f32.mxu0 %v7631
        %v7633 = vand.u32 %v4790, 4294901760
        %7634 = vmatmul.mubr.f32.gmra.mrb[0].mxu0 %v7633
        %v7635 = vpop.f32.mrb[0].mxu0
        %v7636 = vadd.f32 %v7285, %v7635
        %v7637 = vpop.f32.mrb[0].mxu0
        %v7638 = vand.u32 %v4898, 4294901760
        %7639 = vmatprep.mubr.f32.mxu0 %v7638
        %v7640 = vand.u32 %v4792, 4294901760
        %7641 = vmatmul.mubr.f32.gmra.mrb[0].mxu0 %v7640
        %v7642 = vpop.f32.mrb[0].mxu0
        %v7643 = vadd.f32 %v7292, %v7642
        %v7644 = vpop.f32.mrb[0].mxu0
        %v7645 = vand.u32 %v4901, 4294901760
        %7646 = vmatprep.mubr.f32.mxu0 %v7645
        %v7647 = vand.u32 %v4794, 4294901760
        %7648 = vmatmul.mubr.f32.gmra.mrb[0].mxu0 %v7647
        %v7649 = vpop.f32.mrb[0].mxu0
        %v7650 = vadd.f32 %v7299, %v7649
        %v7651 = vpop.f32.mrb[0].mxu0
        %v7652 = vand.u32 %v4904, 4294901760
        %7653 = vmatprep.mubr.f32.mxu0 %v7652
        %v7654 = vand.u32 %v4796, 4294901760
        %7655 = vmatmul.mubr.f32.gmra.mrb[0].mxu0 %v7654
        %v7656 = vpop.f32.mrb[0].mxu0
        %v7657 = vadd.f32 %v7306, %v7656
        %v7658 = vpop.f32.mrb[0].mxu0
        %v7659 = vand.u32 %v4907, 4294901760
        %7660 = vmatprep.mubr.f32.mxu0 %v7659
        %v7661 = vand.u32 %v4798, 4294901760
        %7662 = vmatmul.mubr.f32.gmra.mrb[0].mxu0 %v7661
        %v7663 = vpop.f32.mrb[0].mxu0
        %v7664 = vadd.f32 %v7313, %v7663
        %v7665 = vpop.f32.mrb[0].mxu0
        %v7666 = vand.u32 %v4910, 4294901760
        %7667 = vmatprep.mubr.f32.mxu0 %v7666
        %v7668 = vand.u32 %v4800, 4294901760
        %7669 = vmatmul.mubr.f32.gmra.mrb[0].mxu0 %v7668
        %v7670 = vpop.f32.mrb[0].mxu0
        %v7671 = vadd.f32 %v7320, %v7670
        %v7672 = vpop.f32.mrb[0].mxu0
        %v7673 = vand.u32 %v4913, 4294901760
        %7674 = vmatprep.mubr.f32.mxu0 %v7673
        %v7675 = vand.u32 %v4802, 4294901760
        %7676 = vmatmul.mubr.f32.gmra.mrb[0].mxu0 %v7675
        %v7677 = vpop.f32.mrb[0].mxu0
        %v7678 = vadd.f32 %v7327, %v7677
        %v7679 = vpop.f32.mrb[0].mxu0
        %v7680 = vand.u32 %v4916, 4294901760
        %7681 = vmatprep.mubr.f32.mxu0 %v7680
        %v7682 = vand.u32 %v4804, 4294901760
        %7683 = vmatmul.mubr.f32.gmra.mrb[0].mxu0 %v7682
        %v7684 = vpop.f32.mrb[0].mxu0
        %v7685 = vadd.f32 %v7334, %v7684
        %v7686 = vpop.f32.mrb[0].mxu0
        %v7687 = vand.u32 %v4919, 4294901760
        %7688 = vmatprep.mubr.f32.mxu0 %v7687
        %v7689 = vand.u32 %v4806, 4294901760
        %7690 = vmatmul.mubr.f32.gmra.mrb[0].mxu0 %v7689
        %v7691 = vpop.f32.mrb[0].mxu0
        %v7692 = vadd.f32 %v7341, %v7691
        %v7693 = vpop.f32.mrb[0].mxu0
        %v7694 = vand.u32 %v4922, 4294901760
        %7695 = vmatprep.mubr.f32.mxu0 %v7694
        %v7696 = vand.u32 %v4808, 4294901760
        %7697 = vmatmul.mubr.f32.gmra.mrb[0].mxu0 %v7696
        %v7698 = vpop.f32.mrb[0].mxu0
        %v7699 = vadd.f32 %v7348, %v7698
        %v7700 = vpop.f32.mrb[0].mxu0
        %v7701 = vand.u32 %v4925, 4294901760
        %7702 = vmatprep.mubr.f32.mxu0 %v7701
        %v7703 = vand.u32 %v4810, 4294901760
        %7704 = vmatmul.mubr.f32.gmra.mrb[0].mxu0 %v7703
        %v7705 = vpop.f32.mrb[0].mxu0
        %v7706 = vadd.f32 %v7355, %v7705
        %v7707 = vpop.f32.mrb[0].mxu0
        %7708 = vdwg.mxu0
        %v7710 = vsel %vm4812, %v4661, 0
        %v7713 = vsel %vm4812, %v4663, 0
        %v7716 = vsel %vm4812, %v4665, 0
        %v7719 = vsel %vm4812, %v4667, 0
        %v7722 = vsel %vm4812, %v4669, 0
        %v7725 = vsel %vm4812, %v4671, 0
        %v7728 = vsel %vm4812, %v4673, 0
        %v7731 = vsel %vm4812, %v4675, 0
        %v7734 = vsel %vm4812, %v4677, 0
        %v7737 = vsel %vm4812, %v4679, 0
        %v7740 = vsel %vm4812, %v4681, 0
        %v7743 = vsel %vm4812, %v4683, 0
        %v7746 = vsel %vm4812, %v4685, 0
        %v7749 = vsel %vm4812, %v4687, 0
        %v7752 = vsel %vm4812, %v4689, 0
        %v7755 = vsel %vm4812, %v4691, 0
        %v7758 = vsel %vm4812, %v4693, 0
        %v7761 = vsel %vm4812, %v4695, 0
        %v7764 = vsel %vm4812, %v4697, 0
        %v7767 = vsel %vm4812, %v4699, 0
        %v7770 = vsel %vm4812, %v4701, 0
        %v7773 = vsel %vm4812, %v4703, 0
        %v7776 = vsel %vm4812, %v4705, 0
        %v7779 = vsel %vm4812, %v4707, 0
        %v7782 = vsel %vm4812, %v4709, 0
        %v7785 = vsel %vm4812, %v4711, 0
        %v7788 = vsel %vm4812, %v4713, 0
        %v7791 = vsel %vm4812, %v4715, 0
        %v7794 = vsel %vm4812, %v4717, 0
        %v7797 = vsel %vm4812, %v4719, 0
        %v7800 = vsel %vm4812, %v4721, 0
        %v7803 = vsel %vm4812, %v4723, 0
        %v7806 = vsel %vm4812, %v4725, 0
        %v7809 = vsel %vm4812, %v4727, 0
        %v7812 = vsel %vm4812, %v4729, 0
        %v7815 = vsel %vm4812, %v4731, 0
        %v7818 = vsel %vm4812, %v4733, 0
        %v7821 = vsel %vm4812, %v4735, 0
        %v7824 = vsel %vm4927, %v2559, 0
        %7826 = vmatprep.subr.mxu0 0.0
        %v7827 = vand.u32 %v2540, 4294901760
        %7828 = vmatpush1.msra.mxu0 %v7827
        %7829 = vmatprep.subr.mxu0 0.0
        %v7830 = vand.u32 %v2541, 4294901760
        %7831 = vmatpush1.msra.mxu0 %v7830
        %7832 = vmatprep.subr.mxu0 0.0
        %v7833 = vand.u32 %v2542, 4294901760
        %7834 = vmatpush1.msra.mxu0 %v7833
        %7835 = vmatprep.subr.mxu0 0.0
        %v7836 = vand.u32 %v2543, 4294901760
        %7837 = vmatpush1.msra.mxu0 %v7836
        %7838 = vmatprep.subr.mxu0 0.0
        %v7839 = vand.u32 %v2544, 4294901760
        %7840 = vmatpush1.msra.mxu0 %v7839
        %7841 = vmatprep.subr.mxu0 0.0
        %v7842 = vand.u32 %v2545, 4294901760
        %7843 = vmatpush1.msra.mxu0 %v7842
        %7844 = vmatprep.subr.mxu0 0.0
        %v7845 = vand.u32 %v2546, 4294901760
        %7846 = vmatpush1.msra.mxu0 %v7845
        %7847 = vmatprep.subr.mxu0 0.0
        %v7848 = vand.u32 %v2547, 4294901760
        %7849 = vmatpush1.msra.mxu0 %v7848
        %7850 = vmatprep.subr.mxu0 0.0
        %v7851 = vand.u32 %v2548, 4294901760
        %7852 = vmatpush1.msra.mxu0 %v7851
        %7853 = vmatprep.subr.mxu0 0.0
        %v7854 = vand.u32 %v2549, 4294901760
        %7855 = vmatpush1.msra.mxu0 %v7854
        %7856 = vmatprep.subr.mxu0 0.0
        %v7857 = vand.u32 %v2550, 4294901760
        %7858 = vmatpush1.msra.mxu0 %v7857
        %7859 = vmatprep.subr.mxu0 0.0
        %v7860 = vand.u32 %v2551, 4294901760
        %7861 = vmatpush1.msra.mxu0 %v7860
        %7862 = vmatprep.subr.mxu0 0.0
        %v7863 = vand.u32 %v2552, 4294901760
        %7864 = vmatpush1.msra.mxu0 %v7863
        %7865 = vmatprep.subr.mxu0 0.0
        %v7866 = vand.u32 %v2553, 4294901760
        %7867 = vmatpush1.msra.mxu0 %v7866
        %7868 = vmatprep.subr.mxu0 0.0
        %v7869 = vand.u32 %v2554, 4294901760
        %7870 = vmatpush1.msra.mxu0 %v7869
        %7871 = vmatprep.subr.mxu0 0.0
        %v7872 = vand.u32 %v2555, 4294901760
        %7873 = vmatpush1.msra.mxu0 %v7872
        %7874 = vmatprep.subr.mxu0 0.0
        %v7875 = vand.u32 %v2556, 4294901760
        %7876 = vmatpush1.msra.mxu0 %v7875
        %7877 = vmatprep.subr.mxu0 0.0
        %v7878 = vand.u32 %v2557, 4294901760
        %7879 = vmatpush1.msra.mxu0 %v7878
        %7880 = vmatprep.subr.mxu0 0.0
        %v7881 = vand.u32 %v2558, 4294901760
        %7882 = vmatpush1.msra.mxu0 %v7881
        %7883 = vmatprep.subr.mxu0 0.0
        %v7884 = vand.u32 %v7824, 4294901760
        %7885 = vmatpush1.msra.mxu0 %v7884
        %7886 = vmatprep.subr.mxu0 0.0
        %7887 = vmatpush1.msra.mxu0 0.0
        %7888 = vmatprep.subr.mxu0 0.0
        %7889 = vmatpush1.msra.mxu0 0.0
        %7890 = vmatprep.subr.mxu0 0.0
        %7891 = vmatpush1.msra.mxu0 0.0
        %7892 = vmatprep.subr.mxu0 0.0
        %7893 = vmatpush1.msra.mxu0 0.0
        %7894 = vmatprep.subr.mxu0 0.0
        %7895 = vmatpush1.msra.mxu0 0.0
        %7896 = vmatprep.subr.mxu0 0.0
        %7897 = vmatpush1.msra.mxu0 0.0
        %7898 = vmatprep.subr.mxu0 0.0
        %7899 = vmatpush1.msra.mxu0 0.0
        %7900 = vmatprep.subr.mxu0 0.0
        %7901 = vmatpush1.msra.mxu0 0.0
        %7902 = vmatprep.subr.mxu0 0.0
        %7903 = vmatpush1.msra.mxu0 0.0
        %7904 = vmatprep.subr.mxu0 0.0
        %7905 = vmatpush1.msra.mxu0 0.0
        %7906 = vmatprep.subr.mxu0 0.0
        %7907 = vmatpush1.msra.mxu0 0.0
        %7908 = vmatprep.subr.mxu0 0.0
        %7909 = vmatpush1.msra.mxu0 0.0
        %v7910 = vand.u32 %v7710, 4294901760
        %v7911 = vsub.f32 %v7710, %v7910
        %v7912 = vand.u32 %v7911, 4294901760
        %v7913 = vsub.f32 %v7911, %v7912
        %v7914 = vand.u32 %v7913, 4294901760
        %7915 = vmatprep.mubr.f32.mxu0 %v7914
        %v7916 = vand.u32 %v4660, 4294901760
        %v7917 = vsub.f32 %v4660, %v7916
        %v7918 = vand.u32 %v7917, 4294901760
        %v7919 = vsub.f32 %v7917, %v7918
        %v7920 = vand.u32 %v7919, 4294901760
        %7921 = vmatmul.mubr.f32.gmra.mrb[0].mxu0 %v7920
        %v7922 = vpop.f32.mrb[0].mxu0
        %v7923 = vadd.f32 %v7447, %v7922
        %v7924 = vpop.f32.mrb[0].mxu0
        %v7925 = vand.u32 %v7713, 4294901760
        %v7926 = vsub.f32 %v7713, %v7925
        %v7927 = vand.u32 %v7926, 4294901760
        %v7928 = vsub.f32 %v7926, %v7927
        %v7929 = vand.u32 %v7928, 4294901760
        %7930 = vmatprep.mubr.f32.mxu0 %v7929
        %v7931 = vand.u32 %v4662, 4294901760
        %v7932 = vsub.f32 %v4662, %v7931
        %v7933 = vand.u32 %v7932, 4294901760
        %v7934 = vsub.f32 %v7932, %v7933
        %v7935 = vand.u32 %v7934, 4294901760
        %7936 = vmatmul.mubr.f32.gmra.mrb[0].mxu0 %v7935
        %v7937 = vpop.f32.mrb[0].mxu0
        %v7938 = vadd.f32 %v7454, %v7937
        %v7939 = vpop.f32.mrb[0].mxu0
        %v7940 = vand.u32 %v7716, 4294901760
        %v7941 = vsub.f32 %v7716, %v7940
        %v7942 = vand.u32 %v7941, 4294901760
        %v7943 = vsub.f32 %v7941, %v7942
        %v7944 = vand.u32 %v7943, 4294901760
        %7945 = vmatprep.mubr.f32.mxu0 %v7944
        %v7946 = vand.u32 %v4664, 4294901760
        %v7947 = vsub.f32 %v4664, %v7946
        %v7948 = vand.u32 %v7947, 4294901760
        %v7949 = vsub.f32 %v7947, %v7948
        %v7950 = vand.u32 %v7949, 4294901760
        %7951 = vmatmul.mubr.f32.gmra.mrb[0].mxu0 %v7950
        %v7952 = vpop.f32.mrb[0].mxu0
        %v7953 = vadd.f32 %v7461, %v7952
        %v7954 = vpop.f32.mrb[0].mxu0
        %v7955 = vand.u32 %v7719, 4294901760
        %v7956 = vsub.f32 %v7719, %v7955
        %v7957 = vand.u32 %v7956, 4294901760
        %v7958 = vsub.f32 %v7956, %v7957
        %v7959 = vand.u32 %v7958, 4294901760
        %7960 = vmatprep.mubr.f32.mxu0 %v7959
        %v7961 = vand.u32 %v4666, 4294901760
        %v7962 = vsub.f32 %v4666, %v7961
        %v7963 = vand.u32 %v7962, 4294901760
        %v7964 = vsub.f32 %v7962, %v7963
        %v7965 = vand.u32 %v7964, 4294901760
        %7966 = vmatmul.mubr.f32.gmra.mrb[0].mxu0 %v7965
        %v7967 = vpop.f32.mrb[0].mxu0
        %v7968 = vadd.f32 %v7468, %v7967
        %v7969 = vpop.f32.mrb[0].mxu0
        %v7970 = vand.u32 %v7722, 4294901760
        %v7971 = vsub.f32 %v7722, %v7970
        %v7972 = vand.u32 %v7971, 4294901760
        %v7973 = vsub.f32 %v7971, %v7972
        %v7974 = vand.u32 %v7973, 4294901760
        %7975 = vmatprep.mubr.f32.mxu0 %v7974
        %v7976 = vand.u32 %v4668, 4294901760
        %v7977 = vsub.f32 %v4668, %v7976
        %v7978 = vand.u32 %v7977, 4294901760
        %v7979 = vsub.f32 %v7977, %v7978
        %v7980 = vand.u32 %v7979, 4294901760
        %7981 = vmatmul.mubr.f32.gmra.mrb[0].mxu0 %v7980
        %v7982 = vpop.f32.mrb[0].mxu0
        %v7983 = vadd.f32 %v7475, %v7982
        %v7984 = vpop.f32.mrb[0].mxu0
        %v7985 = vand.u32 %v7725, 4294901760
        %v7986 = vsub.f32 %v7725, %v7985
        %v7987 = vand.u32 %v7986, 4294901760
        %v7988 = vsub.f32 %v7986, %v7987
        %v7989 = vand.u32 %v7988, 4294901760
        %7990 = vmatprep.mubr.f32.mxu0 %v7989
        %v7991 = vand.u32 %v4670, 4294901760
        %v7992 = vsub.f32 %v4670, %v7991
        %v7993 = vand.u32 %v7992, 4294901760
        %v7994 = vsub.f32 %v7992, %v7993
        %v7995 = vand.u32 %v7994, 4294901760
        %7996 = vmatmul.mubr.f32.gmra.mrb[0].mxu0 %v7995
        %v7997 = vpop.f32.mrb[0].mxu0
        %v7998 = vadd.f32 %v7482, %v7997
        %v7999 = vpop.f32.mrb[0].mxu0
        %v8000 = vand.u32 %v7728, 4294901760
        %v8001 = vsub.f32 %v7728, %v8000
        %v8002 = vand.u32 %v8001, 4294901760
        %v8003 = vsub.f32 %v8001, %v8002
        %v8004 = vand.u32 %v8003, 4294901760
        %8005 = vmatprep.mubr.f32.mxu0 %v8004
        %v8006 = vand.u32 %v4672, 4294901760
        %v8007 = vsub.f32 %v4672, %v8006
        %v8008 = vand.u32 %v8007, 4294901760
        %v8009 = vsub.f32 %v8007, %v8008
        %v8010 = vand.u32 %v8009, 4294901760
        %8011 = vmatmul.mubr.f32.gmra.mrb[0].mxu0 %v8010
        %v8012 = vpop.f32.mrb[0].mxu0
        %v8013 = vadd.f32 %v7489, %v8012
        %v8014 = vpop.f32.mrb[0].mxu0
        %v8015 = vand.u32 %v7731, 4294901760
        %v8016 = vsub.f32 %v7731, %v8015
        %v8017 = vand.u32 %v8016, 4294901760
        %v8018 = vsub.f32 %v8016, %v8017
        %v8019 = vand.u32 %v8018, 4294901760
        %8020 = vmatprep.mubr.f32.mxu0 %v8019
        %v8021 = vand.u32 %v4674, 4294901760
        %v8022 = vsub.f32 %v4674, %v8021
        %v8023 = vand.u32 %v8022, 4294901760
        %v8024 = vsub.f32 %v8022, %v8023
        %v8025 = vand.u32 %v8024, 4294901760
        %8026 = vmatmul.mubr.f32.gmra.mrb[0].mxu0 %v8025
        %v8027 = vpop.f32.mrb[0].mxu0
        %v8028 = vadd.f32 %v7496, %v8027
        %v8029 = vpop.f32.mrb[0].mxu0
        %v8030 = vand.u32 %v7734, 4294901760
        %v8031 = vsub.f32 %v7734, %v8030
        %v8032 = vand.u32 %v8031, 4294901760
        %v8033 = vsub.f32 %v8031, %v8032
        %v8034 = vand.u32 %v8033, 4294901760
        %8035 = vmatprep.mubr.f32.mxu0 %v8034
        %v8036 = vand.u32 %v4676, 4294901760
        %v8037 = vsub.f32 %v4676, %v8036
        %v8038 = vand.u32 %v8037, 4294901760
        %v8039 = vsub.f32 %v8037, %v8038
        %v8040 = vand.u32 %v8039, 4294901760
        %8041 = vmatmul.mubr.f32.gmra.mrb[0].mxu0 %v8040
        %v8042 = vpop.f32.mrb[0].mxu0
        %v8043 = vadd.f32 %v7503, %v8042
        %v8044 = vpop.f32.mrb[0].mxu0
        %v8045 = vand.u32 %v7737, 4294901760
        %v8046 = vsub.f32 %v7737, %v8045
        %v8047 = vand.u32 %v8046, 4294901760
        %v8048 = vsub.f32 %v8046, %v8047
        %v8049 = vand.u32 %v8048, 4294901760
        %8050 = vmatprep.mubr.f32.mxu0 %v8049
        %v8051 = vand.u32 %v4678, 4294901760
        %v8052 = vsub.f32 %v4678, %v8051
        %v8053 = vand.u32 %v8052, 4294901760
        %v8054 = vsub.f32 %v8052, %v8053
        %v8055 = vand.u32 %v8054, 4294901760
        %8056 = vmatmul.mubr.f32.gmra.mrb[0].mxu0 %v8055
        %v8057 = vpop.f32.mrb[0].mxu0
        %v8058 = vadd.f32 %v7510, %v8057
        %v8059 = vpop.f32.mrb[0].mxu0
        %v8060 = vand.u32 %v7740, 4294901760
        %v8061 = vsub.f32 %v7740, %v8060
        %v8062 = vand.u32 %v8061, 4294901760
        %v8063 = vsub.f32 %v8061, %v8062
        %v8064 = vand.u32 %v8063, 4294901760
        %8065 = vmatprep.mubr.f32.mxu0 %v8064
        %v8066 = vand.u32 %v4680, 4294901760
        %v8067 = vsub.f32 %v4680, %v8066
        %v8068 = vand.u32 %v8067, 4294901760
        %v8069 = vsub.f32 %v8067, %v8068
        %v8070 = vand.u32 %v8069, 4294901760
        %8071 = vmatmul.mubr.f32.gmra.mrb[0].mxu0 %v8070
        %v8072 = vpop.f32.mrb[0].mxu0
        %v8073 = vadd.f32 %v7517, %v8072
        %v8074 = vpop.f32.mrb[0].mxu0
        %v8075 = vand.u32 %v7743, 4294901760
        %v8076 = vsub.f32 %v7743, %v8075
        %v8077 = vand.u32 %v8076, 4294901760
        %v8078 = vsub.f32 %v8076, %v8077
        %v8079 = vand.u32 %v8078, 4294901760
        %8080 = vmatprep.mubr.f32.mxu0 %v8079
        %v8081 = vand.u32 %v4682, 4294901760
        %v8082 = vsub.f32 %v4682, %v8081
        %v8083 = vand.u32 %v8082, 4294901760
        %v8084 = vsub.f32 %v8082, %v8083
        %v8085 = vand.u32 %v8084, 4294901760
        %8086 = vmatmul.mubr.f32.gmra.mrb[0].mxu0 %v8085
        %v8087 = vpop.f32.mrb[0].mxu0
        %v8088 = vadd.f32 %v7524, %v8087
        %v8089 = vpop.f32.mrb[0].mxu0
        %v8090 = vand.u32 %v7746, 4294901760
        %v8091 = vsub.f32 %v7746, %v8090
        %v8092 = vand.u32 %v8091, 4294901760
        %v8093 = vsub.f32 %v8091, %v8092
        %v8094 = vand.u32 %v8093, 4294901760
        %8095 = vmatprep.mubr.f32.mxu0 %v8094
        %v8096 = vand.u32 %v4684, 4294901760
        %v8097 = vsub.f32 %v4684, %v8096
        %v8098 = vand.u32 %v8097, 4294901760
        %v8099 = vsub.f32 %v8097, %v8098
        %v8100 = vand.u32 %v8099, 4294901760
        %8101 = vmatmul.mubr.f32.gmra.mrb[0].mxu0 %v8100
        %v8102 = vpop.f32.mrb[0].mxu0
        %v8103 = vadd.f32 %v7531, %v8102
        %v8104 = vpop.f32.mrb[0].mxu0
        %v8105 = vand.u32 %v7749, 4294901760
        %v8106 = vsub.f32 %v7749, %v8105
        %v8107 = vand.u32 %v8106, 4294901760
        %v8108 = vsub.f32 %v8106, %v8107
        %v8109 = vand.u32 %v8108, 4294901760
        %8110 = vmatprep.mubr.f32.mxu0 %v8109
        %v8111 = vand.u32 %v4686, 4294901760
        %v8112 = vsub.f32 %v4686, %v8111
        %v8113 = vand.u32 %v8112, 4294901760
        %v8114 = vsub.f32 %v8112, %v8113
        %v8115 = vand.u32 %v8114, 4294901760
        %8116 = vmatmul.mubr.f32.gmra.mrb[0].mxu0 %v8115
        %v8117 = vpop.f32.mrb[0].mxu0
        %v8118 = vadd.f32 %v7538, %v8117
        %v8119 = vpop.f32.mrb[0].mxu0
        %v8120 = vand.u32 %v7752, 4294901760
        %v8121 = vsub.f32 %v7752, %v8120
        %v8122 = vand.u32 %v8121, 4294901760
        %v8123 = vsub.f32 %v8121, %v8122
        %v8124 = vand.u32 %v8123, 4294901760
        %8125 = vmatprep.mubr.f32.mxu0 %v8124
        %v8126 = vand.u32 %v4688, 4294901760
        %v8127 = vsub.f32 %v4688, %v8126
        %v8128 = vand.u32 %v8127, 4294901760
        %v8129 = vsub.f32 %v8127, %v8128
        %v8130 = vand.u32 %v8129, 4294901760
        %8131 = vmatmul.mubr.f32.gmra.mrb[0].mxu0 %v8130
        %v8132 = vpop.f32.mrb[0].mxu0
        %v8133 = vadd.f32 %v7545, %v8132
        %v8134 = vpop.f32.mrb[0].mxu0
        %v8135 = vand.u32 %v7755, 4294901760
        %v8136 = vsub.f32 %v7755, %v8135
        %v8137 = vand.u32 %v8136, 4294901760
        %v8138 = vsub.f32 %v8136, %v8137
        %v8139 = vand.u32 %v8138, 4294901760
        %8140 = vmatprep.mubr.f32.mxu0 %v8139
        %v8141 = vand.u32 %v4690, 4294901760
        %v8142 = vsub.f32 %v4690, %v8141
        %v8143 = vand.u32 %v8142, 4294901760
        %v8144 = vsub.f32 %v8142, %v8143
        %v8145 = vand.u32 %v8144, 4294901760
        %8146 = vmatmul.mubr.f32.gmra.mrb[0].mxu0 %v8145
        %v8147 = vpop.f32.mrb[0].mxu0
        %v8148 = vadd.f32 %v7552, %v8147
        %v8149 = vpop.f32.mrb[0].mxu0
        %v8150 = vand.u32 %v7758, 4294901760
        %v8151 = vsub.f32 %v7758, %v8150
        %v8152 = vand.u32 %v8151, 4294901760
        %v8153 = vsub.f32 %v8151, %v8152
        %v8154 = vand.u32 %v8153, 4294901760
        %8155 = vmatprep.mubr.f32.mxu0 %v8154
        %v8156 = vand.u32 %v4692, 4294901760
        %v8157 = vsub.f32 %v4692, %v8156
        %v8158 = vand.u32 %v8157, 4294901760
        %v8159 = vsub.f32 %v8157, %v8158
        %v8160 = vand.u32 %v8159, 4294901760
        %8161 = vmatmul.mubr.f32.gmra.mrb[0].mxu0 %v8160
        %v8162 = vpop.f32.mrb[0].mxu0
        %v8163 = vadd.f32 %v7559, %v8162
        %v8164 = vpop.f32.mrb[0].mxu0
        %v8165 = vand.u32 %v7761, 4294901760
        %v8166 = vsub.f32 %v7761, %v8165
        %v8167 = vand.u32 %v8166, 4294901760
        %v8168 = vsub.f32 %v8166, %v8167
        %v8169 = vand.u32 %v8168, 4294901760
        %8170 = vmatprep.mubr.f32.mxu0 %v8169
        %v8171 = vand.u32 %v4694, 4294901760
        %v8172 = vsub.f32 %v4694, %v8171
        %v8173 = vand.u32 %v8172, 4294901760
        %v8174 = vsub.f32 %v8172, %v8173
        %v8175 = vand.u32 %v8174, 4294901760
        %8176 = vmatmul.mubr.f32.gmra.mrb[0].mxu0 %v8175
        %v8177 = vpop.f32.mrb[0].mxu0
        %v8178 = vadd.f32 %v7566, %v8177
        %v8179 = vpop.f32.mrb[0].mxu0
        %v8180 = vand.u32 %v7764, 4294901760
        %v8181 = vsub.f32 %v7764, %v8180
        %v8182 = vand.u32 %v8181, 4294901760
        %v8183 = vsub.f32 %v8181, %v8182
        %v8184 = vand.u32 %v8183, 4294901760
        %8185 = vmatprep.mubr.f32.mxu0 %v8184
        %v8186 = vand.u32 %v4696, 4294901760
        %v8187 = vsub.f32 %v4696, %v8186
        %v8188 = vand.u32 %v8187, 4294901760
        %v8189 = vsub.f32 %v8187, %v8188
        %v8190 = vand.u32 %v8189, 4294901760
        %8191 = vmatmul.mubr.f32.gmra.mrb[0].mxu0 %v8190
        %v8192 = vpop.f32.mrb[0].mxu0
        %v8193 = vadd.f32 %v7573, %v8192
        %v8194 = vpop.f32.mrb[0].mxu0
        %v8195 = vand.u32 %v7767, 4294901760
        %v8196 = vsub.f32 %v7767, %v8195
        %v8197 = vand.u32 %v8196, 4294901760
        %v8198 = vsub.f32 %v8196, %v8197
        %v8199 = vand.u32 %v8198, 4294901760
        %8200 = vmatprep.mubr.f32.mxu0 %v8199
        %v8201 = vand.u32 %v4698, 4294901760
        %v8202 = vsub.f32 %v4698, %v8201
        %v8203 = vand.u32 %v8202, 4294901760
        %v8204 = vsub.f32 %v8202, %v8203
        %v8205 = vand.u32 %v8204, 4294901760
        %8206 = vmatmul.mubr.f32.gmra.mrb[0].mxu0 %v8205
        %v8207 = vpop.f32.mrb[0].mxu0
        %v8208 = vadd.f32 %v7580, %v8207
        %v8209 = vpop.f32.mrb[0].mxu0
        %v8210 = vand.u32 %v7770, 4294901760
        %v8211 = vsub.f32 %v7770, %v8210
        %v8212 = vand.u32 %v8211, 4294901760
        %v8213 = vsub.f32 %v8211, %v8212
        %v8214 = vand.u32 %v8213, 4294901760
        %8215 = vmatprep.mubr.f32.mxu0 %v8214
        %v8216 = vand.u32 %v4700, 4294901760
        %v8217 = vsub.f32 %v4700, %v8216
        %v8218 = vand.u32 %v8217, 4294901760
        %v8219 = vsub.f32 %v8217, %v8218
        %v8220 = vand.u32 %v8219, 4294901760
        %8221 = vmatmul.mubr.f32.gmra.mrb[0].mxu0 %v8220
        %v8222 = vpop.f32.mrb[0].mxu0
        %v8223 = vadd.f32 %v7587, %v8222
        %v8224 = vpop.f32.mrb[0].mxu0
        %v8225 = vand.u32 %v7773, 4294901760
        %v8226 = vsub.f32 %v7773, %v8225
        %v8227 = vand.u32 %v8226, 4294901760
        %v8228 = vsub.f32 %v8226, %v8227
        %v8229 = vand.u32 %v8228, 4294901760
        %8230 = vmatprep.mubr.f32.mxu0 %v8229
        %v8231 = vand.u32 %v4702, 4294901760
        %v8232 = vsub.f32 %v4702, %v8231
        %v8233 = vand.u32 %v8232, 4294901760
        %v8234 = vsub.f32 %v8232, %v8233
        %v8235 = vand.u32 %v8234, 4294901760
        %8236 = vmatmul.mubr.f32.gmra.mrb[0].mxu0 %v8235
        %v8237 = vpop.f32.mrb[0].mxu0
        %v8238 = vadd.f32 %v7594, %v8237
        %v8239 = vpop.f32.mrb[0].mxu0
        %v8240 = vand.u32 %v7776, 4294901760
        %v8241 = vsub.f32 %v7776, %v8240
        %v8242 = vand.u32 %v8241, 4294901760
        %v8243 = vsub.f32 %v8241, %v8242
        %v8244 = vand.u32 %v8243, 4294901760
        %8245 = vmatprep.mubr.f32.mxu0 %v8244
        %v8246 = vand.u32 %v4704, 4294901760
        %v8247 = vsub.f32 %v4704, %v8246
        %v8248 = vand.u32 %v8247, 4294901760
        %v8249 = vsub.f32 %v8247, %v8248
        %v8250 = vand.u32 %v8249, 4294901760
        %8251 = vmatmul.mubr.f32.gmra.mrb[0].mxu0 %v8250
        %v8252 = vpop.f32.mrb[0].mxu0
        %v8253 = vadd.f32 %v7601, %v8252
        %v8254 = vpop.f32.mrb[0].mxu0
        %v8255 = vand.u32 %v7779, 4294901760
        %v8256 = vsub.f32 %v7779, %v8255
        %v8257 = vand.u32 %v8256, 4294901760
        %v8258 = vsub.f32 %v8256, %v8257
        %v8259 = vand.u32 %v8258, 4294901760
        %8260 = vmatprep.mubr.f32.mxu0 %v8259
        %v8261 = vand.u32 %v4706, 4294901760
        %v8262 = vsub.f32 %v4706, %v8261
        %v8263 = vand.u32 %v8262, 4294901760
        %v8264 = vsub.f32 %v8262, %v8263
        %v8265 = vand.u32 %v8264, 4294901760
        %8266 = vmatmul.mubr.f32.gmra.mrb[0].mxu0 %v8265
        %v8267 = vpop.f32.mrb[0].mxu0
        %v8268 = vadd.f32 %v7608, %v8267
        %v8269 = vpop.f32.mrb[0].mxu0
        %v8270 = vand.u32 %v7782, 4294901760
        %v8271 = vsub.f32 %v7782, %v8270
        %v8272 = vand.u32 %v8271, 4294901760
        %v8273 = vsub.f32 %v8271, %v8272
        %v8274 = vand.u32 %v8273, 4294901760
        %8275 = vmatprep.mubr.f32.mxu0 %v8274
        %v8276 = vand.u32 %v4708, 4294901760
        %v8277 = vsub.f32 %v4708, %v8276
        %v8278 = vand.u32 %v8277, 4294901760
        %v8279 = vsub.f32 %v8277, %v8278
        %v8280 = vand.u32 %v8279, 4294901760
        %8281 = vmatmul.mubr.f32.gmra.mrb[0].mxu0 %v8280
        %v8282 = vpop.f32.mrb[0].mxu0
        %v8283 = vadd.f32 %v7615, %v8282
        %v8284 = vpop.f32.mrb[0].mxu0
        %v8285 = vand.u32 %v7785, 4294901760
        %v8286 = vsub.f32 %v7785, %v8285
        %v8287 = vand.u32 %v8286, 4294901760
        %v8288 = vsub.f32 %v8286, %v8287
        %v8289 = vand.u32 %v8288, 4294901760
        %8290 = vmatprep.mubr.f32.mxu0 %v8289
        %v8291 = vand.u32 %v4710, 4294901760
        %v8292 = vsub.f32 %v4710, %v8291
        %v8293 = vand.u32 %v8292, 4294901760
        %v8294 = vsub.f32 %v8292, %v8293
        %v8295 = vand.u32 %v8294, 4294901760
        %8296 = vmatmul.mubr.f32.gmra.mrb[0].mxu0 %v8295
        %v8297 = vpop.f32.mrb[0].mxu0
        %v8298 = vadd.f32 %v7622, %v8297
        %v8299 = vpop.f32.mrb[0].mxu0
        %v8300 = vand.u32 %v7788, 4294901760
        %v8301 = vsub.f32 %v7788, %v8300
        %v8302 = vand.u32 %v8301, 4294901760
        %v8303 = vsub.f32 %v8301, %v8302
        %v8304 = vand.u32 %v8303, 4294901760
        %8305 = vmatprep.mubr.f32.mxu0 %v8304
        %v8306 = vand.u32 %v4712, 4294901760
        %v8307 = vsub.f32 %v4712, %v8306
        %v8308 = vand.u32 %v8307, 4294901760
        %v8309 = vsub.f32 %v8307, %v8308
        %v8310 = vand.u32 %v8309, 4294901760
        %8311 = vmatmul.mubr.f32.gmra.mrb[0].mxu0 %v8310
        %v8312 = vpop.f32.mrb[0].mxu0
        %v8313 = vadd.f32 %v7629, %v8312
        %v8314 = vpop.f32.mrb[0].mxu0
        %v8315 = vand.u32 %v7791, 4294901760
        %v8316 = vsub.f32 %v7791, %v8315
        %v8317 = vand.u32 %v8316, 4294901760
        %v8318 = vsub.f32 %v8316, %v8317
        %v8319 = vand.u32 %v8318, 4294901760
        %8320 = vmatprep.mubr.f32.mxu0 %v8319
        %v8321 = vand.u32 %v4714, 4294901760
        %v8322 = vsub.f32 %v4714, %v8321
        %v8323 = vand.u32 %v8322, 4294901760
        %v8324 = vsub.f32 %v8322, %v8323
        %v8325 = vand.u32 %v8324, 4294901760
        %8326 = vmatmul.mubr.f32.gmra.mrb[0].mxu0 %v8325
        %v8327 = vpop.f32.mrb[0].mxu0
        %v8328 = vadd.f32 %v7636, %v8327
        %v8329 = vpop.f32.mrb[0].mxu0
        %v8330 = vand.u32 %v7794, 4294901760
        %v8331 = vsub.f32 %v7794, %v8330
        %v8332 = vand.u32 %v8331, 4294901760
        %v8333 = vsub.f32 %v8331, %v8332
        %v8334 = vand.u32 %v8333, 4294901760
        %8335 = vmatprep.mubr.f32.mxu0 %v8334
        %v8336 = vand.u32 %v4716, 4294901760
        %v8337 = vsub.f32 %v4716, %v8336
        %v8338 = vand.u32 %v8337, 4294901760
        %v8339 = vsub.f32 %v8337, %v8338
        %v8340 = vand.u32 %v8339, 4294901760
        %8341 = vmatmul.mubr.f32.gmra.mrb[0].mxu0 %v8340
        %v8342 = vpop.f32.mrb[0].mxu0
        %v8343 = vadd.f32 %v7643, %v8342
        %v8344 = vpop.f32.mrb[0].mxu0
        %v8345 = vand.u32 %v7797, 4294901760
        %v8346 = vsub.f32 %v7797, %v8345
        %v8347 = vand.u32 %v8346, 4294901760
        %v8348 = vsub.f32 %v8346, %v8347
        %v8349 = vand.u32 %v8348, 4294901760
        %8350 = vmatprep.mubr.f32.mxu0 %v8349
        %v8351 = vand.u32 %v4718, 4294901760
        %v8352 = vsub.f32 %v4718, %v8351
        %v8353 = vand.u32 %v8352, 4294901760
        %v8354 = vsub.f32 %v8352, %v8353
        %v8355 = vand.u32 %v8354, 4294901760
        %8356 = vmatmul.mubr.f32.gmra.mrb[0].mxu0 %v8355
        %v8357 = vpop.f32.mrb[0].mxu0
        %v8358 = vadd.f32 %v7650, %v8357
        %v8359 = vpop.f32.mrb[0].mxu0
        %v8360 = vand.u32 %v7800, 4294901760
        %v8361 = vsub.f32 %v7800, %v8360
        %v8362 = vand.u32 %v8361, 4294901760
        %v8363 = vsub.f32 %v8361, %v8362
        %v8364 = vand.u32 %v8363, 4294901760
        %8365 = vmatprep.mubr.f32.mxu0 %v8364
        %v8366 = vand.u32 %v4720, 4294901760
        %v8367 = vsub.f32 %v4720, %v8366
        %v8368 = vand.u32 %v8367, 4294901760
        %v8369 = vsub.f32 %v8367, %v8368
        %v8370 = vand.u32 %v8369, 4294901760
        %8371 = vmatmul.mubr.f32.gmra.mrb[0].mxu0 %v8370
        %v8372 = vpop.f32.mrb[0].mxu0
        %v8373 = vadd.f32 %v7657, %v8372
        %v8374 = vpop.f32.mrb[0].mxu0
        %v8375 = vand.u32 %v7803, 4294901760
        %v8376 = vsub.f32 %v7803, %v8375
        %v8377 = vand.u32 %v8376, 4294901760
        %v8378 = vsub.f32 %v8376, %v8377
        %v8379 = vand.u32 %v8378, 4294901760
        %8380 = vmatprep.mubr.f32.mxu0 %v8379
        %v8381 = vand.u32 %v4722, 4294901760
        %v8382 = vsub.f32 %v4722, %v8381
        %v8383 = vand.u32 %v8382, 4294901760
        %v8384 = vsub.f32 %v8382, %v8383
        %v8385 = vand.u32 %v8384, 4294901760
        %8386 = vmatmul.mubr.f32.gmra.mrb[0].mxu0 %v8385
        %v8387 = vpop.f32.mrb[0].mxu0
        %v8388 = vadd.f32 %v7664, %v8387
        %v8389 = vpop.f32.mrb[0].mxu0
        %v8390 = vand.u32 %v7806, 4294901760
        %v8391 = vsub.f32 %v7806, %v8390
        %v8392 = vand.u32 %v8391, 4294901760
        %v8393 = vsub.f32 %v8391, %v8392
        %v8394 = vand.u32 %v8393, 4294901760
        %8395 = vmatprep.mubr.f32.mxu0 %v8394
        %v8396 = vand.u32 %v4724, 4294901760
        %v8397 = vsub.f32 %v4724, %v8396
        %v8398 = vand.u32 %v8397, 4294901760
        %v8399 = vsub.f32 %v8397, %v8398
        %v8400 = vand.u32 %v8399, 4294901760
        %8401 = vmatmul.mubr.f32.gmra.mrb[0].mxu0 %v8400
        %v8402 = vpop.f32.mrb[0].mxu0
        %v8403 = vadd.f32 %v7671, %v8402
        %v8404 = vpop.f32.mrb[0].mxu0
        %v8405 = vand.u32 %v7809, 4294901760
        %v8406 = vsub.f32 %v7809, %v8405
        %v8407 = vand.u32 %v8406, 4294901760
        %v8408 = vsub.f32 %v8406, %v8407
        %v8409 = vand.u32 %v8408, 4294901760
        %8410 = vmatprep.mubr.f32.mxu0 %v8409
        %v8411 = vand.u32 %v4726, 4294901760
        %v8412 = vsub.f32 %v4726, %v8411
        %v8413 = vand.u32 %v8412, 4294901760
        %v8414 = vsub.f32 %v8412, %v8413
        %v8415 = vand.u32 %v8414, 4294901760
        %8416 = vmatmul.mubr.f32.gmra.mrb[0].mxu0 %v8415
        %v8417 = vpop.f32.mrb[0].mxu0
        %v8418 = vadd.f32 %v7678, %v8417
        %v8419 = vpop.f32.mrb[0].mxu0
        %v8420 = vand.u32 %v7812, 4294901760
        %v8421 = vsub.f32 %v7812, %v8420
        %v8422 = vand.u32 %v8421, 4294901760
        %v8423 = vsub.f32 %v8421, %v8422
        %v8424 = vand.u32 %v8423, 4294901760
        %8425 = vmatprep.mubr.f32.mxu0 %v8424
        %v8426 = vand.u32 %v4728, 4294901760
        %v8427 = vsub.f32 %v4728, %v8426
        %v8428 = vand.u32 %v8427, 4294901760
        %v8429 = vsub.f32 %v8427, %v8428
        %v8430 = vand.u32 %v8429, 4294901760
        %8431 = vmatmul.mubr.f32.gmra.mrb[0].mxu0 %v8430
        %v8432 = vpop.f32.mrb[0].mxu0
        %v8433 = vadd.f32 %v7685, %v8432
        %v8434 = vpop.f32.mrb[0].mxu0
        %v8435 = vand.u32 %v7815, 4294901760
        %v8436 = vsub.f32 %v7815, %v8435
        %v8437 = vand.u32 %v8436, 4294901760
        %v8438 = vsub.f32 %v8436, %v8437
        %v8439 = vand.u32 %v8438, 4294901760
        %8440 = vmatprep.mubr.f32.mxu0 %v8439
        %v8441 = vand.u32 %v4730, 4294901760
        %v8442 = vsub.f32 %v4730, %v8441
        %v8443 = vand.u32 %v8442, 4294901760
        %v8444 = vsub.f32 %v8442, %v8443
        %v8445 = vand.u32 %v8444, 4294901760
        %8446 = vmatmul.mubr.f32.gmra.mrb[0].mxu0 %v8445
        %v8447 = vpop.f32.mrb[0].mxu0
        %v8448 = vadd.f32 %v7692, %v8447
        %v8449 = vpop.f32.mrb[0].mxu0
        %v8450 = vand.u32 %v7818, 4294901760
        %v8451 = vsub.f32 %v7818, %v8450
        %v8452 = vand.u32 %v8451, 4294901760
        %v8453 = vsub.f32 %v8451, %v8452
        %v8454 = vand.u32 %v8453, 4294901760
        %8455 = vmatprep.mubr.f32.mxu0 %v8454
        %v8456 = vand.u32 %v4732, 4294901760
        %v8457 = vsub.f32 %v4732, %v8456
        %v8458 = vand.u32 %v8457, 4294901760
        %v8459 = vsub.f32 %v8457, %v8458
        %v8460 = vand.u32 %v8459, 4294901760
        %8461 = vmatmul.mubr.f32.gmra.mrb[0].mxu0 %v8460
        %v8462 = vpop.f32.mrb[0].mxu0
        %v8463 = vadd.f32 %v7699, %v8462
        %v8464 = vpop.f32.mrb[0].mxu0
        %v8465 = vand.u32 %v7821, 4294901760
        %v8466 = vsub.f32 %v7821, %v8465
        %v8467 = vand.u32 %v8466, 4294901760
        %v8468 = vsub.f32 %v8466, %v8467
        %v8469 = vand.u32 %v8468, 4294901760
        %8470 = vmatprep.mubr.f32.mxu0 %v8469
        %v8471 = vand.u32 %v4734, 4294901760
        %v8472 = vsub.f32 %v4734, %v8471
        %v8473 = vand.u32 %v8472, 4294901760
        %v8474 = vsub.f32 %v8472, %v8473
        %v8475 = vand.u32 %v8474, 4294901760
        %8476 = vmatmul.mubr.f32.gmra.mrb[0].mxu0 %v8475
        %v8477 = vpop.f32.mrb[0].mxu0
        %v8478 = vadd.f32 %v7706, %v8477
        %v8479 = vpop.f32.mrb[0].mxu0
        %8480 = vdwg.mxu0
        %8481 = vmatprep.subr.mxu0 0.0
        %v8482 = vand.u32 %v2540, 4294901760
        %v8483 = vsub.f32 %v2540, %v8482
        %v8484 = vand.u32 %v8483, 4294901760
        %v8485 = vsub.f32 %v8483, %v8484
        %v8486 = vand.u32 %v8485, 4294901760
        %8487 = vmatpush1.msra.mxu0 %v8486
        %8488 = vmatprep.subr.mxu0 0.0
        %v8489 = vand.u32 %v2541, 4294901760
        %v8490 = vsub.f32 %v2541, %v8489
        %v8491 = vand.u32 %v8490, 4294901760
        %v8492 = vsub.f32 %v8490, %v8491
        %v8493 = vand.u32 %v8492, 4294901760
        %8494 = vmatpush1.msra.mxu0 %v8493
        %8495 = vmatprep.subr.mxu0 0.0
        %v8496 = vand.u32 %v2542, 4294901760
        %v8497 = vsub.f32 %v2542, %v8496
        %v8498 = vand.u32 %v8497, 4294901760
        %v8499 = vsub.f32 %v8497, %v8498
        %v8500 = vand.u32 %v8499, 4294901760
        %8501 = vmatpush1.msra.mxu0 %v8500
        %8502 = vmatprep.subr.mxu0 0.0
        %v8503 = vand.u32 %v2543, 4294901760
        %v8504 = vsub.f32 %v2543, %v8503
        %v8505 = vand.u32 %v8504, 4294901760
        %v8506 = vsub.f32 %v8504, %v8505
        %v8507 = vand.u32 %v8506, 4294901760
        %8508 = vmatpush1.msra.mxu0 %v8507
        %8509 = vmatprep.subr.mxu0 0.0
        %v8510 = vand.u32 %v2544, 4294901760
        %v8511 = vsub.f32 %v2544, %v8510
        %v8512 = vand.u32 %v8511, 4294901760
        %v8513 = vsub.f32 %v8511, %v8512
        %v8514 = vand.u32 %v8513, 4294901760
        %8515 = vmatpush1.msra.mxu0 %v8514
        %8516 = vmatprep.subr.mxu0 0.0
        %v8517 = vand.u32 %v2545, 4294901760
        %v8518 = vsub.f32 %v2545, %v8517
        %v8519 = vand.u32 %v8518, 4294901760
        %v8520 = vsub.f32 %v8518, %v8519
        %v8521 = vand.u32 %v8520, 4294901760
        %8522 = vmatpush1.msra.mxu0 %v8521
        %8523 = vmatprep.subr.mxu0 0.0
        %v8524 = vand.u32 %v2546, 4294901760
        %v8525 = vsub.f32 %v2546, %v8524
        %v8526 = vand.u32 %v8525, 4294901760
        %v8527 = vsub.f32 %v8525, %v8526
        %v8528 = vand.u32 %v8527, 4294901760
        %8529 = vmatpush1.msra.mxu0 %v8528
        %8530 = vmatprep.subr.mxu0 0.0
        %v8531 = vand.u32 %v2547, 4294901760
        %v8532 = vsub.f32 %v2547, %v8531
        %v8533 = vand.u32 %v8532, 4294901760
        %v8534 = vsub.f32 %v8532, %v8533
        %v8535 = vand.u32 %v8534, 4294901760
        %8536 = vmatpush1.msra.mxu0 %v8535
        %8537 = vmatprep.subr.mxu0 0.0
        %v8538 = vand.u32 %v2548, 4294901760
        %v8539 = vsub.f32 %v2548, %v8538
        %v8540 = vand.u32 %v8539, 4294901760
        %v8541 = vsub.f32 %v8539, %v8540
        %v8542 = vand.u32 %v8541, 4294901760
        %8543 = vmatpush1.msra.mxu0 %v8542
        %8544 = vmatprep.subr.mxu0 0.0
        %v8545 = vand.u32 %v2549, 4294901760
        %v8546 = vsub.f32 %v2549, %v8545
        %v8547 = vand.u32 %v8546, 4294901760
        %v8548 = vsub.f32 %v8546, %v8547
        %v8549 = vand.u32 %v8548, 4294901760
        %8550 = vmatpush1.msra.mxu0 %v8549
        %8551 = vmatprep.subr.mxu0 0.0
        %v8552 = vand.u32 %v2550, 4294901760
        %v8553 = vsub.f32 %v2550, %v8552
        %v8554 = vand.u32 %v8553, 4294901760
        %v8555 = vsub.f32 %v8553, %v8554
        %v8556 = vand.u32 %v8555, 4294901760
        %8557 = vmatpush1.msra.mxu0 %v8556
        %8558 = vmatprep.subr.mxu0 0.0
        %v8559 = vand.u32 %v2551, 4294901760
        %v8560 = vsub.f32 %v2551, %v8559
        %v8561 = vand.u32 %v8560, 4294901760
        %v8562 = vsub.f32 %v8560, %v8561
        %v8563 = vand.u32 %v8562, 4294901760
        %8564 = vmatpush1.msra.mxu0 %v8563
        %8565 = vmatprep.subr.mxu0 0.0
        %v8566 = vand.u32 %v2552, 4294901760
        %v8567 = vsub.f32 %v2552, %v8566
        %v8568 = vand.u32 %v8567, 4294901760
        %v8569 = vsub.f32 %v8567, %v8568
        %v8570 = vand.u32 %v8569, 4294901760
        %8571 = vmatpush1.msra.mxu0 %v8570
        %8572 = vmatprep.subr.mxu0 0.0
        %v8573 = vand.u32 %v2553, 4294901760
        %v8574 = vsub.f32 %v2553, %v8573
        %v8575 = vand.u32 %v8574, 4294901760
        %v8576 = vsub.f32 %v8574, %v8575
        %v8577 = vand.u32 %v8576, 4294901760
        %8578 = vmatpush1.msra.mxu0 %v8577
        %8579 = vmatprep.subr.mxu0 0.0
        %v8580 = vand.u32 %v2554, 4294901760
        %v8581 = vsub.f32 %v2554, %v8580
        %v8582 = vand.u32 %v8581, 4294901760
        %v8583 = vsub.f32 %v8581, %v8582
        %v8584 = vand.u32 %v8583, 4294901760
        %8585 = vmatpush1.msra.mxu0 %v8584
        %8586 = vmatprep.subr.mxu0 0.0
        %v8587 = vand.u32 %v2555, 4294901760
        %v8588 = vsub.f32 %v2555, %v8587
        %v8589 = vand.u32 %v8588, 4294901760
        %v8590 = vsub.f32 %v8588, %v8589
        %v8591 = vand.u32 %v8590, 4294901760
        %8592 = vmatpush1.msra.mxu0 %v8591
        %8593 = vmatprep.subr.mxu0 0.0
        %v8594 = vand.u32 %v2556, 4294901760
        %v8595 = vsub.f32 %v2556, %v8594
        %v8596 = vand.u32 %v8595, 4294901760
        %v8597 = vsub.f32 %v8595, %v8596
        %v8598 = vand.u32 %v8597, 4294901760
        %8599 = vmatpush1.msra.mxu0 %v8598
        %8600 = vmatprep.subr.mxu0 0.0
        %v8601 = vand.u32 %v2557, 4294901760
        %v8602 = vsub.f32 %v2557, %v8601
        %v8603 = vand.u32 %v8602, 4294901760
        %v8604 = vsub.f32 %v8602, %v8603
        %v8605 = vand.u32 %v8604, 4294901760
        %8606 = vmatpush1.msra.mxu0 %v8605
        %8607 = vmatprep.subr.mxu0 0.0
        %v8608 = vand.u32 %v2558, 4294901760
        %v8609 = vsub.f32 %v2558, %v8608
        %v8610 = vand.u32 %v8609, 4294901760
        %v8611 = vsub.f32 %v8609, %v8610
        %v8612 = vand.u32 %v8611, 4294901760
        %8613 = vmatpush1.msra.mxu0 %v8612
        %8614 = vmatprep.subr.mxu0 0.0
        %v8615 = vand.u32 %v7824, 4294901760
        %v8616 = vsub.f32 %v7824, %v8615
        %v8617 = vand.u32 %v8616, 4294901760
        %v8618 = vsub.f32 %v8616, %v8617
        %v8619 = vand.u32 %v8618, 4294901760
        %8620 = vmatpush1.msra.mxu0 %v8619
        %8621 = vmatprep.subr.mxu0 0.0
        %8622 = vmatpush1.msra.mxu0 0.0
        %8623 = vmatprep.subr.mxu0 0.0
        %8624 = vmatpush1.msra.mxu0 0.0
        %8625 = vmatprep.subr.mxu0 0.0
        %8626 = vmatpush1.msra.mxu0 0.0
        %8627 = vmatprep.subr.mxu0 0.0
        %8628 = vmatpush1.msra.mxu0 0.0
        %8629 = vmatprep.subr.mxu0 0.0
        %8630 = vmatpush1.msra.mxu0 0.0
        %8631 = vmatprep.subr.mxu0 0.0
        %8632 = vmatpush1.msra.mxu0 0.0
        %8633 = vmatprep.subr.mxu0 0.0
        %8634 = vmatpush1.msra.mxu0 0.0
        %8635 = vmatprep.subr.mxu0 0.0
        %8636 = vmatpush1.msra.mxu0 0.0
        %8637 = vmatprep.subr.mxu0 0.0
        %8638 = vmatpush1.msra.mxu0 0.0
        %8639 = vmatprep.subr.mxu0 0.0
        %8640 = vmatpush1.msra.mxu0 0.0
        %8641 = vmatprep.subr.mxu0 0.0
        %8642 = vmatpush1.msra.mxu0 0.0
        %8643 = vmatprep.subr.mxu0 0.0
        %8644 = vmatpush1.msra.mxu0 0.0
        %v8645 = vand.u32 %v7710, 4294901760
        %8646 = vmatprep.mubr.f32.mxu0 %v8645
        %v8647 = vand.u32 %v4660, 4294901760
        %8648 = vmatmul.mubr.f32.gmra.mrb[0].mxu0 %v8647
        %v8649 = vpop.f32.mrb[0].mxu0
        %v8650 = vadd.f32 %v7923, %v8649
        %v8651 = vpop.f32.mrb[0].mxu0
        %v8652 = vand.u32 %v7713, 4294901760
        %8653 = vmatprep.mubr.f32.mxu0 %v8652
        %v8654 = vand.u32 %v4662, 4294901760
        %8655 = vmatmul.mubr.f32.gmra.mrb[0].mxu0 %v8654
        %v8656 = vpop.f32.mrb[0].mxu0
        %v8657 = vadd.f32 %v7938, %v8656
        %v8658 = vpop.f32.mrb[0].mxu0
        %v8659 = vand.u32 %v7716, 4294901760
        %8660 = vmatprep.mubr.f32.mxu0 %v8659
        %v8661 = vand.u32 %v4664, 4294901760
        %8662 = vmatmul.mubr.f32.gmra.mrb[0].mxu0 %v8661
        %v8663 = vpop.f32.mrb[0].mxu0
        %v8664 = vadd.f32 %v7953, %v8663
        %v8665 = vpop.f32.mrb[0].mxu0
        %v8666 = vand.u32 %v7719, 4294901760
        %8667 = vmatprep.mubr.f32.mxu0 %v8666
        %v8668 = vand.u32 %v4666, 4294901760
        %8669 = vmatmul.mubr.f32.gmra.mrb[0].mxu0 %v8668
        %v8670 = vpop.f32.mrb[0].mxu0
        %v8671 = vadd.f32 %v7968, %v8670
        %v8672 = vpop.f32.mrb[0].mxu0
        %v8673 = vand.u32 %v7722, 4294901760
        %8674 = vmatprep.mubr.f32.mxu0 %v8673
        %v8675 = vand.u32 %v4668, 4294901760
        %8676 = vmatmul.mubr.f32.gmra.mrb[0].mxu0 %v8675
        %v8677 = vpop.f32.mrb[0].mxu0
        %v8678 = vadd.f32 %v7983, %v8677
        %v8679 = vpop.f32.mrb[0].mxu0
        %v8680 = vand.u32 %v7725, 4294901760
        %8681 = vmatprep.mubr.f32.mxu0 %v8680
        %v8682 = vand.u32 %v4670, 4294901760
        %8683 = vmatmul.mubr.f32.gmra.mrb[0].mxu0 %v8682
        %v8684 = vpop.f32.mrb[0].mxu0
        %v8685 = vadd.f32 %v7998, %v8684
        %v8686 = vpop.f32.mrb[0].mxu0
        %v8687 = vand.u32 %v7728, 4294901760
        %8688 = vmatprep.mubr.f32.mxu0 %v8687
        %v8689 = vand.u32 %v4672, 4294901760
        %8690 = vmatmul.mubr.f32.gmra.mrb[0].mxu0 %v8689
        %v8691 = vpop.f32.mrb[0].mxu0
        %v8692 = vadd.f32 %v8013, %v8691
        %v8693 = vpop.f32.mrb[0].mxu0
        %v8694 = vand.u32 %v7731, 4294901760
        %8695 = vmatprep.mubr.f32.mxu0 %v8694
        %v8696 = vand.u32 %v4674, 4294901760
        %8697 = vmatmul.mubr.f32.gmra.mrb[0].mxu0 %v8696
        %v8698 = vpop.f32.mrb[0].mxu0
        %v8699 = vadd.f32 %v8028, %v8698
        %v8700 = vpop.f32.mrb[0].mxu0
        %v8701 = vand.u32 %v7734, 4294901760
        %8702 = vmatprep.mubr.f32.mxu0 %v8701
        %v8703 = vand.u32 %v4676, 4294901760
        %8704 = vmatmul.mubr.f32.gmra.mrb[0].mxu0 %v8703
        %v8705 = vpop.f32.mrb[0].mxu0
        %v8706 = vadd.f32 %v8043, %v8705
        %v8707 = vpop.f32.mrb[0].mxu0
        %v8708 = vand.u32 %v7737, 4294901760
        %8709 = vmatprep.mubr.f32.mxu0 %v8708
        %v8710 = vand.u32 %v4678, 4294901760
        %8711 = vmatmul.mubr.f32.gmra.mrb[0].mxu0 %v8710
        %v8712 = vpop.f32.mrb[0].mxu0
        %v8713 = vadd.f32 %v8058, %v8712
        %v8714 = vpop.f32.mrb[0].mxu0
        %v8715 = vand.u32 %v7740, 4294901760
        %8716 = vmatprep.mubr.f32.mxu0 %v8715
        %v8717 = vand.u32 %v4680, 4294901760
        %8718 = vmatmul.mubr.f32.gmra.mrb[0].mxu0 %v8717
        %v8719 = vpop.f32.mrb[0].mxu0
        %v8720 = vadd.f32 %v8073, %v8719
        %v8721 = vpop.f32.mrb[0].mxu0
        %v8722 = vand.u32 %v7743, 4294901760
        %8723 = vmatprep.mubr.f32.mxu0 %v8722
        %v8724 = vand.u32 %v4682, 4294901760
        %8725 = vmatmul.mubr.f32.gmra.mrb[0].mxu0 %v8724
        %v8726 = vpop.f32.mrb[0].mxu0
        %v8727 = vadd.f32 %v8088, %v8726
        %v8728 = vpop.f32.mrb[0].mxu0
        %v8729 = vand.u32 %v7746, 4294901760
        %8730 = vmatprep.mubr.f32.mxu0 %v8729
        %v8731 = vand.u32 %v4684, 4294901760
        %8732 = vmatmul.mubr.f32.gmra.mrb[0].mxu0 %v8731
        %v8733 = vpop.f32.mrb[0].mxu0
        %v8734 = vadd.f32 %v8103, %v8733
        %v8735 = vpop.f32.mrb[0].mxu0
        %v8736 = vand.u32 %v7749, 4294901760
        %8737 = vmatprep.mubr.f32.mxu0 %v8736
        %v8738 = vand.u32 %v4686, 4294901760
        %8739 = vmatmul.mubr.f32.gmra.mrb[0].mxu0 %v8738
        %v8740 = vpop.f32.mrb[0].mxu0
        %v8741 = vadd.f32 %v8118, %v8740
        %v8742 = vpop.f32.mrb[0].mxu0
        %v8743 = vand.u32 %v7752, 4294901760
        %8744 = vmatprep.mubr.f32.mxu0 %v8743
        %v8745 = vand.u32 %v4688, 4294901760
        %8746 = vmatmul.mubr.f32.gmra.mrb[0].mxu0 %v8745
        %v8747 = vpop.f32.mrb[0].mxu0
        %v8748 = vadd.f32 %v8133, %v8747
        %v8749 = vpop.f32.mrb[0].mxu0
        %v8750 = vand.u32 %v7755, 4294901760
        %8751 = vmatprep.mubr.f32.mxu0 %v8750
        %v8752 = vand.u32 %v4690, 4294901760
        %8753 = vmatmul.mubr.f32.gmra.mrb[0].mxu0 %v8752
        %v8754 = vpop.f32.mrb[0].mxu0
        %v8755 = vadd.f32 %v8148, %v8754
        %v8756 = vpop.f32.mrb[0].mxu0
        %v8757 = vand.u32 %v7758, 4294901760
        %8758 = vmatprep.mubr.f32.mxu0 %v8757
        %v8759 = vand.u32 %v4692, 4294901760
        %8760 = vmatmul.mubr.f32.gmra.mrb[0].mxu0 %v8759
        %v8761 = vpop.f32.mrb[0].mxu0
        %v8762 = vadd.f32 %v8163, %v8761
        %v8763 = vpop.f32.mrb[0].mxu0
        %v8764 = vand.u32 %v7761, 4294901760
        %8765 = vmatprep.mubr.f32.mxu0 %v8764
        %v8766 = vand.u32 %v4694, 4294901760
        %8767 = vmatmul.mubr.f32.gmra.mrb[0].mxu0 %v8766
        %v8768 = vpop.f32.mrb[0].mxu0
        %v8769 = vadd.f32 %v8178, %v8768
        %v8770 = vpop.f32.mrb[0].mxu0
        %v8771 = vand.u32 %v7764, 4294901760
        %8772 = vmatprep.mubr.f32.mxu0 %v8771
        %v8773 = vand.u32 %v4696, 4294901760
        %8774 = vmatmul.mubr.f32.gmra.mrb[0].mxu0 %v8773
        %v8775 = vpop.f32.mrb[0].mxu0
        %v8776 = vadd.f32 %v8193, %v8775
        %v8777 = vpop.f32.mrb[0].mxu0
        %v8778 = vand.u32 %v7767, 4294901760
        %8779 = vmatprep.mubr.f32.mxu0 %v8778
        %v8780 = vand.u32 %v4698, 4294901760
        %8781 = vmatmul.mubr.f32.gmra.mrb[0].mxu0 %v8780
        %v8782 = vpop.f32.mrb[0].mxu0
        %v8783 = vadd.f32 %v8208, %v8782
        %v8784 = vpop.f32.mrb[0].mxu0
        %v8785 = vand.u32 %v7770, 4294901760
        %8786 = vmatprep.mubr.f32.mxu0 %v8785
        %v8787 = vand.u32 %v4700, 4294901760
        %8788 = vmatmul.mubr.f32.gmra.mrb[0].mxu0 %v8787
        %v8789 = vpop.f32.mrb[0].mxu0
        %v8790 = vadd.f32 %v8223, %v8789
        %v8791 = vpop.f32.mrb[0].mxu0
        %v8792 = vand.u32 %v7773, 4294901760
        %8793 = vmatprep.mubr.f32.mxu0 %v8792
        %v8794 = vand.u32 %v4702, 4294901760
        %8795 = vmatmul.mubr.f32.gmra.mrb[0].mxu0 %v8794
        %v8796 = vpop.f32.mrb[0].mxu0
        %v8797 = vadd.f32 %v8238, %v8796
        %v8798 = vpop.f32.mrb[0].mxu0
        %v8799 = vand.u32 %v7776, 4294901760
        %8800 = vmatprep.mubr.f32.mxu0 %v8799
        %v8801 = vand.u32 %v4704, 4294901760
        %8802 = vmatmul.mubr.f32.gmra.mrb[0].mxu0 %v8801
        %v8803 = vpop.f32.mrb[0].mxu0
        %v8804 = vadd.f32 %v8253, %v8803
        %v8805 = vpop.f32.mrb[0].mxu0
        %v8806 = vand.u32 %v7779, 4294901760
        %8807 = vmatprep.mubr.f32.mxu0 %v8806
        %v8808 = vand.u32 %v4706, 4294901760
        %8809 = vmatmul.mubr.f32.gmra.mrb[0].mxu0 %v8808
        %v8810 = vpop.f32.mrb[0].mxu0
        %v8811 = vadd.f32 %v8268, %v8810
        %v8812 = vpop.f32.mrb[0].mxu0
        %v8813 = vand.u32 %v7782, 4294901760
        %8814 = vmatprep.mubr.f32.mxu0 %v8813
        %v8815 = vand.u32 %v4708, 4294901760
        %8816 = vmatmul.mubr.f32.gmra.mrb[0].mxu0 %v8815
        %v8817 = vpop.f32.mrb[0].mxu0
        %v8818 = vadd.f32 %v8283, %v8817
        %v8819 = vpop.f32.mrb[0].mxu0
        %v8820 = vand.u32 %v7785, 4294901760
        %8821 = vmatprep.mubr.f32.mxu0 %v8820
        %v8822 = vand.u32 %v4710, 4294901760
        %8823 = vmatmul.mubr.f32.gmra.mrb[0].mxu0 %v8822
        %v8824 = vpop.f32.mrb[0].mxu0
        %v8825 = vadd.f32 %v8298, %v8824
        %v8826 = vpop.f32.mrb[0].mxu0
        %v8827 = vand.u32 %v7788, 4294901760
        %8828 = vmatprep.mubr.f32.mxu0 %v8827
        %v8829 = vand.u32 %v4712, 4294901760
        %8830 = vmatmul.mubr.f32.gmra.mrb[0].mxu0 %v8829
        %v8831 = vpop.f32.mrb[0].mxu0
        %v8832 = vadd.f32 %v8313, %v8831
        %v8833 = vpop.f32.mrb[0].mxu0
        %v8834 = vand.u32 %v7791, 4294901760
        %8835 = vmatprep.mubr.f32.mxu0 %v8834
        %v8836 = vand.u32 %v4714, 4294901760
        %8837 = vmatmul.mubr.f32.gmra.mrb[0].mxu0 %v8836
        %v8838 = vpop.f32.mrb[0].mxu0
        %v8839 = vadd.f32 %v8328, %v8838
        %v8840 = vpop.f32.mrb[0].mxu0
        %v8841 = vand.u32 %v7794, 4294901760
        %8842 = vmatprep.mubr.f32.mxu0 %v8841
        %v8843 = vand.u32 %v4716, 4294901760
        %8844 = vmatmul.mubr.f32.gmra.mrb[0].mxu0 %v8843
        %v8845 = vpop.f32.mrb[0].mxu0
        %v8846 = vadd.f32 %v8343, %v8845
        %v8847 = vpop.f32.mrb[0].mxu0
        %v8848 = vand.u32 %v7797, 4294901760
        %8849 = vmatprep.mubr.f32.mxu0 %v8848
        %v8850 = vand.u32 %v4718, 4294901760
        %8851 = vmatmul.mubr.f32.gmra.mrb[0].mxu0 %v8850
        %v8852 = vpop.f32.mrb[0].mxu0
        %v8853 = vadd.f32 %v8358, %v8852
        %v8854 = vpop.f32.mrb[0].mxu0
        %v8855 = vand.u32 %v7800, 4294901760
        %8856 = vmatprep.mubr.f32.mxu0 %v8855
        %v8857 = vand.u32 %v4720, 4294901760
        %8858 = vmatmul.mubr.f32.gmra.mrb[0].mxu0 %v8857
        %v8859 = vpop.f32.mrb[0].mxu0
        %v8860 = vadd.f32 %v8373, %v8859
        %v8861 = vpop.f32.mrb[0].mxu0
        %v8862 = vand.u32 %v7803, 4294901760
        %8863 = vmatprep.mubr.f32.mxu0 %v8862
        %v8864 = vand.u32 %v4722, 4294901760
        %8865 = vmatmul.mubr.f32.gmra.mrb[0].mxu0 %v8864
        %v8866 = vpop.f32.mrb[0].mxu0
        %v8867 = vadd.f32 %v8388, %v8866
        %v8868 = vpop.f32.mrb[0].mxu0
        %v8869 = vand.u32 %v7806, 4294901760
        %8870 = vmatprep.mubr.f32.mxu0 %v8869
        %v8871 = vand.u32 %v4724, 4294901760
        %8872 = vmatmul.mubr.f32.gmra.mrb[0].mxu0 %v8871
        %v8873 = vpop.f32.mrb[0].mxu0
        %v8874 = vadd.f32 %v8403, %v8873
        %v8875 = vpop.f32.mrb[0].mxu0
        %v8876 = vand.u32 %v7809, 4294901760
        %8877 = vmatprep.mubr.f32.mxu0 %v8876
        %v8878 = vand.u32 %v4726, 4294901760
        %8879 = vmatmul.mubr.f32.gmra.mrb[0].mxu0 %v8878
        %v8880 = vpop.f32.mrb[0].mxu0
        %v8881 = vadd.f32 %v8418, %v8880
        %v8882 = vpop.f32.mrb[0].mxu0
        %v8883 = vand.u32 %v7812, 4294901760
        %8884 = vmatprep.mubr.f32.mxu0 %v8883
        %v8885 = vand.u32 %v4728, 4294901760
        %8886 = vmatmul.mubr.f32.gmra.mrb[0].mxu0 %v8885
        %v8887 = vpop.f32.mrb[0].mxu0
        %v8888 = vadd.f32 %v8433, %v8887
        %v8889 = vpop.f32.mrb[0].mxu0
        %v8890 = vand.u32 %v7815, 4294901760
        %8891 = vmatprep.mubr.f32.mxu0 %v8890
        %v8892 = vand.u32 %v4730, 4294901760
        %8893 = vmatmul.mubr.f32.gmra.mrb[0].mxu0 %v8892
        %v8894 = vpop.f32.mrb[0].mxu0
        %v8895 = vadd.f32 %v8448, %v8894
        %v8896 = vpop.f32.mrb[0].mxu0
        %v8897 = vand.u32 %v7818, 4294901760
        %8898 = vmatprep.mubr.f32.mxu0 %v8897
        %v8899 = vand.u32 %v4732, 4294901760
        %8900 = vmatmul.mubr.f32.gmra.mrb[0].mxu0 %v8899
        %v8901 = vpop.f32.mrb[0].mxu0
        %v8902 = vadd.f32 %v8463, %v8901
        %v8903 = vpop.f32.mrb[0].mxu0
        %v8904 = vand.u32 %v7821, 4294901760
        %8905 = vmatprep.mubr.f32.mxu0 %v8904
        %v8906 = vand.u32 %v4734, 4294901760
        %8907 = vmatmul.mubr.f32.gmra.mrb[0].mxu0 %v8906
        %v8908 = vpop.f32.mrb[0].mxu0
        %v8909 = vadd.f32 %v8478, %v8908
        %v8910 = vpop.f32.mrb[0].mxu0
        %8911 = vdwg.mxu0
        %8912 = vmatprep.subr.mxu0 0.0
        %v8913 = vand.u32 %v2540, 4294901760
        %v8914 = vsub.f32 %v2540, %v8913
        %8915 = vmatpush1.msra.mxu0 %v8914
        %8916 = vmatprep.subr.mxu0 0.0
        %v8917 = vand.u32 %v2541, 4294901760
        %v8918 = vsub.f32 %v2541, %v8917
        %8919 = vmatpush1.msra.mxu0 %v8918
        %8920 = vmatprep.subr.mxu0 0.0
        %v8921 = vand.u32 %v2542, 4294901760
        %v8922 = vsub.f32 %v2542, %v8921
        %8923 = vmatpush1.msra.mxu0 %v8922
        %8924 = vmatprep.subr.mxu0 0.0
        %v8925 = vand.u32 %v2543, 4294901760
        %v8926 = vsub.f32 %v2543, %v8925
        %8927 = vmatpush1.msra.mxu0 %v8926
        %8928 = vmatprep.subr.mxu0 0.0
        %v8929 = vand.u32 %v2544, 4294901760
        %v8930 = vsub.f32 %v2544, %v8929
        %8931 = vmatpush1.msra.mxu0 %v8930
        %8932 = vmatprep.subr.mxu0 0.0
        %v8933 = vand.u32 %v2545, 4294901760
        %v8934 = vsub.f32 %v2545, %v8933
        %8935 = vmatpush1.msra.mxu0 %v8934
        %8936 = vmatprep.subr.mxu0 0.0
        %v8937 = vand.u32 %v2546, 4294901760
        %v8938 = vsub.f32 %v2546, %v8937
        %8939 = vmatpush1.msra.mxu0 %v8938
        %8940 = vmatprep.subr.mxu0 0.0
        %v8941 = vand.u32 %v2547, 4294901760
        %v8942 = vsub.f32 %v2547, %v8941
        %8943 = vmatpush1.msra.mxu0 %v8942
        %8944 = vmatprep.subr.mxu0 0.0
        %v8945 = vand.u32 %v2548, 4294901760
        %v8946 = vsub.f32 %v2548, %v8945
        %8947 = vmatpush1.msra.mxu0 %v8946
        %8948 = vmatprep.subr.mxu0 0.0
        %v8949 = vand.u32 %v2549, 4294901760
        %v8950 = vsub.f32 %v2549, %v8949
        %8951 = vmatpush1.msra.mxu0 %v8950
        %8952 = vmatprep.subr.mxu0 0.0
        %v8953 = vand.u32 %v2550, 4294901760
        %v8954 = vsub.f32 %v2550, %v8953
        %8955 = vmatpush1.msra.mxu0 %v8954
        %8956 = vmatprep.subr.mxu0 0.0
        %v8957 = vand.u32 %v2551, 4294901760
        %v8958 = vsub.f32 %v2551, %v8957
        %8959 = vmatpush1.msra.mxu0 %v8958
        %8960 = vmatprep.subr.mxu0 0.0
        %v8961 = vand.u32 %v2552, 4294901760
        %v8962 = vsub.f32 %v2552, %v8961
        %8963 = vmatpush1.msra.mxu0 %v8962
        %8964 = vmatprep.subr.mxu0 0.0
        %v8965 = vand.u32 %v2553, 4294901760
        %v8966 = vsub.f32 %v2553, %v8965
        %8967 = vmatpush1.msra.mxu0 %v8966
        %8968 = vmatprep.subr.mxu0 0.0
        %v8969 = vand.u32 %v2554, 4294901760
        %v8970 = vsub.f32 %v2554, %v8969
        %8971 = vmatpush1.msra.mxu0 %v8970
        %8972 = vmatprep.subr.mxu0 0.0
        %v8973 = vand.u32 %v2555, 4294901760
        %v8974 = vsub.f32 %v2555, %v8973
        %8975 = vmatpush1.msra.mxu0 %v8974
        %8976 = vmatprep.subr.mxu0 0.0
        %v8977 = vand.u32 %v2556, 4294901760
        %v8978 = vsub.f32 %v2556, %v8977
        %8979 = vmatpush1.msra.mxu0 %v8978
        %8980 = vmatprep.subr.mxu0 0.0
        %v8981 = vand.u32 %v2557, 4294901760
        %v8982 = vsub.f32 %v2557, %v8981
        %8983 = vmatpush1.msra.mxu0 %v8982
        %8984 = vmatprep.subr.mxu0 0.0
        %v8985 = vand.u32 %v2558, 4294901760
        %v8986 = vsub.f32 %v2558, %v8985
        %8987 = vmatpush1.msra.mxu0 %v8986
        %8988 = vmatprep.subr.mxu0 0.0
        %v8989 = vand.u32 %v7824, 4294901760
        %v8990 = vsub.f32 %v7824, %v8989
        %8991 = vmatpush1.msra.mxu0 %v8990
        %8992 = vmatprep.subr.mxu0 0.0
        %8993 = vmatpush1.msra.mxu0 0.0
        %8994 = vmatprep.subr.mxu0 0.0
        %8995 = vmatpush1.msra.mxu0 0.0
        %8996 = vmatprep.subr.mxu0 0.0
        %8997 = vmatpush1.msra.mxu0 0.0
        %8998 = vmatprep.subr.mxu0 0.0
        %8999 = vmatpush1.msra.mxu0 0.0
        %9000 = vmatprep.subr.mxu0 0.0
        %9001 = vmatpush1.msra.mxu0 0.0
        %9002 = vmatprep.subr.mxu0 0.0
        %9003 = vmatpush1.msra.mxu0 0.0
        %9004 = vmatprep.subr.mxu0 0.0
        %9005 = vmatpush1.msra.mxu0 0.0
        %9006 = vmatprep.subr.mxu0 0.0
        %9007 = vmatpush1.msra.mxu0 0.0
        %9008 = vmatprep.subr.mxu0 0.0
        %9009 = vmatpush1.msra.mxu0 0.0
        %9010 = vmatprep.subr.mxu0 0.0
        %9011 = vmatpush1.msra.mxu0 0.0
        %9012 = vmatprep.subr.mxu0 0.0
        %9013 = vmatpush1.msra.mxu0 0.0
        %9014 = vmatprep.subr.mxu0 0.0
        %9015 = vmatpush1.msra.mxu0 0.0
        %v9016 = vand.u32 %v7710, 4294901760
        %v9017 = vsub.f32 %v7710, %v9016
        %9018 = vmatprep.mubr.f32.mxu0 %v9017
        %v9019 = vand.u32 %v4660, 4294901760
        %v9020 = vsub.f32 %v4660, %v9019
        %9021 = vmatmul.mubr.f32.gmra.mrb[0].mxu0 %v9020
        %v9022 = vpop.f32.mrb[0].mxu0
        %v9023 = vadd.f32 %v8650, %v9022
        %v9024 = vpop.f32.mrb[0].mxu0
        %v9025 = vand.u32 %v7713, 4294901760
        %v9026 = vsub.f32 %v7713, %v9025
        %9027 = vmatprep.mubr.f32.mxu0 %v9026
        %v9028 = vand.u32 %v4662, 4294901760
        %v9029 = vsub.f32 %v4662, %v9028
        %9030 = vmatmul.mubr.f32.gmra.mrb[0].mxu0 %v9029
        %v9031 = vpop.f32.mrb[0].mxu0
        %v9032 = vadd.f32 %v8657, %v9031
        %v9033 = vpop.f32.mrb[0].mxu0
        %v9034 = vand.u32 %v7716, 4294901760
        %v9035 = vsub.f32 %v7716, %v9034
        %9036 = vmatprep.mubr.f32.mxu0 %v9035
        %v9037 = vand.u32 %v4664, 4294901760
        %v9038 = vsub.f32 %v4664, %v9037
        %9039 = vmatmul.mubr.f32.gmra.mrb[0].mxu0 %v9038
        %v9040 = vpop.f32.mrb[0].mxu0
        %v9041 = vadd.f32 %v8664, %v9040
        %v9042 = vpop.f32.mrb[0].mxu0
        %v9043 = vand.u32 %v7719, 4294901760
        %v9044 = vsub.f32 %v7719, %v9043
        %9045 = vmatprep.mubr.f32.mxu0 %v9044
        %v9046 = vand.u32 %v4666, 4294901760
        %v9047 = vsub.f32 %v4666, %v9046
        %9048 = vmatmul.mubr.f32.gmra.mrb[0].mxu0 %v9047
        %v9049 = vpop.f32.mrb[0].mxu0
        %v9050 = vadd.f32 %v8671, %v9049
        %v9051 = vpop.f32.mrb[0].mxu0
        %v9052 = vand.u32 %v7722, 4294901760
        %v9053 = vsub.f32 %v7722, %v9052
        %9054 = vmatprep.mubr.f32.mxu0 %v9053
        %v9055 = vand.u32 %v4668, 4294901760
        %v9056 = vsub.f32 %v4668, %v9055
        %9057 = vmatmul.mubr.f32.gmra.mrb[0].mxu0 %v9056
        %v9058 = vpop.f32.mrb[0].mxu0
        %v9059 = vadd.f32 %v8678, %v9058
        %v9060 = vpop.f32.mrb[0].mxu0
        %v9061 = vand.u32 %v7725, 4294901760
        %v9062 = vsub.f32 %v7725, %v9061
        %9063 = vmatprep.mubr.f32.mxu0 %v9062
        %v9064 = vand.u32 %v4670, 4294901760
        %v9065 = vsub.f32 %v4670, %v9064
        %9066 = vmatmul.mubr.f32.gmra.mrb[0].mxu0 %v9065
        %v9067 = vpop.f32.mrb[0].mxu0
        %v9068 = vadd.f32 %v8685, %v9067
        %v9069 = vpop.f32.mrb[0].mxu0
        %v9070 = vand.u32 %v7728, 4294901760
        %v9071 = vsub.f32 %v7728, %v9070
        %9072 = vmatprep.mubr.f32.mxu0 %v9071
        %v9073 = vand.u32 %v4672, 4294901760
        %v9074 = vsub.f32 %v4672, %v9073
        %9075 = vmatmul.mubr.f32.gmra.mrb[0].mxu0 %v9074
        %v9076 = vpop.f32.mrb[0].mxu0
        %v9077 = vadd.f32 %v8692, %v9076
        %v9078 = vpop.f32.mrb[0].mxu0
        %v9079 = vand.u32 %v7731, 4294901760
        %v9080 = vsub.f32 %v7731, %v9079
        %9081 = vmatprep.mubr.f32.mxu0 %v9080
        %v9082 = vand.u32 %v4674, 4294901760
        %v9083 = vsub.f32 %v4674, %v9082
        %9084 = vmatmul.mubr.f32.gmra.mrb[0].mxu0 %v9083
        %v9085 = vpop.f32.mrb[0].mxu0
        %v9086 = vadd.f32 %v8699, %v9085
        %v9087 = vpop.f32.mrb[0].mxu0
        %v9088 = vand.u32 %v7734, 4294901760
        %v9089 = vsub.f32 %v7734, %v9088
        %9090 = vmatprep.mubr.f32.mxu0 %v9089
        %v9091 = vand.u32 %v4676, 4294901760
        %v9092 = vsub.f32 %v4676, %v9091
        %9093 = vmatmul.mubr.f32.gmra.mrb[0].mxu0 %v9092
        %v9094 = vpop.f32.mrb[0].mxu0
        %v9095 = vadd.f32 %v8706, %v9094
        %v9096 = vpop.f32.mrb[0].mxu0
        %v9097 = vand.u32 %v7737, 4294901760
        %v9098 = vsub.f32 %v7737, %v9097
        %9099 = vmatprep.mubr.f32.mxu0 %v9098
        %v9100 = vand.u32 %v4678, 4294901760
        %v9101 = vsub.f32 %v4678, %v9100
        %9102 = vmatmul.mubr.f32.gmra.mrb[0].mxu0 %v9101
        %v9103 = vpop.f32.mrb[0].mxu0
        %v9104 = vadd.f32 %v8713, %v9103
        %v9105 = vpop.f32.mrb[0].mxu0
        %v9106 = vand.u32 %v7740, 4294901760
        %v9107 = vsub.f32 %v7740, %v9106
        %9108 = vmatprep.mubr.f32.mxu0 %v9107
        %v9109 = vand.u32 %v4680, 4294901760
        %v9110 = vsub.f32 %v4680, %v9109
        %9111 = vmatmul.mubr.f32.gmra.mrb[0].mxu0 %v9110
        %v9112 = vpop.f32.mrb[0].mxu0
        %v9113 = vadd.f32 %v8720, %v9112
        %v9114 = vpop.f32.mrb[0].mxu0
        %v9115 = vand.u32 %v7743, 4294901760
        %v9116 = vsub.f32 %v7743, %v9115
        %9117 = vmatprep.mubr.f32.mxu0 %v9116
        %v9118 = vand.u32 %v4682, 4294901760
        %v9119 = vsub.f32 %v4682, %v9118
        %9120 = vmatmul.mubr.f32.gmra.mrb[0].mxu0 %v9119
        %v9121 = vpop.f32.mrb[0].mxu0
        %v9122 = vadd.f32 %v8727, %v9121
        %v9123 = vpop.f32.mrb[0].mxu0
        %v9124 = vand.u32 %v7746, 4294901760
        %v9125 = vsub.f32 %v7746, %v9124
        %9126 = vmatprep.mubr.f32.mxu0 %v9125
        %v9127 = vand.u32 %v4684, 4294901760
        %v9128 = vsub.f32 %v4684, %v9127
        %9129 = vmatmul.mubr.f32.gmra.mrb[0].mxu0 %v9128
        %v9130 = vpop.f32.mrb[0].mxu0
        %v9131 = vadd.f32 %v8734, %v9130
        %v9132 = vpop.f32.mrb[0].mxu0
        %v9133 = vand.u32 %v7749, 4294901760
        %v9134 = vsub.f32 %v7749, %v9133
        %9135 = vmatprep.mubr.f32.mxu0 %v9134
        %v9136 = vand.u32 %v4686, 4294901760
        %v9137 = vsub.f32 %v4686, %v9136
        %9138 = vmatmul.mubr.f32.gmra.mrb[0].mxu0 %v9137
        %v9139 = vpop.f32.mrb[0].mxu0
        %v9140 = vadd.f32 %v8741, %v9139
        %v9141 = vpop.f32.mrb[0].mxu0
        %v9142 = vand.u32 %v7752, 4294901760
        %v9143 = vsub.f32 %v7752, %v9142
        %9144 = vmatprep.mubr.f32.mxu0 %v9143
        %v9145 = vand.u32 %v4688, 4294901760
        %v9146 = vsub.f32 %v4688, %v9145
        %9147 = vmatmul.mubr.f32.gmra.mrb[0].mxu0 %v9146
        %v9148 = vpop.f32.mrb[0].mxu0
        %v9149 = vadd.f32 %v8748, %v9148
        %v9150 = vpop.f32.mrb[0].mxu0
        %v9151 = vand.u32 %v7755, 4294901760
        %v9152 = vsub.f32 %v7755, %v9151
        %9153 = vmatprep.mubr.f32.mxu0 %v9152
        %v9154 = vand.u32 %v4690, 4294901760
        %v9155 = vsub.f32 %v4690, %v9154
        %9156 = vmatmul.mubr.f32.gmra.mrb[0].mxu0 %v9155
        %v9157 = vpop.f32.mrb[0].mxu0
        %v9158 = vadd.f32 %v8755, %v9157
        %v9159 = vpop.f32.mrb[0].mxu0
        %v9160 = vand.u32 %v7758, 4294901760
        %v9161 = vsub.f32 %v7758, %v9160
        %9162 = vmatprep.mubr.f32.mxu0 %v9161
        %v9163 = vand.u32 %v4692, 4294901760
        %v9164 = vsub.f32 %v4692, %v9163
        %9165 = vmatmul.mubr.f32.gmra.mrb[0].mxu0 %v9164
        %v9166 = vpop.f32.mrb[0].mxu0
        %v9167 = vadd.f32 %v8762, %v9166
        %v9168 = vpop.f32.mrb[0].mxu0
        %v9169 = vand.u32 %v7761, 4294901760
        %v9170 = vsub.f32 %v7761, %v9169
        %9171 = vmatprep.mubr.f32.mxu0 %v9170
        %v9172 = vand.u32 %v4694, 4294901760
        %v9173 = vsub.f32 %v4694, %v9172
        %9174 = vmatmul.mubr.f32.gmra.mrb[0].mxu0 %v9173
        %v9175 = vpop.f32.mrb[0].mxu0
        %v9176 = vadd.f32 %v8769, %v9175
        %v9177 = vpop.f32.mrb[0].mxu0
        %v9178 = vand.u32 %v7764, 4294901760
        %v9179 = vsub.f32 %v7764, %v9178
        %9180 = vmatprep.mubr.f32.mxu0 %v9179
        %v9181 = vand.u32 %v4696, 4294901760
        %v9182 = vsub.f32 %v4696, %v9181
        %9183 = vmatmul.mubr.f32.gmra.mrb[0].mxu0 %v9182
        %v9184 = vpop.f32.mrb[0].mxu0
        %v9185 = vadd.f32 %v8776, %v9184
        %v9186 = vpop.f32.mrb[0].mxu0
        %v9187 = vand.u32 %v7767, 4294901760
        %v9188 = vsub.f32 %v7767, %v9187
        %9189 = vmatprep.mubr.f32.mxu0 %v9188
        %v9190 = vand.u32 %v4698, 4294901760
        %v9191 = vsub.f32 %v4698, %v9190
        %9192 = vmatmul.mubr.f32.gmra.mrb[0].mxu0 %v9191
        %v9193 = vpop.f32.mrb[0].mxu0
        %v9194 = vadd.f32 %v8783, %v9193
        %v9195 = vpop.f32.mrb[0].mxu0
        %v9196 = vand.u32 %v7770, 4294901760
        %v9197 = vsub.f32 %v7770, %v9196
        %9198 = vmatprep.mubr.f32.mxu0 %v9197
        %v9199 = vand.u32 %v4700, 4294901760
        %v9200 = vsub.f32 %v4700, %v9199
        %9201 = vmatmul.mubr.f32.gmra.mrb[0].mxu0 %v9200
        %v9202 = vpop.f32.mrb[0].mxu0
        %v9203 = vadd.f32 %v8790, %v9202
        %v9204 = vpop.f32.mrb[0].mxu0
        %v9205 = vand.u32 %v7773, 4294901760
        %v9206 = vsub.f32 %v7773, %v9205
        %9207 = vmatprep.mubr.f32.mxu0 %v9206
        %v9208 = vand.u32 %v4702, 4294901760
        %v9209 = vsub.f32 %v4702, %v9208
        %9210 = vmatmul.mubr.f32.gmra.mrb[0].mxu0 %v9209
        %v9211 = vpop.f32.mrb[0].mxu0
        %v9212 = vadd.f32 %v8797, %v9211
        %v9213 = vpop.f32.mrb[0].mxu0
        %v9214 = vand.u32 %v7776, 4294901760
        %v9215 = vsub.f32 %v7776, %v9214
        %9216 = vmatprep.mubr.f32.mxu0 %v9215
        %v9217 = vand.u32 %v4704, 4294901760
        %v9218 = vsub.f32 %v4704, %v9217
        %9219 = vmatmul.mubr.f32.gmra.mrb[0].mxu0 %v9218
        %v9220 = vpop.f32.mrb[0].mxu0
        %v9221 = vadd.f32 %v8804, %v9220
        %v9222 = vpop.f32.mrb[0].mxu0
        %v9223 = vand.u32 %v7779, 4294901760
        %v9224 = vsub.f32 %v7779, %v9223
        %9225 = vmatprep.mubr.f32.mxu0 %v9224
        %v9226 = vand.u32 %v4706, 4294901760
        %v9227 = vsub.f32 %v4706, %v9226
        %9228 = vmatmul.mubr.f32.gmra.mrb[0].mxu0 %v9227
        %v9229 = vpop.f32.mrb[0].mxu0
        %v9230 = vadd.f32 %v8811, %v9229
        %v9231 = vpop.f32.mrb[0].mxu0
        %v9232 = vand.u32 %v7782, 4294901760
        %v9233 = vsub.f32 %v7782, %v9232
        %9234 = vmatprep.mubr.f32.mxu0 %v9233
        %v9235 = vand.u32 %v4708, 4294901760
        %v9236 = vsub.f32 %v4708, %v9235
        %9237 = vmatmul.mubr.f32.gmra.mrb[0].mxu0 %v9236
        %v9238 = vpop.f32.mrb[0].mxu0
        %v9239 = vadd.f32 %v8818, %v9238
        %v9240 = vpop.f32.mrb[0].mxu0
        %v9241 = vand.u32 %v7785, 4294901760
        %v9242 = vsub.f32 %v7785, %v9241
        %9243 = vmatprep.mubr.f32.mxu0 %v9242
        %v9244 = vand.u32 %v4710, 4294901760
        %v9245 = vsub.f32 %v4710, %v9244
        %9246 = vmatmul.mubr.f32.gmra.mrb[0].mxu0 %v9245
        %v9247 = vpop.f32.mrb[0].mxu0
        %v9248 = vadd.f32 %v8825, %v9247
        %v9249 = vpop.f32.mrb[0].mxu0
        %v9250 = vand.u32 %v7788, 4294901760
        %v9251 = vsub.f32 %v7788, %v9250
        %9252 = vmatprep.mubr.f32.mxu0 %v9251
        %v9253 = vand.u32 %v4712, 4294901760
        %v9254 = vsub.f32 %v4712, %v9253
        %9255 = vmatmul.mubr.f32.gmra.mrb[0].mxu0 %v9254
        %v9256 = vpop.f32.mrb[0].mxu0
        %v9257 = vadd.f32 %v8832, %v9256
        %v9258 = vpop.f32.mrb[0].mxu0
        %v9259 = vand.u32 %v7791, 4294901760
        %v9260 = vsub.f32 %v7791, %v9259
        %9261 = vmatprep.mubr.f32.mxu0 %v9260
        %v9262 = vand.u32 %v4714, 4294901760
        %v9263 = vsub.f32 %v4714, %v9262
        %9264 = vmatmul.mubr.f32.gmra.mrb[0].mxu0 %v9263
        %v9265 = vpop.f32.mrb[0].mxu0
        %v9266 = vadd.f32 %v8839, %v9265
        %v9267 = vpop.f32.mrb[0].mxu0
        %v9268 = vand.u32 %v7794, 4294901760
        %v9269 = vsub.f32 %v7794, %v9268
        %9270 = vmatprep.mubr.f32.mxu0 %v9269
        %v9271 = vand.u32 %v4716, 4294901760
        %v9272 = vsub.f32 %v4716, %v9271
        %9273 = vmatmul.mubr.f32.gmra.mrb[0].mxu0 %v9272
        %v9274 = vpop.f32.mrb[0].mxu0
        %v9275 = vadd.f32 %v8846, %v9274
        %v9276 = vpop.f32.mrb[0].mxu0
        %v9277 = vand.u32 %v7797, 4294901760
        %v9278 = vsub.f32 %v7797, %v9277
        %9279 = vmatprep.mubr.f32.mxu0 %v9278
        %v9280 = vand.u32 %v4718, 4294901760
        %v9281 = vsub.f32 %v4718, %v9280
        %9282 = vmatmul.mubr.f32.gmra.mrb[0].mxu0 %v9281
        %v9283 = vpop.f32.mrb[0].mxu0
        %v9284 = vadd.f32 %v8853, %v9283
        %v9285 = vpop.f32.mrb[0].mxu0
        %v9286 = vand.u32 %v7800, 4294901760
        %v9287 = vsub.f32 %v7800, %v9286
        %9288 = vmatprep.mubr.f32.mxu0 %v9287
        %v9289 = vand.u32 %v4720, 4294901760
        %v9290 = vsub.f32 %v4720, %v9289
        %9291 = vmatmul.mubr.f32.gmra.mrb[0].mxu0 %v9290
        %v9292 = vpop.f32.mrb[0].mxu0
        %v9293 = vadd.f32 %v8860, %v9292
        %v9294 = vpop.f32.mrb[0].mxu0
        %v9295 = vand.u32 %v7803, 4294901760
        %v9296 = vsub.f32 %v7803, %v9295
        %9297 = vmatprep.mubr.f32.mxu0 %v9296
        %v9298 = vand.u32 %v4722, 4294901760
        %v9299 = vsub.f32 %v4722, %v9298
        %9300 = vmatmul.mubr.f32.gmra.mrb[0].mxu0 %v9299
        %v9301 = vpop.f32.mrb[0].mxu0
        %v9302 = vadd.f32 %v8867, %v9301
        %v9303 = vpop.f32.mrb[0].mxu0
        %v9304 = vand.u32 %v7806, 4294901760
        %v9305 = vsub.f32 %v7806, %v9304
        %9306 = vmatprep.mubr.f32.mxu0 %v9305
        %v9307 = vand.u32 %v4724, 4294901760
        %v9308 = vsub.f32 %v4724, %v9307
        %9309 = vmatmul.mubr.f32.gmra.mrb[0].mxu0 %v9308
        %v9310 = vpop.f32.mrb[0].mxu0
        %v9311 = vadd.f32 %v8874, %v9310
        %v9312 = vpop.f32.mrb[0].mxu0
        %v9313 = vand.u32 %v7809, 4294901760
        %v9314 = vsub.f32 %v7809, %v9313
        %9315 = vmatprep.mubr.f32.mxu0 %v9314
        %v9316 = vand.u32 %v4726, 4294901760
        %v9317 = vsub.f32 %v4726, %v9316
        %9318 = vmatmul.mubr.f32.gmra.mrb[0].mxu0 %v9317
        %v9319 = vpop.f32.mrb[0].mxu0
        %v9320 = vadd.f32 %v8881, %v9319
        %v9321 = vpop.f32.mrb[0].mxu0
        %v9322 = vand.u32 %v7812, 4294901760
        %v9323 = vsub.f32 %v7812, %v9322
        %9324 = vmatprep.mubr.f32.mxu0 %v9323
        %v9325 = vand.u32 %v4728, 4294901760
        %v9326 = vsub.f32 %v4728, %v9325
        %9327 = vmatmul.mubr.f32.gmra.mrb[0].mxu0 %v9326
        %v9328 = vpop.f32.mrb[0].mxu0
        %v9329 = vadd.f32 %v8888, %v9328
        %v9330 = vpop.f32.mrb[0].mxu0
        %v9331 = vand.u32 %v7815, 4294901760
        %v9332 = vsub.f32 %v7815, %v9331
        %9333 = vmatprep.mubr.f32.mxu0 %v9332
        %v9334 = vand.u32 %v4730, 4294901760
        %v9335 = vsub.f32 %v4730, %v9334
        %9336 = vmatmul.mubr.f32.gmra.mrb[0].mxu0 %v9335
        %v9337 = vpop.f32.mrb[0].mxu0
        %v9338 = vadd.f32 %v8895, %v9337
        %v9339 = vpop.f32.mrb[0].mxu0
        %v9340 = vand.u32 %v7818, 4294901760
        %v9341 = vsub.f32 %v7818, %v9340
        %9342 = vmatprep.mubr.f32.mxu0 %v9341
        %v9343 = vand.u32 %v4732, 4294901760
        %v9344 = vsub.f32 %v4732, %v9343
        %9345 = vmatmul.mubr.f32.gmra.mrb[0].mxu0 %v9344
        %v9346 = vpop.f32.mrb[0].mxu0
        %v9347 = vadd.f32 %v8902, %v9346
        %v9348 = vpop.f32.mrb[0].mxu0
        %v9349 = vand.u32 %v7821, 4294901760
        %v9350 = vsub.f32 %v7821, %v9349
        %9351 = vmatprep.mubr.f32.mxu0 %v9350
        %v9352 = vand.u32 %v4734, 4294901760
        %v9353 = vsub.f32 %v4734, %v9352
        %9354 = vmatmul.mubr.f32.gmra.mrb[0].mxu0 %v9353
        %v9355 = vpop.f32.mrb[0].mxu0
        %v9356 = vadd.f32 %v8909, %v9355
        %v9357 = vpop.f32.mrb[0].mxu0
        %9358 = vdwg.mxu0
        %9359 = vmatprep.subr.mxu0 0.0
        %v9360 = vand.u32 %v2540, 4294901760
        %9361 = vmatpush1.msra.mxu0 %v9360
        %9362 = vmatprep.subr.mxu0 0.0
        %v9363 = vand.u32 %v2541, 4294901760
        %9364 = vmatpush1.msra.mxu0 %v9363
        %9365 = vmatprep.subr.mxu0 0.0
        %v9366 = vand.u32 %v2542, 4294901760
        %9367 = vmatpush1.msra.mxu0 %v9366
        %9368 = vmatprep.subr.mxu0 0.0
        %v9369 = vand.u32 %v2543, 4294901760
        %9370 = vmatpush1.msra.mxu0 %v9369
        %9371 = vmatprep.subr.mxu0 0.0
        %v9372 = vand.u32 %v2544, 4294901760
        %9373 = vmatpush1.msra.mxu0 %v9372
        %9374 = vmatprep.subr.mxu0 0.0
        %v9375 = vand.u32 %v2545, 4294901760
        %9376 = vmatpush1.msra.mxu0 %v9375
        %9377 = vmatprep.subr.mxu0 0.0
        %v9378 = vand.u32 %v2546, 4294901760
        %9379 = vmatpush1.msra.mxu0 %v9378
        %9380 = vmatprep.subr.mxu0 0.0
        %v9381 = vand.u32 %v2547, 4294901760
        %9382 = vmatpush1.msra.mxu0 %v9381
        %9383 = vmatprep.subr.mxu0 0.0
        %v9384 = vand.u32 %v2548, 4294901760
        %9385 = vmatpush1.msra.mxu0 %v9384
        %9386 = vmatprep.subr.mxu0 0.0
        %v9387 = vand.u32 %v2549, 4294901760
        %9388 = vmatpush1.msra.mxu0 %v9387
        %9389 = vmatprep.subr.mxu0 0.0
        %v9390 = vand.u32 %v2550, 4294901760
        %9391 = vmatpush1.msra.mxu0 %v9390
        %9392 = vmatprep.subr.mxu0 0.0
        %v9393 = vand.u32 %v2551, 4294901760
        %9394 = vmatpush1.msra.mxu0 %v9393
        %9395 = vmatprep.subr.mxu0 0.0
        %v9396 = vand.u32 %v2552, 4294901760
        %9397 = vmatpush1.msra.mxu0 %v9396
        %9398 = vmatprep.subr.mxu0 0.0
        %v9399 = vand.u32 %v2553, 4294901760
        %9400 = vmatpush1.msra.mxu0 %v9399
        %9401 = vmatprep.subr.mxu0 0.0
        %v9402 = vand.u32 %v2554, 4294901760
        %9403 = vmatpush1.msra.mxu0 %v9402
        %9404 = vmatprep.subr.mxu0 0.0
        %v9405 = vand.u32 %v2555, 4294901760
        %9406 = vmatpush1.msra.mxu0 %v9405
        %9407 = vmatprep.subr.mxu0 0.0
        %v9408 = vand.u32 %v2556, 4294901760
        %9409 = vmatpush1.msra.mxu0 %v9408
        %9410 = vmatprep.subr.mxu0 0.0
        %v9411 = vand.u32 %v2557, 4294901760
        %9412 = vmatpush1.msra.mxu0 %v9411
        %9413 = vmatprep.subr.mxu0 0.0
        %v9414 = vand.u32 %v2558, 4294901760
        %9415 = vmatpush1.msra.mxu0 %v9414
        %9416 = vmatprep.subr.mxu0 0.0
        %v9417 = vand.u32 %v7824, 4294901760
        %9418 = vmatpush1.msra.mxu0 %v9417
        %9419 = vmatprep.subr.mxu0 0.0
        %9420 = vmatpush1.msra.mxu0 0.0
        %9421 = vmatprep.subr.mxu0 0.0
        %9422 = vmatpush1.msra.mxu0 0.0
        %9423 = vmatprep.subr.mxu0 0.0
        %9424 = vmatpush1.msra.mxu0 0.0
        %9425 = vmatprep.subr.mxu0 0.0
        %9426 = vmatpush1.msra.mxu0 0.0
        %9427 = vmatprep.subr.mxu0 0.0
        %9428 = vmatpush1.msra.mxu0 0.0
        %9429 = vmatprep.subr.mxu0 0.0
        %9430 = vmatpush1.msra.mxu0 0.0
        %9431 = vmatprep.subr.mxu0 0.0
        %9432 = vmatpush1.msra.mxu0 0.0
        %9433 = vmatprep.subr.mxu0 0.0
        %9434 = vmatpush1.msra.mxu0 0.0
        %9435 = vmatprep.subr.mxu0 0.0
        %9436 = vmatpush1.msra.mxu0 0.0
        %9437 = vmatprep.subr.mxu0 0.0
        %9438 = vmatpush1.msra.mxu0 0.0
        %9439 = vmatprep.subr.mxu0 0.0
        %9440 = vmatpush1.msra.mxu0 0.0
        %9441 = vmatprep.subr.mxu0 0.0
        %9442 = vmatpush1.msra.mxu0 0.0
        %v9443 = vand.u32 %v7710, 4294901760
        %v9444 = vsub.f32 %v7710, %v9443
        %v9445 = vand.u32 %v9444, 4294901760
        %9446 = vmatprep.mubr.f32.mxu0 %v9445
        %v9447 = vand.u32 %v4660, 4294901760
        %v9448 = vsub.f32 %v4660, %v9447
        %v9449 = vand.u32 %v9448, 4294901760
        %9450 = vmatmul.mubr.f32.gmra.mrb[0].mxu0 %v9449
        %v9451 = vpop.f32.mrb[0].mxu0
        %v9452 = vadd.f32 %v9023, %v9451
        %v9453 = vpop.f32.mrb[0].mxu0
        %v9454 = vand.u32 %v7713, 4294901760
        %v9455 = vsub.f32 %v7713, %v9454
        %v9456 = vand.u32 %v9455, 4294901760
        %9457 = vmatprep.mubr.f32.mxu0 %v9456
        %v9458 = vand.u32 %v4662, 4294901760
        %v9459 = vsub.f32 %v4662, %v9458
        %v9460 = vand.u32 %v9459, 4294901760
        %9461 = vmatmul.mubr.f32.gmra.mrb[0].mxu0 %v9460
        %v9462 = vpop.f32.mrb[0].mxu0
        %v9463 = vadd.f32 %v9032, %v9462
        %v9464 = vpop.f32.mrb[0].mxu0
        %v9465 = vand.u32 %v7716, 4294901760
        %v9466 = vsub.f32 %v7716, %v9465
        %v9467 = vand.u32 %v9466, 4294901760
        %9468 = vmatprep.mubr.f32.mxu0 %v9467
        %v9469 = vand.u32 %v4664, 4294901760
        %v9470 = vsub.f32 %v4664, %v9469
        %v9471 = vand.u32 %v9470, 4294901760
        %9472 = vmatmul.mubr.f32.gmra.mrb[0].mxu0 %v9471
        %v9473 = vpop.f32.mrb[0].mxu0
        %v9474 = vadd.f32 %v9041, %v9473
        %v9475 = vpop.f32.mrb[0].mxu0
        %v9476 = vand.u32 %v7719, 4294901760
        %v9477 = vsub.f32 %v7719, %v9476
        %v9478 = vand.u32 %v9477, 4294901760
        %9479 = vmatprep.mubr.f32.mxu0 %v9478
        %v9480 = vand.u32 %v4666, 4294901760
        %v9481 = vsub.f32 %v4666, %v9480
        %v9482 = vand.u32 %v9481, 4294901760
        %9483 = vmatmul.mubr.f32.gmra.mrb[0].mxu0 %v9482
        %v9484 = vpop.f32.mrb[0].mxu0
        %v9485 = vadd.f32 %v9050, %v9484
        %v9486 = vpop.f32.mrb[0].mxu0
        %v9487 = vand.u32 %v7722, 4294901760
        %v9488 = vsub.f32 %v7722, %v9487
        %v9489 = vand.u32 %v9488, 4294901760
        %9490 = vmatprep.mubr.f32.mxu0 %v9489
        %v9491 = vand.u32 %v4668, 4294901760
        %v9492 = vsub.f32 %v4668, %v9491
        %v9493 = vand.u32 %v9492, 4294901760
        %9494 = vmatmul.mubr.f32.gmra.mrb[0].mxu0 %v9493
        %v9495 = vpop.f32.mrb[0].mxu0
        %v9496 = vadd.f32 %v9059, %v9495
        %v9497 = vpop.f32.mrb[0].mxu0
        %v9498 = vand.u32 %v7725, 4294901760
        %v9499 = vsub.f32 %v7725, %v9498
        %v9500 = vand.u32 %v9499, 4294901760
        %9501 = vmatprep.mubr.f32.mxu0 %v9500
        %v9502 = vand.u32 %v4670, 4294901760
        %v9503 = vsub.f32 %v4670, %v9502
        %v9504 = vand.u32 %v9503, 4294901760
        %9505 = vmatmul.mubr.f32.gmra.mrb[0].mxu0 %v9504
        %v9506 = vpop.f32.mrb[0].mxu0
        %v9507 = vadd.f32 %v9068, %v9506
        %v9508 = vpop.f32.mrb[0].mxu0
        %v9509 = vand.u32 %v7728, 4294901760
        %v9510 = vsub.f32 %v7728, %v9509
        %v9511 = vand.u32 %v9510, 4294901760
        %9512 = vmatprep.mubr.f32.mxu0 %v9511
        %v9513 = vand.u32 %v4672, 4294901760
        %v9514 = vsub.f32 %v4672, %v9513
        %v9515 = vand.u32 %v9514, 4294901760
        %9516 = vmatmul.mubr.f32.gmra.mrb[0].mxu0 %v9515
        %v9517 = vpop.f32.mrb[0].mxu0
        %v9518 = vadd.f32 %v9077, %v9517
        %v9519 = vpop.f32.mrb[0].mxu0
        %v9520 = vand.u32 %v7731, 4294901760
        %v9521 = vsub.f32 %v7731, %v9520
        %v9522 = vand.u32 %v9521, 4294901760
        %9523 = vmatprep.mubr.f32.mxu0 %v9522
        %v9524 = vand.u32 %v4674, 4294901760
        %v9525 = vsub.f32 %v4674, %v9524
        %v9526 = vand.u32 %v9525, 4294901760
        %9527 = vmatmul.mubr.f32.gmra.mrb[0].mxu0 %v9526
        %v9528 = vpop.f32.mrb[0].mxu0
        %v9529 = vadd.f32 %v9086, %v9528
        %v9530 = vpop.f32.mrb[0].mxu0
        %v9531 = vand.u32 %v7734, 4294901760
        %v9532 = vsub.f32 %v7734, %v9531
        %v9533 = vand.u32 %v9532, 4294901760
        %9534 = vmatprep.mubr.f32.mxu0 %v9533
        %v9535 = vand.u32 %v4676, 4294901760
        %v9536 = vsub.f32 %v4676, %v9535
        %v9537 = vand.u32 %v9536, 4294901760
        %9538 = vmatmul.mubr.f32.gmra.mrb[0].mxu0 %v9537
        %v9539 = vpop.f32.mrb[0].mxu0
        %v9540 = vadd.f32 %v9095, %v9539
        %v9541 = vpop.f32.mrb[0].mxu0
        %v9542 = vand.u32 %v7737, 4294901760
        %v9543 = vsub.f32 %v7737, %v9542
        %v9544 = vand.u32 %v9543, 4294901760
        %9545 = vmatprep.mubr.f32.mxu0 %v9544
        %v9546 = vand.u32 %v4678, 4294901760
        %v9547 = vsub.f32 %v4678, %v9546
        %v9548 = vand.u32 %v9547, 4294901760
        %9549 = vmatmul.mubr.f32.gmra.mrb[0].mxu0 %v9548
        %v9550 = vpop.f32.mrb[0].mxu0
        %v9551 = vadd.f32 %v9104, %v9550
        %v9552 = vpop.f32.mrb[0].mxu0
        %v9553 = vand.u32 %v7740, 4294901760
        %v9554 = vsub.f32 %v7740, %v9553
        %v9555 = vand.u32 %v9554, 4294901760
        %9556 = vmatprep.mubr.f32.mxu0 %v9555
        %v9557 = vand.u32 %v4680, 4294901760
        %v9558 = vsub.f32 %v4680, %v9557
        %v9559 = vand.u32 %v9558, 4294901760
        %9560 = vmatmul.mubr.f32.gmra.mrb[0].mxu0 %v9559
        %v9561 = vpop.f32.mrb[0].mxu0
        %v9562 = vadd.f32 %v9113, %v9561
        %v9563 = vpop.f32.mrb[0].mxu0
        %v9564 = vand.u32 %v7743, 4294901760
        %v9565 = vsub.f32 %v7743, %v9564
        %v9566 = vand.u32 %v9565, 4294901760
        %9567 = vmatprep.mubr.f32.mxu0 %v9566
        %v9568 = vand.u32 %v4682, 4294901760
        %v9569 = vsub.f32 %v4682, %v9568
        %v9570 = vand.u32 %v9569, 4294901760
        %9571 = vmatmul.mubr.f32.gmra.mrb[0].mxu0 %v9570
        %v9572 = vpop.f32.mrb[0].mxu0
        %v9573 = vadd.f32 %v9122, %v9572
        %v9574 = vpop.f32.mrb[0].mxu0
        %v9575 = vand.u32 %v7746, 4294901760
        %v9576 = vsub.f32 %v7746, %v9575
        %v9577 = vand.u32 %v9576, 4294901760
        %9578 = vmatprep.mubr.f32.mxu0 %v9577
        %v9579 = vand.u32 %v4684, 4294901760
        %v9580 = vsub.f32 %v4684, %v9579
        %v9581 = vand.u32 %v9580, 4294901760
        %9582 = vmatmul.mubr.f32.gmra.mrb[0].mxu0 %v9581
        %v9583 = vpop.f32.mrb[0].mxu0
        %v9584 = vadd.f32 %v9131, %v9583
        %v9585 = vpop.f32.mrb[0].mxu0
        %v9586 = vand.u32 %v7749, 4294901760
        %v9587 = vsub.f32 %v7749, %v9586
        %v9588 = vand.u32 %v9587, 4294901760
        %9589 = vmatprep.mubr.f32.mxu0 %v9588
        %v9590 = vand.u32 %v4686, 4294901760
        %v9591 = vsub.f32 %v4686, %v9590
        %v9592 = vand.u32 %v9591, 4294901760
        %9593 = vmatmul.mubr.f32.gmra.mrb[0].mxu0 %v9592
        %v9594 = vpop.f32.mrb[0].mxu0
        %v9595 = vadd.f32 %v9140, %v9594
        %v9596 = vpop.f32.mrb[0].mxu0
        %v9597 = vand.u32 %v7752, 4294901760
        %v9598 = vsub.f32 %v7752, %v9597
        %v9599 = vand.u32 %v9598, 4294901760
        %9600 = vmatprep.mubr.f32.mxu0 %v9599
        %v9601 = vand.u32 %v4688, 4294901760
        %v9602 = vsub.f32 %v4688, %v9601
        %v9603 = vand.u32 %v9602, 4294901760
        %9604 = vmatmul.mubr.f32.gmra.mrb[0].mxu0 %v9603
        %v9605 = vpop.f32.mrb[0].mxu0
        %v9606 = vadd.f32 %v9149, %v9605
        %v9607 = vpop.f32.mrb[0].mxu0
        %v9608 = vand.u32 %v7755, 4294901760
        %v9609 = vsub.f32 %v7755, %v9608
        %v9610 = vand.u32 %v9609, 4294901760
        %9611 = vmatprep.mubr.f32.mxu0 %v9610
        %v9612 = vand.u32 %v4690, 4294901760
        %v9613 = vsub.f32 %v4690, %v9612
        %v9614 = vand.u32 %v9613, 4294901760
        %9615 = vmatmul.mubr.f32.gmra.mrb[0].mxu0 %v9614
        %v9616 = vpop.f32.mrb[0].mxu0
        %v9617 = vadd.f32 %v9158, %v9616
        %v9618 = vpop.f32.mrb[0].mxu0
        %v9619 = vand.u32 %v7758, 4294901760
        %v9620 = vsub.f32 %v7758, %v9619
        %v9621 = vand.u32 %v9620, 4294901760
        %9622 = vmatprep.mubr.f32.mxu0 %v9621
        %v9623 = vand.u32 %v4692, 4294901760
        %v9624 = vsub.f32 %v4692, %v9623
        %v9625 = vand.u32 %v9624, 4294901760
        %9626 = vmatmul.mubr.f32.gmra.mrb[0].mxu0 %v9625
        %v9627 = vpop.f32.mrb[0].mxu0
        %v9628 = vadd.f32 %v9167, %v9627
        %v9629 = vpop.f32.mrb[0].mxu0
        %v9630 = vand.u32 %v7761, 4294901760
        %v9631 = vsub.f32 %v7761, %v9630
        %v9632 = vand.u32 %v9631, 4294901760
        %9633 = vmatprep.mubr.f32.mxu0 %v9632
        %v9634 = vand.u32 %v4694, 4294901760
        %v9635 = vsub.f32 %v4694, %v9634
        %v9636 = vand.u32 %v9635, 4294901760
        %9637 = vmatmul.mubr.f32.gmra.mrb[0].mxu0 %v9636
        %v9638 = vpop.f32.mrb[0].mxu0
        %v9639 = vadd.f32 %v9176, %v9638
        %v9640 = vpop.f32.mrb[0].mxu0
        %v9641 = vand.u32 %v7764, 4294901760
        %v9642 = vsub.f32 %v7764, %v9641
        %v9643 = vand.u32 %v9642, 4294901760
        %9644 = vmatprep.mubr.f32.mxu0 %v9643
        %v9645 = vand.u32 %v4696, 4294901760
        %v9646 = vsub.f32 %v4696, %v9645
        %v9647 = vand.u32 %v9646, 4294901760
        %9648 = vmatmul.mubr.f32.gmra.mrb[0].mxu0 %v9647
        %v9649 = vpop.f32.mrb[0].mxu0
        %v9650 = vadd.f32 %v9185, %v9649
        %v9651 = vpop.f32.mrb[0].mxu0
        %v9652 = vand.u32 %v7767, 4294901760
        %v9653 = vsub.f32 %v7767, %v9652
        %v9654 = vand.u32 %v9653, 4294901760
        %9655 = vmatprep.mubr.f32.mxu0 %v9654
        %v9656 = vand.u32 %v4698, 4294901760
        %v9657 = vsub.f32 %v4698, %v9656
        %v9658 = vand.u32 %v9657, 4294901760
        %9659 = vmatmul.mubr.f32.gmra.mrb[0].mxu0 %v9658
        %v9660 = vpop.f32.mrb[0].mxu0
        %v9661 = vadd.f32 %v9194, %v9660
        %v9662 = vpop.f32.mrb[0].mxu0
        %v9663 = vand.u32 %v7770, 4294901760
        %v9664 = vsub.f32 %v7770, %v9663
        %v9665 = vand.u32 %v9664, 4294901760
        %9666 = vmatprep.mubr.f32.mxu0 %v9665
        %v9667 = vand.u32 %v4700, 4294901760
        %v9668 = vsub.f32 %v4700, %v9667
        %v9669 = vand.u32 %v9668, 4294901760
        %9670 = vmatmul.mubr.f32.gmra.mrb[0].mxu0 %v9669
        %v9671 = vpop.f32.mrb[0].mxu0
        %v9672 = vadd.f32 %v9203, %v9671
        %v9673 = vpop.f32.mrb[0].mxu0
        %v9674 = vand.u32 %v7773, 4294901760
        %v9675 = vsub.f32 %v7773, %v9674
        %v9676 = vand.u32 %v9675, 4294901760
        %9677 = vmatprep.mubr.f32.mxu0 %v9676
        %v9678 = vand.u32 %v4702, 4294901760
        %v9679 = vsub.f32 %v4702, %v9678
        %v9680 = vand.u32 %v9679, 4294901760
        %9681 = vmatmul.mubr.f32.gmra.mrb[0].mxu0 %v9680
        %v9682 = vpop.f32.mrb[0].mxu0
        %v9683 = vadd.f32 %v9212, %v9682
        %v9684 = vpop.f32.mrb[0].mxu0
        %v9685 = vand.u32 %v7776, 4294901760
        %v9686 = vsub.f32 %v7776, %v9685
        %v9687 = vand.u32 %v9686, 4294901760
        %9688 = vmatprep.mubr.f32.mxu0 %v9687
        %v9689 = vand.u32 %v4704, 4294901760
        %v9690 = vsub.f32 %v4704, %v9689
        %v9691 = vand.u32 %v9690, 4294901760
        %9692 = vmatmul.mubr.f32.gmra.mrb[0].mxu0 %v9691
        %v9693 = vpop.f32.mrb[0].mxu0
        %v9694 = vadd.f32 %v9221, %v9693
        %v9695 = vpop.f32.mrb[0].mxu0
        %v9696 = vand.u32 %v7779, 4294901760
        %v9697 = vsub.f32 %v7779, %v9696
        %v9698 = vand.u32 %v9697, 4294901760
        %9699 = vmatprep.mubr.f32.mxu0 %v9698
        %v9700 = vand.u32 %v4706, 4294901760
        %v9701 = vsub.f32 %v4706, %v9700
        %v9702 = vand.u32 %v9701, 4294901760
        %9703 = vmatmul.mubr.f32.gmra.mrb[0].mxu0 %v9702
        %v9704 = vpop.f32.mrb[0].mxu0
        %v9705 = vadd.f32 %v9230, %v9704
        %v9706 = vpop.f32.mrb[0].mxu0
        %v9707 = vand.u32 %v7782, 4294901760
        %v9708 = vsub.f32 %v7782, %v9707
        %v9709 = vand.u32 %v9708, 4294901760
        %9710 = vmatprep.mubr.f32.mxu0 %v9709
        %v9711 = vand.u32 %v4708, 4294901760
        %v9712 = vsub.f32 %v4708, %v9711
        %v9713 = vand.u32 %v9712, 4294901760
        %9714 = vmatmul.mubr.f32.gmra.mrb[0].mxu0 %v9713
        %v9715 = vpop.f32.mrb[0].mxu0
        %v9716 = vadd.f32 %v9239, %v9715
        %v9717 = vpop.f32.mrb[0].mxu0
        %v9718 = vand.u32 %v7785, 4294901760
        %v9719 = vsub.f32 %v7785, %v9718
        %v9720 = vand.u32 %v9719, 4294901760
        %9721 = vmatprep.mubr.f32.mxu0 %v9720
        %v9722 = vand.u32 %v4710, 4294901760
        %v9723 = vsub.f32 %v4710, %v9722
        %v9724 = vand.u32 %v9723, 4294901760
        %9725 = vmatmul.mubr.f32.gmra.mrb[0].mxu0 %v9724
        %v9726 = vpop.f32.mrb[0].mxu0
        %v9727 = vadd.f32 %v9248, %v9726
        %v9728 = vpop.f32.mrb[0].mxu0
        %v9729 = vand.u32 %v7788, 4294901760
        %v9730 = vsub.f32 %v7788, %v9729
        %v9731 = vand.u32 %v9730, 4294901760
        %9732 = vmatprep.mubr.f32.mxu0 %v9731
        %v9733 = vand.u32 %v4712, 4294901760
        %v9734 = vsub.f32 %v4712, %v9733
        %v9735 = vand.u32 %v9734, 4294901760
        %9736 = vmatmul.mubr.f32.gmra.mrb[0].mxu0 %v9735
        %v9737 = vpop.f32.mrb[0].mxu0
        %v9738 = vadd.f32 %v9257, %v9737
        %v9739 = vpop.f32.mrb[0].mxu0
        %v9740 = vand.u32 %v7791, 4294901760
        %v9741 = vsub.f32 %v7791, %v9740
        %v9742 = vand.u32 %v9741, 4294901760
        %9743 = vmatprep.mubr.f32.mxu0 %v9742
        %v9744 = vand.u32 %v4714, 4294901760
        %v9745 = vsub.f32 %v4714, %v9744
        %v9746 = vand.u32 %v9745, 4294901760
        %9747 = vmatmul.mubr.f32.gmra.mrb[0].mxu0 %v9746
        %v9748 = vpop.f32.mrb[0].mxu0
        %v9749 = vadd.f32 %v9266, %v9748
        %v9750 = vpop.f32.mrb[0].mxu0
        %v9751 = vand.u32 %v7794, 4294901760
        %v9752 = vsub.f32 %v7794, %v9751
        %v9753 = vand.u32 %v9752, 4294901760
        %9754 = vmatprep.mubr.f32.mxu0 %v9753
        %v9755 = vand.u32 %v4716, 4294901760
        %v9756 = vsub.f32 %v4716, %v9755
        %v9757 = vand.u32 %v9756, 4294901760
        %9758 = vmatmul.mubr.f32.gmra.mrb[0].mxu0 %v9757
        %v9759 = vpop.f32.mrb[0].mxu0
        %v9760 = vadd.f32 %v9275, %v9759
        %v9761 = vpop.f32.mrb[0].mxu0
        %v9762 = vand.u32 %v7797, 4294901760
        %v9763 = vsub.f32 %v7797, %v9762
        %v9764 = vand.u32 %v9763, 4294901760
        %9765 = vmatprep.mubr.f32.mxu0 %v9764
        %v9766 = vand.u32 %v4718, 4294901760
        %v9767 = vsub.f32 %v4718, %v9766
        %v9768 = vand.u32 %v9767, 4294901760
        %9769 = vmatmul.mubr.f32.gmra.mrb[0].mxu0 %v9768
        %v9770 = vpop.f32.mrb[0].mxu0
        %v9771 = vadd.f32 %v9284, %v9770
        %v9772 = vpop.f32.mrb[0].mxu0
        %v9773 = vand.u32 %v7800, 4294901760
        %v9774 = vsub.f32 %v7800, %v9773
        %v9775 = vand.u32 %v9774, 4294901760
        %9776 = vmatprep.mubr.f32.mxu0 %v9775
        %v9777 = vand.u32 %v4720, 4294901760
        %v9778 = vsub.f32 %v4720, %v9777
        %v9779 = vand.u32 %v9778, 4294901760
        %9780 = vmatmul.mubr.f32.gmra.mrb[0].mxu0 %v9779
        %v9781 = vpop.f32.mrb[0].mxu0
        %v9782 = vadd.f32 %v9293, %v9781
        %v9783 = vpop.f32.mrb[0].mxu0
        %v9784 = vand.u32 %v7803, 4294901760
        %v9785 = vsub.f32 %v7803, %v9784
        %v9786 = vand.u32 %v9785, 4294901760
        %9787 = vmatprep.mubr.f32.mxu0 %v9786
        %v9788 = vand.u32 %v4722, 4294901760
        %v9789 = vsub.f32 %v4722, %v9788
        %v9790 = vand.u32 %v9789, 4294901760
        %9791 = vmatmul.mubr.f32.gmra.mrb[0].mxu0 %v9790
        %v9792 = vpop.f32.mrb[0].mxu0
        %v9793 = vadd.f32 %v9302, %v9792
        %v9794 = vpop.f32.mrb[0].mxu0
        %v9795 = vand.u32 %v7806, 4294901760
        %v9796 = vsub.f32 %v7806, %v9795
        %v9797 = vand.u32 %v9796, 4294901760
        %9798 = vmatprep.mubr.f32.mxu0 %v9797
        %v9799 = vand.u32 %v4724, 4294901760
        %v9800 = vsub.f32 %v4724, %v9799
        %v9801 = vand.u32 %v9800, 4294901760
        %9802 = vmatmul.mubr.f32.gmra.mrb[0].mxu0 %v9801
        %v9803 = vpop.f32.mrb[0].mxu0
        %v9804 = vadd.f32 %v9311, %v9803
        %v9805 = vpop.f32.mrb[0].mxu0
        %v9806 = vand.u32 %v7809, 4294901760
        %v9807 = vsub.f32 %v7809, %v9806
        %v9808 = vand.u32 %v9807, 4294901760
        %9809 = vmatprep.mubr.f32.mxu0 %v9808
        %v9810 = vand.u32 %v4726, 4294901760
        %v9811 = vsub.f32 %v4726, %v9810
        %v9812 = vand.u32 %v9811, 4294901760
        %9813 = vmatmul.mubr.f32.gmra.mrb[0].mxu0 %v9812
        %v9814 = vpop.f32.mrb[0].mxu0
        %v9815 = vadd.f32 %v9320, %v9814
        %v9816 = vpop.f32.mrb[0].mxu0
        %v9817 = vand.u32 %v7812, 4294901760
        %v9818 = vsub.f32 %v7812, %v9817
        %v9819 = vand.u32 %v9818, 4294901760
        %9820 = vmatprep.mubr.f32.mxu0 %v9819
        %v9821 = vand.u32 %v4728, 4294901760
        %v9822 = vsub.f32 %v4728, %v9821
        %v9823 = vand.u32 %v9822, 4294901760
        %9824 = vmatmul.mubr.f32.gmra.mrb[0].mxu0 %v9823
        %v9825 = vpop.f32.mrb[0].mxu0
        %v9826 = vadd.f32 %v9329, %v9825
        %v9827 = vpop.f32.mrb[0].mxu0
        %v9828 = vand.u32 %v7815, 4294901760
        %v9829 = vsub.f32 %v7815, %v9828
        %v9830 = vand.u32 %v9829, 4294901760
        %9831 = vmatprep.mubr.f32.mxu0 %v9830
        %v9832 = vand.u32 %v4730, 4294901760
        %v9833 = vsub.f32 %v4730, %v9832
        %v9834 = vand.u32 %v9833, 4294901760
        %9835 = vmatmul.mubr.f32.gmra.mrb[0].mxu0 %v9834
        %v9836 = vpop.f32.mrb[0].mxu0
        %v9837 = vadd.f32 %v9338, %v9836
        %v9838 = vpop.f32.mrb[0].mxu0
        %v9839 = vand.u32 %v7818, 4294901760
        %v9840 = vsub.f32 %v7818, %v9839
        %v9841 = vand.u32 %v9840, 4294901760
        %9842 = vmatprep.mubr.f32.mxu0 %v9841
        %v9843 = vand.u32 %v4732, 4294901760
        %v9844 = vsub.f32 %v4732, %v9843
        %v9845 = vand.u32 %v9844, 4294901760
        %9846 = vmatmul.mubr.f32.gmra.mrb[0].mxu0 %v9845
        %v9847 = vpop.f32.mrb[0].mxu0
        %v9848 = vadd.f32 %v9347, %v9847
        %v9849 = vpop.f32.mrb[0].mxu0
        %v9850 = vand.u32 %v7821, 4294901760
        %v9851 = vsub.f32 %v7821, %v9850
        %v9852 = vand.u32 %v9851, 4294901760
        %9853 = vmatprep.mubr.f32.mxu0 %v9852
        %v9854 = vand.u32 %v4734, 4294901760
        %v9855 = vsub.f32 %v4734, %v9854
        %v9856 = vand.u32 %v9855, 4294901760
        %9857 = vmatmul.mubr.f32.gmra.mrb[0].mxu0 %v9856
        %v9858 = vpop.f32.mrb[0].mxu0
        %v9859 = vadd.f32 %v9356, %v9858
        %v9860 = vpop.f32.mrb[0].mxu0
        %9861 = vdwg.mxu0
        %9862 = vmatprep.subr.mxu0 0.0
        %v9863 = vand.u32 %v2540, 4294901760
        %v9864 = vsub.f32 %v2540, %v9863
        %v9865 = vand.u32 %v9864, 4294901760
        %9866 = vmatpush1.msra.mxu0 %v9865
        %9867 = vmatprep.subr.mxu0 0.0
        %v9868 = vand.u32 %v2541, 4294901760
        %v9869 = vsub.f32 %v2541, %v9868
        %v9870 = vand.u32 %v9869, 4294901760
        %9871 = vmatpush1.msra.mxu0 %v9870
        %9872 = vmatprep.subr.mxu0 0.0
        %v9873 = vand.u32 %v2542, 4294901760
        %v9874 = vsub.f32 %v2542, %v9873
        %v9875 = vand.u32 %v9874, 4294901760
        %9876 = vmatpush1.msra.mxu0 %v9875
        %9877 = vmatprep.subr.mxu0 0.0
        %v9878 = vand.u32 %v2543, 4294901760
        %v9879 = vsub.f32 %v2543, %v9878
        %v9880 = vand.u32 %v9879, 4294901760
        %9881 = vmatpush1.msra.mxu0 %v9880
        %9882 = vmatprep.subr.mxu0 0.0
        %v9883 = vand.u32 %v2544, 4294901760
        %v9884 = vsub.f32 %v2544, %v9883
        %v9885 = vand.u32 %v9884, 4294901760
        %9886 = vmatpush1.msra.mxu0 %v9885
        %9887 = vmatprep.subr.mxu0 0.0
        %v9888 = vand.u32 %v2545, 4294901760
        %v9889 = vsub.f32 %v2545, %v9888
        %v9890 = vand.u32 %v9889, 4294901760
        %9891 = vmatpush1.msra.mxu0 %v9890
        %9892 = vmatprep.subr.mxu0 0.0
        %v9893 = vand.u32 %v2546, 4294901760
        %v9894 = vsub.f32 %v2546, %v9893
        %v9895 = vand.u32 %v9894, 4294901760
        %9896 = vmatpush1.msra.mxu0 %v9895
        %9897 = vmatprep.subr.mxu0 0.0
        %v9898 = vand.u32 %v2547, 4294901760
        %v9899 = vsub.f32 %v2547, %v9898
        %v9900 = vand.u32 %v9899, 4294901760
        %9901 = vmatpush1.msra.mxu0 %v9900
        %9902 = vmatprep.subr.mxu0 0.0
        %v9903 = vand.u32 %v2548, 4294901760
        %v9904 = vsub.f32 %v2548, %v9903
        %v9905 = vand.u32 %v9904, 4294901760
        %9906 = vmatpush1.msra.mxu0 %v9905
        %9907 = vmatprep.subr.mxu0 0.0
        %v9908 = vand.u32 %v2549, 4294901760
        %v9909 = vsub.f32 %v2549, %v9908
        %v9910 = vand.u32 %v9909, 4294901760
        %9911 = vmatpush1.msra.mxu0 %v9910
        %9912 = vmatprep.subr.mxu0 0.0
        %v9913 = vand.u32 %v2550, 4294901760
        %v9914 = vsub.f32 %v2550, %v9913
        %v9915 = vand.u32 %v9914, 4294901760
        %9916 = vmatpush1.msra.mxu0 %v9915
        %9917 = vmatprep.subr.mxu0 0.0
        %v9918 = vand.u32 %v2551, 4294901760
        %v9919 = vsub.f32 %v2551, %v9918
        %v9920 = vand.u32 %v9919, 4294901760
        %9921 = vmatpush1.msra.mxu0 %v9920
        %9922 = vmatprep.subr.mxu0 0.0
        %v9923 = vand.u32 %v2552, 4294901760
        %v9924 = vsub.f32 %v2552, %v9923
        %v9925 = vand.u32 %v9924, 4294901760
        %9926 = vmatpush1.msra.mxu0 %v9925
        %9927 = vmatprep.subr.mxu0 0.0
        %v9928 = vand.u32 %v2553, 4294901760
        %v9929 = vsub.f32 %v2553, %v9928
        %v9930 = vand.u32 %v9929, 4294901760
        %9931 = vmatpush1.msra.mxu0 %v9930
        %9932 = vmatprep.subr.mxu0 0.0
        %v9933 = vand.u32 %v2554, 4294901760
        %v9934 = vsub.f32 %v2554, %v9933
        %v9935 = vand.u32 %v9934, 4294901760
        %9936 = vmatpush1.msra.mxu0 %v9935
        %9937 = vmatprep.subr.mxu0 0.0
        %v9938 = vand.u32 %v2555, 4294901760
        %v9939 = vsub.f32 %v2555, %v9938
        %v9940 = vand.u32 %v9939, 4294901760
        %9941 = vmatpush1.msra.mxu0 %v9940
        %9942 = vmatprep.subr.mxu0 0.0
        %v9943 = vand.u32 %v2556, 4294901760
        %v9944 = vsub.f32 %v2556, %v9943
        %v9945 = vand.u32 %v9944, 4294901760
        %9946 = vmatpush1.msra.mxu0 %v9945
        %9947 = vmatprep.subr.mxu0 0.0
        %v9948 = vand.u32 %v2557, 4294901760
        %v9949 = vsub.f32 %v2557, %v9948
        %v9950 = vand.u32 %v9949, 4294901760
        %9951 = vmatpush1.msra.mxu0 %v9950
        %9952 = vmatprep.subr.mxu0 0.0
        %v9953 = vand.u32 %v2558, 4294901760
        %v9954 = vsub.f32 %v2558, %v9953
        %v9955 = vand.u32 %v9954, 4294901760
        %9956 = vmatpush1.msra.mxu0 %v9955
        %9957 = vmatprep.subr.mxu0 0.0
        %v9958 = vand.u32 %v7824, 4294901760
        %v9959 = vsub.f32 %v7824, %v9958
        %v9960 = vand.u32 %v9959, 4294901760
        %9961 = vmatpush1.msra.mxu0 %v9960
        %9962 = vmatprep.subr.mxu0 0.0
        %9963 = vmatpush1.msra.mxu0 0.0
        %9964 = vmatprep.subr.mxu0 0.0
        %9965 = vmatpush1.msra.mxu0 0.0
        %9966 = vmatprep.subr.mxu0 0.0
        %9967 = vmatpush1.msra.mxu0 0.0
        %9968 = vmatprep.subr.mxu0 0.0
        %9969 = vmatpush1.msra.mxu0 0.0
        %9970 = vmatprep.subr.mxu0 0.0
        %9971 = vmatpush1.msra.mxu0 0.0
        %9972 = vmatprep.subr.mxu0 0.0
        %9973 = vmatpush1.msra.mxu0 0.0
        %9974 = vmatprep.subr.mxu0 0.0
        %9975 = vmatpush1.msra.mxu0 0.0
        %9976 = vmatprep.subr.mxu0 0.0
        %9977 = vmatpush1.msra.mxu0 0.0
        %9978 = vmatprep.subr.mxu0 0.0
        %9979 = vmatpush1.msra.mxu0 0.0
        %9980 = vmatprep.subr.mxu0 0.0
        %9981 = vmatpush1.msra.mxu0 0.0
        %9982 = vmatprep.subr.mxu0 0.0
        %9983 = vmatpush1.msra.mxu0 0.0
        %9984 = vmatprep.subr.mxu0 0.0
        %9985 = vmatpush1.msra.mxu0 0.0
        %v9986 = vand.u32 %v7710, 4294901760
        %9987 = vmatprep.mubr.f32.mxu0 %v9986
        %v9988 = vand.u32 %v4660, 4294901760
        %9989 = vmatmul.mubr.f32.gmra.mrb[0].mxu0 %v9988
        %v9990 = vpop.f32.mrb[0].mxu0
        %v9991 = vadd.f32 %v9452, %v9990
        %v9992 = vpop.f32.mrb[0].mxu0
        %v9993 = vand.u32 %v7713, 4294901760
        %9994 = vmatprep.mubr.f32.mxu0 %v9993
        %v9995 = vand.u32 %v4662, 4294901760
        %9996 = vmatmul.mubr.f32.gmra.mrb[0].mxu0 %v9995
        %v9997 = vpop.f32.mrb[0].mxu0
        %v9998 = vadd.f32 %v9463, %v9997
        %v9999 = vpop.f32.mrb[0].mxu0
        %v10000 = vand.u32 %v7716, 4294901760
        %10001 = vmatprep.mubr.f32.mxu0 %v10000
        %v10002 = vand.u32 %v4664, 4294901760
        %10003 = vmatmul.mubr.f32.gmra.mrb[0].mxu0 %v10002
        %v10004 = vpop.f32.mrb[0].mxu0
        %v10005 = vadd.f32 %v9474, %v10004
        %v10006 = vpop.f32.mrb[0].mxu0
        %v10007 = vand.u32 %v7719, 4294901760
        %10008 = vmatprep.mubr.f32.mxu0 %v10007
        %v10009 = vand.u32 %v4666, 4294901760
        %10010 = vmatmul.mubr.f32.gmra.mrb[0].mxu0 %v10009
        %v10011 = vpop.f32.mrb[0].mxu0
        %v10012 = vadd.f32 %v9485, %v10011
        %v10013 = vpop.f32.mrb[0].mxu0
        %v10014 = vand.u32 %v7722, 4294901760
        %10015 = vmatprep.mubr.f32.mxu0 %v10014
        %v10016 = vand.u32 %v4668, 4294901760
        %10017 = vmatmul.mubr.f32.gmra.mrb[0].mxu0 %v10016
        %v10018 = vpop.f32.mrb[0].mxu0
        %v10019 = vadd.f32 %v9496, %v10018
        %v10020 = vpop.f32.mrb[0].mxu0
        %v10021 = vand.u32 %v7725, 4294901760
        %10022 = vmatprep.mubr.f32.mxu0 %v10021
        %v10023 = vand.u32 %v4670, 4294901760
        %10024 = vmatmul.mubr.f32.gmra.mrb[0].mxu0 %v10023
        %v10025 = vpop.f32.mrb[0].mxu0
        %v10026 = vadd.f32 %v9507, %v10025
        %v10027 = vpop.f32.mrb[0].mxu0
        %v10028 = vand.u32 %v7728, 4294901760
        %10029 = vmatprep.mubr.f32.mxu0 %v10028
        %v10030 = vand.u32 %v4672, 4294901760
        %10031 = vmatmul.mubr.f32.gmra.mrb[0].mxu0 %v10030
        %v10032 = vpop.f32.mrb[0].mxu0
        %v10033 = vadd.f32 %v9518, %v10032
        %v10034 = vpop.f32.mrb[0].mxu0
        %v10035 = vand.u32 %v7731, 4294901760
        %10036 = vmatprep.mubr.f32.mxu0 %v10035
        %v10037 = vand.u32 %v4674, 4294901760
        %10038 = vmatmul.mubr.f32.gmra.mrb[0].mxu0 %v10037
        %v10039 = vpop.f32.mrb[0].mxu0
        %v10040 = vadd.f32 %v9529, %v10039
        %v10041 = vpop.f32.mrb[0].mxu0
        %v10042 = vand.u32 %v7734, 4294901760
        %10043 = vmatprep.mubr.f32.mxu0 %v10042
        %v10044 = vand.u32 %v4676, 4294901760
        %10045 = vmatmul.mubr.f32.gmra.mrb[0].mxu0 %v10044
        %v10046 = vpop.f32.mrb[0].mxu0
        %v10047 = vadd.f32 %v9540, %v10046
        %v10048 = vpop.f32.mrb[0].mxu0
        %v10049 = vand.u32 %v7737, 4294901760
        %10050 = vmatprep.mubr.f32.mxu0 %v10049
        %v10051 = vand.u32 %v4678, 4294901760
        %10052 = vmatmul.mubr.f32.gmra.mrb[0].mxu0 %v10051
        %v10053 = vpop.f32.mrb[0].mxu0
        %v10054 = vadd.f32 %v9551, %v10053
        %v10055 = vpop.f32.mrb[0].mxu0
        %v10056 = vand.u32 %v7740, 4294901760
        %10057 = vmatprep.mubr.f32.mxu0 %v10056
        %v10058 = vand.u32 %v4680, 4294901760
        %10059 = vmatmul.mubr.f32.gmra.mrb[0].mxu0 %v10058
        %v10060 = vpop.f32.mrb[0].mxu0
        %v10061 = vadd.f32 %v9562, %v10060
        %v10062 = vpop.f32.mrb[0].mxu0
        %v10063 = vand.u32 %v7743, 4294901760
        %10064 = vmatprep.mubr.f32.mxu0 %v10063
        %v10065 = vand.u32 %v4682, 4294901760
        %10066 = vmatmul.mubr.f32.gmra.mrb[0].mxu0 %v10065
        %v10067 = vpop.f32.mrb[0].mxu0
        %v10068 = vadd.f32 %v9573, %v10067
        %v10069 = vpop.f32.mrb[0].mxu0
        %v10070 = vand.u32 %v7746, 4294901760
        %10071 = vmatprep.mubr.f32.mxu0 %v10070
        %v10072 = vand.u32 %v4684, 4294901760
        %10073 = vmatmul.mubr.f32.gmra.mrb[0].mxu0 %v10072
        %v10074 = vpop.f32.mrb[0].mxu0
        %v10075 = vadd.f32 %v9584, %v10074
        %v10076 = vpop.f32.mrb[0].mxu0
        %v10077 = vand.u32 %v7749, 4294901760
        %10078 = vmatprep.mubr.f32.mxu0 %v10077
        %v10079 = vand.u32 %v4686, 4294901760
        %10080 = vmatmul.mubr.f32.gmra.mrb[0].mxu0 %v10079
        %v10081 = vpop.f32.mrb[0].mxu0
        %v10082 = vadd.f32 %v9595, %v10081
        %v10083 = vpop.f32.mrb[0].mxu0
        %v10084 = vand.u32 %v7752, 4294901760
        %10085 = vmatprep.mubr.f32.mxu0 %v10084
        %v10086 = vand.u32 %v4688, 4294901760
        %10087 = vmatmul.mubr.f32.gmra.mrb[0].mxu0 %v10086
        %v10088 = vpop.f32.mrb[0].mxu0
        %v10089 = vadd.f32 %v9606, %v10088
        %v10090 = vpop.f32.mrb[0].mxu0
        %v10091 = vand.u32 %v7755, 4294901760
        %10092 = vmatprep.mubr.f32.mxu0 %v10091
        %v10093 = vand.u32 %v4690, 4294901760
        %10094 = vmatmul.mubr.f32.gmra.mrb[0].mxu0 %v10093
        %v10095 = vpop.f32.mrb[0].mxu0
        %v10096 = vadd.f32 %v9617, %v10095
        %v10097 = vpop.f32.mrb[0].mxu0
        %v10098 = vand.u32 %v7758, 4294901760
        %10099 = vmatprep.mubr.f32.mxu0 %v10098
        %v10100 = vand.u32 %v4692, 4294901760
        %10101 = vmatmul.mubr.f32.gmra.mrb[0].mxu0 %v10100
        %v10102 = vpop.f32.mrb[0].mxu0
        %v10103 = vadd.f32 %v9628, %v10102
        %v10104 = vpop.f32.mrb[0].mxu0
        %v10105 = vand.u32 %v7761, 4294901760
        %10106 = vmatprep.mubr.f32.mxu0 %v10105
        %v10107 = vand.u32 %v4694, 4294901760
        %10108 = vmatmul.mubr.f32.gmra.mrb[0].mxu0 %v10107
        %v10109 = vpop.f32.mrb[0].mxu0
        %v10110 = vadd.f32 %v9639, %v10109
        %v10111 = vpop.f32.mrb[0].mxu0
        %v10112 = vand.u32 %v7764, 4294901760
        %10113 = vmatprep.mubr.f32.mxu0 %v10112
        %v10114 = vand.u32 %v4696, 4294901760
        %10115 = vmatmul.mubr.f32.gmra.mrb[0].mxu0 %v10114
        %v10116 = vpop.f32.mrb[0].mxu0
        %v10117 = vadd.f32 %v9650, %v10116
        %v10118 = vpop.f32.mrb[0].mxu0
        %v10119 = vand.u32 %v7767, 4294901760
        %10120 = vmatprep.mubr.f32.mxu0 %v10119
        %v10121 = vand.u32 %v4698, 4294901760
        %10122 = vmatmul.mubr.f32.gmra.mrb[0].mxu0 %v10121
        %v10123 = vpop.f32.mrb[0].mxu0
        %v10124 = vadd.f32 %v9661, %v10123
        %v10125 = vpop.f32.mrb[0].mxu0
        %v10126 = vand.u32 %v7770, 4294901760
        %10127 = vmatprep.mubr.f32.mxu0 %v10126
        %v10128 = vand.u32 %v4700, 4294901760
        %10129 = vmatmul.mubr.f32.gmra.mrb[0].mxu0 %v10128
        %v10130 = vpop.f32.mrb[0].mxu0
        %v10131 = vadd.f32 %v9672, %v10130
        %v10132 = vpop.f32.mrb[0].mxu0
        %v10133 = vand.u32 %v7773, 4294901760
        %10134 = vmatprep.mubr.f32.mxu0 %v10133
        %v10135 = vand.u32 %v4702, 4294901760
        %10136 = vmatmul.mubr.f32.gmra.mrb[0].mxu0 %v10135
        %v10137 = vpop.f32.mrb[0].mxu0
        %v10138 = vadd.f32 %v9683, %v10137
        %v10139 = vpop.f32.mrb[0].mxu0
        %v10140 = vand.u32 %v7776, 4294901760
        %10141 = vmatprep.mubr.f32.mxu0 %v10140
        %v10142 = vand.u32 %v4704, 4294901760
        %10143 = vmatmul.mubr.f32.gmra.mrb[0].mxu0 %v10142
        %v10144 = vpop.f32.mrb[0].mxu0
        %v10145 = vadd.f32 %v9694, %v10144
        %v10146 = vpop.f32.mrb[0].mxu0
        %v10147 = vand.u32 %v7779, 4294901760
        %10148 = vmatprep.mubr.f32.mxu0 %v10147
        %v10149 = vand.u32 %v4706, 4294901760
        %10150 = vmatmul.mubr.f32.gmra.mrb[0].mxu0 %v10149
        %v10151 = vpop.f32.mrb[0].mxu0
        %v10152 = vadd.f32 %v9705, %v10151
        %v10153 = vpop.f32.mrb[0].mxu0
        %v10154 = vand.u32 %v7782, 4294901760
        %10155 = vmatprep.mubr.f32.mxu0 %v10154
        %v10156 = vand.u32 %v4708, 4294901760
        %10157 = vmatmul.mubr.f32.gmra.mrb[0].mxu0 %v10156
        %v10158 = vpop.f32.mrb[0].mxu0
        %v10159 = vadd.f32 %v9716, %v10158
        %v10160 = vpop.f32.mrb[0].mxu0
        %v10161 = vand.u32 %v7785, 4294901760
        %10162 = vmatprep.mubr.f32.mxu0 %v10161
        %v10163 = vand.u32 %v4710, 4294901760
        %10164 = vmatmul.mubr.f32.gmra.mrb[0].mxu0 %v10163
        %v10165 = vpop.f32.mrb[0].mxu0
        %v10166 = vadd.f32 %v9727, %v10165
        %v10167 = vpop.f32.mrb[0].mxu0
        %v10168 = vand.u32 %v7788, 4294901760
        %10169 = vmatprep.mubr.f32.mxu0 %v10168
        %v10170 = vand.u32 %v4712, 4294901760
        %10171 = vmatmul.mubr.f32.gmra.mrb[0].mxu0 %v10170
        %v10172 = vpop.f32.mrb[0].mxu0
        %v10173 = vadd.f32 %v9738, %v10172
        %v10174 = vpop.f32.mrb[0].mxu0
        %v10175 = vand.u32 %v7791, 4294901760
        %10176 = vmatprep.mubr.f32.mxu0 %v10175
        %v10177 = vand.u32 %v4714, 4294901760
        %10178 = vmatmul.mubr.f32.gmra.mrb[0].mxu0 %v10177
        %v10179 = vpop.f32.mrb[0].mxu0
        %v10180 = vadd.f32 %v9749, %v10179
        %v10181 = vpop.f32.mrb[0].mxu0
        %v10182 = vand.u32 %v7794, 4294901760
        %10183 = vmatprep.mubr.f32.mxu0 %v10182
        %v10184 = vand.u32 %v4716, 4294901760
        %10185 = vmatmul.mubr.f32.gmra.mrb[0].mxu0 %v10184
        %v10186 = vpop.f32.mrb[0].mxu0
        %v10187 = vadd.f32 %v9760, %v10186
        %v10188 = vpop.f32.mrb[0].mxu0
        %v10189 = vand.u32 %v7797, 4294901760
        %10190 = vmatprep.mubr.f32.mxu0 %v10189
        %v10191 = vand.u32 %v4718, 4294901760
        %10192 = vmatmul.mubr.f32.gmra.mrb[0].mxu0 %v10191
        %v10193 = vpop.f32.mrb[0].mxu0
        %v10194 = vadd.f32 %v9771, %v10193
        %v10195 = vpop.f32.mrb[0].mxu0
        %v10196 = vand.u32 %v7800, 4294901760
        %10197 = vmatprep.mubr.f32.mxu0 %v10196
        %v10198 = vand.u32 %v4720, 4294901760
        %10199 = vmatmul.mubr.f32.gmra.mrb[0].mxu0 %v10198
        %v10200 = vpop.f32.mrb[0].mxu0
        %v10201 = vadd.f32 %v9782, %v10200
        %v10202 = vpop.f32.mrb[0].mxu0
        %v10203 = vand.u32 %v7803, 4294901760
        %10204 = vmatprep.mubr.f32.mxu0 %v10203
        %v10205 = vand.u32 %v4722, 4294901760
        %10206 = vmatmul.mubr.f32.gmra.mrb[0].mxu0 %v10205
        %v10207 = vpop.f32.mrb[0].mxu0
        %v10208 = vadd.f32 %v9793, %v10207
        %v10209 = vpop.f32.mrb[0].mxu0
        %v10210 = vand.u32 %v7806, 4294901760
        %10211 = vmatprep.mubr.f32.mxu0 %v10210
        %v10212 = vand.u32 %v4724, 4294901760
        %10213 = vmatmul.mubr.f32.gmra.mrb[0].mxu0 %v10212
        %v10214 = vpop.f32.mrb[0].mxu0
        %v10215 = vadd.f32 %v9804, %v10214
        %v10216 = vpop.f32.mrb[0].mxu0
        %v10217 = vand.u32 %v7809, 4294901760
        %10218 = vmatprep.mubr.f32.mxu0 %v10217
        %v10219 = vand.u32 %v4726, 4294901760
        %10220 = vmatmul.mubr.f32.gmra.mrb[0].mxu0 %v10219
        %v10221 = vpop.f32.mrb[0].mxu0
        %v10222 = vadd.f32 %v9815, %v10221
        %v10223 = vpop.f32.mrb[0].mxu0
        %v10224 = vand.u32 %v7812, 4294901760
        %10225 = vmatprep.mubr.f32.mxu0 %v10224
        %v10226 = vand.u32 %v4728, 4294901760
        %10227 = vmatmul.mubr.f32.gmra.mrb[0].mxu0 %v10226
        %v10228 = vpop.f32.mrb[0].mxu0
        %v10229 = vadd.f32 %v9826, %v10228
        %v10230 = vpop.f32.mrb[0].mxu0
        %v10231 = vand.u32 %v7815, 4294901760
        %10232 = vmatprep.mubr.f32.mxu0 %v10231
        %v10233 = vand.u32 %v4730, 4294901760
        %10234 = vmatmul.mubr.f32.gmra.mrb[0].mxu0 %v10233
        %v10235 = vpop.f32.mrb[0].mxu0
        %v10236 = vadd.f32 %v9837, %v10235
        %v10237 = vpop.f32.mrb[0].mxu0
        %v10238 = vand.u32 %v7818, 4294901760
        %10239 = vmatprep.mubr.f32.mxu0 %v10238
        %v10240 = vand.u32 %v4732, 4294901760
        %10241 = vmatmul.mubr.f32.gmra.mrb[0].mxu0 %v10240
        %v10242 = vpop.f32.mrb[0].mxu0
        %v10243 = vadd.f32 %v9848, %v10242
        %v10244 = vpop.f32.mrb[0].mxu0
        %v10245 = vand.u32 %v7821, 4294901760
        %10246 = vmatprep.mubr.f32.mxu0 %v10245
        %v10247 = vand.u32 %v4734, 4294901760
        %10248 = vmatmul.mubr.f32.gmra.mrb[0].mxu0 %v10247
        %v10249 = vpop.f32.mrb[0].mxu0
        %v10250 = vadd.f32 %v9859, %v10249
        %v10251 = vpop.f32.mrb[0].mxu0
        %10252 = vdwg.mxu0
        %10253 = vmatprep.subr.mxu0 0.0
        %v10254 = vand.u32 %v2540, 4294901760
        %10255 = vmatpush1.msra.mxu0 %v10254
        %10256 = vmatprep.subr.mxu0 0.0
        %v10257 = vand.u32 %v2541, 4294901760
        %10258 = vmatpush1.msra.mxu0 %v10257
        %10259 = vmatprep.subr.mxu0 0.0
        %v10260 = vand.u32 %v2542, 4294901760
        %10261 = vmatpush1.msra.mxu0 %v10260
        %10262 = vmatprep.subr.mxu0 0.0
        %v10263 = vand.u32 %v2543, 4294901760
        %10264 = vmatpush1.msra.mxu0 %v10263
        %10265 = vmatprep.subr.mxu0 0.0
        %v10266 = vand.u32 %v2544, 4294901760
        %10267 = vmatpush1.msra.mxu0 %v10266
        %10268 = vmatprep.subr.mxu0 0.0
        %v10269 = vand.u32 %v2545, 4294901760
        %10270 = vmatpush1.msra.mxu0 %v10269
        %10271 = vmatprep.subr.mxu0 0.0
        %v10272 = vand.u32 %v2546, 4294901760
        %10273 = vmatpush1.msra.mxu0 %v10272
        %10274 = vmatprep.subr.mxu0 0.0
        %v10275 = vand.u32 %v2547, 4294901760
        %10276 = vmatpush1.msra.mxu0 %v10275
        %10277 = vmatprep.subr.mxu0 0.0
        %v10278 = vand.u32 %v2548, 4294901760
        %10279 = vmatpush1.msra.mxu0 %v10278
        %10280 = vmatprep.subr.mxu0 0.0
        %v10281 = vand.u32 %v2549, 4294901760
        %10282 = vmatpush1.msra.mxu0 %v10281
        %10283 = vmatprep.subr.mxu0 0.0
        %v10284 = vand.u32 %v2550, 4294901760
        %10285 = vmatpush1.msra.mxu0 %v10284
        %10286 = vmatprep.subr.mxu0 0.0
        %v10287 = vand.u32 %v2551, 4294901760
        %10288 = vmatpush1.msra.mxu0 %v10287
        %10289 = vmatprep.subr.mxu0 0.0
        %v10290 = vand.u32 %v2552, 4294901760
        %10291 = vmatpush1.msra.mxu0 %v10290
        %10292 = vmatprep.subr.mxu0 0.0
        %v10293 = vand.u32 %v2553, 4294901760
        %10294 = vmatpush1.msra.mxu0 %v10293
        %10295 = vmatprep.subr.mxu0 0.0
        %v10296 = vand.u32 %v2554, 4294901760
        %10297 = vmatpush1.msra.mxu0 %v10296
        %10298 = vmatprep.subr.mxu0 0.0
        %v10299 = vand.u32 %v2555, 4294901760
        %10300 = vmatpush1.msra.mxu0 %v10299
        %10301 = vmatprep.subr.mxu0 0.0
        %v10302 = vand.u32 %v2556, 4294901760
        %10303 = vmatpush1.msra.mxu0 %v10302
        %10304 = vmatprep.subr.mxu0 0.0
        %v10305 = vand.u32 %v2557, 4294901760
        %10306 = vmatpush1.msra.mxu0 %v10305
        %10307 = vmatprep.subr.mxu0 0.0
        %v10308 = vand.u32 %v2558, 4294901760
        %10309 = vmatpush1.msra.mxu0 %v10308
        %10310 = vmatprep.subr.mxu0 0.0
        %v10311 = vand.u32 %v7824, 4294901760
        %10312 = vmatpush1.msra.mxu0 %v10311
        %10313 = vmatprep.subr.mxu0 0.0
        %10314 = vmatpush1.msra.mxu0 0.0
        %10315 = vmatprep.subr.mxu0 0.0
        %10316 = vmatpush1.msra.mxu0 0.0
        %10317 = vmatprep.subr.mxu0 0.0
        %10318 = vmatpush1.msra.mxu0 0.0
        %10319 = vmatprep.subr.mxu0 0.0
        %10320 = vmatpush1.msra.mxu0 0.0
        %10321 = vmatprep.subr.mxu0 0.0
        %10322 = vmatpush1.msra.mxu0 0.0
        %10323 = vmatprep.subr.mxu0 0.0
        %10324 = vmatpush1.msra.mxu0 0.0
        %10325 = vmatprep.subr.mxu0 0.0
        %10326 = vmatpush1.msra.mxu0 0.0
        %10327 = vmatprep.subr.mxu0 0.0
        %10328 = vmatpush1.msra.mxu0 0.0
        %10329 = vmatprep.subr.mxu0 0.0
        %10330 = vmatpush1.msra.mxu0 0.0
        %10331 = vmatprep.subr.mxu0 0.0
        %10332 = vmatpush1.msra.mxu0 0.0
        %10333 = vmatprep.subr.mxu0 0.0
        %10334 = vmatpush1.msra.mxu0 0.0
        %10335 = vmatprep.subr.mxu0 0.0
        %10336 = vmatpush1.msra.mxu0 0.0
        %v10337 = vand.u32 %v7710, 4294901760
        %10338 = vmatprep.mubr.f32.mxu0 %v10337
        %v10339 = vand.u32 %v4660, 4294901760
        %10340 = vmatmul.mubr.f32.gmra.mrb[0].mxu0 %v10339
        %v10341 = vpop.f32.mrb[0].mxu0
        %v10342 = vadd.f32 %v9991, %v10341
        %v10343 = vpop.f32.mrb[0].mxu0
        %v10344 = vand.u32 %v7713, 4294901760
        %10345 = vmatprep.mubr.f32.mxu0 %v10344
        %v10346 = vand.u32 %v4662, 4294901760
        %10347 = vmatmul.mubr.f32.gmra.mrb[0].mxu0 %v10346
        %v10348 = vpop.f32.mrb[0].mxu0
        %v10349 = vadd.f32 %v9998, %v10348
        %v10350 = vpop.f32.mrb[0].mxu0
        %v10351 = vand.u32 %v7716, 4294901760
        %10352 = vmatprep.mubr.f32.mxu0 %v10351
        %v10353 = vand.u32 %v4664, 4294901760
        %10354 = vmatmul.mubr.f32.gmra.mrb[0].mxu0 %v10353
        %v10355 = vpop.f32.mrb[0].mxu0
        %v10356 = vadd.f32 %v10005, %v10355
        %v10357 = vpop.f32.mrb[0].mxu0
        %v10358 = vand.u32 %v7719, 4294901760
        %10359 = vmatprep.mubr.f32.mxu0 %v10358
        %v10360 = vand.u32 %v4666, 4294901760
        %10361 = vmatmul.mubr.f32.gmra.mrb[0].mxu0 %v10360
        %v10362 = vpop.f32.mrb[0].mxu0
        %v10363 = vadd.f32 %v10012, %v10362
        %v10364 = vpop.f32.mrb[0].mxu0
        %v10365 = vand.u32 %v7722, 4294901760
        %10366 = vmatprep.mubr.f32.mxu0 %v10365
        %v10367 = vand.u32 %v4668, 4294901760
        %10368 = vmatmul.mubr.f32.gmra.mrb[0].mxu0 %v10367
        %v10369 = vpop.f32.mrb[0].mxu0
        %v10370 = vadd.f32 %v10019, %v10369
        %v10371 = vpop.f32.mrb[0].mxu0
        %v10372 = vand.u32 %v7725, 4294901760
        %10373 = vmatprep.mubr.f32.mxu0 %v10372
        %v10374 = vand.u32 %v4670, 4294901760
        %10375 = vmatmul.mubr.f32.gmra.mrb[0].mxu0 %v10374
        %v10376 = vpop.f32.mrb[0].mxu0
        %v10377 = vadd.f32 %v10026, %v10376
        %v10378 = vpop.f32.mrb[0].mxu0
        %v10379 = vand.u32 %v7728, 4294901760
        %10380 = vmatprep.mubr.f32.mxu0 %v10379
        %v10381 = vand.u32 %v4672, 4294901760
        %10382 = vmatmul.mubr.f32.gmra.mrb[0].mxu0 %v10381
        %v10383 = vpop.f32.mrb[0].mxu0
        %v10384 = vadd.f32 %v10033, %v10383
        %v10385 = vpop.f32.mrb[0].mxu0
        %v10386 = vand.u32 %v7731, 4294901760
        %10387 = vmatprep.mubr.f32.mxu0 %v10386
        %v10388 = vand.u32 %v4674, 4294901760
        %10389 = vmatmul.mubr.f32.gmra.mrb[0].mxu0 %v10388
        %v10390 = vpop.f32.mrb[0].mxu0
        %v10391 = vadd.f32 %v10040, %v10390
        %v10392 = vpop.f32.mrb[0].mxu0
        %v10393 = vand.u32 %v7734, 4294901760
        %10394 = vmatprep.mubr.f32.mxu0 %v10393
        %v10395 = vand.u32 %v4676, 4294901760
        %10396 = vmatmul.mubr.f32.gmra.mrb[0].mxu0 %v10395
        %v10397 = vpop.f32.mrb[0].mxu0
        %v10398 = vadd.f32 %v10047, %v10397
        %v10399 = vpop.f32.mrb[0].mxu0
        %v10400 = vand.u32 %v7737, 4294901760
        %10401 = vmatprep.mubr.f32.mxu0 %v10400
        %v10402 = vand.u32 %v4678, 4294901760
        %10403 = vmatmul.mubr.f32.gmra.mrb[0].mxu0 %v10402
        %v10404 = vpop.f32.mrb[0].mxu0
        %v10405 = vadd.f32 %v10054, %v10404
        %v10406 = vpop.f32.mrb[0].mxu0
        %v10407 = vand.u32 %v7740, 4294901760
        %10408 = vmatprep.mubr.f32.mxu0 %v10407
        %v10409 = vand.u32 %v4680, 4294901760
        %10410 = vmatmul.mubr.f32.gmra.mrb[0].mxu0 %v10409
        %v10411 = vpop.f32.mrb[0].mxu0
        %v10412 = vadd.f32 %v10061, %v10411
        %v10413 = vpop.f32.mrb[0].mxu0
        %v10414 = vand.u32 %v7743, 4294901760
        %10415 = vmatprep.mubr.f32.mxu0 %v10414
        %v10416 = vand.u32 %v4682, 4294901760
        %10417 = vmatmul.mubr.f32.gmra.mrb[0].mxu0 %v10416
        %v10418 = vpop.f32.mrb[0].mxu0
        %v10419 = vadd.f32 %v10068, %v10418
        %v10420 = vpop.f32.mrb[0].mxu0
        %v10421 = vand.u32 %v7746, 4294901760
        %10422 = vmatprep.mubr.f32.mxu0 %v10421
        %v10423 = vand.u32 %v4684, 4294901760
        %10424 = vmatmul.mubr.f32.gmra.mrb[0].mxu0 %v10423
        %v10425 = vpop.f32.mrb[0].mxu0
        %v10426 = vadd.f32 %v10075, %v10425
        %v10427 = vpop.f32.mrb[0].mxu0
        %v10428 = vand.u32 %v7749, 4294901760
        %10429 = vmatprep.mubr.f32.mxu0 %v10428
        %v10430 = vand.u32 %v4686, 4294901760
        %10431 = vmatmul.mubr.f32.gmra.mrb[0].mxu0 %v10430
        %v10432 = vpop.f32.mrb[0].mxu0
        %v10433 = vadd.f32 %v10082, %v10432
        %v10434 = vpop.f32.mrb[0].mxu0
        %v10435 = vand.u32 %v7752, 4294901760
        %10436 = vmatprep.mubr.f32.mxu0 %v10435
        %v10437 = vand.u32 %v4688, 4294901760
        %10438 = vmatmul.mubr.f32.gmra.mrb[0].mxu0 %v10437
        %v10439 = vpop.f32.mrb[0].mxu0
        %v10440 = vadd.f32 %v10089, %v10439
        %v10441 = vpop.f32.mrb[0].mxu0
        %v10442 = vand.u32 %v7755, 4294901760
        %10443 = vmatprep.mubr.f32.mxu0 %v10442
        %v10444 = vand.u32 %v4690, 4294901760
        %10445 = vmatmul.mubr.f32.gmra.mrb[0].mxu0 %v10444
        %v10446 = vpop.f32.mrb[0].mxu0
        %v10447 = vadd.f32 %v10096, %v10446
        %v10448 = vpop.f32.mrb[0].mxu0
        %v10449 = vand.u32 %v7758, 4294901760
        %10450 = vmatprep.mubr.f32.mxu0 %v10449
        %v10451 = vand.u32 %v4692, 4294901760
        %10452 = vmatmul.mubr.f32.gmra.mrb[0].mxu0 %v10451
        %v10453 = vpop.f32.mrb[0].mxu0
        %v10454 = vadd.f32 %v10103, %v10453
        %v10455 = vpop.f32.mrb[0].mxu0
        %v10456 = vand.u32 %v7761, 4294901760
        %10457 = vmatprep.mubr.f32.mxu0 %v10456
        %v10458 = vand.u32 %v4694, 4294901760
        %10459 = vmatmul.mubr.f32.gmra.mrb[0].mxu0 %v10458
        %v10460 = vpop.f32.mrb[0].mxu0
        %v10461 = vadd.f32 %v10110, %v10460
        %v10462 = vpop.f32.mrb[0].mxu0
        %v10463 = vand.u32 %v7764, 4294901760
        %10464 = vmatprep.mubr.f32.mxu0 %v10463
        %v10465 = vand.u32 %v4696, 4294901760
        %10466 = vmatmul.mubr.f32.gmra.mrb[0].mxu0 %v10465
        %v10467 = vpop.f32.mrb[0].mxu0
        %v10468 = vadd.f32 %v10117, %v10467
        %v10469 = vpop.f32.mrb[0].mxu0
        %v10470 = vand.u32 %v7767, 4294901760
        %10471 = vmatprep.mubr.f32.mxu0 %v10470
        %v10472 = vand.u32 %v4698, 4294901760
        %10473 = vmatmul.mubr.f32.gmra.mrb[0].mxu0 %v10472
        %v10474 = vpop.f32.mrb[0].mxu0
        %v10475 = vadd.f32 %v10124, %v10474
        %v10476 = vpop.f32.mrb[0].mxu0
        %v10477 = vand.u32 %v7770, 4294901760
        %10478 = vmatprep.mubr.f32.mxu0 %v10477
        %v10479 = vand.u32 %v4700, 4294901760
        %10480 = vmatmul.mubr.f32.gmra.mrb[0].mxu0 %v10479
        %v10481 = vpop.f32.mrb[0].mxu0
        %v10482 = vadd.f32 %v10131, %v10481
        %v10483 = vpop.f32.mrb[0].mxu0
        %v10484 = vand.u32 %v7773, 4294901760
        %10485 = vmatprep.mubr.f32.mxu0 %v10484
        %v10486 = vand.u32 %v4702, 4294901760
        %10487 = vmatmul.mubr.f32.gmra.mrb[0].mxu0 %v10486
        %v10488 = vpop.f32.mrb[0].mxu0
        %v10489 = vadd.f32 %v10138, %v10488
        %v10490 = vpop.f32.mrb[0].mxu0
        %v10491 = vand.u32 %v7776, 4294901760
        %10492 = vmatprep.mubr.f32.mxu0 %v10491
        %v10493 = vand.u32 %v4704, 4294901760
        %10494 = vmatmul.mubr.f32.gmra.mrb[0].mxu0 %v10493
        %v10495 = vpop.f32.mrb[0].mxu0
        %v10496 = vadd.f32 %v10145, %v10495
        %v10497 = vpop.f32.mrb[0].mxu0
        %v10498 = vand.u32 %v7779, 4294901760
        %10499 = vmatprep.mubr.f32.mxu0 %v10498
        %v10500 = vand.u32 %v4706, 4294901760
        %10501 = vmatmul.mubr.f32.gmra.mrb[0].mxu0 %v10500
        %v10502 = vpop.f32.mrb[0].mxu0
        %v10503 = vadd.f32 %v10152, %v10502
        %v10504 = vpop.f32.mrb[0].mxu0
        %v10505 = vand.u32 %v7782, 4294901760
        %10506 = vmatprep.mubr.f32.mxu0 %v10505
        %v10507 = vand.u32 %v4708, 4294901760
        %10508 = vmatmul.mubr.f32.gmra.mrb[0].mxu0 %v10507
        %v10509 = vpop.f32.mrb[0].mxu0
        %v10510 = vadd.f32 %v10159, %v10509
        %v10511 = vpop.f32.mrb[0].mxu0
        %v10512 = vand.u32 %v7785, 4294901760
        %10513 = vmatprep.mubr.f32.mxu0 %v10512
        %v10514 = vand.u32 %v4710, 4294901760
        %10515 = vmatmul.mubr.f32.gmra.mrb[0].mxu0 %v10514
        %v10516 = vpop.f32.mrb[0].mxu0
        %v10517 = vadd.f32 %v10166, %v10516
        %v10518 = vpop.f32.mrb[0].mxu0
        %v10519 = vand.u32 %v7788, 4294901760
        %10520 = vmatprep.mubr.f32.mxu0 %v10519
        %v10521 = vand.u32 %v4712, 4294901760
        %10522 = vmatmul.mubr.f32.gmra.mrb[0].mxu0 %v10521
        %v10523 = vpop.f32.mrb[0].mxu0
        %v10524 = vadd.f32 %v10173, %v10523
        %v10525 = vpop.f32.mrb[0].mxu0
        %v10526 = vand.u32 %v7791, 4294901760
        %10527 = vmatprep.mubr.f32.mxu0 %v10526
        %v10528 = vand.u32 %v4714, 4294901760
        %10529 = vmatmul.mubr.f32.gmra.mrb[0].mxu0 %v10528
        %v10530 = vpop.f32.mrb[0].mxu0
        %v10531 = vadd.f32 %v10180, %v10530
        %v10532 = vpop.f32.mrb[0].mxu0
        %v10533 = vand.u32 %v7794, 4294901760
        %10534 = vmatprep.mubr.f32.mxu0 %v10533
        %v10535 = vand.u32 %v4716, 4294901760
        %10536 = vmatmul.mubr.f32.gmra.mrb[0].mxu0 %v10535
        %v10537 = vpop.f32.mrb[0].mxu0
        %v10538 = vadd.f32 %v10187, %v10537
        %v10539 = vpop.f32.mrb[0].mxu0
        %v10540 = vand.u32 %v7797, 4294901760
        %10541 = vmatprep.mubr.f32.mxu0 %v10540
        %v10542 = vand.u32 %v4718, 4294901760
        %10543 = vmatmul.mubr.f32.gmra.mrb[0].mxu0 %v10542
        %v10544 = vpop.f32.mrb[0].mxu0
        %v10545 = vadd.f32 %v10194, %v10544
        %v10546 = vpop.f32.mrb[0].mxu0
        %v10547 = vand.u32 %v7800, 4294901760
        %10548 = vmatprep.mubr.f32.mxu0 %v10547
        %v10549 = vand.u32 %v4720, 4294901760
        %10550 = vmatmul.mubr.f32.gmra.mrb[0].mxu0 %v10549
        %v10551 = vpop.f32.mrb[0].mxu0
        %v10552 = vadd.f32 %v10201, %v10551
        %v10553 = vpop.f32.mrb[0].mxu0
        %v10554 = vand.u32 %v7803, 4294901760
        %10555 = vmatprep.mubr.f32.mxu0 %v10554
        %v10556 = vand.u32 %v4722, 4294901760
        %10557 = vmatmul.mubr.f32.gmra.mrb[0].mxu0 %v10556
        %v10558 = vpop.f32.mrb[0].mxu0
        %v10559 = vadd.f32 %v10208, %v10558
        %v10560 = vpop.f32.mrb[0].mxu0
        %v10561 = vand.u32 %v7806, 4294901760
        %10562 = vmatprep.mubr.f32.mxu0 %v10561
        %v10563 = vand.u32 %v4724, 4294901760
        %10564 = vmatmul.mubr.f32.gmra.mrb[0].mxu0 %v10563
        %v10565 = vpop.f32.mrb[0].mxu0
        %v10566 = vadd.f32 %v10215, %v10565
        %v10567 = vpop.f32.mrb[0].mxu0
        %v10568 = vand.u32 %v7809, 4294901760
        %10569 = vmatprep.mubr.f32.mxu0 %v10568
        %v10570 = vand.u32 %v4726, 4294901760
        %10571 = vmatmul.mubr.f32.gmra.mrb[0].mxu0 %v10570
        %v10572 = vpop.f32.mrb[0].mxu0
        %v10573 = vadd.f32 %v10222, %v10572
        %v10574 = vpop.f32.mrb[0].mxu0
        %v10575 = vand.u32 %v7812, 4294901760
        %10576 = vmatprep.mubr.f32.mxu0 %v10575
        %v10577 = vand.u32 %v4728, 4294901760
        %10578 = vmatmul.mubr.f32.gmra.mrb[0].mxu0 %v10577
        %v10579 = vpop.f32.mrb[0].mxu0
        %v10580 = vadd.f32 %v10229, %v10579
        %v10581 = vpop.f32.mrb[0].mxu0
        %v10582 = vand.u32 %v7815, 4294901760
        %10583 = vmatprep.mubr.f32.mxu0 %v10582
        %v10584 = vand.u32 %v4730, 4294901760
        %10585 = vmatmul.mubr.f32.gmra.mrb[0].mxu0 %v10584
        %v10586 = vpop.f32.mrb[0].mxu0
        %v10587 = vadd.f32 %v10236, %v10586
        %v10588 = vpop.f32.mrb[0].mxu0
        %v10589 = vand.u32 %v7818, 4294901760
        %10590 = vmatprep.mubr.f32.mxu0 %v10589
        %v10591 = vand.u32 %v4732, 4294901760
        %10592 = vmatmul.mubr.f32.gmra.mrb[0].mxu0 %v10591
        %v10593 = vpop.f32.mrb[0].mxu0
        %v10594 = vadd.f32 %v10243, %v10593
        %v10595 = vpop.f32.mrb[0].mxu0
        %v10596 = vand.u32 %v7821, 4294901760
        %10597 = vmatprep.mubr.f32.mxu0 %v10596
        %v10598 = vand.u32 %v4734, 4294901760
        %10599 = vmatmul.mubr.f32.gmra.mrb[0].mxu0 %v10598
        %v10600 = vpop.f32.mrb[0].mxu0
        %v10601 = vadd.f32 %v10250, %v10600
        %v10602 = vpop.f32.mrb[0].mxu0
        %10603 = vdwg.mxu0
        %10604 = vxpose.xlu0.b32.start [1/16] %v10342, 128
        %10605 = vxpose.xlu0.b32.cont [2/16] %v10349, 128
        %10606 = vxpose.xlu0.b32.cont [3/16] %v10356, 128
        %10607 = vxpose.xlu0.b32.cont [4/16] %v10363, 128
        %10608 = vxpose.xlu0.b32.cont [5/16] %v10370, 128
        %10609 = vxpose.xlu0.b32.cont [6/16] %v10377, 128
        %10610 = vxpose.xlu0.b32.cont [7/16] %v10384, 128
        %10611 = vxpose.xlu0.b32.cont [8/16] %v10391, 128
        %10612 = vxpose.xlu0.b32.cont [9/16] %v10398, 128
        %10613 = vxpose.xlu0.b32.cont [10/16] %v10405, 128
        %10614 = vxpose.xlu0.b32.cont [11/16] %v10412, 128
        %10615 = vxpose.xlu0.b32.cont [12/16] %v10419, 128
        %10616 = vxpose.xlu0.b32.cont [13/16] %v10426, 128
        %10617 = vxpose.xlu0.b32.cont [14/16] %v10433, 128
        %10618 = vxpose.xlu0.b32.cont [15/16] %v10440, 128
        %10619 = vxpose.xlu0.b32.end [16/16] %v10447, 128
        %v10620 = vpop.trf.xlu0
        %v10621 = vpop.trf.xlu0
        %v10622 = vpop.trf.xlu0
        %v10623 = vpop.trf.xlu0
        %v10624 = vpop.trf.xlu0
        %v10625 = vpop.trf.xlu0
        %v10626 = vpop.trf.xlu0
        %v10627 = vpop.trf.xlu0
        %v10628 = vpop.trf.xlu0
        %v10629 = vpop.trf.xlu0
        %v10630 = vpop.trf.xlu0
        %v10631 = vpop.trf.xlu0
        %v10632 = vpop.trf.xlu0
        %v10633 = vpop.trf.xlu0
        %v10634 = vpop.trf.xlu0
        %v10635 = vpop.trf.xlu0
        %10636 = vxpose.xlu0.b32.start [1/16] %v10454, 128
        %10637 = vxpose.xlu0.b32.cont [2/16] %v10461, 128
        %10638 = vxpose.xlu0.b32.cont [3/16] %v10468, 128
        %10639 = vxpose.xlu0.b32.cont [4/16] 0.0, 128
        %10640 = vxpose.xlu0.b32.cont [5/16] 0.0, 128
        %10641 = vxpose.xlu0.b32.cont [6/16] 0.0, 128
        %10642 = vxpose.xlu0.b32.cont [7/16] 0.0, 128
        %10643 = vxpose.xlu0.b32.cont [8/16] 0.0, 128
        %10644 = vxpose.xlu0.b32.cont [9/16] 0.0, 128
        %10645 = vxpose.xlu0.b32.cont [10/16] 0.0, 128
        %10646 = vxpose.xlu0.b32.cont [11/16] 0.0, 128
        %10647 = vxpose.xlu0.b32.cont [12/16] 0.0, 128
        %10648 = vxpose.xlu0.b32.cont [13/16] 0.0, 128
        %10649 = vxpose.xlu0.b32.cont [14/16] 0.0, 128
        %10650 = vxpose.xlu0.b32.cont [15/16] 0.0, 128
        %10651 = vxpose.xlu0.b32.end [16/16] 0.0, 128
        %v10652 = vpop.trf.xlu0
        %v10653 = vpop.trf.xlu0
        %v10654 = vpop.trf.xlu0
        %v10655 = vpop.trf.xlu0
        %v10656 = vpop.trf.xlu0
        %v10657 = vpop.trf.xlu0
        %v10658 = vpop.trf.xlu0
        %v10659 = vpop.trf.xlu0
        %v10660 = vpop.trf.xlu0
        %v10661 = vpop.trf.xlu0
        %v10662 = vpop.trf.xlu0
        %v10663 = vpop.trf.xlu0
        %v10664 = vpop.trf.xlu0
        %v10665 = vpop.trf.xlu0
        %v10666 = vpop.trf.xlu0
        %v10667 = vpop.trf.xlu0
        %10668 = vxpose.xlu0.b32.start [1/16] %v10475, 128
        %10669 = vxpose.xlu0.b32.cont [2/16] %v10482, 128
        %10670 = vxpose.xlu0.b32.cont [3/16] %v10489, 128
        %10671 = vxpose.xlu0.b32.cont [4/16] %v10496, 128
        %10672 = vxpose.xlu0.b32.cont [5/16] %v10503, 128
        %10673 = vxpose.xlu0.b32.cont [6/16] %v10510, 128
        %10674 = vxpose.xlu0.b32.cont [7/16] %v10517, 128
        %10675 = vxpose.xlu0.b32.cont [8/16] %v10524, 128
        %10676 = vxpose.xlu0.b32.cont [9/16] %v10531, 128
        %10677 = vxpose.xlu0.b32.cont [10/16] %v10538, 128
        %10678 = vxpose.xlu0.b32.cont [11/16] %v10545, 128
        %10679 = vxpose.xlu0.b32.cont [12/16] %v10552, 128
        %10680 = vxpose.xlu0.b32.cont [13/16] %v10559, 128
        %10681 = vxpose.xlu0.b32.cont [14/16] %v10566, 128
        %10682 = vxpose.xlu0.b32.cont [15/16] %v10573, 128
        %10683 = vxpose.xlu0.b32.end [16/16] %v10580, 128
        %v10684 = vpop.trf.xlu0
        %v10685 = vpop.trf.xlu0
        %v10686 = vpop.trf.xlu0
        %v10687 = vpop.trf.xlu0
        %v10688 = vpop.trf.xlu0
        %v10689 = vpop.trf.xlu0
        %v10690 = vpop.trf.xlu0
        %v10691 = vpop.trf.xlu0
        %v10692 = vpop.trf.xlu0
        %v10693 = vpop.trf.xlu0
        %v10694 = vpop.trf.xlu0
        %v10695 = vpop.trf.xlu0
        %v10696 = vpop.trf.xlu0
        %v10697 = vpop.trf.xlu0
        %v10698 = vpop.trf.xlu0
        %v10699 = vpop.trf.xlu0
        %10700 = vxpose.xlu0.b32.start [1/16] %v10587, 128
        %10701 = vxpose.xlu0.b32.cont [2/16] %v10594, 128
        %10702 = vxpose.xlu0.b32.cont [3/16] %v10601, 128
        %10703 = vxpose.xlu0.b32.cont [4/16] 0.0, 128
        %10704 = vxpose.xlu0.b32.cont [5/16] 0.0, 128
        %10705 = vxpose.xlu0.b32.cont [6/16] 0.0, 128
        %10706 = vxpose.xlu0.b32.cont [7/16] 0.0, 128
        %10707 = vxpose.xlu0.b32.cont [8/16] 0.0, 128
        %10708 = vxpose.xlu0.b32.cont [9/16] 0.0, 128
        %10709 = vxpose.xlu0.b32.cont [10/16] 0.0, 128
        %10710 = vxpose.xlu0.b32.cont [11/16] 0.0, 128
        %10711 = vxpose.xlu0.b32.cont [12/16] 0.0, 128
        %10712 = vxpose.xlu0.b32.cont [13/16] 0.0, 128
        %10713 = vxpose.xlu0.b32.cont [14/16] 0.0, 128
        %10714 = vxpose.xlu0.b32.cont [15/16] 0.0, 128
        %10715 = vxpose.xlu0.b32.end [16/16] 0.0, 128
        %v10716 = vpop.trf.xlu0
        %v10717 = vpop.trf.xlu0
        %v10718 = vpop.trf.xlu0
        %v10719 = vpop.trf.xlu0
        %v10720 = vpop.trf.xlu0
        %v10721 = vpop.trf.xlu0
        %v10722 = vpop.trf.xlu0
        %v10723 = vpop.trf.xlu0
        %v10724 = vpop.trf.xlu0
        %v10725 = vpop.trf.xlu0
        %v10726 = vpop.trf.xlu0
        %v10727 = vpop.trf.xlu0
        %v10728 = vpop.trf.xlu0
        %v10729 = vpop.trf.xlu0
        %v10730 = vpop.trf.xlu0
        %v10731 = vpop.trf.xlu0
        %v10734 = vrot.slane %v10684, 7
        %v10735 = vrot.slane %v10716, 7
        %v10738 = vadd.f32 %v10620, %v10734
        %v10739 = vadd.f32 %v10652, %v10735
        %v10740 = vadd.f32 %v10621, %v10734
        %v10741 = vadd.f32 %v10653, %v10735
        %vm10746 = vcmask 1046528
        %v10747 = vrot.slane %v10738, 1
        %v10748 = vrot.slane %v10740, 1
        %v10749 = vsel %vm10746, %v10747, %v10748
        %v10750 = vrot.slane %v10739, 1
        %v10751 = vrot.slane %v10741, 1
        %v10752 = vsel %vm10746, %v10750, %v10751
        %10755 = vst [vmem:[%s369] sm:$0xff] %v10749
        %vm10756 = vcmask 195584
        %10757 = vst.msk [vmem:[%s369 + $0x8] sm:$0xff] %vm10756, %v10752
        %s10758 = sand.u32 %s236, 1
        %s10759 = scalar_lea.sflag [#allocation3], %s10758
        %s10760 = sand.u32 %s236, 1
        %s10761 = smul.addr %s10760, 16
        %s10762 = scalar_lea.vmem [#allocation2], %s10761
        // Predicated region
        $region53: #{tpu_custom_call.1} parent=51 // pred_check
          %p10763 = pneg %p246
        $region54: #{tpu_custom_call.1} parent=51 // pred_check_branch
          %10765 = sbr.rel (%p10763) target = $region56
        $region55: #{tpu_custom_call.1} parent=51 // pred_region
          %s10767 = ssub.s32 256, 256
          %10768 = vsyncadd %s10759, %s10767
          %s10769 = smul.addr %s27, 2
          %s10770 = smul.addr %s26, 2
          %s10771 = sadd.s32 %s10769, %s10770
          %s10772 = smul.addr %s10771, 128
          %s10773 = scalar_lea.hbm %s8, %s10772
          %s10775 = sshll.u32 %s10762, 4
          %s10776 = int_to_ptr.vmem [resolvable:$true] %s10775
          %10778 = dma.vmem_to_hbm [thread:$0]  %s10776, 256, %s10773, %s10759
        $region56: #{tpu_custom_call.1} parent=51 // pred_fallthru
          _
      $region52: #{tpu_custom_call.1} parent=5 // pred_fallthru
        _
      %p10779 = scmp.le.s32.totalorder 2, %s17
      // Predicated region
      $region57: #{tpu_custom_call.1} parent=5 // pred_check
        %p10780 = pneg %p10779
      $region58: #{tpu_custom_call.1} parent=5 // pred_check_branch
        %10782 = sbr.rel (%p10780) target = $region60
      $region59: #{tpu_custom_call.1} parent=5 // pred_region
        %s10783 = ssub.s32 %s17, 2
        // Predicated region
        $region61: #{tpu_custom_call.1} parent=59 // pred_check
          %p10784 = pneg %p252
        $region62: #{tpu_custom_call.1} parent=59 // pred_check_branch
          %10786 = sbr.rel (%p10784) target = $region64
        $region63: #{tpu_custom_call.1} parent=59 // pred_region
          %s10787 = sand.u32 %s237, 1
          %s10788 = scalar_lea.sflag [#allocation3], %s10787
          %s10789 = sand.u32 %s237, 1
          %s10790 = smul.addr %s10789, 16
          %s10791 = scalar_lea.vmem [#allocation2], %s10790
          %10792 = dma.done %s10788, 256
        $region64: #{tpu_custom_call.1} parent=59 // pred_fallthru
          _
      $region60: #{tpu_custom_call.1} parent=5 // pred_fallthru
        _
    $region6: #{tpu_custom_call.1} parent=1 // loop_footer
      %s21 = sadd.s32 1, %s17
    $region7: #{tpu_custom_call.1} parent=1 // loop_footer_branch
      %16 = sbr.rel target = $region3
    $region8: #{tpu_custom_call.1} parent=1 // loop_exit
      _
    %10793 = vsyncpa [#allocation3], 1
    %s10794 = scalar_lea.sflag [#allocation3], 1
    %10795 = vsyncpa %s10794, 1

</llo_original>
